<compile_context>
chip_gen: v5e
topology: v5e:2x2
jax: 0.10.0
libtpu: 0.0.40
codegen_flags: <defaults>
</compile_context>

<pallas_src>
import functools

import jax
import jax.numpy as jnp
from jax.experimental import pallas as pl
from jax.experimental.pallas import tpu as pltpu

LANE = 128  # TPU lane width; channels are zero-padded to a multiple of this.


def _round_up(x, m):
    return ((x + m - 1) // m) * m


# ----------------------------------------------------------------------------
# Conv(kxk, 'same', stride 1, bias=False) + folded BatchNorm(eval) + ReLU
# [+ fused MaxPool2d(2,2)] -- one Pallas kernel per layer, grid over batch.
# ----------------------------------------------------------------------------
def _conv_kernel(x_ref, w_ref, b_ref, o_ref, *scratch, k, H, W, cin, cout, pool):
    # x_ref: (1, H+2p, W+2p, cin)  bf16, zero-padded spatially and on channels
    # w_ref: (k*k, cin, cout)      bf16, BN scale already folded in
    # b_ref: (1, cout)             f32 folded BN bias
    # o_ref: (1, HW_out, cout)     bf16 flat-spatial output (lane-dense, cout=128*)
    HW = H * W
    acc = jnp.zeros((HW, cout), jnp.float32)
    for kh in range(k):                      # static, fully unrolled K*K taps
        for kw in range(k):
            # shifted window straight from the padded block (no HBM im2col)
            win = x_ref[0, kh:kh + H, kw:kw + W, :].astype(jnp.float32)
            win = win.reshape(HW, cin).astype(jnp.bfloat16)
            acc = acc + jnp.dot(win, w_ref[kh * k + kw],
                                preferred_element_type=jnp.float32)
    y = jnp.maximum(acc + b_ref[...], 0.0)   # (HW, cout) f32 epilogue
    if pool:
        # Fused MaxPool2d(kernel=2, stride=2).
        pbuf = scratch[0]                    # ((H//2)*W, cout) f32 VMEM scratch
        Hh, Wh = H // 2, W // 2
        # pool along H first: contiguous, sublane-aligned row-block maxima
        for i in range(Hh):
            top = y[(2 * i) * W:(2 * i + 1) * W]
            bot = y[(2 * i + 1) * W:(2 * i + 2) * W]
            pbuf[i * W:(i + 1) * W, :] = jnp.maximum(top, bot)
        # pool along W: even/odd w == even/odd rows of the flat (h,w) layout
        even = pbuf[pl.ds(0, Hh * Wh, stride=2), :]
        odd = pbuf[pl.ds(1, Hh * Wh, stride=2), :]
        y = jnp.maximum(even, odd)           # (Hh*Wh, cout)
    o_ref[0] = y.astype(o_ref.dtype)


def conv_bn_relu(xp, w, b, *, k, pool):
    """xp: (N, H+2p, W+2p, Cin_p) bf16 padded input; returns (N, HW_out, Cout_p) bf16."""
    N, Hp, Wp, cin = xp.shape
    pad = k // 2
    H, W = Hp - 2 * pad, Wp - 2 * pad
    cout = w.shape[-1]
    if pool:
        assert H % 2 == 0 and W % 2 == 0
        hw_out = (H // 2) * (W // 2)
        scratch = [pltpu.VMEM(((H // 2) * W, cout), jnp.float32)]
    else:
        hw_out = H * W
        scratch = []
    kernel = functools.partial(_conv_kernel, k=k, H=H, W=W,
                               cin=cin, cout=cout, pool=pool)
    return pl.pallas_call(
        kernel,
        out_shape=jax.ShapeDtypeStruct((N, hw_out, cout), jnp.bfloat16),
        grid=(N,),
        in_specs=[
            pl.BlockSpec((1, Hp, Wp, cin), lambda n: (n, 0, 0, 0)),
            pl.BlockSpec((k * k, cin, cout), lambda n: (0, 0, 0)),
            pl.BlockSpec((1, cout), lambda n: (0, 0)),
        ],
        out_specs=pl.BlockSpec((1, hw_out, cout), lambda n: (n, 0, 0)),
        scratch_shapes=scratch,
        compiler_params=pltpu.CompilerParams(
            dimension_semantics=("parallel",),
            vmem_limit_bytes=32 * 1024 * 1024),
    )(xp, w, b)


# ----------------------------------------------------------------------------
# AdaptiveAvgPool2d((1,1)) + flatten + Linear: one grid step over the whole batch.
# ----------------------------------------------------------------------------
def _head_kernel(x_ref, w_ref, b_ref, o_ref, *, inv_hw):
    x = x_ref[...].astype(jnp.float32)               # (N, HW, C)
    pooled = jnp.sum(x, axis=1) * inv_hw             # (N, C) global average pool
    o_ref[...] = jnp.dot(pooled, w_ref[...],
                         preferred_element_type=jnp.float32) + b_ref[...]


def avgpool_linear(x_flat, w_lin, b_lin):
    N, HW, C = x_flat.shape
    D = w_lin.shape[-1]
    kernel = functools.partial(_head_kernel, inv_hw=1.0 / HW)
    return pl.pallas_call(
        kernel,
        out_shape=jax.ShapeDtypeStruct((N, D), jnp.float32),
        grid=(1,),
        in_specs=[
            pl.BlockSpec((N, HW, C), lambda i: (0, 0, 0)),
            pl.BlockSpec((C, D), lambda i: (0, 0)),
            pl.BlockSpec((1, D), lambda i: (0, 0)),
        ],
        out_specs=pl.BlockSpec((N, D), lambda i: (0, 0)),
        compiler_params=pltpu.CompilerParams(vmem_limit_bytes=32 * 1024 * 1024),
    )(x_flat, w_lin, b_lin)


# ----------------------------------------------------------------------------
# Parameter init (deterministic, synthetic): BN folded, channels padded, bf16.
# ----------------------------------------------------------------------------
def init_params(key, *, n_blocks, block_depth, out_channels, k_conv, in_channels=3):
    eps = 1e-5
    blocks = []
    for n in range(n_blocks):
        cin = in_channels if n == 0 else out_channels * 2 ** (n - 1)
        cout = out_channels * 2 ** n
        layers = []
        for d in range(block_depth):
            c_in = cin if d == 0 else cout
            key, kw, kg, kb, km, kv = jax.random.split(key, 6)
            w_oihw = jax.random.normal(kw, (cout, c_in, k_conv, k_conv), jnp.float32)
            w_oihw = w_oihw * (2.0 / (c_in * k_conv * k_conv)) ** 0.5
            gamma = 1.0 + 0.1 * jax.random.normal(kg, (cout,), jnp.float32)
            beta = 0.1 * jax.random.normal(kb, (cout,), jnp.float32)
            rmean = 0.1 * jax.random.normal(km, (cout,), jnp.float32)
            rvar = 1.0 + 0.1 * jax.random.uniform(kv, (cout,), jnp.float32)
            bn_scale = gamma / jnp.sqrt(rvar + eps)       # eval-mode BN fold
            bn_bias = beta - rmean * bn_scale
            w_hwio = jnp.transpose(w_oihw, (2, 3, 1, 0))  # OIHW -> HWIO
            w_fold = w_hwio * bn_scale                    # fold scale into weights
            cin_p, cout_p = _round_up(c_in, LANE), _round_up(cout, LANE)
            w_p = jnp.zeros((k_conv, k_conv, cin_p, cout_p), jnp.float32)
            w_p = w_p.at[:, :, :c_in, :cout].set(w_fold)
            w_p = w_p.reshape(k_conv * k_conv, cin_p, cout_p).astype(jnp.bfloat16)
            b_p = jnp.zeros((1, cout_p), jnp.float32).at[0, :cout].set(bn_bias)
            layers.append((w_p, b_p))
        blocks.append(layers)

    c_final = out_channels * 2 ** (n_blocks - 1)
    # TODO(synk): the reference builds nn.Linear(c_final // 4, 10), which mismatches the
    # actual pooled feature width (c_final) and would raise in PyTorch; we use c_final.
    key, kw, kb = jax.random.split(key, 3)
    w_lin = jax.random.normal(kw, (c_final, 10), jnp.float32) * (1.0 / c_final) ** 0.5
    b_lin = 0.1 * jax.random.normal(kb, (10,), jnp.float32)
    cfp = _round_up(c_final, LANE)
    w_lin_p = jnp.zeros((cfp, LANE), jnp.float32).at[:c_final, :10].set(w_lin)
    b_lin_p = jnp.zeros((1, LANE), jnp.float32).at[0, :10].set(b_lin)
    return blocks, (w_lin_p, b_lin_p)


# ----------------------------------------------------------------------------
# Forward pass (accepts NCHW like PyTorch; kernels compute in channels-last).
# ----------------------------------------------------------------------------
def griddy_forward(x_nchw, block_params, head_params, *, maxpool, k_conv, pad, stride):
    # TODO(synk): only 'same'-padded stride-1 convs are implemented (matches the config).
    assert stride == 1 and pad == k_conv // 2
    N, c_in, H, W = x_nchw.shape
    cp = _round_up(c_in, LANE)
    x = jnp.transpose(x_nchw, (0, 2, 3, 1)).astype(jnp.float32)
    x = jnp.pad(x, ((0, 0), (0, 0), (0, 0), (0, cp - c_in))).astype(jnp.bfloat16)
    for n, layers in enumerate(block_params):
        for d, (w_p, b_p) in enumerate(layers):
            do_pool = (n < maxpool) and (d == len(layers) - 1)
            xp = jnp.pad(x, ((0, 0), (pad, pad), (pad, pad), (0, 0)))
            y = conv_bn_relu(xp, w_p, b_p, k=k_conv, pool=do_pool)  # (N, HW_out, Cp)
            if do_pool:
                H //= 2
                W //= 2
            x = y.reshape(N, H, W, w_p.shape[-1])
    # TODO(synk): nn.Dropout is applied as inference-mode identity (no RNG mask).
    w_lin_p, b_lin_p = head_params
    x_flat = x.reshape(N, H * W, x.shape[-1])
    logits = avgpool_linear(x_flat, w_lin_p, b_lin_p)   # (N, 128) lane-dense
    return logits[:, :10]


# ----------------------------------------------------------------------------
if __name__ == "__main__":
    # Small but structurally faithful configuration of GriddyModel(**params).
    cfg = dict(n_blocks=2, block_depth=2, out_channels=16, k_conv=3,
               pad=1, stride=1, maxpool=3, dropout=0.3)

    key = jax.random.PRNGKey(0)
    kx, kp = jax.random.split(key)
    x = jax.random.normal(kx, (2, 3, 16, 16), jnp.float32)   # NCHW input

    block_params, head_params = init_params(
        kp,
        n_blocks=cfg["n_blocks"],
        block_depth=cfg["block_depth"],
        out_channels=cfg["out_channels"],
        k_conv=cfg["k_conv"],
    )

    fwd = jax.jit(functools.partial(
        griddy_forward, maxpool=cfg["maxpool"], k_conv=cfg["k_conv"],
        pad=cfg["pad"], stride=cfg["stride"]))
    out = fwd(x, block_params, head_params)
    jax.block_until_ready(out)

    assert out.shape == (2, 10), out.shape
    assert bool(jnp.all(jnp.isfinite(out)))
    print("KERNEL_OK")
</pallas_src>

<mosaic_0001>
module attributes {stable_mosaic.version = 11 : i64} {
  func.func @_conv_kernel(%arg0: i32, %arg1: memref<1x18x18x128xbf16, #tpu.memory_space<vmem>>, %arg2: memref<9x128x128xbf16, #tpu.memory_space<vmem>>, %arg3: memref<1x128xf32, #tpu.memory_space<vmem>>, %arg4: memref<1x256x128xbf16, #tpu.memory_space<vmem>>) attributes {dimension_semantics = [#tpu.dimension_semantics<parallel>], iteration_bounds = array<i64: 2>, scalar_prefetch = 0 : i64, scratch_operands = 0 : i64, tpu.core_type = #tpu.core_type<tc>, window_params = [{transform_indices = @transform_0, window_bounds = array<i64: 1, 18, 18, 128>}, {pipeline_mode = #tpu.pipeline_mode<synchronous>, transform_indices = @transform_1, window_bounds = array<i64: 9, 128, 128>}, {pipeline_mode = #tpu.pipeline_mode<synchronous>, transform_indices = @transform_2, window_bounds = array<i64: 1, 128>}, {transform_indices = @transform_3, window_bounds = array<i64: 1, 256, 128>}]} {
    %cst = arith.constant 0.000000e+00 : f32
    %0 = vector.broadcast %cst : f32 to vector<256x128xf32>
    %c0 = arith.constant 0 : index
    %c0_0 = arith.constant 0 : index
    %c0_1 = arith.constant 0 : index
    %c0_2 = arith.constant 0 : index
    %1 = vector.load %arg1[%c0, %c0_0, %c0_1, %c0_2] : memref<1x18x18x128xbf16, #tpu.memory_space<vmem>>, vector<1x16x16x128xbf16>
    %2 = vector.shape_cast %1 : vector<1x16x16x128xbf16> to vector<16x16x128xbf16>
    %3 = arith.extf %2 : vector<16x16x128xbf16> to vector<16x16x128xf32>
    %4 = vector.shape_cast %3 : vector<16x16x128xf32> to vector<256x128xf32>
    %5 = arith.truncf %4 : vector<256x128xf32> to vector<256x128xbf16>
    %c0_3 = arith.constant 0 : index
    %c0_4 = arith.constant 0 : index
    %c0_5 = arith.constant 0 : index
    %6 = vector.load %arg2[%c0_3, %c0_4, %c0_5] : memref<9x128x128xbf16, #tpu.memory_space<vmem>>, vector<1x128x128xbf16>
    %7 = vector.shape_cast %6 : vector<1x128x128xbf16> to vector<128x128xbf16>
    %cst_6 = arith.constant dense<0.000000e+00> : vector<256x128xf32>
    %8 = tpu.matmul %5, %7, %cst_6 {dimension_numbers = #tpu.dot_dimension_numbers<[1], [0], [0], [1], [0, 0, 1, 1], [], []>} : vector<256x128xbf16>, vector<128x128xbf16>, vector<256x128xf32> -> vector<256x128xf32>
    %9 = arith.addf %0, %8 : vector<256x128xf32>
    %c0_7 = arith.constant 0 : index
    %c0_8 = arith.constant 0 : index
    %c1 = arith.constant 1 : index
    %c0_9 = arith.constant 0 : index
    %10 = vector.load %arg1[%c0_7, %c0_8, %c1, %c0_9] : memref<1x18x18x128xbf16, #tpu.memory_space<vmem>>, vector<1x16x16x128xbf16>
    %11 = vector.shape_cast %10 : vector<1x16x16x128xbf16> to vector<16x16x128xbf16>
    %12 = arith.extf %11 : vector<16x16x128xbf16> to vector<16x16x128xf32>
    %13 = vector.shape_cast %12 : vector<16x16x128xf32> to vector<256x128xf32>
    %14 = arith.truncf %13 : vector<256x128xf32> to vector<256x128xbf16>
    %c1_10 = arith.constant 1 : index
    %c0_11 = arith.constant 0 : index
    %c0_12 = arith.constant 0 : index
    %15 = vector.load %arg2[%c1_10, %c0_11, %c0_12] : memref<9x128x128xbf16, #tpu.memory_space<vmem>>, vector<1x128x128xbf16>
    %16 = vector.shape_cast %15 : vector<1x128x128xbf16> to vector<128x128xbf16>
    %cst_13 = arith.constant dense<0.000000e+00> : vector<256x128xf32>
    %17 = tpu.matmul %14, %16, %cst_13 {dimension_numbers = #tpu.dot_dimension_numbers<[1], [0], [0], [1], [0, 0, 1, 1], [], []>} : vector<256x128xbf16>, vector<128x128xbf16>, vector<256x128xf32> -> vector<256x128xf32>
    %18 = arith.addf %9, %17 : vector<256x128xf32>
    %c0_14 = arith.constant 0 : index
    %c0_15 = arith.constant 0 : index
    %c2 = arith.constant 2 : index
    %c0_16 = arith.constant 0 : index
    %19 = vector.load %arg1[%c0_14, %c0_15, %c2, %c0_16] : memref<1x18x18x128xbf16, #tpu.memory_space<vmem>>, vector<1x16x16x128xbf16>
    %20 = vector.shape_cast %19 : vector<1x16x16x128xbf16> to vector<16x16x128xbf16>
    %21 = arith.extf %20 : vector<16x16x128xbf16> to vector<16x16x128xf32>
    %22 = vector.shape_cast %21 : vector<16x16x128xf32> to vector<256x128xf32>
    %23 = arith.truncf %22 : vector<256x128xf32> to vector<256x128xbf16>
    %c2_17 = arith.constant 2 : index
    %c0_18 = arith.constant 0 : index
    %c0_19 = arith.constant 0 : index
    %24 = vector.load %arg2[%c2_17, %c0_18, %c0_19] : memref<9x128x128xbf16, #tpu.memory_space<vmem>>, vector<1x128x128xbf16>
    %25 = vector.shape_cast %24 : vector<1x128x128xbf16> to vector<128x128xbf16>
    %cst_20 = arith.constant dense<0.000000e+00> : vector<256x128xf32>
    %26 = tpu.matmul %23, %25, %cst_20 {dimension_numbers = #tpu.dot_dimension_numbers<[1], [0], [0], [1], [0, 0, 1, 1], [], []>} : vector<256x128xbf16>, vector<128x128xbf16>, vector<256x128xf32> -> vector<256x128xf32>
    %27 = arith.addf %18, %26 : vector<256x128xf32>
    %c0_21 = arith.constant 0 : index
    %c1_22 = arith.constant 1 : index
    %c0_23 = arith.constant 0 : index
    %c0_24 = arith.constant 0 : index
    %28 = vector.load %arg1[%c0_21, %c1_22, %c0_23, %c0_24] : memref<1x18x18x128xbf16, #tpu.memory_space<vmem>>, vector<1x16x16x128xbf16>
    %29 = vector.shape_cast %28 : vector<1x16x16x128xbf16> to vector<16x16x128xbf16>
    %30 = arith.extf %29 : vector<16x16x128xbf16> to vector<16x16x128xf32>
    %31 = vector.shape_cast %30 : vector<16x16x128xf32> to vector<256x128xf32>
    %32 = arith.truncf %31 : vector<256x128xf32> to vector<256x128xbf16>
    %c3 = arith.constant 3 : index
    %c0_25 = arith.constant 0 : index
    %c0_26 = arith.constant 0 : index
    %33 = vector.load %arg2[%c3, %c0_25, %c0_26] : memref<9x128x128xbf16, #tpu.memory_space<vmem>>, vector<1x128x128xbf16>
    %34 = vector.shape_cast %33 : vector<1x128x128xbf16> to vector<128x128xbf16>
    %cst_27 = arith.constant dense<0.000000e+00> : vector<256x128xf32>
    %35 = tpu.matmul %32, %34, %cst_27 {dimension_numbers = #tpu.dot_dimension_numbers<[1], [0], [0], [1], [0, 0, 1, 1], [], []>} : vector<256x128xbf16>, vector<128x128xbf16>, vector<256x128xf32> -> vector<256x128xf32>
    %36 = arith.addf %27, %35 : vector<256x128xf32>
    %c0_28 = arith.constant 0 : index
    %c1_29 = arith.constant 1 : index
    %c1_30 = arith.constant 1 : index
    %c0_31 = arith.constant 0 : index
    %37 = vector.load %arg1[%c0_28, %c1_29, %c1_30, %c0_31] : memref<1x18x18x128xbf16, #tpu.memory_space<vmem>>, vector<1x16x16x128xbf16>
    %38 = vector.shape_cast %37 : vector<1x16x16x128xbf16> to vector<16x16x128xbf16>
    %39 = arith.extf %38 : vector<16x16x128xbf16> to vector<16x16x128xf32>
    %40 = vector.shape_cast %39 : vector<16x16x128xf32> to vector<256x128xf32>
    %41 = arith.truncf %40 : vector<256x128xf32> to vector<256x128xbf16>
    %c4 = arith.constant 4 : index
    %c0_32 = arith.constant 0 : index
    %c0_33 = arith.constant 0 : index
    %42 = vector.load %arg2[%c4, %c0_32, %c0_33] : memref<9x128x128xbf16, #tpu.memory_space<vmem>>, vector<1x128x128xbf16>
    %43 = vector.shape_cast %42 : vector<1x128x128xbf16> to vector<128x128xbf16>
    %cst_34 = arith.constant dense<0.000000e+00> : vector<256x128xf32>
    %44 = tpu.matmul %41, %43, %cst_34 {dimension_numbers = #tpu.dot_dimension_numbers<[1], [0], [0], [1], [0, 0, 1, 1], [], []>} : vector<256x128xbf16>, vector<128x128xbf16>, vector<256x128xf32> -> vector<256x128xf32>
    %45 = arith.addf %36, %44 : vector<256x128xf32>
    %c0_35 = arith.constant 0 : index
    %c1_36 = arith.constant 1 : index
    %c2_37 = arith.constant 2 : index
    %c0_38 = arith.constant 0 : index
    %46 = vector.load %arg1[%c0_35, %c1_36, %c2_37, %c0_38] : memref<1x18x18x128xbf16, #tpu.memory_space<vmem>>, vector<1x16x16x128xbf16>
    %47 = vector.shape_cast %46 : vector<1x16x16x128xbf16> to vector<16x16x128xbf16>
    %48 = arith.extf %47 : vector<16x16x128xbf16> to vector<16x16x128xf32>
    %49 = vector.shape_cast %48 : vector<16x16x128xf32> to vector<256x128xf32>
    %50 = arith.truncf %49 : vector<256x128xf32> to vector<256x128xbf16>
    %c5 = arith.constant 5 : index
    %c0_39 = arith.constant 0 : index
    %c0_40 = arith.constant 0 : index
    %51 = vector.load %arg2[%c5, %c0_39, %c0_40] : memref<9x128x128xbf16, #tpu.memory_space<vmem>>, vector<1x128x128xbf16>
    %52 = vector.shape_cast %51 : vector<1x128x128xbf16> to vector<128x128xbf16>
    %cst_41 = arith.constant dense<0.000000e+00> : vector<256x128xf32>
    %53 = tpu.matmul %50, %52, %cst_41 {dimension_numbers = #tpu.dot_dimension_numbers<[1], [0], [0], [1], [0, 0, 1, 1], [], []>} : vector<256x128xbf16>, vector<128x128xbf16>, vector<256x128xf32> -> vector<256x128xf32>
    %54 = arith.addf %45, %53 : vector<256x128xf32>
    %c0_42 = arith.constant 0 : index
    %c2_43 = arith.constant 2 : index
    %c0_44 = arith.constant 0 : index
    %c0_45 = arith.constant 0 : index
    %55 = vector.load %arg1[%c0_42, %c2_43, %c0_44, %c0_45] : memref<1x18x18x128xbf16, #tpu.memory_space<vmem>>, vector<1x16x16x128xbf16>
    %56 = vector.shape_cast %55 : vector<1x16x16x128xbf16> to vector<16x16x128xbf16>
    %57 = arith.extf %56 : vector<16x16x128xbf16> to vector<16x16x128xf32>
    %58 = vector.shape_cast %57 : vector<16x16x128xf32> to vector<256x128xf32>
    %59 = arith.truncf %58 : vector<256x128xf32> to vector<256x128xbf16>
    %c6 = arith.constant 6 : index
    %c0_46 = arith.constant 0 : index
    %c0_47 = arith.constant 0 : index
    %60 = vector.load %arg2[%c6, %c0_46, %c0_47] : memref<9x128x128xbf16, #tpu.memory_space<vmem>>, vector<1x128x128xbf16>
    %61 = vector.shape_cast %60 : vector<1x128x128xbf16> to vector<128x128xbf16>
    %cst_48 = arith.constant dense<0.000000e+00> : vector<256x128xf32>
    %62 = tpu.matmul %59, %61, %cst_48 {dimension_numbers = #tpu.dot_dimension_numbers<[1], [0], [0], [1], [0, 0, 1, 1], [], []>} : vector<256x128xbf16>, vector<128x128xbf16>, vector<256x128xf32> -> vector<256x128xf32>
    %63 = arith.addf %54, %62 : vector<256x128xf32>
    %c0_49 = arith.constant 0 : index
    %c2_50 = arith.constant 2 : index
    %c1_51 = arith.constant 1 : index
    %c0_52 = arith.constant 0 : index
    %64 = vector.load %arg1[%c0_49, %c2_50, %c1_51, %c0_52] : memref<1x18x18x128xbf16, #tpu.memory_space<vmem>>, vector<1x16x16x128xbf16>
    %65 = vector.shape_cast %64 : vector<1x16x16x128xbf16> to vector<16x16x128xbf16>
    %66 = arith.extf %65 : vector<16x16x128xbf16> to vector<16x16x128xf32>
    %67 = vector.shape_cast %66 : vector<16x16x128xf32> to vector<256x128xf32>
    %68 = arith.truncf %67 : vector<256x128xf32> to vector<256x128xbf16>
    %c7 = arith.constant 7 : index
    %c0_53 = arith.constant 0 : index
    %c0_54 = arith.constant 0 : index
    %69 = vector.load %arg2[%c7, %c0_53, %c0_54] : memref<9x128x128xbf16, #tpu.memory_space<vmem>>, vector<1x128x128xbf16>
    %70 = vector.shape_cast %69 : vector<1x128x128xbf16> to vector<128x128xbf16>
    %cst_55 = arith.constant dense<0.000000e+00> : vector<256x128xf32>
    %71 = tpu.matmul %68, %70, %cst_55 {dimension_numbers = #tpu.dot_dimension_numbers<[1], [0], [0], [1], [0, 0, 1, 1], [], []>} : vector<256x128xbf16>, vector<128x128xbf16>, vector<256x128xf32> -> vector<256x128xf32>
    %72 = arith.addf %63, %71 : vector<256x128xf32>
    %c0_56 = arith.constant 0 : index
    %c2_57 = arith.constant 2 : index
    %c2_58 = arith.constant 2 : index
    %c0_59 = arith.constant 0 : index
    %73 = vector.load %arg1[%c0_56, %c2_57, %c2_58, %c0_59] : memref<1x18x18x128xbf16, #tpu.memory_space<vmem>>, vector<1x16x16x128xbf16>
    %74 = vector.shape_cast %73 : vector<1x16x16x128xbf16> to vector<16x16x128xbf16>
    %75 = arith.extf %74 : vector<16x16x128xbf16> to vector<16x16x128xf32>
    %76 = vector.shape_cast %75 : vector<16x16x128xf32> to vector<256x128xf32>
    %77 = arith.truncf %76 : vector<256x128xf32> to vector<256x128xbf16>
    %c8 = arith.constant 8 : index
    %c0_60 = arith.constant 0 : index
    %c0_61 = arith.constant 0 : index
    %78 = vector.load %arg2[%c8, %c0_60, %c0_61] : memref<9x128x128xbf16, #tpu.memory_space<vmem>>, vector<1x128x128xbf16>
    %79 = vector.shape_cast %78 : vector<1x128x128xbf16> to vector<128x128xbf16>
    %cst_62 = arith.constant dense<0.000000e+00> : vector<256x128xf32>
    %80 = tpu.matmul %77, %79, %cst_62 {dimension_numbers = #tpu.dot_dimension_numbers<[1], [0], [0], [1], [0, 0, 1, 1], [], []>} : vector<256x128xbf16>, vector<128x128xbf16>, vector<256x128xf32> -> vector<256x128xf32>
    %81 = arith.addf %72, %80 : vector<256x128xf32>
    %c0_63 = arith.constant 0 : index
    %c0_64 = arith.constant 0 : index
    %82 = vector.load %arg3[%c0_63, %c0_64] : memref<1x128xf32, #tpu.memory_space<vmem>>, vector<1x128xf32>
    %83 = vector.broadcast %82 : vector<1x128xf32> to vector<256x128xf32>
    %84 = arith.addf %81, %83 : vector<256x128xf32>
    %cst_65 = arith.constant 0.000000e+00 : f32
    %85 = vector.broadcast %cst_65 : f32 to vector<256x128xf32>
    %86 = arith.maximumf %84, %85 : vector<256x128xf32>
    %87 = arith.truncf %86 : vector<256x128xf32> to vector<256x128xbf16>
    %c0_66 = arith.constant 0 : index
    %c0_67 = arith.constant 0 : index
    %c0_68 = arith.constant 0 : index
    %88 = vector.load %arg4[%c0_66, %c0_67, %c0_68] : memref<1x256x128xbf16, #tpu.memory_space<vmem>>, vector<1x256x128xbf16>
    %89 = vector.shape_cast %88 : vector<1x256x128xbf16> to vector<256x128xbf16>
    %90 = vector.shape_cast %87 : vector<256x128xbf16> to vector<1x256x128xbf16>
    tpu.vector_store %arg4[%c0_66, %c0_67, %c0_68], %90 {strides = array<i32>} : memref<1x256x128xbf16, #tpu.memory_space<vmem>>, vector<1x256x128xbf16>,
    return
  }
  func.func @transform_0(%arg0: i32) -> (i32, i32, i32, i32) {
    %c0_i32 = arith.constant 0 : i32
    %c0_i32_0 = arith.constant 0 : i32
    %c0_i32_1 = arith.constant 0 : i32
    %c0_i32_2 = arith.constant 0 : i32
    return %arg0, %c0_i32, %c0_i32_0, %c0_i32_1 : i32, i32, i32, i32
  }
  func.func @transform_1(%arg0: i32) -> (i32, i32, i32) {
    %c0_i32 = arith.constant 0 : i32
    %c0_i32_0 = arith.constant 0 : i32
    %c0_i32_1 = arith.constant 0 : i32
    %c0_i32_2 = arith.constant 0 : i32
    return %c0_i32, %c0_i32_0, %c0_i32_1 : i32, i32, i32
  }
  func.func @transform_2(%arg0: i32) -> (i32, i32) {
    %c0_i32 = arith.constant 0 : i32
    %c0_i32_0 = arith.constant 0 : i32
    %c0_i32_1 = arith.constant 0 : i32
    return %c0_i32, %c0_i32_0 : i32, i32
  }
  func.func @transform_3(%arg0: i32) -> (i32, i32, i32) {
    %c0_i32 = arith.constant 0 : i32
    %c0_i32_0 = arith.constant 0 : i32
    %c0_i32_1 = arith.constant 0 : i32
    return %arg0, %c0_i32, %c0_i32_0 : i32, i32, i32
  }
}

module attributes {stable_mosaic.version = 11 : i64} {
  func.func @_conv_kernel(%arg0: i32, %arg1: memref<1x18x18x128xbf16, #tpu.memory_space<vmem>>, %arg2: memref<9x128x128xbf16, #tpu.memory_space<vmem>>, %arg3: memref<1x128xf32, #tpu.memory_space<vmem>>, %arg4: memref<1x64x128xbf16, #tpu.memory_space<vmem>>, %arg5: memref<128x128xf32, #tpu.memory_space<vmem>>) attributes {dimension_semantics = [#tpu.dimension_semantics<parallel>], iteration_bounds = array<i64: 2>, scalar_prefetch = 0 : i64, scratch_operands = 1 : i64, tpu.core_type = #tpu.core_type<tc>, window_params = [{transform_indices = @transform_0, window_bounds = array<i64: 1, 18, 18, 128>}, {pipeline_mode = #tpu.pipeline_mode<synchronous>, transform_indices = @transform_1, window_bounds = array<i64: 9, 128, 128>}, {pipeline_mode = #tpu.pipeline_mode<synchronous>, transform_indices = @transform_2, window_bounds = array<i64: 1, 128>}, {transform_indices = @transform_3, window_bounds = array<i64: 1, 64, 128>}]} {
    %cst = arith.constant 0.000000e+00 : f32
    %0 = vector.broadcast %cst : f32 to vector<256x128xf32>
    %c0 = arith.constant 0 : index
    %c0_0 = arith.constant 0 : index
    %c0_1 = arith.constant 0 : index
    %c0_2 = arith.constant 0 : index
    %1 = vector.load %arg1[%c0, %c0_0, %c0_1, %c0_2] : memref<1x18x18x128xbf16, #tpu.memory_space<vmem>>, vector<1x16x16x128xbf16>
    %2 = vector.shape_cast %1 : vector<1x16x16x128xbf16> to vector<16x16x128xbf16>
    %3 = arith.extf %2 : vector<16x16x128xbf16> to vector<16x16x128xf32>
    %4 = vector.shape_cast %3 : vector<16x16x128xf32> to vector<256x128xf32>
    %5 = arith.truncf %4 : vector<256x128xf32> to vector<256x128xbf16>
    %c0_3 = arith.constant 0 : index
    %c0_4 = arith.constant 0 : index
    %c0_5 = arith.constant 0 : index
    %6 = vector.load %arg2[%c0_3, %c0_4, %c0_5] : memref<9x128x128xbf16, #tpu.memory_space<vmem>>, vector<1x128x128xbf16>
    %7 = vector.shape_cast %6 : vector<1x128x128xbf16> to vector<128x128xbf16>
    %cst_6 = arith.constant dense<0.000000e+00> : vector<256x128xf32>
    %8 = tpu.matmul %5, %7, %cst_6 {dimension_numbers = #tpu.dot_dimension_numbers<[1], [0], [0], [1], [0, 0, 1, 1], [], []>} : vector<256x128xbf16>, vector<128x128xbf16>, vector<256x128xf32> -> vector<256x128xf32>
    %9 = arith.addf %0, %8 : vector<256x128xf32>
    %c0_7 = arith.constant 0 : index
    %c0_8 = arith.constant 0 : index
    %c1 = arith.constant 1 : index
    %c0_9 = arith.constant 0 : index
    %10 = vector.load %arg1[%c0_7, %c0_8, %c1, %c0_9] : memref<1x18x18x128xbf16, #tpu.memory_space<vmem>>, vector<1x16x16x128xbf16>
    %11 = vector.shape_cast %10 : vector<1x16x16x128xbf16> to vector<16x16x128xbf16>
    %12 = arith.extf %11 : vector<16x16x128xbf16> to vector<16x16x128xf32>
    %13 = vector.shape_cast %12 : vector<16x16x128xf32> to vector<256x128xf32>
    %14 = arith.truncf %13 : vector<256x128xf32> to vector<256x128xbf16>
    %c1_10 = arith.constant 1 : index
    %c0_11 = arith.constant 0 : index
    %c0_12 = arith.constant 0 : index
    %15 = vector.load %arg2[%c1_10, %c0_11, %c0_12] : memref<9x128x128xbf16, #tpu.memory_space<vmem>>, vector<1x128x128xbf16>
    %16 = vector.shape_cast %15 : vector<1x128x128xbf16> to vector<128x128xbf16>
    %cst_13 = arith.constant dense<0.000000e+00> : vector<256x128xf32>
    %17 = tpu.matmul %14, %16, %cst_13 {dimension_numbers = #tpu.dot_dimension_numbers<[1], [0], [0], [1], [0, 0, 1, 1], [], []>} : vector<256x128xbf16>, vector<128x128xbf16>, vector<256x128xf32> -> vector<256x128xf32>
    %18 = arith.addf %9, %17 : vector<256x128xf32>
    %c0_14 = arith.constant 0 : index
    %c0_15 = arith.constant 0 : index
    %c2 = arith.constant 2 : index
    %c0_16 = arith.constant 0 : index
    %19 = vector.load %arg1[%c0_14, %c0_15, %c2, %c0_16] : memref<1x18x18x128xbf16, #tpu.memory_space<vmem>>, vector<1x16x16x128xbf16>
    %20 = vector.shape_cast %19 : vector<1x16x16x128xbf16> to vector<16x16x128xbf16>
    %21 = arith.extf %20 : vector<16x16x128xbf16> to vector<16x16x128xf32>
    %22 = vector.shape_cast %21 : vector<16x16x128xf32> to vector<256x128xf32>
    %23 = arith.truncf %22 : vector<256x128xf32> to vector<256x128xbf16>
    %c2_17 = arith.constant 2 : index
    %c0_18 = arith.constant 0 : index
    %c0_19 = arith.constant 0 : index
    %24 = vector.load %arg2[%c2_17, %c0_18, %c0_19] : memref<9x128x128xbf16, #tpu.memory_space<vmem>>, vector<1x128x128xbf16>
    %25 = vector.shape_cast %24 : vector<1x128x128xbf16> to vector<128x128xbf16>
    %cst_20 = arith.constant dense<0.000000e+00> : vector<256x128xf32>
    %26 = tpu.matmul %23, %25, %cst_20 {dimension_numbers = #tpu.dot_dimension_numbers<[1], [0], [0], [1], [0, 0, 1, 1], [], []>} : vector<256x128xbf16>, vector<128x128xbf16>, vector<256x128xf32> -> vector<256x128xf32>
    %27 = arith.addf %18, %26 : vector<256x128xf32>
    %c0_21 = arith.constant 0 : index
    %c1_22 = arith.constant 1 : index
    %c0_23 = arith.constant 0 : index
    %c0_24 = arith.constant 0 : index
    %28 = vector.load %arg1[%c0_21, %c1_22, %c0_23, %c0_24] : memref<1x18x18x128xbf16, #tpu.memory_space<vmem>>, vector<1x16x16x128xbf16>
    %29 = vector.shape_cast %28 : vector<1x16x16x128xbf16> to vector<16x16x128xbf16>
    %30 = arith.extf %29 : vector<16x16x128xbf16> to vector<16x16x128xf32>
    %31 = vector.shape_cast %30 : vector<16x16x128xf32> to vector<256x128xf32>
    %32 = arith.truncf %31 : vector<256x128xf32> to vector<256x128xbf16>
    %c3 = arith.constant 3 : index
    %c0_25 = arith.constant 0 : index
    %c0_26 = arith.constant 0 : index
    %33 = vector.load %arg2[%c3, %c0_25, %c0_26] : memref<9x128x128xbf16, #tpu.memory_space<vmem>>, vector<1x128x128xbf16>
    %34 = vector.shape_cast %33 : vector<1x128x128xbf16> to vector<128x128xbf16>
    %cst_27 = arith.constant dense<0.000000e+00> : vector<256x128xf32>
    %35 = tpu.matmul %32, %34, %cst_27 {dimension_numbers = #tpu.dot_dimension_numbers<[1], [0], [0], [1], [0, 0, 1, 1], [], []>} : vector<256x128xbf16>, vector<128x128xbf16>, vector<256x128xf32> -> vector<256x128xf32>
    %36 = arith.addf %27, %35 : vector<256x128xf32>
    %c0_28 = arith.constant 0 : index
    %c1_29 = arith.constant 1 : index
    %c1_30 = arith.constant 1 : index
    %c0_31 = arith.constant 0 : index
    %37 = vector.load %arg1[%c0_28, %c1_29, %c1_30, %c0_31] : memref<1x18x18x128xbf16, #tpu.memory_space<vmem>>, vector<1x16x16x128xbf16>
    %38 = vector.shape_cast %37 : vector<1x16x16x128xbf16> to vector<16x16x128xbf16>
    %39 = arith.extf %38 : vector<16x16x128xbf16> to vector<16x16x128xf32>
    %40 = vector.shape_cast %39 : vector<16x16x128xf32> to vector<256x128xf32>
    %41 = arith.truncf %40 : vector<256x128xf32> to vector<256x128xbf16>
    %c4 = arith.constant 4 : index
    %c0_32 = arith.constant 0 : index
    %c0_33 = arith.constant 0 : index
    %42 = vector.load %arg2[%c4, %c0_32, %c0_33] : memref<9x128x128xbf16, #tpu.memory_space<vmem>>, vector<1x128x128xbf16>
    %43 = vector.shape_cast %42 : vector<1x128x128xbf16> to vector<128x128xbf16>
    %cst_34 = arith.constant dense<0.000000e+00> : vector<256x128xf32>
    %44 = tpu.matmul %41, %43, %cst_34 {dimension_numbers = #tpu.dot_dimension_numbers<[1], [0], [0], [1], [0, 0, 1, 1], [], []>} : vector<256x128xbf16>, vector<128x128xbf16>, vector<256x128xf32> -> vector<256x128xf32>
    %45 = arith.addf %36, %44 : vector<256x128xf32>
    %c0_35 = arith.constant 0 : index
    %c1_36 = arith.constant 1 : index
    %c2_37 = arith.constant 2 : index
    %c0_38 = arith.constant 0 : index
    %46 = vector.load %arg1[%c0_35, %c1_36, %c2_37, %c0_38] : memref<1x18x18x128xbf16, #tpu.memory_space<vmem>>, vector<1x16x16x128xbf16>
    %47 = vector.shape_cast %46 : vector<1x16x16x128xbf16> to vector<16x16x128xbf16>
    %48 = arith.extf %47 : vector<16x16x128xbf16> to vector<16x16x128xf32>
    %49 = vector.shape_cast %48 : vector<16x16x128xf32> to vector<256x128xf32>
    %50 = arith.truncf %49 : vector<256x128xf32> to vector<256x128xbf16>
    %c5 = arith.constant 5 : index
    %c0_39 = arith.constant 0 : index
    %c0_40 = arith.constant 0 : index
    %51 = vector.load %arg2[%c5, %c0_39, %c0_40] : memref<9x128x128xbf16, #tpu.memory_space<vmem>>, vector<1x128x128xbf16>
    %52 = vector.shape_cast %51 : vector<1x128x128xbf16> to vector<128x128xbf16>
    %cst_41 = arith.constant dense<0.000000e+00> : vector<256x128xf32>
    %53 = tpu.matmul %50, %52, %cst_41 {dimension_numbers = #tpu.dot_dimension_numbers<[1], [0], [0], [1], [0, 0, 1, 1], [], []>} : vector<256x128xbf16>, vector<128x128xbf16>, vector<256x128xf32> -> vector<256x128xf32>
    %54 = arith.addf %45, %53 : vector<256x128xf32>
    %c0_42 = arith.constant 0 : index
    %c2_43 = arith.constant 2 : index
    %c0_44 = arith.constant 0 : index
    %c0_45 = arith.constant 0 : index
    %55 = vector.load %arg1[%c0_42, %c2_43, %c0_44, %c0_45] : memref<1x18x18x128xbf16, #tpu.memory_space<vmem>>, vector<1x16x16x128xbf16>
    %56 = vector.shape_cast %55 : vector<1x16x16x128xbf16> to vector<16x16x128xbf16>
    %57 = arith.extf %56 : vector<16x16x128xbf16> to vector<16x16x128xf32>
    %58 = vector.shape_cast %57 : vector<16x16x128xf32> to vector<256x128xf32>
    %59 = arith.truncf %58 : vector<256x128xf32> to vector<256x128xbf16>
    %c6 = arith.constant 6 : index
    %c0_46 = arith.constant 0 : index
    %c0_47 = arith.constant 0 : index
    %60 = vector.load %arg2[%c6, %c0_46, %c0_47] : memref<9x128x128xbf16, #tpu.memory_space<vmem>>, vector<1x128x128xbf16>
    %61 = vector.shape_cast %60 : vector<1x128x128xbf16> to vector<128x128xbf16>
    %cst_48 = arith.constant dense<0.000000e+00> : vector<256x128xf32>
    %62 = tpu.matmul %59, %61, %cst_48 {dimension_numbers = #tpu.dot_dimension_numbers<[1], [0], [0], [1], [0, 0, 1, 1], [], []>} : vector<256x128xbf16>, vector<128x128xbf16>, vector<256x128xf32> -> vector<256x128xf32>
    %63 = arith.addf %54, %62 : vector<256x128xf32>
    %c0_49 = arith.constant 0 : index
    %c2_50 = arith.constant 2 : index
    %c1_51 = arith.constant 1 : index
    %c0_52 = arith.constant 0 : index
    %64 = vector.load %arg1[%c0_49, %c2_50, %c1_51, %c0_52] : memref<1x18x18x128xbf16, #tpu.memory_space<vmem>>, vector<1x16x16x128xbf16>
    %65 = vector.shape_cast %64 : vector<1x16x16x128xbf16> to vector<16x16x128xbf16>
    %66 = arith.extf %65 : vector<16x16x128xbf16> to vector<16x16x128xf32>
    %67 = vector.shape_cast %66 : vector<16x16x128xf32> to vector<256x128xf32>
    %68 = arith.truncf %67 : vector<256x128xf32> to vector<256x128xbf16>
    %c7 = arith.constant 7 : index
    %c0_53 = arith.constant 0 : index
    %c0_54 = arith.constant 0 : index
    %69 = vector.load %arg2[%c7, %c0_53, %c0_54] : memref<9x128x128xbf16, #tpu.memory_space<vmem>>, vector<1x128x128xbf16>
    %70 = vector.shape_cast %69 : vector<1x128x128xbf16> to vector<128x128xbf16>
    %cst_55 = arith.constant dense<0.000000e+00> : vector<256x128xf32>
    %71 = tpu.matmul %68, %70, %cst_55 {dimension_numbers = #tpu.dot_dimension_numbers<[1], [0], [0], [1], [0, 0, 1, 1], [], []>} : vector<256x128xbf16>, vector<128x128xbf16>, vector<256x128xf32> -> vector<256x128xf32>
    %72 = arith.addf %63, %71 : vector<256x128xf32>
    %c0_56 = arith.constant 0 : index
    %c2_57 = arith.constant 2 : index
    %c2_58 = arith.constant 2 : index
    %c0_59 = arith.constant 0 : index
    %73 = vector.load %arg1[%c0_56, %c2_57, %c2_58, %c0_59] : memref<1x18x18x128xbf16, #tpu.memory_space<vmem>>, vector<1x16x16x128xbf16>
    %74 = vector.shape_cast %73 : vector<1x16x16x128xbf16> to vector<16x16x128xbf16>
    %75 = arith.extf %74 : vector<16x16x128xbf16> to vector<16x16x128xf32>
    %76 = vector.shape_cast %75 : vector<16x16x128xf32> to vector<256x128xf32>
    %77 = arith.truncf %76 : vector<256x128xf32> to vector<256x128xbf16>
    %c8 = arith.constant 8 : index
    %c0_60 = arith.constant 0 : index
    %c0_61 = arith.constant 0 : index
    %78 = vector.load %arg2[%c8, %c0_60, %c0_61] : memref<9x128x128xbf16, #tpu.memory_space<vmem>>, vector<1x128x128xbf16>
    %79 = vector.shape_cast %78 : vector<1x128x128xbf16> to vector<128x128xbf16>
    %cst_62 = arith.constant dense<0.000000e+00> : vector<256x128xf32>
    %80 = tpu.matmul %77, %79, %cst_62 {dimension_numbers = #tpu.dot_dimension_numbers<[1], [0], [0], [1], [0, 0, 1, 1], [], []>} : vector<256x128xbf16>, vector<128x128xbf16>, vector<256x128xf32> -> vector<256x128xf32>
    %81 = arith.addf %72, %80 : vector<256x128xf32>
    %c0_63 = arith.constant 0 : index
    %c0_64 = arith.constant 0 : index
    %82 = vector.load %arg3[%c0_63, %c0_64] : memref<1x128xf32, #tpu.memory_space<vmem>>, vector<1x128xf32>
    %83 = vector.broadcast %82 : vector<1x128xf32> to vector<256x128xf32>
    %84 = arith.addf %81, %83 : vector<256x128xf32>
    %cst_65 = arith.constant 0.000000e+00 : f32
    %85 = vector.broadcast %cst_65 : f32 to vector<256x128xf32>
    %86 = arith.maximumf %84, %85 : vector<256x128xf32>
    %87 = vector.extract_strided_slice %86 {offsets = [0, 0], sizes = [16, 128], strides = [1, 1]} : vector<256x128xf32> to vector<16x128xf32>
    %88 = vector.extract_strided_slice %86 {offsets = [16, 0], sizes = [16, 128], strides = [1, 1]} : vector<256x128xf32> to vector<16x128xf32>
    %89 = arith.maximumf %87, %88 : vector<16x128xf32>
    %c0_66 = arith.constant 0 : index
    %c0_67 = arith.constant 0 : index
    %90 = vector.load %arg5[%c0_66, %c0_67] : memref<128x128xf32, #tpu.memory_space<vmem>>, vector<16x128xf32>
    tpu.vector_store %arg5[%c0_66, %c0_67], %89 {strides = array<i32>} : memref<128x128xf32, #tpu.memory_space<vmem>>, vector<16x128xf32>,
    %91 = vector.extract_strided_slice %86 {offsets = [32, 0], sizes = [16, 128], strides = [1, 1]} : vector<256x128xf32> to vector<16x128xf32>
    %92 = vector.extract_strided_slice %86 {offsets = [48, 0], sizes = [16, 128], strides = [1, 1]} : vector<256x128xf32> to vector<16x128xf32>
    %93 = arith.maximumf %91, %92 : vector<16x128xf32>
    %c16 = arith.constant 16 : index
    %c0_68 = arith.constant 0 : index
    %94 = vector.load %arg5[%c16, %c0_68] : memref<128x128xf32, #tpu.memory_space<vmem>>, vector<16x128xf32>
    tpu.vector_store %arg5[%c16, %c0_68], %93 {strides = array<i32>} : memref<128x128xf32, #tpu.memory_space<vmem>>, vector<16x128xf32>,
    %95 = vector.extract_strided_slice %86 {offsets = [64, 0], sizes = [16, 128], strides = [1, 1]} : vector<256x128xf32> to vector<16x128xf32>
    %96 = vector.extract_strided_slice %86 {offsets = [80, 0], sizes = [16, 128], strides = [1, 1]} : vector<256x128xf32> to vector<16x128xf32>
    %97 = arith.maximumf %95, %96 : vector<16x128xf32>
    %c32 = arith.constant 32 : index
    %c0_69 = arith.constant 0 : index
    %98 = vector.load %arg5[%c32, %c0_69] : memref<128x128xf32, #tpu.memory_space<vmem>>, vector<16x128xf32>
    tpu.vector_store %arg5[%c32, %c0_69], %97 {strides = array<i32>} : memref<128x128xf32, #tpu.memory_space<vmem>>, vector<16x128xf32>,
    %99 = vector.extract_strided_slice %86 {offsets = [96, 0], sizes = [16, 128], strides = [1, 1]} : vector<256x128xf32> to vector<16x128xf32>
    %100 = vector.extract_strided_slice %86 {offsets = [112, 0], sizes = [16, 128], strides = [1, 1]} : vector<256x128xf32> to vector<16x128xf32>
    %101 = arith.maximumf %99, %100 : vector<16x128xf32>
    %c48 = arith.constant 48 : index
    %c0_70 = arith.constant 0 : index
    %102 = vector.load %arg5[%c48, %c0_70] : memref<128x128xf32, #tpu.memory_space<vmem>>, vector<16x128xf32>
    tpu.vector_store %arg5[%c48, %c0_70], %101 {strides = array<i32>} : memref<128x128xf32, #tpu.memory_space<vmem>>, vector<16x128xf32>,
    %103 = vector.extract_strided_slice %86 {offsets = [128, 0], sizes = [16, 128], strides = [1, 1]} : vector<256x128xf32> to vector<16x128xf32>
    %104 = vector.extract_strided_slice %86 {offsets = [144, 0], sizes = [16, 128], strides = [1, 1]} : vector<256x128xf32> to vector<16x128xf32>
    %105 = arith.maximumf %103, %104 : vector<16x128xf32>
    %c64 = arith.constant 64 : index
    %c0_71 = arith.constant 0 : index
    %106 = vector.load %arg5[%c64, %c0_71] : memref<128x128xf32, #tpu.memory_space<vmem>>, vector<16x128xf32>
    tpu.vector_store %arg5[%c64, %c0_71], %105 {strides = array<i32>} : memref<128x128xf32, #tpu.memory_space<vmem>>, vector<16x128xf32>,
    %107 = vector.extract_strided_slice %86 {offsets = [160, 0], sizes = [16, 128], strides = [1, 1]} : vector<256x128xf32> to vector<16x128xf32>
    %108 = vector.extract_strided_slice %86 {offsets = [176, 0], sizes = [16, 128], strides = [1, 1]} : vector<256x128xf32> to vector<16x128xf32>
    %109 = arith.maximumf %107, %108 : vector<16x128xf32>
    %c80 = arith.constant 80 : index
    %c0_72 = arith.constant 0 : index
    %110 = vector.load %arg5[%c80, %c0_72] : memref<128x128xf32, #tpu.memory_space<vmem>>, vector<16x128xf32>
    tpu.vector_store %arg5[%c80, %c0_72], %109 {strides = array<i32>} : memref<128x128xf32, #tpu.memory_space<vmem>>, vector<16x128xf32>,
    %111 = vector.extract_strided_slice %86 {offsets = [192, 0], sizes = [16, 128], strides = [1, 1]} : vector<256x128xf32> to vector<16x128xf32>
    %112 = vector.extract_strided_slice %86 {offsets = [208, 0], sizes = [16, 128], strides = [1, 1]} : vector<256x128xf32> to vector<16x128xf32>
    %113 = arith.maximumf %111, %112 : vector<16x128xf32>
    %c96 = arith.constant 96 : index
    %c0_73 = arith.constant 0 : index
    %114 = vector.load %arg5[%c96, %c0_73] : memref<128x128xf32, #tpu.memory_space<vmem>>, vector<16x128xf32>
    tpu.vector_store %arg5[%c96, %c0_73], %113 {strides = array<i32>} : memref<128x128xf32, #tpu.memory_space<vmem>>, vector<16x128xf32>,
    %115 = vector.extract_strided_slice %86 {offsets = [224, 0], sizes = [16, 128], strides = [1, 1]} : vector<256x128xf32> to vector<16x128xf32>
    %116 = vector.extract_strided_slice %86 {offsets = [240, 0], sizes = [16, 128], strides = [1, 1]} : vector<256x128xf32> to vector<16x128xf32>
    %117 = arith.maximumf %115, %116 : vector<16x128xf32>
    %c112 = arith.constant 112 : index
    %c0_74 = arith.constant 0 : index
    %118 = vector.load %arg5[%c112, %c0_74] : memref<128x128xf32, #tpu.memory_space<vmem>>, vector<16x128xf32>
    tpu.vector_store %arg5[%c112, %c0_74], %117 {strides = array<i32>} : memref<128x128xf32, #tpu.memory_space<vmem>>, vector<16x128xf32>,
    %c0_75 = arith.constant 0 : index
    %c0_76 = arith.constant 0 : index
    %119 = tpu.strided_load %arg5[%c0_75, %c0_76] {strides = array<i32: 2, 1>} : memref<128x128xf32, #tpu.memory_space<vmem>>, vector<64x128xf32>
    %c1_77 = arith.constant 1 : index
    %c0_78 = arith.constant 0 : index
    %120 = tpu.strided_load %arg5[%c1_77, %c0_78] {strides = array<i32: 2, 1>} : memref<128x128xf32, #tpu.memory_space<vmem>>, vector<64x128xf32>
    %121 = arith.maximumf %119, %120 : vector<64x128xf32>
    %122 = arith.truncf %121 : vector<64x128xf32> to vector<64x128xbf16>
    %c0_79 = arith.constant 0 : index
    %c0_80 = arith.constant 0 : index
    %c0_81 = arith.constant 0 : index
    %123 = vector.load %arg4[%c0_79, %c0_80, %c0_81] : memref<1x64x128xbf16, #tpu.memory_space<vmem>>, vector<1x64x128xbf16>
    %124 = vector.shape_cast %123 : vector<1x64x128xbf16> to vector<64x128xbf16>
    %125 = vector.shape_cast %122 : vector<64x128xbf16> to vector<1x64x128xbf16>
    tpu.vector_store %arg4[%c0_79, %c0_80, %c0_81], %125 {strides = array<i32>} : memref<1x64x128xbf16, #tpu.memory_space<vmem>>, vector<1x64x128xbf16>,
    return
  }
  func.func @transform_0(%arg0: i32) -> (i32, i32, i32, i32) {
    %c0_i32 = arith.constant 0 : i32
    %c0_i32_0 = arith.constant 0 : i32
    %c0_i32_1 = arith.constant 0 : i32
    %c0_i32_2 = arith.constant 0 : i32
    return %arg0, %c0_i32, %c0_i32_0, %c0_i32_1 : i32, i32, i32, i32
  }
  func.func @transform_1(%arg0: i32) -> (i32, i32, i32) {
    %c0_i32 = arith.constant 0 : i32
    %c0_i32_0 = arith.constant 0 : i32
    %c0_i32_1 = arith.constant 0 : i32
    %c0_i32_2 = arith.constant 0 : i32
    return %c0_i32, %c0_i32_0, %c0_i32_1 : i32, i32, i32
  }
  func.func @transform_2(%arg0: i32) -> (i32, i32) {
    %c0_i32 = arith.constant 0 : i32
    %c0_i32_0 = arith.constant 0 : i32
    %c0_i32_1 = arith.constant 0 : i32
    return %c0_i32, %c0_i32_0 : i32, i32
  }
  func.func @transform_3(%arg0: i32) -> (i32, i32, i32) {
    %c0_i32 = arith.constant 0 : i32
    %c0_i32_0 = arith.constant 0 : i32
    %c0_i32_1 = arith.constant 0 : i32
    return %arg0, %c0_i32, %c0_i32_0 : i32, i32, i32
  }
}

module attributes {stable_mosaic.version = 11 : i64} {
  func.func @_conv_kernel(%arg0: i32, %arg1: memref<1x10x10x128xbf16, #tpu.memory_space<vmem>>, %arg2: memref<9x128x128xbf16, #tpu.memory_space<vmem>>, %arg3: memref<1x128xf32, #tpu.memory_space<vmem>>, %arg4: memref<1x64x128xbf16, #tpu.memory_space<vmem>>) attributes {dimension_semantics = [#tpu.dimension_semantics<parallel>], iteration_bounds = array<i64: 2>, scalar_prefetch = 0 : i64, scratch_operands = 0 : i64, tpu.core_type = #tpu.core_type<tc>, window_params = [{transform_indices = @transform_0, window_bounds = array<i64: 1, 10, 10, 128>}, {pipeline_mode = #tpu.pipeline_mode<synchronous>, transform_indices = @transform_1, window_bounds = array<i64: 9, 128, 128>}, {pipeline_mode = #tpu.pipeline_mode<synchronous>, transform_indices = @transform_2, window_bounds = array<i64: 1, 128>}, {transform_indices = @transform_3, window_bounds = array<i64: 1, 64, 128>}]} {
    %cst = arith.constant 0.000000e+00 : f32
    %0 = vector.broadcast %cst : f32 to vector<64x128xf32>
    %c0 = arith.constant 0 : index
    %c0_0 = arith.constant 0 : index
    %c0_1 = arith.constant 0 : index
    %c0_2 = arith.constant 0 : index
    %1 = vector.load %arg1[%c0, %c0_0, %c0_1, %c0_2] : memref<1x10x10x128xbf16, #tpu.memory_space<vmem>>, vector<1x8x8x128xbf16>
    %2 = vector.shape_cast %1 : vector<1x8x8x128xbf16> to vector<8x8x128xbf16>
    %3 = arith.extf %2 : vector<8x8x128xbf16> to vector<8x8x128xf32>
    %4 = vector.shape_cast %3 : vector<8x8x128xf32> to vector<64x128xf32>
    %5 = arith.truncf %4 : vector<64x128xf32> to vector<64x128xbf16>
    %c0_3 = arith.constant 0 : index
    %c0_4 = arith.constant 0 : index
    %c0_5 = arith.constant 0 : index
    %6 = vector.load %arg2[%c0_3, %c0_4, %c0_5] : memref<9x128x128xbf16, #tpu.memory_space<vmem>>, vector<1x128x128xbf16>
    %7 = vector.shape_cast %6 : vector<1x128x128xbf16> to vector<128x128xbf16>
    %cst_6 = arith.constant dense<0.000000e+00> : vector<64x128xf32>
    %8 = tpu.matmul %5, %7, %cst_6 {dimension_numbers = #tpu.dot_dimension_numbers<[1], [0], [0], [1], [0, 0, 1, 1], [], []>} : vector<64x128xbf16>, vector<128x128xbf16>, vector<64x128xf32> -> vector<64x128xf32>
    %9 = arith.addf %0, %8 : vector<64x128xf32>
    %c0_7 = arith.constant 0 : index
    %c0_8 = arith.constant 0 : index
    %c1 = arith.constant 1 : index
    %c0_9 = arith.constant 0 : index
    %10 = vector.load %arg1[%c0_7, %c0_8, %c1, %c0_9] : memref<1x10x10x128xbf16, #tpu.memory_space<vmem>>, vector<1x8x8x128xbf16>
    %11 = vector.shape_cast %10 : vector<1x8x8x128xbf16> to vector<8x8x128xbf16>
    %12 = arith.extf %11 : vector<8x8x128xbf16> to vector<8x8x128xf32>
    %13 = vector.shape_cast %12 : vector<8x8x128xf32> to vector<64x128xf32>
    %14 = arith.truncf %13 : vector<64x128xf32> to vector<64x128xbf16>
    %c1_10 = arith.constant 1 : index
    %c0_11 = arith.constant 0 : index
    %c0_12 = arith.constant 0 : index
    %15 = vector.load %arg2[%c1_10, %c0_11, %c0_12] : memref<9x128x128xbf16, #tpu.memory_space<vmem>>, vector<1x128x128xbf16>
    %16 = vector.shape_cast %15 : vector<1x128x128xbf16> to vector<128x128xbf16>
    %cst_13 = arith.constant dense<0.000000e+00> : vector<64x128xf32>
    %17 = tpu.matmul %14, %16, %cst_13 {dimension_numbers = #tpu.dot_dimension_numbers<[1], [0], [0], [1], [0, 0, 1, 1], [], []>} : vector<64x128xbf16>, vector<128x128xbf16>, vector<64x128xf32> -> vector<64x128xf32>
    %18 = arith.addf %9, %17 : vector<64x128xf32>
    %c0_14 = arith.constant 0 : index
    %c0_15 = arith.constant 0 : index
    %c2 = arith.constant 2 : index
    %c0_16 = arith.constant 0 : index
    %19 = vector.load %arg1[%c0_14, %c0_15, %c2, %c0_16] : memref<1x10x10x128xbf16, #tpu.memory_space<vmem>>, vector<1x8x8x128xbf16>
    %20 = vector.shape_cast %19 : vector<1x8x8x128xbf16> to vector<8x8x128xbf16>
    %21 = arith.extf %20 : vector<8x8x128xbf16> to vector<8x8x128xf32>
    %22 = vector.shape_cast %21 : vector<8x8x128xf32> to vector<64x128xf32>
    %23 = arith.truncf %22 : vector<64x128xf32> to vector<64x128xbf16>
    %c2_17 = arith.constant 2 : index
    %c0_18 = arith.constant 0 : index
    %c0_19 = arith.constant 0 : index
    %24 = vector.load %arg2[%c2_17, %c0_18, %c0_19] : memref<9x128x128xbf16, #tpu.memory_space<vmem>>, vector<1x128x128xbf16>
    %25 = vector.shape_cast %24 : vector<1x128x128xbf16> to vector<128x128xbf16>
    %cst_20 = arith.constant dense<0.000000e+00> : vector<64x128xf32>
    %26 = tpu.matmul %23, %25, %cst_20 {dimension_numbers = #tpu.dot_dimension_numbers<[1], [0], [0], [1], [0, 0, 1, 1], [], []>} : vector<64x128xbf16>, vector<128x128xbf16>, vector<64x128xf32> -> vector<64x128xf32>
    %27 = arith.addf %18, %26 : vector<64x128xf32>
    %c0_21 = arith.constant 0 : index
    %c1_22 = arith.constant 1 : index
    %c0_23 = arith.constant 0 : index
    %c0_24 = arith.constant 0 : index
    %28 = vector.load %arg1[%c0_21, %c1_22, %c0_23, %c0_24] : memref<1x10x10x128xbf16, #tpu.memory_space<vmem>>, vector<1x8x8x128xbf16>
    %29 = vector.shape_cast %28 : vector<1x8x8x128xbf16> to vector<8x8x128xbf16>
    %30 = arith.extf %29 : vector<8x8x128xbf16> to vector<8x8x128xf32>
    %31 = vector.shape_cast %30 : vector<8x8x128xf32> to vector<64x128xf32>
    %32 = arith.truncf %31 : vector<64x128xf32> to vector<64x128xbf16>
    %c3 = arith.constant 3 : index
    %c0_25 = arith.constant 0 : index
    %c0_26 = arith.constant 0 : index
    %33 = vector.load %arg2[%c3, %c0_25, %c0_26] : memref<9x128x128xbf16, #tpu.memory_space<vmem>>, vector<1x128x128xbf16>
    %34 = vector.shape_cast %33 : vector<1x128x128xbf16> to vector<128x128xbf16>
    %cst_27 = arith.constant dense<0.000000e+00> : vector<64x128xf32>
    %35 = tpu.matmul %32, %34, %cst_27 {dimension_numbers = #tpu.dot_dimension_numbers<[1], [0], [0], [1], [0, 0, 1, 1], [], []>} : vector<64x128xbf16>, vector<128x128xbf16>, vector<64x128xf32> -> vector<64x128xf32>
    %36 = arith.addf %27, %35 : vector<64x128xf32>
    %c0_28 = arith.constant 0 : index
    %c1_29 = arith.constant 1 : index
    %c1_30 = arith.constant 1 : index
    %c0_31 = arith.constant 0 : index
    %37 = vector.load %arg1[%c0_28, %c1_29, %c1_30, %c0_31] : memref<1x10x10x128xbf16, #tpu.memory_space<vmem>>, vector<1x8x8x128xbf16>
    %38 = vector.shape_cast %37 : vector<1x8x8x128xbf16> to vector<8x8x128xbf16>
    %39 = arith.extf %38 : vector<8x8x128xbf16> to vector<8x8x128xf32>
    %40 = vector.shape_cast %39 : vector<8x8x128xf32> to vector<64x128xf32>
    %41 = arith.truncf %40 : vector<64x128xf32> to vector<64x128xbf16>
    %c4 = arith.constant 4 : index
    %c0_32 = arith.constant 0 : index
    %c0_33 = arith.constant 0 : index
    %42 = vector.load %arg2[%c4, %c0_32, %c0_33] : memref<9x128x128xbf16, #tpu.memory_space<vmem>>, vector<1x128x128xbf16>
    %43 = vector.shape_cast %42 : vector<1x128x128xbf16> to vector<128x128xbf16>
    %cst_34 = arith.constant dense<0.000000e+00> : vector<64x128xf32>
    %44 = tpu.matmul %41, %43, %cst_34 {dimension_numbers = #tpu.dot_dimension_numbers<[1], [0], [0], [1], [0, 0, 1, 1], [], []>} : vector<64x128xbf16>, vector<128x128xbf16>, vector<64x128xf32> -> vector<64x128xf32>
    %45 = arith.addf %36, %44 : vector<64x128xf32>
    %c0_35 = arith.constant 0 : index
    %c1_36 = arith.constant 1 : index
    %c2_37 = arith.constant 2 : index
    %c0_38 = arith.constant 0 : index
    %46 = vector.load %arg1[%c0_35, %c1_36, %c2_37, %c0_38] : memref<1x10x10x128xbf16, #tpu.memory_space<vmem>>, vector<1x8x8x128xbf16>
    %47 = vector.shape_cast %46 : vector<1x8x8x128xbf16> to vector<8x8x128xbf16>
    %48 = arith.extf %47 : vector<8x8x128xbf16> to vector<8x8x128xf32>
    %49 = vector.shape_cast %48 : vector<8x8x128xf32> to vector<64x128xf32>
    %50 = arith.truncf %49 : vector<64x128xf32> to vector<64x128xbf16>
    %c5 = arith.constant 5 : index
    %c0_39 = arith.constant 0 : index
    %c0_40 = arith.constant 0 : index
    %51 = vector.load %arg2[%c5, %c0_39, %c0_40] : memref<9x128x128xbf16, #tpu.memory_space<vmem>>, vector<1x128x128xbf16>
    %52 = vector.shape_cast %51 : vector<1x128x128xbf16> to vector<128x128xbf16>
    %cst_41 = arith.constant dense<0.000000e+00> : vector<64x128xf32>
    %53 = tpu.matmul %50, %52, %cst_41 {dimension_numbers = #tpu.dot_dimension_numbers<[1], [0], [0], [1], [0, 0, 1, 1], [], []>} : vector<64x128xbf16>, vector<128x128xbf16>, vector<64x128xf32> -> vector<64x128xf32>
    %54 = arith.addf %45, %53 : vector<64x128xf32>
    %c0_42 = arith.constant 0 : index
    %c2_43 = arith.constant 2 : index
    %c0_44 = arith.constant 0 : index
    %c0_45 = arith.constant 0 : index
    %55 = vector.load %arg1[%c0_42, %c2_43, %c0_44, %c0_45] : memref<1x10x10x128xbf16, #tpu.memory_space<vmem>>, vector<1x8x8x128xbf16>
    %56 = vector.shape_cast %55 : vector<1x8x8x128xbf16> to vector<8x8x128xbf16>
    %57 = arith.extf %56 : vector<8x8x128xbf16> to vector<8x8x128xf32>
    %58 = vector.shape_cast %57 : vector<8x8x128xf32> to vector<64x128xf32>
    %59 = arith.truncf %58 : vector<64x128xf32> to vector<64x128xbf16>
    %c6 = arith.constant 6 : index
    %c0_46 = arith.constant 0 : index
    %c0_47 = arith.constant 0 : index
    %60 = vector.load %arg2[%c6, %c0_46, %c0_47] : memref<9x128x128xbf16, #tpu.memory_space<vmem>>, vector<1x128x128xbf16>
    %61 = vector.shape_cast %60 : vector<1x128x128xbf16> to vector<128x128xbf16>
    %cst_48 = arith.constant dense<0.000000e+00> : vector<64x128xf32>
    %62 = tpu.matmul %59, %61, %cst_48 {dimension_numbers = #tpu.dot_dimension_numbers<[1], [0], [0], [1], [0, 0, 1, 1], [], []>} : vector<64x128xbf16>, vector<128x128xbf16>, vector<64x128xf32> -> vector<64x128xf32>
    %63 = arith.addf %54, %62 : vector<64x128xf32>
    %c0_49 = arith.constant 0 : index
    %c2_50 = arith.constant 2 : index
    %c1_51 = arith.constant 1 : index
    %c0_52 = arith.constant 0 : index
    %64 = vector.load %arg1[%c0_49, %c2_50, %c1_51, %c0_52] : memref<1x10x10x128xbf16, #tpu.memory_space<vmem>>, vector<1x8x8x128xbf16>
    %65 = vector.shape_cast %64 : vector<1x8x8x128xbf16> to vector<8x8x128xbf16>
    %66 = arith.extf %65 : vector<8x8x128xbf16> to vector<8x8x128xf32>
    %67 = vector.shape_cast %66 : vector<8x8x128xf32> to vector<64x128xf32>
    %68 = arith.truncf %67 : vector<64x128xf32> to vector<64x128xbf16>
    %c7 = arith.constant 7 : index
    %c0_53 = arith.constant 0 : index
    %c0_54 = arith.constant 0 : index
    %69 = vector.load %arg2[%c7, %c0_53, %c0_54] : memref<9x128x128xbf16, #tpu.memory_space<vmem>>, vector<1x128x128xbf16>
    %70 = vector.shape_cast %69 : vector<1x128x128xbf16> to vector<128x128xbf16>
    %cst_55 = arith.constant dense<0.000000e+00> : vector<64x128xf32>
    %71 = tpu.matmul %68, %70, %cst_55 {dimension_numbers = #tpu.dot_dimension_numbers<[1], [0], [0], [1], [0, 0, 1, 1], [], []>} : vector<64x128xbf16>, vector<128x128xbf16>, vector<64x128xf32> -> vector<64x128xf32>
    %72 = arith.addf %63, %71 : vector<64x128xf32>
    %c0_56 = arith.constant 0 : index
    %c2_57 = arith.constant 2 : index
    %c2_58 = arith.constant 2 : index
    %c0_59 = arith.constant 0 : index
    %73 = vector.load %arg1[%c0_56, %c2_57, %c2_58, %c0_59] : memref<1x10x10x128xbf16, #tpu.memory_space<vmem>>, vector<1x8x8x128xbf16>
    %74 = vector.shape_cast %73 : vector<1x8x8x128xbf16> to vector<8x8x128xbf16>
    %75 = arith.extf %74 : vector<8x8x128xbf16> to vector<8x8x128xf32>
    %76 = vector.shape_cast %75 : vector<8x8x128xf32> to vector<64x128xf32>
    %77 = arith.truncf %76 : vector<64x128xf32> to vector<64x128xbf16>
    %c8 = arith.constant 8 : index
    %c0_60 = arith.constant 0 : index
    %c0_61 = arith.constant 0 : index
    %78 = vector.load %arg2[%c8, %c0_60, %c0_61] : memref<9x128x128xbf16, #tpu.memory_space<vmem>>, vector<1x128x128xbf16>
    %79 = vector.shape_cast %78 : vector<1x128x128xbf16> to vector<128x128xbf16>
    %cst_62 = arith.constant dense<0.000000e+00> : vector<64x128xf32>
    %80 = tpu.matmul %77, %79, %cst_62 {dimension_numbers = #tpu.dot_dimension_numbers<[1], [0], [0], [1], [0, 0, 1, 1], [], []>} : vector<64x128xbf16>, vector<128x128xbf16>, vector<64x128xf32> -> vector<64x128xf32>
    %81 = arith.addf %72, %80 : vector<64x128xf32>
    %c0_63 = arith.constant 0 : index
    %c0_64 = arith.constant 0 : index
    %82 = vector.load %arg3[%c0_63, %c0_64] : memref<1x128xf32, #tpu.memory_space<vmem>>, vector<1x128xf32>
    %83 = vector.broadcast %82 : vector<1x128xf32> to vector<64x128xf32>
    %84 = arith.addf %81, %83 : vector<64x128xf32>
    %cst_65 = arith.constant 0.000000e+00 : f32
    %85 = vector.broadcast %cst_65 : f32 to vector<64x128xf32>
    %86 = arith.maximumf %84, %85 : vector<64x128xf32>
    %87 = arith.truncf %86 : vector<64x128xf32> to vector<64x128xbf16>
    %c0_66 = arith.constant 0 : index
    %c0_67 = arith.constant 0 : index
    %c0_68 = arith.constant 0 : index
    %88 = vector.load %arg4[%c0_66, %c0_67, %c0_68] : memref<1x64x128xbf16, #tpu.memory_space<vmem>>, vector<1x64x128xbf16>
    %89 = vector.shape_cast %88 : vector<1x64x128xbf16> to vector<64x128xbf16>
    %90 = vector.shape_cast %87 : vector<64x128xbf16> to vector<1x64x128xbf16>
    tpu.vector_store %arg4[%c0_66, %c0_67, %c0_68], %90 {strides = array<i32>} : memref<1x64x128xbf16, #tpu.memory_space<vmem>>, vector<1x64x128xbf16>,
    return
  }
  func.func @transform_0(%arg0: i32) -> (i32, i32, i32, i32) {
    %c0_i32 = arith.constant 0 : i32
    %c0_i32_0 = arith.constant 0 : i32
    %c0_i32_1 = arith.constant 0 : i32
    %c0_i32_2 = arith.constant 0 : i32
    return %arg0, %c0_i32, %c0_i32_0, %c0_i32_1 : i32, i32, i32, i32
  }
  func.func @transform_1(%arg0: i32) -> (i32, i32, i32) {
    %c0_i32 = arith.constant 0 : i32
    %c0_i32_0 = arith.constant 0 : i32
    %c0_i32_1 = arith.constant 0 : i32
    %c0_i32_2 = arith.constant 0 : i32
    return %c0_i32, %c0_i32_0, %c0_i32_1 : i32, i32, i32
  }
  func.func @transform_2(%arg0: i32) -> (i32, i32) {
    %c0_i32 = arith.constant 0 : i32
    %c0_i32_0 = arith.constant 0 : i32
    %c0_i32_1 = arith.constant 0 : i32
    return %c0_i32, %c0_i32_0 : i32, i32
  }
  func.func @transform_3(%arg0: i32) -> (i32, i32, i32) {
    %c0_i32 = arith.constant 0 : i32
    %c0_i32_0 = arith.constant 0 : i32
    %c0_i32_1 = arith.constant 0 : i32
    return %arg0, %c0_i32, %c0_i32_0 : i32, i32, i32
  }
}

module attributes {stable_mosaic.version = 11 : i64} {
  func.func @_conv_kernel(%arg0: i32, %arg1: memref<1x10x10x128xbf16, #tpu.memory_space<vmem>>, %arg2: memref<9x128x128xbf16, #tpu.memory_space<vmem>>, %arg3: memref<1x128xf32, #tpu.memory_space<vmem>>, %arg4: memref<1x16x128xbf16, #tpu.memory_space<vmem>>, %arg5: memref<32x128xf32, #tpu.memory_space<vmem>>) attributes {dimension_semantics = [#tpu.dimension_semantics<parallel>], iteration_bounds = array<i64: 2>, scalar_prefetch = 0 : i64, scratch_operands = 1 : i64, tpu.core_type = #tpu.core_type<tc>, window_params = [{transform_indices = @transform_0, window_bounds = array<i64: 1, 10, 10, 128>}, {pipeline_mode = #tpu.pipeline_mode<synchronous>, transform_indices = @transform_1, window_bounds = array<i64: 9, 128, 128>}, {pipeline_mode = #tpu.pipeline_mode<synchronous>, transform_indices = @transform_2, window_bounds = array<i64: 1, 128>}, {transform_indices = @transform_3, window_bounds = array<i64: 1, 16, 128>}]} {
    %cst = arith.constant 0.000000e+00 : f32
    %0 = vector.broadcast %cst : f32 to vector<64x128xf32>
    %c0 = arith.constant 0 : index
    %c0_0 = arith.constant 0 : index
    %c0_1 = arith.constant 0 : index
    %c0_2 = arith.constant 0 : index
    %1 = vector.load %arg1[%c0, %c0_0, %c0_1, %c0_2] : memref<1x10x10x128xbf16, #tpu.memory_space<vmem>>, vector<1x8x8x128xbf16>
    %2 = vector.shape_cast %1 : vector<1x8x8x128xbf16> to vector<8x8x128xbf16>
    %3 = arith.extf %2 : vector<8x8x128xbf16> to vector<8x8x128xf32>
    %4 = vector.shape_cast %3 : vector<8x8x128xf32> to vector<64x128xf32>
    %5 = arith.truncf %4 : vector<64x128xf32> to vector<64x128xbf16>
    %c0_3 = arith.constant 0 : index
    %c0_4 = arith.constant 0 : index
    %c0_5 = arith.constant 0 : index
    %6 = vector.load %arg2[%c0_3, %c0_4, %c0_5] : memref<9x128x128xbf16, #tpu.memory_space<vmem>>, vector<1x128x128xbf16>
    %7 = vector.shape_cast %6 : vector<1x128x128xbf16> to vector<128x128xbf16>
    %cst_6 = arith.constant dense<0.000000e+00> : vector<64x128xf32>
    %8 = tpu.matmul %5, %7, %cst_6 {dimension_numbers = #tpu.dot_dimension_numbers<[1], [0], [0], [1], [0, 0, 1, 1], [], []>} : vector<64x128xbf16>, vector<128x128xbf16>, vector<64x128xf32> -> vector<64x128xf32>
    %9 = arith.addf %0, %8 : vector<64x128xf32>
    %c0_7 = arith.constant 0 : index
    %c0_8 = arith.constant 0 : index
    %c1 = arith.constant 1 : index
    %c0_9 = arith.constant 0 : index
    %10 = vector.load %arg1[%c0_7, %c0_8, %c1, %c0_9] : memref<1x10x10x128xbf16, #tpu.memory_space<vmem>>, vector<1x8x8x128xbf16>
    %11 = vector.shape_cast %10 : vector<1x8x8x128xbf16> to vector<8x8x128xbf16>
    %12 = arith.extf %11 : vector<8x8x128xbf16> to vector<8x8x128xf32>
    %13 = vector.shape_cast %12 : vector<8x8x128xf32> to vector<64x128xf32>
    %14 = arith.truncf %13 : vector<64x128xf32> to vector<64x128xbf16>
    %c1_10 = arith.constant 1 : index
    %c0_11 = arith.constant 0 : index
    %c0_12 = arith.constant 0 : index
    %15 = vector.load %arg2[%c1_10, %c0_11, %c0_12] : memref<9x128x128xbf16, #tpu.memory_space<vmem>>, vector<1x128x128xbf16>
    %16 = vector.shape_cast %15 : vector<1x128x128xbf16> to vector<128x128xbf16>
    %cst_13 = arith.constant dense<0.000000e+00> : vector<64x128xf32>
    %17 = tpu.matmul %14, %16, %cst_13 {dimension_numbers = #tpu.dot_dimension_numbers<[1], [0], [0], [1], [0, 0, 1, 1], [], []>} : vector<64x128xbf16>, vector<128x128xbf16>, vector<64x128xf32> -> vector<64x128xf32>
    %18 = arith.addf %9, %17 : vector<64x128xf32>
    %c0_14 = arith.constant 0 : index
    %c0_15 = arith.constant 0 : index
    %c2 = arith.constant 2 : index
    %c0_16 = arith.constant 0 : index
    %19 = vector.load %arg1[%c0_14, %c0_15, %c2, %c0_16] : memref<1x10x10x128xbf16, #tpu.memory_space<vmem>>, vector<1x8x8x128xbf16>
    %20 = vector.shape_cast %19 : vector<1x8x8x128xbf16> to vector<8x8x128xbf16>
    %21 = arith.extf %20 : vector<8x8x128xbf16> to vector<8x8x128xf32>
    %22 = vector.shape_cast %21 : vector<8x8x128xf32> to vector<64x128xf32>
    %23 = arith.truncf %22 : vector<64x128xf32> to vector<64x128xbf16>
    %c2_17 = arith.constant 2 : index
    %c0_18 = arith.constant 0 : index
    %c0_19 = arith.constant 0 : index
    %24 = vector.load %arg2[%c2_17, %c0_18, %c0_19] : memref<9x128x128xbf16, #tpu.memory_space<vmem>>, vector<1x128x128xbf16>
    %25 = vector.shape_cast %24 : vector<1x128x128xbf16> to vector<128x128xbf16>
    %cst_20 = arith.constant dense<0.000000e+00> : vector<64x128xf32>
    %26 = tpu.matmul %23, %25, %cst_20 {dimension_numbers = #tpu.dot_dimension_numbers<[1], [0], [0], [1], [0, 0, 1, 1], [], []>} : vector<64x128xbf16>, vector<128x128xbf16>, vector<64x128xf32> -> vector<64x128xf32>
    %27 = arith.addf %18, %26 : vector<64x128xf32>
    %c0_21 = arith.constant 0 : index
    %c1_22 = arith.constant 1 : index
    %c0_23 = arith.constant 0 : index
    %c0_24 = arith.constant 0 : index
    %28 = vector.load %arg1[%c0_21, %c1_22, %c0_23, %c0_24] : memref<1x10x10x128xbf16, #tpu.memory_space<vmem>>, vector<1x8x8x128xbf16>
    %29 = vector.shape_cast %28 : vector<1x8x8x128xbf16> to vector<8x8x128xbf16>
    %30 = arith.extf %29 : vector<8x8x128xbf16> to vector<8x8x128xf32>
    %31 = vector.shape_cast %30 : vector<8x8x128xf32> to vector<64x128xf32>
    %32 = arith.truncf %31 : vector<64x128xf32> to vector<64x128xbf16>
    %c3 = arith.constant 3 : index
    %c0_25 = arith.constant 0 : index
    %c0_26 = arith.constant 0 : index
    %33 = vector.load %arg2[%c3, %c0_25, %c0_26] : memref<9x128x128xbf16, #tpu.memory_space<vmem>>, vector<1x128x128xbf16>
    %34 = vector.shape_cast %33 : vector<1x128x128xbf16> to vector<128x128xbf16>
    %cst_27 = arith.constant dense<0.000000e+00> : vector<64x128xf32>
    %35 = tpu.matmul %32, %34, %cst_27 {dimension_numbers = #tpu.dot_dimension_numbers<[1], [0], [0], [1], [0, 0, 1, 1], [], []>} : vector<64x128xbf16>, vector<128x128xbf16>, vector<64x128xf32> -> vector<64x128xf32>
    %36 = arith.addf %27, %35 : vector<64x128xf32>
    %c0_28 = arith.constant 0 : index
    %c1_29 = arith.constant 1 : index
    %c1_30 = arith.constant 1 : index
    %c0_31 = arith.constant 0 : index
    %37 = vector.load %arg1[%c0_28, %c1_29, %c1_30, %c0_31] : memref<1x10x10x128xbf16, #tpu.memory_space<vmem>>, vector<1x8x8x128xbf16>
    %38 = vector.shape_cast %37 : vector<1x8x8x128xbf16> to vector<8x8x128xbf16>
    %39 = arith.extf %38 : vector<8x8x128xbf16> to vector<8x8x128xf32>
    %40 = vector.shape_cast %39 : vector<8x8x128xf32> to vector<64x128xf32>
    %41 = arith.truncf %40 : vector<64x128xf32> to vector<64x128xbf16>
    %c4 = arith.constant 4 : index
    %c0_32 = arith.constant 0 : index
    %c0_33 = arith.constant 0 : index
    %42 = vector.load %arg2[%c4, %c0_32, %c0_33] : memref<9x128x128xbf16, #tpu.memory_space<vmem>>, vector<1x128x128xbf16>
    %43 = vector.shape_cast %42 : vector<1x128x128xbf16> to vector<128x128xbf16>
    %cst_34 = arith.constant dense<0.000000e+00> : vector<64x128xf32>
    %44 = tpu.matmul %41, %43, %cst_34 {dimension_numbers = #tpu.dot_dimension_numbers<[1], [0], [0], [1], [0, 0, 1, 1], [], []>} : vector<64x128xbf16>, vector<128x128xbf16>, vector<64x128xf32> -> vector<64x128xf32>
    %45 = arith.addf %36, %44 : vector<64x128xf32>
    %c0_35 = arith.constant 0 : index
    %c1_36 = arith.constant 1 : index
    %c2_37 = arith.constant 2 : index
    %c0_38 = arith.constant 0 : index
    %46 = vector.load %arg1[%c0_35, %c1_36, %c2_37, %c0_38] : memref<1x10x10x128xbf16, #tpu.memory_space<vmem>>, vector<1x8x8x128xbf16>
    %47 = vector.shape_cast %46 : vector<1x8x8x128xbf16> to vector<8x8x128xbf16>
    %48 = arith.extf %47 : vector<8x8x128xbf16> to vector<8x8x128xf32>
    %49 = vector.shape_cast %48 : vector<8x8x128xf32> to vector<64x128xf32>
    %50 = arith.truncf %49 : vector<64x128xf32> to vector<64x128xbf16>
    %c5 = arith.constant 5 : index
    %c0_39 = arith.constant 0 : index
    %c0_40 = arith.constant 0 : index
    %51 = vector.load %arg2[%c5, %c0_39, %c0_40] : memref<9x128x128xbf16, #tpu.memory_space<vmem>>, vector<1x128x128xbf16>
    %52 = vector.shape_cast %51 : vector<1x128x128xbf16> to vector<128x128xbf16>
    %cst_41 = arith.constant dense<0.000000e+00> : vector<64x128xf32>
    %53 = tpu.matmul %50, %52, %cst_41 {dimension_numbers = #tpu.dot_dimension_numbers<[1], [0], [0], [1], [0, 0, 1, 1], [], []>} : vector<64x128xbf16>, vector<128x128xbf16>, vector<64x128xf32> -> vector<64x128xf32>
    %54 = arith.addf %45, %53 : vector<64x128xf32>
    %c0_42 = arith.constant 0 : index
    %c2_43 = arith.constant 2 : index
    %c0_44 = arith.constant 0 : index
    %c0_45 = arith.constant 0 : index
    %55 = vector.load %arg1[%c0_42, %c2_43, %c0_44, %c0_45] : memref<1x10x10x128xbf16, #tpu.memory_space<vmem>>, vector<1x8x8x128xbf16>
    %56 = vector.shape_cast %55 : vector<1x8x8x128xbf16> to vector<8x8x128xbf16>
    %57 = arith.extf %56 : vector<8x8x128xbf16> to vector<8x8x128xf32>
    %58 = vector.shape_cast %57 : vector<8x8x128xf32> to vector<64x128xf32>
    %59 = arith.truncf %58 : vector<64x128xf32> to vector<64x128xbf16>
    %c6 = arith.constant 6 : index
    %c0_46 = arith.constant 0 : index
    %c0_47 = arith.constant 0 : index
    %60 = vector.load %arg2[%c6, %c0_46, %c0_47] : memref<9x128x128xbf16, #tpu.memory_space<vmem>>, vector<1x128x128xbf16>
    %61 = vector.shape_cast %60 : vector<1x128x128xbf16> to vector<128x128xbf16>
    %cst_48 = arith.constant dense<0.000000e+00> : vector<64x128xf32>
    %62 = tpu.matmul %59, %61, %cst_48 {dimension_numbers = #tpu.dot_dimension_numbers<[1], [0], [0], [1], [0, 0, 1, 1], [], []>} : vector<64x128xbf16>, vector<128x128xbf16>, vector<64x128xf32> -> vector<64x128xf32>
    %63 = arith.addf %54, %62 : vector<64x128xf32>
    %c0_49 = arith.constant 0 : index
    %c2_50 = arith.constant 2 : index
    %c1_51 = arith.constant 1 : index
    %c0_52 = arith.constant 0 : index
    %64 = vector.load %arg1[%c0_49, %c2_50, %c1_51, %c0_52] : memref<1x10x10x128xbf16, #tpu.memory_space<vmem>>, vector<1x8x8x128xbf16>
    %65 = vector.shape_cast %64 : vector<1x8x8x128xbf16> to vector<8x8x128xbf16>
    %66 = arith.extf %65 : vector<8x8x128xbf16> to vector<8x8x128xf32>
    %67 = vector.shape_cast %66 : vector<8x8x128xf32> to vector<64x128xf32>
    %68 = arith.truncf %67 : vector<64x128xf32> to vector<64x128xbf16>
    %c7 = arith.constant 7 : index
    %c0_53 = arith.constant 0 : index
    %c0_54 = arith.constant 0 : index
    %69 = vector.load %arg2[%c7, %c0_53, %c0_54] : memref<9x128x128xbf16, #tpu.memory_space<vmem>>, vector<1x128x128xbf16>
    %70 = vector.shape_cast %69 : vector<1x128x128xbf16> to vector<128x128xbf16>
    %cst_55 = arith.constant dense<0.000000e+00> : vector<64x128xf32>
    %71 = tpu.matmul %68, %70, %cst_55 {dimension_numbers = #tpu.dot_dimension_numbers<[1], [0], [0], [1], [0, 0, 1, 1], [], []>} : vector<64x128xbf16>, vector<128x128xbf16>, vector<64x128xf32> -> vector<64x128xf32>
    %72 = arith.addf %63, %71 : vector<64x128xf32>
    %c0_56 = arith.constant 0 : index
    %c2_57 = arith.constant 2 : index
    %c2_58 = arith.constant 2 : index
    %c0_59 = arith.constant 0 : index
    %73 = vector.load %arg1[%c0_56, %c2_57, %c2_58, %c0_59] : memref<1x10x10x128xbf16, #tpu.memory_space<vmem>>, vector<1x8x8x128xbf16>
    %74 = vector.shape_cast %73 : vector<1x8x8x128xbf16> to vector<8x8x128xbf16>
    %75 = arith.extf %74 : vector<8x8x128xbf16> to vector<8x8x128xf32>
    %76 = vector.shape_cast %75 : vector<8x8x128xf32> to vector<64x128xf32>
    %77 = arith.truncf %76 : vector<64x128xf32> to vector<64x128xbf16>
    %c8 = arith.constant 8 : index
    %c0_60 = arith.constant 0 : index
    %c0_61 = arith.constant 0 : index
    %78 = vector.load %arg2[%c8, %c0_60, %c0_61] : memref<9x128x128xbf16, #tpu.memory_space<vmem>>, vector<1x128x128xbf16>
    %79 = vector.shape_cast %78 : vector<1x128x128xbf16> to vector<128x128xbf16>
    %cst_62 = arith.constant dense<0.000000e+00> : vector<64x128xf32>
    %80 = tpu.matmul %77, %79, %cst_62 {dimension_numbers = #tpu.dot_dimension_numbers<[1], [0], [0], [1], [0, 0, 1, 1], [], []>} : vector<64x128xbf16>, vector<128x128xbf16>, vector<64x128xf32> -> vector<64x128xf32>
    %81 = arith.addf %72, %80 : vector<64x128xf32>
    %c0_63 = arith.constant 0 : index
    %c0_64 = arith.constant 0 : index
    %82 = vector.load %arg3[%c0_63, %c0_64] : memref<1x128xf32, #tpu.memory_space<vmem>>, vector<1x128xf32>
    %83 = vector.broadcast %82 : vector<1x128xf32> to vector<64x128xf32>
    %84 = arith.addf %81, %83 : vector<64x128xf32>
    %cst_65 = arith.constant 0.000000e+00 : f32
    %85 = vector.broadcast %cst_65 : f32 to vector<64x128xf32>
    %86 = arith.maximumf %84, %85 : vector<64x128xf32>
    %87 = vector.extract_strided_slice %86 {offsets = [0, 0], sizes = [8, 128], strides = [1, 1]} : vector<64x128xf32> to vector<8x128xf32>
    %88 = vector.extract_strided_slice %86 {offsets = [8, 0], sizes = [8, 128], strides = [1, 1]} : vector<64x128xf32> to vector<8x128xf32>
    %89 = arith.maximumf %87, %88 : vector<8x128xf32>
    %c0_66 = arith.constant 0 : index
    %c0_67 = arith.constant 0 : index
    %90 = vector.load %arg5[%c0_66, %c0_67] : memref<32x128xf32, #tpu.memory_space<vmem>>, vector<8x128xf32>
    tpu.vector_store %arg5[%c0_66, %c0_67], %89 {strides = array<i32>} : memref<32x128xf32, #tpu.memory_space<vmem>>, vector<8x128xf32>,
    %91 = vector.extract_strided_slice %86 {offsets = [16, 0], sizes = [8, 128], strides = [1, 1]} : vector<64x128xf32> to vector<8x128xf32>
    %92 = vector.extract_strided_slice %86 {offsets = [24, 0], sizes = [8, 128], strides = [1, 1]} : vector<64x128xf32> to vector<8x128xf32>
    %93 = arith.maximumf %91, %92 : vector<8x128xf32>
    %c8_68 = arith.constant 8 : index
    %c0_69 = arith.constant 0 : index
    %94 = vector.load %arg5[%c8_68, %c0_69] : memref<32x128xf32, #tpu.memory_space<vmem>>, vector<8x128xf32>
    tpu.vector_store %arg5[%c8_68, %c0_69], %93 {strides = array<i32>} : memref<32x128xf32, #tpu.memory_space<vmem>>, vector<8x128xf32>,
    %95 = vector.extract_strided_slice %86 {offsets = [32, 0], sizes = [8, 128], strides = [1, 1]} : vector<64x128xf32> to vector<8x128xf32>
    %96 = vector.extract_strided_slice %86 {offsets = [40, 0], sizes = [8, 128], strides = [1, 1]} : vector<64x128xf32> to vector<8x128xf32>
    %97 = arith.maximumf %95, %96 : vector<8x128xf32>
    %c16 = arith.constant 16 : index
    %c0_70 = arith.constant 0 : index
    %98 = vector.load %arg5[%c16, %c0_70] : memref<32x128xf32, #tpu.memory_space<vmem>>, vector<8x128xf32>
    tpu.vector_store %arg5[%c16, %c0_70], %97 {strides = array<i32>} : memref<32x128xf32, #tpu.memory_space<vmem>>, vector<8x128xf32>,
    %99 = vector.extract_strided_slice %86 {offsets = [48, 0], sizes = [8, 128], strides = [1, 1]} : vector<64x128xf32> to vector<8x128xf32>
    %100 = vector.extract_strided_slice %86 {offsets = [56, 0], sizes = [8, 128], strides = [1, 1]} : vector<64x128xf32> to vector<8x128xf32>
    %101 = arith.maximumf %99, %100 : vector<8x128xf32>
    %c24 = arith.constant 24 : index
    %c0_71 = arith.constant 0 : index
    %102 = vector.load %arg5[%c24, %c0_71] : memref<32x128xf32, #tpu.memory_space<vmem>>, vector<8x128xf32>
    tpu.vector_store %arg5[%c24, %c0_71], %101 {strides = array<i32>} : memref<32x128xf32, #tpu.memory_space<vmem>>, vector<8x128xf32>,
    %c0_72 = arith.constant 0 : index
    %c0_73 = arith.constant 0 : index
    %103 = tpu.strided_load %arg5[%c0_72, %c0_73] {strides = array<i32: 2, 1>} : memref<32x128xf32, #tpu.memory_space<vmem>>, vector<16x128xf32>
    %c1_74 = arith.constant 1 : index
    %c0_75 = arith.constant 0 : index
    %104 = tpu.strided_load %arg5[%c1_74, %c0_75] {strides = array<i32: 2, 1>} : memref<32x128xf32, #tpu.memory_space<vmem>>, vector<16x128xf32>
    %105 = arith.maximumf %103, %104 : vector<16x128xf32>
    %106 = arith.truncf %105 : vector<16x128xf32> to vector<16x128xbf16>
    %c0_76 = arith.constant 0 : index
    %c0_77 = arith.constant 0 : index
    %c0_78 = arith.constant 0 : index
    %107 = vector.load %arg4[%c0_76, %c0_77, %c0_78] : memref<1x16x128xbf16, #tpu.memory_space<vmem>>, vector<1x16x128xbf16>
    %108 = vector.shape_cast %107 : vector<1x16x128xbf16> to vector<16x128xbf16>
    %109 = vector.shape_cast %106 : vector<16x128xbf16> to vector<1x16x128xbf16>
    tpu.vector_store %arg4[%c0_76, %c0_77, %c0_78], %109 {strides = array<i32>} : memref<1x16x128xbf16, #tpu.memory_space<vmem>>, vector<1x16x128xbf16>,
    return
  }
  func.func @transform_0(%arg0: i32) -> (i32, i32, i32, i32) {
    %c0_i32 = arith.constant 0 : i32
    %c0_i32_0 = arith.constant 0 : i32
    %c0_i32_1 = arith.constant 0 : i32
    %c0_i32_2 = arith.constant 0 : i32
    return %arg0, %c0_i32, %c0_i32_0, %c0_i32_1 : i32, i32, i32, i32
  }
  func.func @transform_1(%arg0: i32) -> (i32, i32, i32) {
    %c0_i32 = arith.constant 0 : i32
    %c0_i32_0 = arith.constant 0 : i32
    %c0_i32_1 = arith.constant 0 : i32
    %c0_i32_2 = arith.constant 0 : i32
    return %c0_i32, %c0_i32_0, %c0_i32_1 : i32, i32, i32
  }
  func.func @transform_2(%arg0: i32) -> (i32, i32) {
    %c0_i32 = arith.constant 0 : i32
    %c0_i32_0 = arith.constant 0 : i32
    %c0_i32_1 = arith.constant 0 : i32
    return %c0_i32, %c0_i32_0 : i32, i32
  }
  func.func @transform_3(%arg0: i32) -> (i32, i32, i32) {
    %c0_i32 = arith.constant 0 : i32
    %c0_i32_0 = arith.constant 0 : i32
    %c0_i32_1 = arith.constant 0 : i32
    return %arg0, %c0_i32, %c0_i32_0 : i32, i32, i32
  }
}

module attributes {stable_mosaic.version = 11 : i64} {
  func.func @_head_kernel(%arg0: i32, %arg1: memref<2x16x128xbf16, #tpu.memory_space<vmem>>, %arg2: memref<128x128xf32, #tpu.memory_space<vmem>>, %arg3: memref<1x128xf32, #tpu.memory_space<vmem>>, %arg4: memref<2x128xf32, #tpu.memory_space<vmem>>) attributes {dimension_semantics = [#tpu.dimension_semantics<arbitrary>], iteration_bounds = array<i64: 1>, scalar_prefetch = 0 : i64, scratch_operands = 0 : i64, tpu.core_type = #tpu.core_type<tc>, window_params = [{pipeline_mode = #tpu.pipeline_mode<synchronous>, transform_indices = @transform_0, window_bounds = array<i64: 2, 16, 128>}, {pipeline_mode = #tpu.pipeline_mode<synchronous>, transform_indices = @transform_1, window_bounds = array<i64: 128, 128>}, {pipeline_mode = #tpu.pipeline_mode<synchronous>, transform_indices = @transform_2, window_bounds = array<i64: 1, 128>}, {pipeline_mode = #tpu.pipeline_mode<synchronous>, transform_indices = @transform_3, window_bounds = array<i64: 2, 128>}]} {
    %c0 = arith.constant 0 : index
    %c0_0 = arith.constant 0 : index
    %c0_1 = arith.constant 0 : index
    %0 = vector.load %arg1[%c0, %c0_0, %c0_1] : memref<2x16x128xbf16, #tpu.memory_space<vmem>>, vector<2x16x128xbf16>
    %1 = arith.extf %0 : vector<2x16x128xbf16> to vector<2x16x128xf32>
    %cst = arith.constant dense<0.000000e+00> : vector<2x128xf32>
    %2 = vector.multi_reduction <add>, %1, %cst [1] : vector<2x16x128xf32> to vector<2x128xf32>
    %cst_2 = arith.constant 6.250000e-02 : f32
    %3 = vector.broadcast %cst_2 : f32 to vector<2x128xf32>
    %4 = arith.mulf %2, %3 : vector<2x128xf32>
    %c0_3 = arith.constant 0 : index
    %c0_4 = arith.constant 0 : index
    %5 = vector.load %arg2[%c0_3, %c0_4] : memref<128x128xf32, #tpu.memory_space<vmem>>, vector<128x128xf32>
    %cst_5 = arith.constant dense<0.000000e+00> : vector<2x128xf32>
    %6 = tpu.matmul %4, %5, %cst_5 {dimension_numbers = #tpu.dot_dimension_numbers<[1], [0], [0], [1], [0, 0, 1, 1], [], []>} : vector<2x128xf32>, vector<128x128xf32>, vector<2x128xf32> -> vector<2x128xf32>
    %c0_6 = arith.constant 0 : index
    %c0_7 = arith.constant 0 : index
    %7 = vector.load %arg3[%c0_6, %c0_7] : memref<1x128xf32, #tpu.memory_space<vmem>>, vector<1x128xf32>
    %8 = vector.broadcast %7 : vector<1x128xf32> to vector<2x128xf32>
    %9 = arith.addf %6, %8 : vector<2x128xf32>
    %c0_8 = arith.constant 0 : index
    %c0_9 = arith.constant 0 : index
    %10 = vector.load %arg4[%c0_8, %c0_9] : memref<2x128xf32, #tpu.memory_space<vmem>>, vector<2x128xf32>
    tpu.vector_store %arg4[%c0_8, %c0_9], %9 {strides = array<i32>} : memref<2x128xf32, #tpu.memory_space<vmem>>, vector<2x128xf32>,
    return
  }
  func.func @transform_0(%arg0: i32) -> (i32, i32, i32) {
    %c0_i32 = arith.constant 0 : i32
    %c0_i32_0 = arith.constant 0 : i32
    %c0_i32_1 = arith.constant 0 : i32
    %c0_i32_2 = arith.constant 0 : i32
    return %c0_i32, %c0_i32_0, %c0_i32_1 : i32, i32, i32
  }
  func.func @transform_1(%arg0: i32) -> (i32, i32) {
    %c0_i32 = arith.constant 0 : i32
    %c0_i32_0 = arith.constant 0 : i32
    %c0_i32_1 = arith.constant 0 : i32
    return %c0_i32, %c0_i32_0 : i32, i32
  }
  func.func @transform_2(%arg0: i32) -> (i32, i32) {
    %c0_i32 = arith.constant 0 : i32
    %c0_i32_0 = arith.constant 0 : i32
    %c0_i32_1 = arith.constant 0 : i32
    return %c0_i32, %c0_i32_0 : i32, i32
  }
  func.func @transform_3(%arg0: i32) -> (i32, i32) {
    %c0_i32 = arith.constant 0 : i32
    %c0_i32_0 = arith.constant 0 : i32
    %c0_i32_1 = arith.constant 0 : i32
    return %c0_i32, %c0_i32_0 : i32, i32
  }
}

</mosaic_0001>

<llo_original>
// kernel: griddy_forward.7
$region0: #{griddy_forward.7}
  #allocation0 [shape = 'u32[]', space=smem, size = 0x4, offset = 0x4, fixed_abs, tag = 'smem constant byte address 0x4 - core index']
  #allocation1 [shape = 'u32[72,128]{1,0:T(1,128)}', space=vmem, size = 0x9000, scoped, tag = 'internal scratch']
  %s0 = inlined_call_operand.vmem [shape: bf16[2,10,10,128], index: 0, kind: input, shape index: {}]
  %s1 = inlined_call_operand.vmem [shape: bf16[9,128,128], index: 1, kind: input, shape index: {}]
  %s2 = inlined_call_operand.vmem [shape: f32[1,128], index: 2, kind: input, shape index: {}]
  %s3 = inlined_call_operand.vmem [shape: bf16[2,64,128], index: 3, kind: output, shape index: {}]
  %s4 = sld [smem:[#allocation0]]
  $region45: #{griddy_forward.7} parent=0
    _
  %s6 = ssub.s32 1, %s4
  %s7 = scalar_select 0, %s6, %s4
  loop: start=0, step=1, limit=4
  $region2: #{griddy_forward.7} parent=0 // loop_pre_header
    _
  $region3: #{griddy_forward.7} parent=0 // loop_header
    %s9 = sphi 0, %s13
    %p10 = scmp.ge.s32.totalorder %s9, 4
    %s19 = sphi 0, %s21
    %s22 = sphi 0, %s19
    %s23 = sphi 0, %s22
    %s39 = sphi 0, %s23
    %s43 = sphi 0, %s43
    %s45 = sphi 0, %s43
    %s46 = sphi 0, %s45
    %s60 = sphi 0, %s46
    %s64 = sphi 0, %s64
    %s66 = sphi 0, %s64
    %s67 = sphi 0, %s66
    %s81 = sphi 0, %s67
    %s87 = sphi 0, %s89
    %s90 = sphi 0, %s87
    %s91 = sphi 0, %s90
    %s107 = sphi 0, %s91
  $region4: #{griddy_forward.7} parent=0 // loop_header_branch
    %12 = sbr.rel (%p10) target = $region8
  $region5: #{griddy_forward.7} parent=0 // loop_body
    %s14 = ssub.s32 %s9, 1
    %s15 = ssub.s32 %s9, 2
    %s16 = sadd.s32 %s9, 1
    %s17 = ssub.s32 %s9, %s16
    %p18 = scmp.eq.s32.totalorder %s17, 0
    %s20 = sadd.s32 %s19, 1
    %s21 = scalar_select %p18, %s19, %s20
    %p24 = pneg %p18
    %p25 = scmp.eq.s32.totalorder %s9, 1
    %p26 = por %p24, %p25
    %p27 = scmp.ne.s32.totalorder %s19, %s22
    %p28 = scmp.eq.s32.totalorder %s9, 0
    %p29 = por %p27, %p28
    %p30 = scmp.ne.s32.totalorder %s19, %s22
    %p31 = scmp.eq.s32.totalorder %s14, 1
    %p32 = por %p30, %p31
    %p33 = scmp.ne.s32.totalorder %s22, %s23
    %p34 = scmp.eq.s32.totalorder %s14, 0
    %p35 = por %p33, %p34
    %p36 = scmp.ne.s32.totalorder %s22, %s23
    %p37 = scmp.eq.s32.totalorder %s15, 1
    %p38 = por %p36, %p37
    %p40 = scmp.ne.s32.totalorder %s23, %s39
    %p41 = scmp.eq.s32.totalorder %s15, 0
    %p42 = por %p40, %p41
    %s44 = sadd.s32 %s43, 1
    %p47 = scmp.eq.s32.totalorder %s9, 1
    %p48 = scmp.ne.s32.totalorder %s43, %s45
    %p49 = scmp.eq.s32.totalorder %s9, 0
    %p50 = por %p48, %p49
    %p51 = scmp.ne.s32.totalorder %s43, %s45
    %p52 = scmp.eq.s32.totalorder %s14, 1
    %p53 = por %p51, %p52
    %p54 = scmp.ne.s32.totalorder %s45, %s46
    %p55 = scmp.eq.s32.totalorder %s14, 0
    %p56 = por %p54, %p55
    %p57 = scmp.ne.s32.totalorder %s45, %s46
    %p58 = scmp.eq.s32.totalorder %s15, 1
    %p59 = por %p57, %p58
    %p61 = scmp.ne.s32.totalorder %s46, %s60
    %p62 = scmp.eq.s32.totalorder %s15, 0
    %p63 = por %p61, %p62
    %s65 = sadd.s32 %s64, 1
    %p68 = scmp.eq.s32.totalorder %s9, 1
    %p69 = scmp.ne.s32.totalorder %s64, %s66
    %p70 = scmp.eq.s32.totalorder %s9, 0
    %p71 = por %p69, %p70
    %p72 = scmp.ne.s32.totalorder %s64, %s66
    %p73 = scmp.eq.s32.totalorder %s14, 1
    %p74 = por %p72, %p73
    %p75 = scmp.ne.s32.totalorder %s66, %s67
    %p76 = scmp.eq.s32.totalorder %s14, 0
    %p77 = por %p75, %p76
    %p78 = scmp.ne.s32.totalorder %s66, %s67
    %p79 = scmp.eq.s32.totalorder %s15, 1
    %p80 = por %p78, %p79
    %p82 = scmp.ne.s32.totalorder %s67, %s81
    %p83 = scmp.eq.s32.totalorder %s15, 0
    %p84 = por %p82, %p83
    %s85 = ssub.s32 %s9, %s16
    %p86 = scmp.eq.s32.totalorder %s85, 0
    %s88 = sadd.s32 %s87, 1
    %s89 = scalar_select %p86, %s87, %s88
    %p92 = pneg %p86
    %p93 = scmp.eq.s32.totalorder %s9, 1
    %p94 = por %p92, %p93
    %p95 = scmp.ne.s32.totalorder %s87, %s90
    %p96 = scmp.eq.s32.totalorder %s9, 0
    %p97 = por %p95, %p96
    %p98 = scmp.ne.s32.totalorder %s87, %s90
    %p99 = scmp.eq.s32.totalorder %s14, 1
    %p100 = por %p98, %p99
    %p101 = scmp.ne.s32.totalorder %s90, %s91
    %p102 = scmp.eq.s32.totalorder %s14, 0
    %p103 = por %p101, %p102
    %p104 = scmp.ne.s32.totalorder %s90, %s91
    %p105 = scmp.eq.s32.totalorder %s15, 1
    %p106 = por %p104, %p105
    %p108 = scmp.ne.s32.totalorder %s91, %s107
    %p109 = scmp.eq.s32.totalorder %s15, 0
    %p110 = por %p108, %p109
    %p111 = scmp.le.s32.totalorder 1, %s9
    %p112 = scmp.lt.s32.totalorder %s9, 3
    %p113 = pnand %p111, %p112
    %p114 = pneg %p113
    // Predicated region
    $region9: #{griddy_forward.7} parent=5 // pred_check
      _
    $region10: #{griddy_forward.7} parent=5 // pred_check_branch
      %116 = sbr.rel (%p113) target = $region12
    $region11: #{griddy_forward.7} parent=5 // pred_region
      %s117 = ssub.s32 %s9, 1
      // Predicated region
      $region13: #{griddy_forward.7} parent=11 // pred_check
        %p118 = pneg %p56
      $region14: #{griddy_forward.7} parent=11 // pred_check_branch
        %120 = sbr.rel (%p118) target = $region16
      $region15: #{griddy_forward.7} parent=11 // pred_region
        _
      $region16: #{griddy_forward.7} parent=11 // pred_fallthru
        _
      // Predicated region
      $region17: #{griddy_forward.7} parent=11 // pred_check
        %p121 = pneg %p77
      $region18: #{griddy_forward.7} parent=11 // pred_check_branch
        %123 = sbr.rel (%p121) target = $region20
      $region19: #{griddy_forward.7} parent=11 // pred_region
        _
      $region20: #{griddy_forward.7} parent=11 // pred_fallthru
        _
    $region12: #{griddy_forward.7} parent=5 // pred_fallthru
      _
    %p124 = scmp.lt.s32.totalorder %s9, 2
    // Predicated region
    $region21: #{griddy_forward.7} parent=5 // pred_check
      %p125 = pneg %p124
    $region22: #{griddy_forward.7} parent=5 // pred_check_branch
      %127 = sbr.rel (%p125) target = $region24
    $region23: #{griddy_forward.7} parent=5 // pred_region
      // Predicated region
      $region25: #{griddy_forward.7} parent=23 // pred_check
        %p128 = pneg %p29
      $region26: #{griddy_forward.7} parent=23 // pred_check_branch
        %130 = sbr.rel (%p128) target = $region28
      $region27: #{griddy_forward.7} parent=23 // pred_region
        %p131 = scmp.lt.s32.totalorder %s9, 1
        %s132 = scalar_select %p131, %s9, 1
        %s133 = smul.addr %s132, 20
        %s134 = smul.addr %s133, 4
        %s135 = scalar_lea.vmem %s0, %s134
      $region28: #{griddy_forward.7} parent=23 // pred_fallthru
        _
    $region24: #{griddy_forward.7} parent=5 // pred_fallthru
      _
    %p136 = scmp.le.s32.totalorder 1, %s9
    %p137 = scmp.lt.s32.totalorder %s9, 3
    %p138 = pnand %p136, %p137
    %p139 = pneg %p138
    // Predicated region
    $region29: #{griddy_forward.7} parent=5 // pred_check
      _
    $region30: #{griddy_forward.7} parent=5 // pred_check_branch
      %141 = sbr.rel (%p138) target = $region32
    $region31: #{griddy_forward.7} parent=5 // pred_region
      %s142 = ssub.s32 %s9, 1
      %p143 = scmp.lt.s32.totalorder %s14, 1
      %s144 = scalar_select %p143, %s14, 1
      %s145 = smul.addr %s144, 20
      %s146 = smul.addr %s145, 4
      %s147 = scalar_lea.vmem %s0, %s146
      %p148 = pneg %p35
      %p149 = pneg %p32
      %p150 = pneg %p56
      %p151 = pneg %p53
      %p152 = pneg %p77
      %p153 = pneg %p74
      %p154 = pneg %p103
      %p155 = pneg %p100
      %p156 = scmp.lt.s32.totalorder %s14, 1
      %s157 = scalar_select %p156, %s14, 1
      %s158 = smul.addr %s157, 8
      %s159 = smul.addr %s158, 4
      %s160 = scalar_lea.vmem %s3, %s159
      %p161 = scmp.lt.s32.totalorder %s14, 1
      %s162 = scalar_select %p161, %s14, 1
      %s163 = smul.addr %s162, 20
      %s164 = smul.addr %s163, 4
      %s165 = scalar_lea.vmem %s0, %s164
      %p166 = scmp.lt.s32.totalorder %s14, 1
      %s167 = scalar_select %p166, %s14, 1
      %s168 = smul.addr %s167, 8
      %s169 = smul.addr %s168, 4
      %s170 = scalar_lea.vmem %s3, %s169
      %v171 = vld [vmem:[%s165] sm:$0xf]
      %v172 = vld [vmem:[%s165 + $0x8] sm:$0xf]
      %v173 = vld [vmem:[%s165 + $0x10] sm:$0xf]
      %v174 = vld [vmem:[%s165 + $0x18] sm:$0xf]
      %v175 = vld [vmem:[%s165 + $0x20] sm:$0xf]
      %v176 = vld [vmem:[%s165 + $0x28] sm:$0xf]
      %v177 = vld [vmem:[%s165 + $0x30] sm:$0xf]
      %v178 = vld [vmem:[%s165 + $0x38] sm:$0xf]
      %v179 = vunpack.c.l.bf16 %v171
      %v180 = vunpack.c.l.bf16 %v172
      %v181 = vunpack.c.l.bf16 %v173
      %v182 = vunpack.c.l.bf16 %v174
      %v183 = vunpack.c.l.bf16 %v175
      %v184 = vunpack.c.l.bf16 %v176
      %v185 = vunpack.c.l.bf16 %v177
      %v186 = vunpack.c.l.bf16 %v178
      %v187 = vpack.c.bf16 %v180, %v179
      %v188 = vpack.c.bf16 %v182, %v181
      %v189 = vpack.c.bf16 %v184, %v183
      %v190 = vpack.c.bf16 %v186, %v185
      %v191 = vld [vmem:[%s1] sm:$0xf]
      %v192 = vld [vmem:[%s1 + $0x4] sm:$0xf]
      %v193 = vld [vmem:[%s1 + $0x8] sm:$0xf]
      %v194 = vld [vmem:[%s1 + $0xc] sm:$0xf]
      %v195 = vld [vmem:[%s1 + $0x10] sm:$0xf]
      %v196 = vld [vmem:[%s1 + $0x14] sm:$0xf]
      %v197 = vld [vmem:[%s1 + $0x18] sm:$0xf]
      %v198 = vld [vmem:[%s1 + $0x1c] sm:$0xf]
      %v199 = vld [vmem:[%s1 + $0x20] sm:$0xf]
      %v200 = vld [vmem:[%s1 + $0x24] sm:$0xf]
      %v201 = vld [vmem:[%s1 + $0x28] sm:$0xf]
      %v202 = vld [vmem:[%s1 + $0x2c] sm:$0xf]
      %v203 = vld [vmem:[%s1 + $0x30] sm:$0xf]
      %v204 = vld [vmem:[%s1 + $0x34] sm:$0xf]
      %v205 = vld [vmem:[%s1 + $0x38] sm:$0xf]
      %v206 = vld [vmem:[%s1 + $0x3c] sm:$0xf]
      %v207 = vld [vmem:[%s165 + $0x4] sm:$0x1]
      %v208 = vld [vmem:[%s165 + $0xc] sm:$0x1]
      %v209 = vld [vmem:[%s165 + $0x14] sm:$0x1]
      %v210 = vld [vmem:[%s165 + $0x1c] sm:$0x1]
      %v211 = vld [vmem:[%s165 + $0x24] sm:$0x1]
      %v212 = vld [vmem:[%s165 + $0x2c] sm:$0x1]
      %v213 = vld [vmem:[%s165 + $0x34] sm:$0x1]
      %v214 = vld [vmem:[%s165 + $0x3c] sm:$0x1]
      %v215 = vunpack.c.l.bf16 %v207
      %v216 = vunpack.c.l.bf16 %v208
      %v217 = vunpack.c.l.bf16 %v209
      %v218 = vunpack.c.l.bf16 %v210
      %v219 = vunpack.c.l.bf16 %v211
      %v220 = vunpack.c.l.bf16 %v212
      %v221 = vunpack.c.l.bf16 %v213
      %v222 = vunpack.c.l.bf16 %v214
      %vm239 = vcmask 1046528
      %v240 = vrot.slane %v179, 1
      %v241 = vrot.slane %v215, 1
      %v242 = vsel %vm239, %v240, %v241
      %v243 = vrot.slane %v180, 1
      %v244 = vrot.slane %v216, 1
      %v245 = vsel %vm239, %v243, %v244
      %v246 = vrot.slane %v181, 1
      %v247 = vrot.slane %v217, 1
      %v248 = vsel %vm239, %v246, %v247
      %v249 = vrot.slane %v182, 1
      %v250 = vrot.slane %v218, 1
      %v251 = vsel %vm239, %v249, %v250
      %v252 = vrot.slane %v183, 1
      %v253 = vrot.slane %v219, 1
      %v254 = vsel %vm239, %v252, %v253
      %v255 = vrot.slane %v184, 1
      %v256 = vrot.slane %v220, 1
      %v257 = vsel %vm239, %v255, %v256
      %v258 = vrot.slane %v185, 1
      %v259 = vrot.slane %v221, 1
      %v260 = vsel %vm239, %v258, %v259
      %v261 = vrot.slane %v186, 1
      %v262 = vrot.slane %v222, 1
      %v263 = vsel %vm239, %v261, %v262
      %v272 = vpack.c.bf16 %v245, %v242
      %v273 = vpack.c.bf16 %v251, %v248
      %v274 = vpack.c.bf16 %v257, %v254
      %v275 = vpack.c.bf16 %v263, %v260
      %s276 = scalar_lea.vmem %s1, 64
      %v277 = vld [vmem:[%s276] sm:$0xf]
      %v278 = vld [vmem:[%s276 + $0x4] sm:$0xf]
      %v279 = vld [vmem:[%s276 + $0x8] sm:$0xf]
      %v280 = vld [vmem:[%s276 + $0xc] sm:$0xf]
      %v281 = vld [vmem:[%s276 + $0x10] sm:$0xf]
      %v282 = vld [vmem:[%s276 + $0x14] sm:$0xf]
      %v283 = vld [vmem:[%s276 + $0x18] sm:$0xf]
      %v284 = vld [vmem:[%s276 + $0x1c] sm:$0xf]
      %v285 = vld [vmem:[%s276 + $0x20] sm:$0xf]
      %v286 = vld [vmem:[%s276 + $0x24] sm:$0xf]
      %v287 = vld [vmem:[%s276 + $0x28] sm:$0xf]
      %v288 = vld [vmem:[%s276 + $0x2c] sm:$0xf]
      %v289 = vld [vmem:[%s276 + $0x30] sm:$0xf]
      %v290 = vld [vmem:[%s276 + $0x34] sm:$0xf]
      %v291 = vld [vmem:[%s276 + $0x38] sm:$0xf]
      %v292 = vld [vmem:[%s276 + $0x3c] sm:$0xf]
      %v309 = vunpack.c.l.b16 %v277
      %v310 = vunpack.c.l.b16 %v278
      %v311 = vunpack.c.l.b16 %v279
      %v312 = vunpack.c.l.b16 %v280
      %v313 = vunpack.c.l.b16 %v281
      %v314 = vunpack.c.l.b16 %v282
      %v315 = vunpack.c.l.b16 %v283
      %v316 = vunpack.c.l.b16 %v284
      %v317 = vunpack.c.l.b16 %v285
      %v318 = vunpack.c.l.b16 %v286
      %v319 = vunpack.c.l.b16 %v287
      %v320 = vunpack.c.l.b16 %v288
      %v321 = vunpack.c.l.b16 %v289
      %v322 = vunpack.c.l.b16 %v290
      %v323 = vunpack.c.l.b16 %v291
      %v324 = vunpack.c.l.b16 %v292
      %v325 = vpack.c.b16 %v310, %v309
      %v326 = vpack.c.b16 %v312, %v311
      %v327 = vpack.c.b16 %v314, %v313
      %v328 = vpack.c.b16 %v316, %v315
      %v329 = vpack.c.b16 %v318, %v317
      %v330 = vpack.c.b16 %v320, %v319
      %v331 = vpack.c.b16 %v322, %v321
      %v332 = vpack.c.b16 %v324, %v323
      %341 = vmatpush.bf16.msra.mxu0 %v332
      %342 = vmatpush.bf16.msra.mxu0 %v331
      %343 = vmatpush.bf16.msra.mxu0 %v330
      %344 = vmatpush.bf16.msra.mxu0 %v329
      %345 = vmatpush.bf16.msra.mxu0 %v328
      %346 = vmatpush.bf16.msra.mxu0 %v327
      %347 = vmatpush.bf16.msra.mxu0 %v326
      %348 = vmatpush.bf16.msra.mxu0 %v325
      %349 = vmatmul.bf16.gmra.mxu0 %v272
      %v350 = vpop.f32.mrf.mxu0
      %v351 = vadd.f32 0.0, %v350
      %v352 = vpop.f32.mrf.mxu0
      %v353 = vadd.f32 0.0, %v352
      %354 = vmatmul.bf16.gmra.mxu0 %v273
      %v355 = vpop.f32.mrf.mxu0
      %v356 = vadd.f32 0.0, %v355
      %v357 = vpop.f32.mrf.mxu0
      %v358 = vadd.f32 0.0, %v357
      %359 = vmatmul.bf16.gmra.mxu0 %v274
      %v360 = vpop.f32.mrf.mxu0
      %v361 = vadd.f32 0.0, %v360
      %v362 = vpop.f32.mrf.mxu0
      %v363 = vadd.f32 0.0, %v362
      %364 = vmatmul.bf16.gmra.mxu0 %v275
      %v365 = vpop.f32.mrf.mxu0
      %v366 = vadd.f32 0.0, %v365
      %v367 = vpop.f32.mrf.mxu0
      %v368 = vadd.f32 0.0, %v367
      %369 = vdwg.mxu0
      %v386 = vunpack.c.l.b16 %v191
      %v387 = vunpack.c.l.b16 %v192
      %v388 = vunpack.c.l.b16 %v193
      %v389 = vunpack.c.l.b16 %v194
      %v390 = vunpack.c.l.b16 %v195
      %v391 = vunpack.c.l.b16 %v196
      %v392 = vunpack.c.l.b16 %v197
      %v393 = vunpack.c.l.b16 %v198
      %v394 = vunpack.c.l.b16 %v199
      %v395 = vunpack.c.l.b16 %v200
      %v396 = vunpack.c.l.b16 %v201
      %v397 = vunpack.c.l.b16 %v202
      %v398 = vunpack.c.l.b16 %v203
      %v399 = vunpack.c.l.b16 %v204
      %v400 = vunpack.c.l.b16 %v205
      %v401 = vunpack.c.l.b16 %v206
      %v402 = vpack.c.b16 %v387, %v386
      %v403 = vpack.c.b16 %v389, %v388
      %v404 = vpack.c.b16 %v391, %v390
      %v405 = vpack.c.b16 %v393, %v392
      %v406 = vpack.c.b16 %v395, %v394
      %v407 = vpack.c.b16 %v397, %v396
      %v408 = vpack.c.b16 %v399, %v398
      %v409 = vpack.c.b16 %v401, %v400
      %418 = vmatpush.bf16.msra.mxu0 %v409
      %419 = vmatpush.bf16.msra.mxu0 %v408
      %420 = vmatpush.bf16.msra.mxu0 %v407
      %421 = vmatpush.bf16.msra.mxu0 %v406
      %422 = vmatpush.bf16.msra.mxu0 %v405
      %423 = vmatpush.bf16.msra.mxu0 %v404
      %424 = vmatpush.bf16.msra.mxu0 %v403
      %425 = vmatpush.bf16.msra.mxu0 %v402
      %426 = vmatmul.bf16.gmra.mxu0 %v187
      %v427 = vpop.f32.mrf.mxu0
      %v428 = vadd.f32 %v351, %v427
      %v429 = vpop.f32.mrf.mxu0
      %v430 = vadd.f32 %v353, %v429
      %431 = vmatmul.bf16.gmra.mxu0 %v188
      %v432 = vpop.f32.mrf.mxu0
      %v433 = vadd.f32 %v356, %v432
      %v434 = vpop.f32.mrf.mxu0
      %v435 = vadd.f32 %v358, %v434
      %436 = vmatmul.bf16.gmra.mxu0 %v189
      %v437 = vpop.f32.mrf.mxu0
      %v438 = vadd.f32 %v361, %v437
      %v439 = vpop.f32.mrf.mxu0
      %v440 = vadd.f32 %v363, %v439
      %441 = vmatmul.bf16.gmra.mxu0 %v190
      %v442 = vpop.f32.mrf.mxu0
      %v443 = vadd.f32 %v366, %v442
      %v444 = vpop.f32.mrf.mxu0
      %v445 = vadd.f32 %v368, %v444
      %446 = vdwg.mxu0
      %v447 = vld [vmem:[%s165] sm:$0xe]
      %v448 = vld [vmem:[%s165 + $0x8] sm:$0xe]
      %v449 = vld [vmem:[%s165 + $0x10] sm:$0xe]
      %v450 = vld [vmem:[%s165 + $0x18] sm:$0xe]
      %v451 = vld [vmem:[%s165 + $0x20] sm:$0xe]
      %v452 = vld [vmem:[%s165 + $0x28] sm:$0xe]
      %v453 = vld [vmem:[%s165 + $0x30] sm:$0xe]
      %v454 = vld [vmem:[%s165 + $0x38] sm:$0xe]
      %v455 = vunpack.c.l.bf16 %v447
      %v456 = vunpack.c.l.bf16 %v448
      %v457 = vunpack.c.l.bf16 %v449
      %v458 = vunpack.c.l.bf16 %v450
      %v459 = vunpack.c.l.bf16 %v451
      %v460 = vunpack.c.l.bf16 %v452
      %v461 = vunpack.c.l.bf16 %v453
      %v462 = vunpack.c.l.bf16 %v454
      %vm471 = vcmask 1045504
      %v472 = vrot.slane %v455, 2
      %v473 = vrot.slane %v215, 2
      %v474 = vsel %vm471, %v472, %v473
      %v475 = vrot.slane %v456, 2
      %v476 = vrot.slane %v216, 2
      %v477 = vsel %vm471, %v475, %v476
      %v478 = vrot.slane %v457, 2
      %v479 = vrot.slane %v217, 2
      %v480 = vsel %vm471, %v478, %v479
      %v481 = vrot.slane %v458, 2
      %v482 = vrot.slane %v218, 2
      %v483 = vsel %vm471, %v481, %v482
      %v484 = vrot.slane %v459, 2
      %v485 = vrot.slane %v219, 2
      %v486 = vsel %vm471, %v484, %v485
      %v487 = vrot.slane %v460, 2
      %v488 = vrot.slane %v220, 2
      %v489 = vsel %vm471, %v487, %v488
      %v490 = vrot.slane %v461, 2
      %v491 = vrot.slane %v221, 2
      %v492 = vsel %vm471, %v490, %v491
      %v493 = vrot.slane %v462, 2
      %v494 = vrot.slane %v222, 2
      %v495 = vsel %vm471, %v493, %v494
      %v504 = vpack.c.bf16 %v477, %v474
      %v505 = vpack.c.bf16 %v483, %v480
      %v506 = vpack.c.bf16 %v489, %v486
      %v507 = vpack.c.bf16 %v495, %v492
      %s508 = scalar_lea.vmem %s1, 128
      %v509 = vld [vmem:[%s508] sm:$0xf]
      %v510 = vld [vmem:[%s508 + $0x4] sm:$0xf]
      %v511 = vld [vmem:[%s508 + $0x8] sm:$0xf]
      %v512 = vld [vmem:[%s508 + $0xc] sm:$0xf]
      %v513 = vld [vmem:[%s508 + $0x10] sm:$0xf]
      %v514 = vld [vmem:[%s508 + $0x14] sm:$0xf]
      %v515 = vld [vmem:[%s508 + $0x18] sm:$0xf]
      %v516 = vld [vmem:[%s508 + $0x1c] sm:$0xf]
      %v517 = vld [vmem:[%s508 + $0x20] sm:$0xf]
      %v518 = vld [vmem:[%s508 + $0x24] sm:$0xf]
      %v519 = vld [vmem:[%s508 + $0x28] sm:$0xf]
      %v520 = vld [vmem:[%s508 + $0x2c] sm:$0xf]
      %v521 = vld [vmem:[%s508 + $0x30] sm:$0xf]
      %v522 = vld [vmem:[%s508 + $0x34] sm:$0xf]
      %v523 = vld [vmem:[%s508 + $0x38] sm:$0xf]
      %v524 = vld [vmem:[%s508 + $0x3c] sm:$0xf]
      %v541 = vunpack.c.l.b16 %v509
      %v542 = vunpack.c.l.b16 %v510
      %v543 = vunpack.c.l.b16 %v511
      %v544 = vunpack.c.l.b16 %v512
      %v545 = vunpack.c.l.b16 %v513
      %v546 = vunpack.c.l.b16 %v514
      %v547 = vunpack.c.l.b16 %v515
      %v548 = vunpack.c.l.b16 %v516
      %v549 = vunpack.c.l.b16 %v517
      %v550 = vunpack.c.l.b16 %v518
      %v551 = vunpack.c.l.b16 %v519
      %v552 = vunpack.c.l.b16 %v520
      %v553 = vunpack.c.l.b16 %v521
      %v554 = vunpack.c.l.b16 %v522
      %v555 = vunpack.c.l.b16 %v523
      %v556 = vunpack.c.l.b16 %v524
      %v557 = vpack.c.b16 %v542, %v541
      %v558 = vpack.c.b16 %v544, %v543
      %v559 = vpack.c.b16 %v546, %v545
      %v560 = vpack.c.b16 %v548, %v547
      %v561 = vpack.c.b16 %v550, %v549
      %v562 = vpack.c.b16 %v552, %v551
      %v563 = vpack.c.b16 %v554, %v553
      %v564 = vpack.c.b16 %v556, %v555
      %573 = vmatpush.bf16.msra.mxu0 %v564
      %574 = vmatpush.bf16.msra.mxu0 %v563
      %575 = vmatpush.bf16.msra.mxu0 %v562
      %576 = vmatpush.bf16.msra.mxu0 %v561
      %577 = vmatpush.bf16.msra.mxu0 %v560
      %578 = vmatpush.bf16.msra.mxu0 %v559
      %579 = vmatpush.bf16.msra.mxu0 %v558
      %580 = vmatpush.bf16.msra.mxu0 %v557
      %581 = vmatmul.bf16.gmra.mxu0 %v504
      %v582 = vpop.f32.mrf.mxu0
      %v583 = vadd.f32 0.0, %v582
      %v584 = vpop.f32.mrf.mxu0
      %v585 = vadd.f32 0.0, %v584
      %586 = vmatmul.bf16.gmra.mxu0 %v505
      %v587 = vpop.f32.mrf.mxu0
      %v588 = vadd.f32 0.0, %v587
      %v589 = vpop.f32.mrf.mxu0
      %v590 = vadd.f32 0.0, %v589
      %591 = vmatmul.bf16.gmra.mxu0 %v506
      %v592 = vpop.f32.mrf.mxu0
      %v593 = vadd.f32 0.0, %v592
      %v594 = vpop.f32.mrf.mxu0
      %v595 = vadd.f32 0.0, %v594
      %596 = vmatmul.bf16.gmra.mxu0 %v507
      %v597 = vpop.f32.mrf.mxu0
      %v598 = vadd.f32 0.0, %v597
      %v599 = vpop.f32.mrf.mxu0
      %v600 = vadd.f32 0.0, %v599
      %601 = vdwg.mxu0
      %v602 = vadd.f32 %v428, %v583
      %v603 = vadd.f32 %v430, %v585
      %v604 = vadd.f32 %v433, %v588
      %v605 = vadd.f32 %v435, %v590
      %v606 = vadd.f32 %v438, %v593
      %v607 = vadd.f32 %v440, %v595
      %v608 = vadd.f32 %v443, %v598
      %v609 = vadd.f32 %v445, %v600
      %s610 = scalar_lea.vmem %s165, 8
      %v611 = vld [vmem:[%s610] sm:$0xf]
      %v612 = vld [vmem:[%s610 + $0x8] sm:$0xf]
      %v613 = vld [vmem:[%s610 + $0x10] sm:$0xf]
      %v614 = vld [vmem:[%s610 + $0x18] sm:$0xf]
      %v615 = vld [vmem:[%s610 + $0x20] sm:$0xf]
      %v616 = vld [vmem:[%s610 + $0x28] sm:$0xf]
      %v617 = vld [vmem:[%s610 + $0x30] sm:$0xf]
      %v618 = vld [vmem:[%s610 + $0x38] sm:$0xf]
      %v619 = vunpack.c.l.bf16 %v611
      %v620 = vunpack.c.l.bf16 %v612
      %v621 = vunpack.c.l.bf16 %v613
      %v622 = vunpack.c.l.bf16 %v614
      %v623 = vunpack.c.l.bf16 %v615
      %v624 = vunpack.c.l.bf16 %v616
      %v625 = vunpack.c.l.bf16 %v617
      %v626 = vunpack.c.l.bf16 %v618
      %v627 = vpack.c.bf16 %v620, %v619
      %v628 = vpack.c.bf16 %v622, %v621
      %v629 = vpack.c.bf16 %v624, %v623
      %v630 = vpack.c.bf16 %v626, %v625
      %s631 = scalar_lea.vmem %s1, 192
      %v632 = vld [vmem:[%s631] sm:$0xf]
      %v633 = vld [vmem:[%s631 + $0x4] sm:$0xf]
      %v634 = vld [vmem:[%s631 + $0x8] sm:$0xf]
      %v635 = vld [vmem:[%s631 + $0xc] sm:$0xf]
      %v636 = vld [vmem:[%s631 + $0x10] sm:$0xf]
      %v637 = vld [vmem:[%s631 + $0x14] sm:$0xf]
      %v638 = vld [vmem:[%s631 + $0x18] sm:$0xf]
      %v639 = vld [vmem:[%s631 + $0x1c] sm:$0xf]
      %v640 = vld [vmem:[%s631 + $0x20] sm:$0xf]
      %v641 = vld [vmem:[%s631 + $0x24] sm:$0xf]
      %v642 = vld [vmem:[%s631 + $0x28] sm:$0xf]
      %v643 = vld [vmem:[%s631 + $0x2c] sm:$0xf]
      %v644 = vld [vmem:[%s631 + $0x30] sm:$0xf]
      %v645 = vld [vmem:[%s631 + $0x34] sm:$0xf]
      %v646 = vld [vmem:[%s631 + $0x38] sm:$0xf]
      %v647 = vld [vmem:[%s631 + $0x3c] sm:$0xf]
      %v664 = vunpack.c.l.b16 %v632
      %v665 = vunpack.c.l.b16 %v633
      %v666 = vunpack.c.l.b16 %v634
      %v667 = vunpack.c.l.b16 %v635
      %v668 = vunpack.c.l.b16 %v636
      %v669 = vunpack.c.l.b16 %v637
      %v670 = vunpack.c.l.b16 %v638
      %v671 = vunpack.c.l.b16 %v639
      %v672 = vunpack.c.l.b16 %v640
      %v673 = vunpack.c.l.b16 %v641
      %v674 = vunpack.c.l.b16 %v642
      %v675 = vunpack.c.l.b16 %v643
      %v676 = vunpack.c.l.b16 %v644
      %v677 = vunpack.c.l.b16 %v645
      %v678 = vunpack.c.l.b16 %v646
      %v679 = vunpack.c.l.b16 %v647
      %v680 = vpack.c.b16 %v665, %v664
      %v681 = vpack.c.b16 %v667, %v666
      %v682 = vpack.c.b16 %v669, %v668
      %v683 = vpack.c.b16 %v671, %v670
      %v684 = vpack.c.b16 %v673, %v672
      %v685 = vpack.c.b16 %v675, %v674
      %v686 = vpack.c.b16 %v677, %v676
      %v687 = vpack.c.b16 %v679, %v678
      %696 = vmatpush.bf16.msra.mxu0 %v687
      %697 = vmatpush.bf16.msra.mxu0 %v686
      %698 = vmatpush.bf16.msra.mxu0 %v685
      %699 = vmatpush.bf16.msra.mxu0 %v684
      %700 = vmatpush.bf16.msra.mxu0 %v683
      %701 = vmatpush.bf16.msra.mxu0 %v682
      %702 = vmatpush.bf16.msra.mxu0 %v681
      %703 = vmatpush.bf16.msra.mxu0 %v680
      %704 = vmatmul.bf16.gmra.mxu0 %v627
      %v705 = vpop.f32.mrf.mxu0
      %v706 = vadd.f32 0.0, %v705
      %v707 = vpop.f32.mrf.mxu0
      %v708 = vadd.f32 0.0, %v707
      %709 = vmatmul.bf16.gmra.mxu0 %v628
      %v710 = vpop.f32.mrf.mxu0
      %v711 = vadd.f32 0.0, %v710
      %v712 = vpop.f32.mrf.mxu0
      %v713 = vadd.f32 0.0, %v712
      %714 = vmatmul.bf16.gmra.mxu0 %v629
      %v715 = vpop.f32.mrf.mxu0
      %v716 = vadd.f32 0.0, %v715
      %v717 = vpop.f32.mrf.mxu0
      %v718 = vadd.f32 0.0, %v717
      %719 = vmatmul.bf16.gmra.mxu0 %v630
      %v720 = vpop.f32.mrf.mxu0
      %v721 = vadd.f32 0.0, %v720
      %v722 = vpop.f32.mrf.mxu0
      %v723 = vadd.f32 0.0, %v722
      %724 = vdwg.mxu0
      %v725 = vadd.f32 %v602, %v706
      %v726 = vadd.f32 %v603, %v708
      %v727 = vadd.f32 %v604, %v711
      %v728 = vadd.f32 %v605, %v713
      %v729 = vadd.f32 %v606, %v716
      %v730 = vadd.f32 %v607, %v718
      %v731 = vadd.f32 %v608, %v721
      %v732 = vadd.f32 %v609, %v723
      %v733 = vld [vmem:[%s610] sm:$0xf]
      %v734 = vld [vmem:[%s610 + $0x4] sm:$0x1]
      %v735 = vld [vmem:[%s610 + $0x8] sm:$0xf]
      %v736 = vld [vmem:[%s610 + $0xc] sm:$0x1]
      %v737 = vld [vmem:[%s610 + $0x10] sm:$0xf]
      %v738 = vld [vmem:[%s610 + $0x14] sm:$0x1]
      %v739 = vld [vmem:[%s610 + $0x18] sm:$0xf]
      %v740 = vld [vmem:[%s610 + $0x1c] sm:$0x1]
      %v741 = vld [vmem:[%s610 + $0x20] sm:$0xf]
      %v742 = vld [vmem:[%s610 + $0x24] sm:$0x1]
      %v743 = vld [vmem:[%s610 + $0x28] sm:$0xf]
      %v744 = vld [vmem:[%s610 + $0x2c] sm:$0x1]
      %v745 = vld [vmem:[%s610 + $0x30] sm:$0xf]
      %v746 = vld [vmem:[%s610 + $0x34] sm:$0x1]
      %v747 = vld [vmem:[%s610 + $0x38] sm:$0xf]
      %v748 = vld [vmem:[%s610 + $0x3c] sm:$0x1]
      %v749 = vunpack.c.l.bf16 %v733
      %v750 = vunpack.c.l.bf16 %v734
      %v751 = vunpack.c.l.bf16 %v735
      %v752 = vunpack.c.l.bf16 %v736
      %v753 = vunpack.c.l.bf16 %v737
      %v754 = vunpack.c.l.bf16 %v738
      %v755 = vunpack.c.l.bf16 %v739
      %v756 = vunpack.c.l.bf16 %v740
      %v757 = vunpack.c.l.bf16 %v741
      %v758 = vunpack.c.l.bf16 %v742
      %v759 = vunpack.c.l.bf16 %v743
      %v760 = vunpack.c.l.bf16 %v744
      %v761 = vunpack.c.l.bf16 %v745
      %v762 = vunpack.c.l.bf16 %v746
      %v763 = vunpack.c.l.bf16 %v747
      %v764 = vunpack.c.l.bf16 %v748
      %v781 = vrot.slane %v749, 1
      %v782 = vrot.slane %v750, 1
      %v783 = vsel %vm239, %v781, %v782
      %v784 = vrot.slane %v751, 1
      %v785 = vrot.slane %v752, 1
      %v786 = vsel %vm239, %v784, %v785
      %v787 = vrot.slane %v753, 1
      %v788 = vrot.slane %v754, 1
      %v789 = vsel %vm239, %v787, %v788
      %v790 = vrot.slane %v755, 1
      %v791 = vrot.slane %v756, 1
      %v792 = vsel %vm239, %v790, %v791
      %v793 = vrot.slane %v757, 1
      %v794 = vrot.slane %v758, 1
      %v795 = vsel %vm239, %v793, %v794
      %v796 = vrot.slane %v759, 1
      %v797 = vrot.slane %v760, 1
      %v798 = vsel %vm239, %v796, %v797
      %v799 = vrot.slane %v761, 1
      %v800 = vrot.slane %v762, 1
      %v801 = vsel %vm239, %v799, %v800
      %v802 = vrot.slane %v763, 1
      %v803 = vrot.slane %v764, 1
      %v804 = vsel %vm239, %v802, %v803
      %v813 = vpack.c.bf16 %v786, %v783
      %v814 = vpack.c.bf16 %v792, %v789
      %v815 = vpack.c.bf16 %v798, %v795
      %v816 = vpack.c.bf16 %v804, %v801
      %s817 = scalar_lea.vmem %s1, 256
      %v818 = vld [vmem:[%s817] sm:$0xf]
      %v819 = vld [vmem:[%s817 + $0x4] sm:$0xf]
      %v820 = vld [vmem:[%s817 + $0x8] sm:$0xf]
      %v821 = vld [vmem:[%s817 + $0xc] sm:$0xf]
      %v822 = vld [vmem:[%s817 + $0x10] sm:$0xf]
      %v823 = vld [vmem:[%s817 + $0x14] sm:$0xf]
      %v824 = vld [vmem:[%s817 + $0x18] sm:$0xf]
      %v825 = vld [vmem:[%s817 + $0x1c] sm:$0xf]
      %v826 = vld [vmem:[%s817 + $0x20] sm:$0xf]
      %v827 = vld [vmem:[%s817 + $0x24] sm:$0xf]
      %v828 = vld [vmem:[%s817 + $0x28] sm:$0xf]
      %v829 = vld [vmem:[%s817 + $0x2c] sm:$0xf]
      %v830 = vld [vmem:[%s817 + $0x30] sm:$0xf]
      %v831 = vld [vmem:[%s817 + $0x34] sm:$0xf]
      %v832 = vld [vmem:[%s817 + $0x38] sm:$0xf]
      %v833 = vld [vmem:[%s817 + $0x3c] sm:$0xf]
      %v850 = vunpack.c.l.b16 %v818
      %v851 = vunpack.c.l.b16 %v819
      %v852 = vunpack.c.l.b16 %v820
      %v853 = vunpack.c.l.b16 %v821
      %v854 = vunpack.c.l.b16 %v822
      %v855 = vunpack.c.l.b16 %v823
      %v856 = vunpack.c.l.b16 %v824
      %v857 = vunpack.c.l.b16 %v825
      %v858 = vunpack.c.l.b16 %v826
      %v859 = vunpack.c.l.b16 %v827
      %v860 = vunpack.c.l.b16 %v828
      %v861 = vunpack.c.l.b16 %v829
      %v862 = vunpack.c.l.b16 %v830
      %v863 = vunpack.c.l.b16 %v831
      %v864 = vunpack.c.l.b16 %v832
      %v865 = vunpack.c.l.b16 %v833
      %v866 = vpack.c.b16 %v851, %v850
      %v867 = vpack.c.b16 %v853, %v852
      %v868 = vpack.c.b16 %v855, %v854
      %v869 = vpack.c.b16 %v857, %v856
      %v870 = vpack.c.b16 %v859, %v858
      %v871 = vpack.c.b16 %v861, %v860
      %v872 = vpack.c.b16 %v863, %v862
      %v873 = vpack.c.b16 %v865, %v864
      %882 = vmatpush.bf16.msra.mxu0 %v873
      %883 = vmatpush.bf16.msra.mxu0 %v872
      %884 = vmatpush.bf16.msra.mxu0 %v871
      %885 = vmatpush.bf16.msra.mxu0 %v870
      %886 = vmatpush.bf16.msra.mxu0 %v869
      %887 = vmatpush.bf16.msra.mxu0 %v868
      %888 = vmatpush.bf16.msra.mxu0 %v867
      %889 = vmatpush.bf16.msra.mxu0 %v866
      %890 = vmatmul.bf16.gmra.mxu0 %v813
      %v891 = vpop.f32.mrf.mxu0
      %v892 = vadd.f32 0.0, %v891
      %v893 = vpop.f32.mrf.mxu0
      %v894 = vadd.f32 0.0, %v893
      %895 = vmatmul.bf16.gmra.mxu0 %v814
      %v896 = vpop.f32.mrf.mxu0
      %v897 = vadd.f32 0.0, %v896
      %v898 = vpop.f32.mrf.mxu0
      %v899 = vadd.f32 0.0, %v898
      %900 = vmatmul.bf16.gmra.mxu0 %v815
      %v901 = vpop.f32.mrf.mxu0
      %v902 = vadd.f32 0.0, %v901
      %v903 = vpop.f32.mrf.mxu0
      %v904 = vadd.f32 0.0, %v903
      %905 = vmatmul.bf16.gmra.mxu0 %v816
      %v906 = vpop.f32.mrf.mxu0
      %v907 = vadd.f32 0.0, %v906
      %v908 = vpop.f32.mrf.mxu0
      %v909 = vadd.f32 0.0, %v908
      %910 = vdwg.mxu0
      %v911 = vadd.f32 %v725, %v892
      %v912 = vadd.f32 %v726, %v894
      %v913 = vadd.f32 %v727, %v897
      %v914 = vadd.f32 %v728, %v899
      %v915 = vadd.f32 %v729, %v902
      %v916 = vadd.f32 %v730, %v904
      %v917 = vadd.f32 %v731, %v907
      %v918 = vadd.f32 %v732, %v909
      %v919 = vld [vmem:[%s610] sm:$0xe]
      %v920 = vld [vmem:[%s610 + $0x8] sm:$0xe]
      %v921 = vld [vmem:[%s610 + $0x10] sm:$0xe]
      %v922 = vld [vmem:[%s610 + $0x18] sm:$0xe]
      %v923 = vld [vmem:[%s610 + $0x20] sm:$0xe]
      %v924 = vld [vmem:[%s610 + $0x28] sm:$0xe]
      %v925 = vld [vmem:[%s610 + $0x30] sm:$0xe]
      %v926 = vld [vmem:[%s610 + $0x38] sm:$0xe]
      %v927 = vunpack.c.l.bf16 %v919
      %v928 = vunpack.c.l.bf16 %v920
      %v929 = vunpack.c.l.bf16 %v921
      %v930 = vunpack.c.l.bf16 %v922
      %v931 = vunpack.c.l.bf16 %v923
      %v932 = vunpack.c.l.bf16 %v924
      %v933 = vunpack.c.l.bf16 %v925
      %v934 = vunpack.c.l.bf16 %v926
      %v943 = vrot.slane %v927, 2
      %v944 = vrot.slane %v750, 2
      %v945 = vsel %vm471, %v943, %v944
      %v946 = vrot.slane %v928, 2
      %v947 = vrot.slane %v752, 2
      %v948 = vsel %vm471, %v946, %v947
      %v949 = vrot.slane %v929, 2
      %v950 = vrot.slane %v754, 2
      %v951 = vsel %vm471, %v949, %v950
      %v952 = vrot.slane %v930, 2
      %v953 = vrot.slane %v756, 2
      %v954 = vsel %vm471, %v952, %v953
      %v955 = vrot.slane %v931, 2
      %v956 = vrot.slane %v758, 2
      %v957 = vsel %vm471, %v955, %v956
      %v958 = vrot.slane %v932, 2
      %v959 = vrot.slane %v760, 2
      %v960 = vsel %vm471, %v958, %v959
      %v961 = vrot.slane %v933, 2
      %v962 = vrot.slane %v762, 2
      %v963 = vsel %vm471, %v961, %v962
      %v964 = vrot.slane %v934, 2
      %v965 = vrot.slane %v764, 2
      %v966 = vsel %vm471, %v964, %v965
      %v975 = vpack.c.bf16 %v948, %v945
      %v976 = vpack.c.bf16 %v954, %v951
      %v977 = vpack.c.bf16 %v960, %v957
      %v978 = vpack.c.bf16 %v966, %v963
      %s979 = scalar_lea.vmem %s1, 320
      %v980 = vld [vmem:[%s979] sm:$0xf]
      %v981 = vld [vmem:[%s979 + $0x4] sm:$0xf]
      %v982 = vld [vmem:[%s979 + $0x8] sm:$0xf]
      %v983 = vld [vmem:[%s979 + $0xc] sm:$0xf]
      %v984 = vld [vmem:[%s979 + $0x10] sm:$0xf]
      %v985 = vld [vmem:[%s979 + $0x14] sm:$0xf]
      %v986 = vld [vmem:[%s979 + $0x18] sm:$0xf]
      %v987 = vld [vmem:[%s979 + $0x1c] sm:$0xf]
      %v988 = vld [vmem:[%s979 + $0x20] sm:$0xf]
      %v989 = vld [vmem:[%s979 + $0x24] sm:$0xf]
      %v990 = vld [vmem:[%s979 + $0x28] sm:$0xf]
      %v991 = vld [vmem:[%s979 + $0x2c] sm:$0xf]
      %v992 = vld [vmem:[%s979 + $0x30] sm:$0xf]
      %v993 = vld [vmem:[%s979 + $0x34] sm:$0xf]
      %v994 = vld [vmem:[%s979 + $0x38] sm:$0xf]
      %v995 = vld [vmem:[%s979 + $0x3c] sm:$0xf]
      %v1012 = vunpack.c.l.b16 %v980
      %v1013 = vunpack.c.l.b16 %v981
      %v1014 = vunpack.c.l.b16 %v982
      %v1015 = vunpack.c.l.b16 %v983
      %v1016 = vunpack.c.l.b16 %v984
      %v1017 = vunpack.c.l.b16 %v985
      %v1018 = vunpack.c.l.b16 %v986
      %v1019 = vunpack.c.l.b16 %v987
      %v1020 = vunpack.c.l.b16 %v988
      %v1021 = vunpack.c.l.b16 %v989
      %v1022 = vunpack.c.l.b16 %v990
      %v1023 = vunpack.c.l.b16 %v991
      %v1024 = vunpack.c.l.b16 %v992
      %v1025 = vunpack.c.l.b16 %v993
      %v1026 = vunpack.c.l.b16 %v994
      %v1027 = vunpack.c.l.b16 %v995
      %v1028 = vpack.c.b16 %v1013, %v1012
      %v1029 = vpack.c.b16 %v1015, %v1014
      %v1030 = vpack.c.b16 %v1017, %v1016
      %v1031 = vpack.c.b16 %v1019, %v1018
      %v1032 = vpack.c.b16 %v1021, %v1020
      %v1033 = vpack.c.b16 %v1023, %v1022
      %v1034 = vpack.c.b16 %v1025, %v1024
      %v1035 = vpack.c.b16 %v1027, %v1026
      %1044 = vmatpush.bf16.msra.mxu0 %v1035
      %1045 = vmatpush.bf16.msra.mxu0 %v1034
      %1046 = vmatpush.bf16.msra.mxu0 %v1033
      %1047 = vmatpush.bf16.msra.mxu0 %v1032
      %1048 = vmatpush.bf16.msra.mxu0 %v1031
      %1049 = vmatpush.bf16.msra.mxu0 %v1030
      %1050 = vmatpush.bf16.msra.mxu0 %v1029
      %1051 = vmatpush.bf16.msra.mxu0 %v1028
      %1052 = vmatmul.bf16.gmra.mxu0 %v975
      %v1053 = vpop.f32.mrf.mxu0
      %v1054 = vadd.f32 0.0, %v1053
      %v1055 = vpop.f32.mrf.mxu0
      %v1056 = vadd.f32 0.0, %v1055
      %1057 = vmatmul.bf16.gmra.mxu0 %v976
      %v1058 = vpop.f32.mrf.mxu0
      %v1059 = vadd.f32 0.0, %v1058
      %v1060 = vpop.f32.mrf.mxu0
      %v1061 = vadd.f32 0.0, %v1060
      %1062 = vmatmul.bf16.gmra.mxu0 %v977
      %v1063 = vpop.f32.mrf.mxu0
      %v1064 = vadd.f32 0.0, %v1063
      %v1065 = vpop.f32.mrf.mxu0
      %v1066 = vadd.f32 0.0, %v1065
      %1067 = vmatmul.bf16.gmra.mxu0 %v978
      %v1068 = vpop.f32.mrf.mxu0
      %v1069 = vadd.f32 0.0, %v1068
      %v1070 = vpop.f32.mrf.mxu0
      %v1071 = vadd.f32 0.0, %v1070
      %1072 = vdwg.mxu0
      %v1073 = vadd.f32 %v911, %v1054
      %v1074 = vadd.f32 %v912, %v1056
      %v1075 = vadd.f32 %v913, %v1059
      %v1076 = vadd.f32 %v914, %v1061
      %v1077 = vadd.f32 %v915, %v1064
      %v1078 = vadd.f32 %v916, %v1066
      %v1079 = vadd.f32 %v917, %v1069
      %v1080 = vadd.f32 %v918, %v1071
      %s1081 = scalar_lea.vmem %s165, 16
      %v1082 = vld [vmem:[%s1081] sm:$0xf]
      %v1083 = vld [vmem:[%s1081 + $0x8] sm:$0xf]
      %v1084 = vld [vmem:[%s1081 + $0x10] sm:$0xf]
      %v1085 = vld [vmem:[%s1081 + $0x18] sm:$0xf]
      %v1086 = vld [vmem:[%s1081 + $0x20] sm:$0xf]
      %v1087 = vld [vmem:[%s1081 + $0x28] sm:$0xf]
      %v1088 = vld [vmem:[%s1081 + $0x30] sm:$0xf]
      %v1089 = vld [vmem:[%s1081 + $0x38] sm:$0xf]
      %v1090 = vunpack.c.l.bf16 %v1082
      %v1091 = vunpack.c.l.bf16 %v1083
      %v1092 = vunpack.c.l.bf16 %v1084
      %v1093 = vunpack.c.l.bf16 %v1085
      %v1094 = vunpack.c.l.bf16 %v1086
      %v1095 = vunpack.c.l.bf16 %v1087
      %v1096 = vunpack.c.l.bf16 %v1088
      %v1097 = vunpack.c.l.bf16 %v1089
      %v1098 = vpack.c.bf16 %v1091, %v1090
      %v1099 = vpack.c.bf16 %v1093, %v1092
      %v1100 = vpack.c.bf16 %v1095, %v1094
      %v1101 = vpack.c.bf16 %v1097, %v1096
      %s1102 = scalar_lea.vmem %s1, 384
      %v1103 = vld [vmem:[%s1102] sm:$0xf]
      %v1104 = vld [vmem:[%s1102 + $0x4] sm:$0xf]
      %v1105 = vld [vmem:[%s1102 + $0x8] sm:$0xf]
      %v1106 = vld [vmem:[%s1102 + $0xc] sm:$0xf]
      %v1107 = vld [vmem:[%s1102 + $0x10] sm:$0xf]
      %v1108 = vld [vmem:[%s1102 + $0x14] sm:$0xf]
      %v1109 = vld [vmem:[%s1102 + $0x18] sm:$0xf]
      %v1110 = vld [vmem:[%s1102 + $0x1c] sm:$0xf]
      %v1111 = vld [vmem:[%s1102 + $0x20] sm:$0xf]
      %v1112 = vld [vmem:[%s1102 + $0x24] sm:$0xf]
      %v1113 = vld [vmem:[%s1102 + $0x28] sm:$0xf]
      %v1114 = vld [vmem:[%s1102 + $0x2c] sm:$0xf]
      %v1115 = vld [vmem:[%s1102 + $0x30] sm:$0xf]
      %v1116 = vld [vmem:[%s1102 + $0x34] sm:$0xf]
      %v1117 = vld [vmem:[%s1102 + $0x38] sm:$0xf]
      %v1118 = vld [vmem:[%s1102 + $0x3c] sm:$0xf]
      %v1135 = vunpack.c.l.b16 %v1103
      %v1136 = vunpack.c.l.b16 %v1104
      %v1137 = vunpack.c.l.b16 %v1105
      %v1138 = vunpack.c.l.b16 %v1106
      %v1139 = vunpack.c.l.b16 %v1107
      %v1140 = vunpack.c.l.b16 %v1108
      %v1141 = vunpack.c.l.b16 %v1109
      %v1142 = vunpack.c.l.b16 %v1110
      %v1143 = vunpack.c.l.b16 %v1111
      %v1144 = vunpack.c.l.b16 %v1112
      %v1145 = vunpack.c.l.b16 %v1113
      %v1146 = vunpack.c.l.b16 %v1114
      %v1147 = vunpack.c.l.b16 %v1115
      %v1148 = vunpack.c.l.b16 %v1116
      %v1149 = vunpack.c.l.b16 %v1117
      %v1150 = vunpack.c.l.b16 %v1118
      %v1151 = vpack.c.b16 %v1136, %v1135
      %v1152 = vpack.c.b16 %v1138, %v1137
      %v1153 = vpack.c.b16 %v1140, %v1139
      %v1154 = vpack.c.b16 %v1142, %v1141
      %v1155 = vpack.c.b16 %v1144, %v1143
      %v1156 = vpack.c.b16 %v1146, %v1145
      %v1157 = vpack.c.b16 %v1148, %v1147
      %v1158 = vpack.c.b16 %v1150, %v1149
      %1167 = vmatpush.bf16.msra.mxu0 %v1158
      %1168 = vmatpush.bf16.msra.mxu0 %v1157
      %1169 = vmatpush.bf16.msra.mxu0 %v1156
      %1170 = vmatpush.bf16.msra.mxu0 %v1155
      %1171 = vmatpush.bf16.msra.mxu0 %v1154
      %1172 = vmatpush.bf16.msra.mxu0 %v1153
      %1173 = vmatpush.bf16.msra.mxu0 %v1152
      %1174 = vmatpush.bf16.msra.mxu0 %v1151
      %1175 = vmatmul.bf16.gmra.mxu0 %v1098
      %v1176 = vpop.f32.mrf.mxu0
      %v1177 = vadd.f32 0.0, %v1176
      %v1178 = vpop.f32.mrf.mxu0
      %v1179 = vadd.f32 0.0, %v1178
      %1180 = vmatmul.bf16.gmra.mxu0 %v1099
      %v1181 = vpop.f32.mrf.mxu0
      %v1182 = vadd.f32 0.0, %v1181
      %v1183 = vpop.f32.mrf.mxu0
      %v1184 = vadd.f32 0.0, %v1183
      %1185 = vmatmul.bf16.gmra.mxu0 %v1100
      %v1186 = vpop.f32.mrf.mxu0
      %v1187 = vadd.f32 0.0, %v1186
      %v1188 = vpop.f32.mrf.mxu0
      %v1189 = vadd.f32 0.0, %v1188
      %1190 = vmatmul.bf16.gmra.mxu0 %v1101
      %v1191 = vpop.f32.mrf.mxu0
      %v1192 = vadd.f32 0.0, %v1191
      %v1193 = vpop.f32.mrf.mxu0
      %v1194 = vadd.f32 0.0, %v1193
      %1195 = vdwg.mxu0
      %v1196 = vadd.f32 %v1073, %v1177
      %v1197 = vadd.f32 %v1074, %v1179
      %v1198 = vadd.f32 %v1075, %v1182
      %v1199 = vadd.f32 %v1076, %v1184
      %v1200 = vadd.f32 %v1077, %v1187
      %v1201 = vadd.f32 %v1078, %v1189
      %v1202 = vadd.f32 %v1079, %v1192
      %v1203 = vadd.f32 %v1080, %v1194
      %v1204 = vld [vmem:[%s1081] sm:$0xf]
      %v1205 = vld [vmem:[%s1081 + $0x4] sm:$0x1]
      %v1206 = vld [vmem:[%s1081 + $0x8] sm:$0xf]
      %v1207 = vld [vmem:[%s1081 + $0xc] sm:$0x1]
      %v1208 = vld [vmem:[%s1081 + $0x10] sm:$0xf]
      %v1209 = vld [vmem:[%s1081 + $0x14] sm:$0x1]
      %v1210 = vld [vmem:[%s1081 + $0x18] sm:$0xf]
      %v1211 = vld [vmem:[%s1081 + $0x1c] sm:$0x1]
      %v1212 = vld [vmem:[%s1081 + $0x20] sm:$0xf]
      %v1213 = vld [vmem:[%s1081 + $0x24] sm:$0x1]
      %v1214 = vld [vmem:[%s1081 + $0x28] sm:$0xf]
      %v1215 = vld [vmem:[%s1081 + $0x2c] sm:$0x1]
      %v1216 = vld [vmem:[%s1081 + $0x30] sm:$0xf]
      %v1217 = vld [vmem:[%s1081 + $0x34] sm:$0x1]
      %v1218 = vld [vmem:[%s1081 + $0x38] sm:$0xf]
      %v1219 = vld [vmem:[%s1081 + $0x3c] sm:$0x1]
      %v1220 = vunpack.c.l.bf16 %v1204
      %v1221 = vunpack.c.l.bf16 %v1205
      %v1222 = vunpack.c.l.bf16 %v1206
      %v1223 = vunpack.c.l.bf16 %v1207
      %v1224 = vunpack.c.l.bf16 %v1208
      %v1225 = vunpack.c.l.bf16 %v1209
      %v1226 = vunpack.c.l.bf16 %v1210
      %v1227 = vunpack.c.l.bf16 %v1211
      %v1228 = vunpack.c.l.bf16 %v1212
      %v1229 = vunpack.c.l.bf16 %v1213
      %v1230 = vunpack.c.l.bf16 %v1214
      %v1231 = vunpack.c.l.bf16 %v1215
      %v1232 = vunpack.c.l.bf16 %v1216
      %v1233 = vunpack.c.l.bf16 %v1217
      %v1234 = vunpack.c.l.bf16 %v1218
      %v1235 = vunpack.c.l.bf16 %v1219
      %v1252 = vrot.slane %v1220, 1
      %v1253 = vrot.slane %v1221, 1
      %v1254 = vsel %vm239, %v1252, %v1253
      %v1255 = vrot.slane %v1222, 1
      %v1256 = vrot.slane %v1223, 1
      %v1257 = vsel %vm239, %v1255, %v1256
      %v1258 = vrot.slane %v1224, 1
      %v1259 = vrot.slane %v1225, 1
      %v1260 = vsel %vm239, %v1258, %v1259
      %v1261 = vrot.slane %v1226, 1
      %v1262 = vrot.slane %v1227, 1
      %v1263 = vsel %vm239, %v1261, %v1262
      %v1264 = vrot.slane %v1228, 1
      %v1265 = vrot.slane %v1229, 1
      %v1266 = vsel %vm239, %v1264, %v1265
      %v1267 = vrot.slane %v1230, 1
      %v1268 = vrot.slane %v1231, 1
      %v1269 = vsel %vm239, %v1267, %v1268
      %v1270 = vrot.slane %v1232, 1
      %v1271 = vrot.slane %v1233, 1
      %v1272 = vsel %vm239, %v1270, %v1271
      %v1273 = vrot.slane %v1234, 1
      %v1274 = vrot.slane %v1235, 1
      %v1275 = vsel %vm239, %v1273, %v1274
      %v1284 = vpack.c.bf16 %v1257, %v1254
      %v1285 = vpack.c.bf16 %v1263, %v1260
      %v1286 = vpack.c.bf16 %v1269, %v1266
      %v1287 = vpack.c.bf16 %v1275, %v1272
      %s1288 = scalar_lea.vmem %s1, 448
      %v1289 = vld [vmem:[%s1288] sm:$0xf]
      %v1290 = vld [vmem:[%s1288 + $0x4] sm:$0xf]
      %v1291 = vld [vmem:[%s1288 + $0x8] sm:$0xf]
      %v1292 = vld [vmem:[%s1288 + $0xc] sm:$0xf]
      %v1293 = vld [vmem:[%s1288 + $0x10] sm:$0xf]
      %v1294 = vld [vmem:[%s1288 + $0x14] sm:$0xf]
      %v1295 = vld [vmem:[%s1288 + $0x18] sm:$0xf]
      %v1296 = vld [vmem:[%s1288 + $0x1c] sm:$0xf]
      %v1297 = vld [vmem:[%s1288 + $0x20] sm:$0xf]
      %v1298 = vld [vmem:[%s1288 + $0x24] sm:$0xf]
      %v1299 = vld [vmem:[%s1288 + $0x28] sm:$0xf]
      %v1300 = vld [vmem:[%s1288 + $0x2c] sm:$0xf]
      %v1301 = vld [vmem:[%s1288 + $0x30] sm:$0xf]
      %v1302 = vld [vmem:[%s1288 + $0x34] sm:$0xf]
      %v1303 = vld [vmem:[%s1288 + $0x38] sm:$0xf]
      %v1304 = vld [vmem:[%s1288 + $0x3c] sm:$0xf]
      %v1321 = vunpack.c.l.b16 %v1289
      %v1322 = vunpack.c.l.b16 %v1290
      %v1323 = vunpack.c.l.b16 %v1291
      %v1324 = vunpack.c.l.b16 %v1292
      %v1325 = vunpack.c.l.b16 %v1293
      %v1326 = vunpack.c.l.b16 %v1294
      %v1327 = vunpack.c.l.b16 %v1295
      %v1328 = vunpack.c.l.b16 %v1296
      %v1329 = vunpack.c.l.b16 %v1297
      %v1330 = vunpack.c.l.b16 %v1298
      %v1331 = vunpack.c.l.b16 %v1299
      %v1332 = vunpack.c.l.b16 %v1300
      %v1333 = vunpack.c.l.b16 %v1301
      %v1334 = vunpack.c.l.b16 %v1302
      %v1335 = vunpack.c.l.b16 %v1303
      %v1336 = vunpack.c.l.b16 %v1304
      %v1337 = vpack.c.b16 %v1322, %v1321
      %v1338 = vpack.c.b16 %v1324, %v1323
      %v1339 = vpack.c.b16 %v1326, %v1325
      %v1340 = vpack.c.b16 %v1328, %v1327
      %v1341 = vpack.c.b16 %v1330, %v1329
      %v1342 = vpack.c.b16 %v1332, %v1331
      %v1343 = vpack.c.b16 %v1334, %v1333
      %v1344 = vpack.c.b16 %v1336, %v1335
      %1353 = vmatpush.bf16.msra.mxu0 %v1344
      %1354 = vmatpush.bf16.msra.mxu0 %v1343
      %1355 = vmatpush.bf16.msra.mxu0 %v1342
      %1356 = vmatpush.bf16.msra.mxu0 %v1341
      %1357 = vmatpush.bf16.msra.mxu0 %v1340
      %1358 = vmatpush.bf16.msra.mxu0 %v1339
      %1359 = vmatpush.bf16.msra.mxu0 %v1338
      %1360 = vmatpush.bf16.msra.mxu0 %v1337
      %1361 = vmatmul.bf16.gmra.mxu0 %v1284
      %v1362 = vpop.f32.mrf.mxu0
      %v1363 = vadd.f32 0.0, %v1362
      %v1364 = vpop.f32.mrf.mxu0
      %v1365 = vadd.f32 0.0, %v1364
      %1366 = vmatmul.bf16.gmra.mxu0 %v1285
      %v1367 = vpop.f32.mrf.mxu0
      %v1368 = vadd.f32 0.0, %v1367
      %v1369 = vpop.f32.mrf.mxu0
      %v1370 = vadd.f32 0.0, %v1369
      %1371 = vmatmul.bf16.gmra.mxu0 %v1286
      %v1372 = vpop.f32.mrf.mxu0
      %v1373 = vadd.f32 0.0, %v1372
      %v1374 = vpop.f32.mrf.mxu0
      %v1375 = vadd.f32 0.0, %v1374
      %1376 = vmatmul.bf16.gmra.mxu0 %v1287
      %v1377 = vpop.f32.mrf.mxu0
      %v1378 = vadd.f32 0.0, %v1377
      %v1379 = vpop.f32.mrf.mxu0
      %v1380 = vadd.f32 0.0, %v1379
      %1381 = vdwg.mxu0
      %v1382 = vadd.f32 %v1196, %v1363
      %v1383 = vadd.f32 %v1197, %v1365
      %v1384 = vadd.f32 %v1198, %v1368
      %v1385 = vadd.f32 %v1199, %v1370
      %v1386 = vadd.f32 %v1200, %v1373
      %v1387 = vadd.f32 %v1201, %v1375
      %v1388 = vadd.f32 %v1202, %v1378
      %v1389 = vadd.f32 %v1203, %v1380
      %v1390 = vld [vmem:[%s1081] sm:$0xe]
      %v1391 = vld [vmem:[%s1081 + $0x8] sm:$0xe]
      %v1392 = vld [vmem:[%s1081 + $0x10] sm:$0xe]
      %v1393 = vld [vmem:[%s1081 + $0x18] sm:$0xe]
      %v1394 = vld [vmem:[%s1081 + $0x20] sm:$0xe]
      %v1395 = vld [vmem:[%s1081 + $0x28] sm:$0xe]
      %v1396 = vld [vmem:[%s1081 + $0x30] sm:$0xe]
      %v1397 = vld [vmem:[%s1081 + $0x38] sm:$0xe]
      %v1398 = vunpack.c.l.bf16 %v1390
      %v1399 = vunpack.c.l.bf16 %v1391
      %v1400 = vunpack.c.l.bf16 %v1392
      %v1401 = vunpack.c.l.bf16 %v1393
      %v1402 = vunpack.c.l.bf16 %v1394
      %v1403 = vunpack.c.l.bf16 %v1395
      %v1404 = vunpack.c.l.bf16 %v1396
      %v1405 = vunpack.c.l.bf16 %v1397
      %v1414 = vrot.slane %v1398, 2
      %v1415 = vrot.slane %v1221, 2
      %v1416 = vsel %vm471, %v1414, %v1415
      %v1417 = vrot.slane %v1399, 2
      %v1418 = vrot.slane %v1223, 2
      %v1419 = vsel %vm471, %v1417, %v1418
      %v1420 = vrot.slane %v1400, 2
      %v1421 = vrot.slane %v1225, 2
      %v1422 = vsel %vm471, %v1420, %v1421
      %v1423 = vrot.slane %v1401, 2
      %v1424 = vrot.slane %v1227, 2
      %v1425 = vsel %vm471, %v1423, %v1424
      %v1426 = vrot.slane %v1402, 2
      %v1427 = vrot.slane %v1229, 2
      %v1428 = vsel %vm471, %v1426, %v1427
      %v1429 = vrot.slane %v1403, 2
      %v1430 = vrot.slane %v1231, 2
      %v1431 = vsel %vm471, %v1429, %v1430
      %v1432 = vrot.slane %v1404, 2
      %v1433 = vrot.slane %v1233, 2
      %v1434 = vsel %vm471, %v1432, %v1433
      %v1435 = vrot.slane %v1405, 2
      %v1436 = vrot.slane %v1235, 2
      %v1437 = vsel %vm471, %v1435, %v1436
      %v1446 = vpack.c.bf16 %v1419, %v1416
      %v1447 = vpack.c.bf16 %v1425, %v1422
      %v1448 = vpack.c.bf16 %v1431, %v1428
      %v1449 = vpack.c.bf16 %v1437, %v1434
      %s1450 = scalar_lea.vmem %s1, 512
      %v1451 = vld [vmem:[%s1450] sm:$0xf]
      %v1452 = vld [vmem:[%s1450 + $0x4] sm:$0xf]
      %v1453 = vld [vmem:[%s1450 + $0x8] sm:$0xf]
      %v1454 = vld [vmem:[%s1450 + $0xc] sm:$0xf]
      %v1455 = vld [vmem:[%s1450 + $0x10] sm:$0xf]
      %v1456 = vld [vmem:[%s1450 + $0x14] sm:$0xf]
      %v1457 = vld [vmem:[%s1450 + $0x18] sm:$0xf]
      %v1458 = vld [vmem:[%s1450 + $0x1c] sm:$0xf]
      %v1459 = vld [vmem:[%s1450 + $0x20] sm:$0xf]
      %v1460 = vld [vmem:[%s1450 + $0x24] sm:$0xf]
      %v1461 = vld [vmem:[%s1450 + $0x28] sm:$0xf]
      %v1462 = vld [vmem:[%s1450 + $0x2c] sm:$0xf]
      %v1463 = vld [vmem:[%s1450 + $0x30] sm:$0xf]
      %v1464 = vld [vmem:[%s1450 + $0x34] sm:$0xf]
      %v1465 = vld [vmem:[%s1450 + $0x38] sm:$0xf]
      %v1466 = vld [vmem:[%s1450 + $0x3c] sm:$0xf]
      %v1483 = vunpack.c.l.b16 %v1451
      %v1484 = vunpack.c.l.b16 %v1452
      %v1485 = vunpack.c.l.b16 %v1453
      %v1486 = vunpack.c.l.b16 %v1454
      %v1487 = vunpack.c.l.b16 %v1455
      %v1488 = vunpack.c.l.b16 %v1456
      %v1489 = vunpack.c.l.b16 %v1457
      %v1490 = vunpack.c.l.b16 %v1458
      %v1491 = vunpack.c.l.b16 %v1459
      %v1492 = vunpack.c.l.b16 %v1460
      %v1493 = vunpack.c.l.b16 %v1461
      %v1494 = vunpack.c.l.b16 %v1462
      %v1495 = vunpack.c.l.b16 %v1463
      %v1496 = vunpack.c.l.b16 %v1464
      %v1497 = vunpack.c.l.b16 %v1465
      %v1498 = vunpack.c.l.b16 %v1466
      %v1499 = vpack.c.b16 %v1484, %v1483
      %v1500 = vpack.c.b16 %v1486, %v1485
      %v1501 = vpack.c.b16 %v1488, %v1487
      %v1502 = vpack.c.b16 %v1490, %v1489
      %v1503 = vpack.c.b16 %v1492, %v1491
      %v1504 = vpack.c.b16 %v1494, %v1493
      %v1505 = vpack.c.b16 %v1496, %v1495
      %v1506 = vpack.c.b16 %v1498, %v1497
      %1515 = vmatpush.bf16.msra.mxu0 %v1506
      %1516 = vmatpush.bf16.msra.mxu0 %v1505
      %1517 = vmatpush.bf16.msra.mxu0 %v1504
      %1518 = vmatpush.bf16.msra.mxu0 %v1503
      %1519 = vmatpush.bf16.msra.mxu0 %v1502
      %1520 = vmatpush.bf16.msra.mxu0 %v1501
      %1521 = vmatpush.bf16.msra.mxu0 %v1500
      %1522 = vmatpush.bf16.msra.mxu0 %v1499
      %1523 = vmatmul.bf16.gmra.mxu0 %v1446
      %v1524 = vpop.f32.mrf.mxu0
      %v1525 = vadd.f32 0.0, %v1524
      %v1526 = vpop.f32.mrf.mxu0
      %v1527 = vadd.f32 0.0, %v1526
      %1528 = vmatmul.bf16.gmra.mxu0 %v1447
      %v1529 = vpop.f32.mrf.mxu0
      %v1530 = vadd.f32 0.0, %v1529
      %v1531 = vpop.f32.mrf.mxu0
      %v1532 = vadd.f32 0.0, %v1531
      %1533 = vmatmul.bf16.gmra.mxu0 %v1448
      %v1534 = vpop.f32.mrf.mxu0
      %v1535 = vadd.f32 0.0, %v1534
      %v1536 = vpop.f32.mrf.mxu0
      %v1537 = vadd.f32 0.0, %v1536
      %1538 = vmatmul.bf16.gmra.mxu0 %v1449
      %v1539 = vpop.f32.mrf.mxu0
      %v1540 = vadd.f32 0.0, %v1539
      %v1541 = vpop.f32.mrf.mxu0
      %v1542 = vadd.f32 0.0, %v1541
      %1543 = vdwg.mxu0
      %v1544 = vadd.f32 %v1382, %v1525
      %v1545 = vadd.f32 %v1383, %v1527
      %v1546 = vadd.f32 %v1384, %v1530
      %v1547 = vadd.f32 %v1385, %v1532
      %v1548 = vadd.f32 %v1386, %v1535
      %v1549 = vadd.f32 %v1387, %v1537
      %v1550 = vadd.f32 %v1388, %v1540
      %v1551 = vadd.f32 %v1389, %v1542
      %v1552 = vld [vmem:[%s2] sm:$0x1]
      %v1554 = vperm.slane %v1552, 0
      %v1556 = vadd.f32 %v1544, %v1554
      %v1557 = vadd.f32 %v1545, %v1554
      %v1558 = vadd.f32 %v1546, %v1554
      %v1559 = vadd.f32 %v1547, %v1554
      %v1560 = vadd.f32 %v1548, %v1554
      %v1561 = vadd.f32 %v1549, %v1554
      %v1562 = vadd.f32 %v1550, %v1554
      %v1563 = vadd.f32 %v1551, %v1554
      %v1564 = vmax.f32 %v1556, 0.0
      %v1565 = vmax.f32 %v1557, 0.0
      %v1566 = vmax.f32 %v1558, 0.0
      %v1567 = vmax.f32 %v1559, 0.0
      %v1568 = vmax.f32 %v1560, 0.0
      %v1569 = vmax.f32 %v1561, 0.0
      %v1570 = vmax.f32 %v1562, 0.0
      %v1571 = vmax.f32 %v1563, 0.0
      %v1572 = vpack.c.bf16 %v1564, %v1564
      %v1573 = vpack.c.bf16 %v1565, %v1565
      %v1574 = vpack.c.bf16 %v1566, %v1566
      %v1575 = vpack.c.bf16 %v1567, %v1567
      %v1576 = vpack.c.bf16 %v1568, %v1568
      %v1577 = vpack.c.bf16 %v1569, %v1569
      %v1578 = vpack.c.bf16 %v1570, %v1570
      %v1579 = vpack.c.bf16 %v1571, %v1571
      %1580 = vst [vmem:[%s170] sm:$0xf] %v1572
      %1581 = vst [vmem:[%s170 + $0x4] sm:$0xf] %v1573
      %1582 = vst [vmem:[%s170 + $0x8] sm:$0xf] %v1574
      %1583 = vst [vmem:[%s170 + $0xc] sm:$0xf] %v1575
      %1584 = vst [vmem:[%s170 + $0x10] sm:$0xf] %v1576
      %1585 = vst [vmem:[%s170 + $0x14] sm:$0xf] %v1577
      %1586 = vst [vmem:[%s170 + $0x18] sm:$0xf] %v1578
      %1587 = vst [vmem:[%s170 + $0x1c] sm:$0xf] %v1579
      %p1588 = scmp.lt.s32.totalorder %s14, 1
      %s1589 = scalar_select %p1588, %s14, 1
      %s1590 = smul.addr %s1589, 8
      %s1591 = smul.addr %s1590, 4
      %s1592 = scalar_lea.vmem %s3, %s1591
      // Predicated region
      $region33: #{griddy_forward.7} parent=31 // pred_check
        %p1593 = pneg %p100
      $region34: #{griddy_forward.7} parent=31 // pred_check_branch
        %1595 = sbr.rel (%p1593) target = $region36
      $region35: #{griddy_forward.7} parent=31 // pred_region
        _
      $region36: #{griddy_forward.7} parent=31 // pred_fallthru
        _
    $region32: #{griddy_forward.7} parent=5 // pred_fallthru
      _
    %p1596 = scmp.le.s32.totalorder 2, %s9
    // Predicated region
    $region37: #{griddy_forward.7} parent=5 // pred_check
      %p1597 = pneg %p1596
    $region38: #{griddy_forward.7} parent=5 // pred_check_branch
      %1599 = sbr.rel (%p1597) target = $region40
    $region39: #{griddy_forward.7} parent=5 // pred_region
      %s1600 = ssub.s32 %s9, 2
      // Predicated region
      $region41: #{griddy_forward.7} parent=39 // pred_check
        %p1601 = pneg %p106
      $region42: #{griddy_forward.7} parent=39 // pred_check_branch
        %1603 = sbr.rel (%p1601) target = $region44
      $region43: #{griddy_forward.7} parent=39 // pred_region
        %p1604 = scmp.lt.s32.totalorder %s15, 1
        %s1605 = scalar_select %p1604, %s15, 1
        %s1606 = smul.addr %s1605, 8
        %s1607 = smul.addr %s1606, 4
        %s1608 = scalar_lea.vmem %s3, %s1607
      $region44: #{griddy_forward.7} parent=39 // pred_fallthru
        _
    $region40: #{griddy_forward.7} parent=5 // pred_fallthru
      _
  $region6: #{griddy_forward.7} parent=0 // loop_footer
    %s13 = sadd.s32 1, %s9
  $region7: #{griddy_forward.7} parent=0 // loop_footer_branch
    %8 = sbr.rel target = $region3
  $region8: #{griddy_forward.7} parent=0 // loop_exit
    _

// kernel: griddy_forward.8
$region0: #{griddy_forward.8}
  #allocation0 [shape = 'u32[]', space=smem, size = 0x4, offset = 0x4, fixed_abs, tag = 'smem constant byte address 0x4 - core index']
  #allocation1 [shape = 'u32[72,128]{1,0:T(1,128)}', space=vmem, size = 0x9000, scoped, tag = 'internal scratch']
  #allocation2 [shape = 'f32[32,128]{1,0:T(8,128)}', space=vmem, size = 0x4000, scoped, tag = 'scratch operand']
  %s0 = inlined_call_operand.vmem [shape: bf16[2,10,10,128], index: 0, kind: input, shape index: {}]
  %s1 = inlined_call_operand.hbm [shape: bf16[9,128,128], index: 1, kind: input, shape index: {}]
  %s2 = inlined_call_operand.vmem [shape: f32[1,128], index: 2, kind: input, shape index: {}]
  %s3 = inlined_call_operand.vmem [shape: bf16[2,16,128], index: 3, kind: output, shape index: {}]
  %s4 = sld [smem:[#allocation0]]
  $region49: #{griddy_forward.8} parent=0
    _
  %s6 = ssub.s32 1, %s4
  %s7 = scalar_select 0, %s6, %s4
  $region1: #{griddy_forward.8} parent=0
    #allocation3 [shape = 'u8[294912]{0}', space=vmem, size = 0x48000, scoped, tag = 'input window, operand 1, single buffered']
    #allocation4 [shape = 's32[2]{0}', space=sflag, size = 0x8, scoped, tag = 'scoped memory for griddy_forward.8']
    %8 = vsyncpa [#allocation4], 0
    loop: start=0, step=1, limit=4
    $region2: #{griddy_forward.8} parent=1 // loop_pre_header
      _
    $region3: #{griddy_forward.8} parent=1 // loop_header
      %s10 = sphi 0, %s14
      %p11 = scmp.ge.s32.totalorder %s10, 4
      %s20 = sphi 0, %s22
      %s23 = sphi 0, %s20
      %s24 = sphi 0, %s23
      %s40 = sphi 0, %s24
      %s44 = sphi 0, %s44
      %s46 = sphi 0, %s44
      %s47 = sphi 0, %s46
      %s61 = sphi 0, %s47
      %s65 = sphi 0, %s65
      %s67 = sphi 0, %s65
      %s68 = sphi 0, %s67
      %s82 = sphi 0, %s68
      %s88 = sphi 0, %s90
      %s91 = sphi 0, %s88
      %s92 = sphi 0, %s91
      %s108 = sphi 0, %s92
    $region4: #{griddy_forward.8} parent=1 // loop_header_branch
      %13 = sbr.rel (%p11) target = $region8
    $region5: #{griddy_forward.8} parent=1 // loop_body
      %s15 = ssub.s32 %s10, 1
      %s16 = ssub.s32 %s10, 2
      %s17 = sadd.s32 %s10, 1
      %s18 = ssub.s32 %s10, %s17
      %p19 = scmp.eq.s32.totalorder %s18, 0
      %s21 = sadd.s32 %s20, 1
      %s22 = scalar_select %p19, %s20, %s21
      %p25 = pneg %p19
      %p26 = scmp.eq.s32.totalorder %s10, 1
      %p27 = por %p25, %p26
      %p28 = scmp.ne.s32.totalorder %s20, %s23
      %p29 = scmp.eq.s32.totalorder %s10, 0
      %p30 = por %p28, %p29
      %p31 = scmp.ne.s32.totalorder %s20, %s23
      %p32 = scmp.eq.s32.totalorder %s15, 1
      %p33 = por %p31, %p32
      %p34 = scmp.ne.s32.totalorder %s23, %s24
      %p35 = scmp.eq.s32.totalorder %s15, 0
      %p36 = por %p34, %p35
      %p37 = scmp.ne.s32.totalorder %s23, %s24
      %p38 = scmp.eq.s32.totalorder %s16, 1
      %p39 = por %p37, %p38
      %p41 = scmp.ne.s32.totalorder %s24, %s40
      %p42 = scmp.eq.s32.totalorder %s16, 0
      %p43 = por %p41, %p42
      %s45 = sadd.s32 %s44, 1
      %p48 = scmp.eq.s32.totalorder %s10, 1
      %p49 = scmp.ne.s32.totalorder %s44, %s46
      %p50 = scmp.eq.s32.totalorder %s10, 0
      %p51 = por %p49, %p50
      %p52 = scmp.ne.s32.totalorder %s44, %s46
      %p53 = scmp.eq.s32.totalorder %s15, 1
      %p54 = por %p52, %p53
      %p55 = scmp.ne.s32.totalorder %s46, %s47
      %p56 = scmp.eq.s32.totalorder %s15, 0
      %p57 = por %p55, %p56
      %p58 = scmp.ne.s32.totalorder %s46, %s47
      %p59 = scmp.eq.s32.totalorder %s16, 1
      %p60 = por %p58, %p59
      %p62 = scmp.ne.s32.totalorder %s47, %s61
      %p63 = scmp.eq.s32.totalorder %s16, 0
      %p64 = por %p62, %p63
      %s66 = sadd.s32 %s65, 1
      %p69 = scmp.eq.s32.totalorder %s10, 1
      %p70 = scmp.ne.s32.totalorder %s65, %s67
      %p71 = scmp.eq.s32.totalorder %s10, 0
      %p72 = por %p70, %p71
      %p73 = scmp.ne.s32.totalorder %s65, %s67
      %p74 = scmp.eq.s32.totalorder %s15, 1
      %p75 = por %p73, %p74
      %p76 = scmp.ne.s32.totalorder %s67, %s68
      %p77 = scmp.eq.s32.totalorder %s15, 0
      %p78 = por %p76, %p77
      %p79 = scmp.ne.s32.totalorder %s67, %s68
      %p80 = scmp.eq.s32.totalorder %s16, 1
      %p81 = por %p79, %p80
      %p83 = scmp.ne.s32.totalorder %s68, %s82
      %p84 = scmp.eq.s32.totalorder %s16, 0
      %p85 = por %p83, %p84
      %s86 = ssub.s32 %s10, %s17
      %p87 = scmp.eq.s32.totalorder %s86, 0
      %s89 = sadd.s32 %s88, 1
      %s90 = scalar_select %p87, %s88, %s89
      %p93 = pneg %p87
      %p94 = scmp.eq.s32.totalorder %s10, 1
      %p95 = por %p93, %p94
      %p96 = scmp.ne.s32.totalorder %s88, %s91
      %p97 = scmp.eq.s32.totalorder %s10, 0
      %p98 = por %p96, %p97
      %p99 = scmp.ne.s32.totalorder %s88, %s91
      %p100 = scmp.eq.s32.totalorder %s15, 1
      %p101 = por %p99, %p100
      %p102 = scmp.ne.s32.totalorder %s91, %s92
      %p103 = scmp.eq.s32.totalorder %s15, 0
      %p104 = por %p102, %p103
      %p105 = scmp.ne.s32.totalorder %s91, %s92
      %p106 = scmp.eq.s32.totalorder %s16, 1
      %p107 = por %p105, %p106
      %p109 = scmp.ne.s32.totalorder %s92, %s108
      %p110 = scmp.eq.s32.totalorder %s16, 0
      %p111 = por %p109, %p110
      %p112 = scmp.le.s32.totalorder 1, %s10
      %p113 = scmp.lt.s32.totalorder %s10, 3
      %p114 = pnand %p112, %p113
      %p115 = pneg %p114
      // Predicated region
      $region9: #{griddy_forward.8} parent=5 // pred_check
        _
      $region10: #{griddy_forward.8} parent=5 // pred_check_branch
        %117 = sbr.rel (%p114) target = $region12
      $region11: #{griddy_forward.8} parent=5 // pred_region
        %s118 = ssub.s32 %s10, 1
        // Predicated region
        $region13: #{griddy_forward.8} parent=11 // pred_check
          %p119 = pneg %p57
        $region14: #{griddy_forward.8} parent=11 // pred_check_branch
          %121 = sbr.rel (%p119) target = $region16
        $region15: #{griddy_forward.8} parent=11 // pred_region
          %123 = vsyncadd [#allocation4], 0
          %s124 = sshll.u32 %s1, 4
          %s125 = int_to_ptr.hbm [resolvable:$true] %s124
          %s126 = sshll.u32 [#allocation3], 4
          %s127 = int_to_ptr.vmem [resolvable:$true] %s126
          %132 = dma.hbm_to_vmem [thread:$0]  %s125, 9216, %s127, [#allocation4], 64, 64, 4
        $region16: #{griddy_forward.8} parent=11 // pred_fallthru
          _
        // Predicated region
        $region17: #{griddy_forward.8} parent=11 // pred_check
          %p133 = pneg %p78
        $region18: #{griddy_forward.8} parent=11 // pred_check_branch
          %135 = sbr.rel (%p133) target = $region20
        $region19: #{griddy_forward.8} parent=11 // pred_region
          _
        $region20: #{griddy_forward.8} parent=11 // pred_fallthru
          _
      $region12: #{griddy_forward.8} parent=5 // pred_fallthru
        _
      %p136 = scmp.lt.s32.totalorder %s10, 2
      // Predicated region
      $region21: #{griddy_forward.8} parent=5 // pred_check
        %p137 = pneg %p136
      $region22: #{griddy_forward.8} parent=5 // pred_check_branch
        %139 = sbr.rel (%p137) target = $region24
      $region23: #{griddy_forward.8} parent=5 // pred_region
        // Predicated region
        $region25: #{griddy_forward.8} parent=23 // pred_check
          %p140 = pneg %p30
        $region26: #{griddy_forward.8} parent=23 // pred_check_branch
          %142 = sbr.rel (%p140) target = $region28
        $region27: #{griddy_forward.8} parent=23 // pred_region
          %p143 = scmp.lt.s32.totalorder %s10, 1
          %s144 = scalar_select %p143, %s10, 1
          %s145 = smul.addr %s144, 20
          %s146 = smul.addr %s145, 4
          %s147 = scalar_lea.vmem %s0, %s146
        $region28: #{griddy_forward.8} parent=23 // pred_fallthru
          _
      $region24: #{griddy_forward.8} parent=5 // pred_fallthru
        _
      %p148 = scmp.le.s32.totalorder 1, %s10
      %p149 = scmp.lt.s32.totalorder %s10, 3
      %p150 = pnand %p148, %p149
      %p151 = pneg %p150
      // Predicated region
      $region29: #{griddy_forward.8} parent=5 // pred_check
        _
      $region30: #{griddy_forward.8} parent=5 // pred_check_branch
        %153 = sbr.rel (%p150) target = $region32
      $region31: #{griddy_forward.8} parent=5 // pred_region
        %s154 = ssub.s32 %s10, 1
        // Predicated region
        $region33: #{griddy_forward.8} parent=31 // pred_check
          %p155 = pneg %p57
        $region34: #{griddy_forward.8} parent=31 // pred_check_branch
          %157 = sbr.rel (%p155) target = $region36
        $region35: #{griddy_forward.8} parent=31 // pred_region
          %159 = dma.done [#allocation4], 9216
        $region36: #{griddy_forward.8} parent=31 // pred_fallthru
          _
        %p160 = scmp.lt.s32.totalorder %s15, 1
        %s161 = scalar_select %p160, %s15, 1
        %s162 = smul.addr %s161, 20
        %s163 = smul.addr %s162, 4
        %s164 = scalar_lea.vmem %s0, %s163
        %p165 = pneg %p36
        %p166 = pneg %p33
        %p167 = pneg %p57
        %p168 = pneg %p54
        %p169 = pneg %p78
        %p170 = pneg %p75
        %p171 = pneg %p104
        %p172 = pneg %p101
        %p173 = scmp.lt.s32.totalorder %s15, 1
        %s174 = scalar_select %p173, %s15, 1
        %s175 = smul.addr %s174, 2
        %s176 = smul.addr %s175, 4
        %s177 = scalar_lea.vmem %s3, %s176
        %p178 = scmp.lt.s32.totalorder %s15, 1
        %s179 = scalar_select %p178, %s15, 1
        %s180 = smul.addr %s179, 20
        %s181 = smul.addr %s180, 4
        %s182 = scalar_lea.vmem %s0, %s181
        %p183 = scmp.lt.s32.totalorder %s15, 1
        %s184 = scalar_select %p183, %s15, 1
        %s185 = smul.addr %s184, 2
        %s186 = smul.addr %s185, 4
        %s187 = scalar_lea.vmem %s3, %s186
        %v188 = vld [vmem:[%s182] sm:$0xf]
        %v189 = vld [vmem:[%s182 + $0x8] sm:$0xf]
        %v190 = vld [vmem:[%s182 + $0x10] sm:$0xf]
        %v191 = vld [vmem:[%s182 + $0x18] sm:$0xf]
        %v192 = vld [vmem:[%s182 + $0x20] sm:$0xf]
        %v193 = vld [vmem:[%s182 + $0x28] sm:$0xf]
        %v194 = vld [vmem:[%s182 + $0x30] sm:$0xf]
        %v195 = vld [vmem:[%s182 + $0x38] sm:$0xf]
        %v196 = vunpack.c.l.bf16 %v188
        %v197 = vunpack.c.l.bf16 %v189
        %v198 = vunpack.c.l.bf16 %v190
        %v199 = vunpack.c.l.bf16 %v191
        %v200 = vunpack.c.l.bf16 %v192
        %v201 = vunpack.c.l.bf16 %v193
        %v202 = vunpack.c.l.bf16 %v194
        %v203 = vunpack.c.l.bf16 %v195
        %v204 = vpack.c.bf16 %v197, %v196
        %v205 = vpack.c.bf16 %v199, %v198
        %v206 = vpack.c.bf16 %v201, %v200
        %v207 = vpack.c.bf16 %v203, %v202
        %v208 = vld [vmem:[#allocation3] sm:$0xf]
        %v209 = vld [vmem:[#allocation3 + $0x4] sm:$0xf]
        %v210 = vld [vmem:[#allocation3 + $0x8] sm:$0xf]
        %v211 = vld [vmem:[#allocation3 + $0xc] sm:$0xf]
        %v212 = vld [vmem:[#allocation3 + $0x10] sm:$0xf]
        %v213 = vld [vmem:[#allocation3 + $0x14] sm:$0xf]
        %v214 = vld [vmem:[#allocation3 + $0x18] sm:$0xf]
        %v215 = vld [vmem:[#allocation3 + $0x1c] sm:$0xf]
        %v216 = vld [vmem:[#allocation3 + $0x20] sm:$0xf]
        %v217 = vld [vmem:[#allocation3 + $0x24] sm:$0xf]
        %v218 = vld [vmem:[#allocation3 + $0x28] sm:$0xf]
        %v219 = vld [vmem:[#allocation3 + $0x2c] sm:$0xf]
        %v220 = vld [vmem:[#allocation3 + $0x30] sm:$0xf]
        %v221 = vld [vmem:[#allocation3 + $0x34] sm:$0xf]
        %v222 = vld [vmem:[#allocation3 + $0x38] sm:$0xf]
        %v223 = vld [vmem:[#allocation3 + $0x3c] sm:$0xf]
        %v224 = vld [vmem:[%s182 + $0x4] sm:$0x1]
        %v225 = vld [vmem:[%s182 + $0xc] sm:$0x1]
        %v226 = vld [vmem:[%s182 + $0x14] sm:$0x1]
        %v227 = vld [vmem:[%s182 + $0x1c] sm:$0x1]
        %v228 = vld [vmem:[%s182 + $0x24] sm:$0x1]
        %v229 = vld [vmem:[%s182 + $0x2c] sm:$0x1]
        %v230 = vld [vmem:[%s182 + $0x34] sm:$0x1]
        %v231 = vld [vmem:[%s182 + $0x3c] sm:$0x1]
        %v232 = vunpack.c.l.bf16 %v224
        %v233 = vunpack.c.l.bf16 %v225
        %v234 = vunpack.c.l.bf16 %v226
        %v235 = vunpack.c.l.bf16 %v227
        %v236 = vunpack.c.l.bf16 %v228
        %v237 = vunpack.c.l.bf16 %v229
        %v238 = vunpack.c.l.bf16 %v230
        %v239 = vunpack.c.l.bf16 %v231
        %vm256 = vcmask 1046528
        %v257 = vrot.slane %v196, 1
        %v258 = vrot.slane %v232, 1
        %v259 = vsel %vm256, %v257, %v258
        %v260 = vrot.slane %v197, 1
        %v261 = vrot.slane %v233, 1
        %v262 = vsel %vm256, %v260, %v261
        %v263 = vrot.slane %v198, 1
        %v264 = vrot.slane %v234, 1
        %v265 = vsel %vm256, %v263, %v264
        %v266 = vrot.slane %v199, 1
        %v267 = vrot.slane %v235, 1
        %v268 = vsel %vm256, %v266, %v267
        %v269 = vrot.slane %v200, 1
        %v270 = vrot.slane %v236, 1
        %v271 = vsel %vm256, %v269, %v270
        %v272 = vrot.slane %v201, 1
        %v273 = vrot.slane %v237, 1
        %v274 = vsel %vm256, %v272, %v273
        %v275 = vrot.slane %v202, 1
        %v276 = vrot.slane %v238, 1
        %v277 = vsel %vm256, %v275, %v276
        %v278 = vrot.slane %v203, 1
        %v279 = vrot.slane %v239, 1
        %v280 = vsel %vm256, %v278, %v279
        %v289 = vpack.c.bf16 %v262, %v259
        %v290 = vpack.c.bf16 %v268, %v265
        %v291 = vpack.c.bf16 %v274, %v271
        %v292 = vpack.c.bf16 %v280, %v277
        %s293 = scalar_lea.vmem [#allocation3], 64
        %v294 = vld [vmem:[%s293] sm:$0xf]
        %v295 = vld [vmem:[%s293 + $0x4] sm:$0xf]
        %v296 = vld [vmem:[%s293 + $0x8] sm:$0xf]
        %v297 = vld [vmem:[%s293 + $0xc] sm:$0xf]
        %v298 = vld [vmem:[%s293 + $0x10] sm:$0xf]
        %v299 = vld [vmem:[%s293 + $0x14] sm:$0xf]
        %v300 = vld [vmem:[%s293 + $0x18] sm:$0xf]
        %v301 = vld [vmem:[%s293 + $0x1c] sm:$0xf]
        %v302 = vld [vmem:[%s293 + $0x20] sm:$0xf]
        %v303 = vld [vmem:[%s293 + $0x24] sm:$0xf]
        %v304 = vld [vmem:[%s293 + $0x28] sm:$0xf]
        %v305 = vld [vmem:[%s293 + $0x2c] sm:$0xf]
        %v306 = vld [vmem:[%s293 + $0x30] sm:$0xf]
        %v307 = vld [vmem:[%s293 + $0x34] sm:$0xf]
        %v308 = vld [vmem:[%s293 + $0x38] sm:$0xf]
        %v309 = vld [vmem:[%s293 + $0x3c] sm:$0xf]
        %v326 = vunpack.c.l.b16 %v294
        %v327 = vunpack.c.l.b16 %v295
        %v328 = vunpack.c.l.b16 %v296
        %v329 = vunpack.c.l.b16 %v297
        %v330 = vunpack.c.l.b16 %v298
        %v331 = vunpack.c.l.b16 %v299
        %v332 = vunpack.c.l.b16 %v300
        %v333 = vunpack.c.l.b16 %v301
        %v334 = vunpack.c.l.b16 %v302
        %v335 = vunpack.c.l.b16 %v303
        %v336 = vunpack.c.l.b16 %v304
        %v337 = vunpack.c.l.b16 %v305
        %v338 = vunpack.c.l.b16 %v306
        %v339 = vunpack.c.l.b16 %v307
        %v340 = vunpack.c.l.b16 %v308
        %v341 = vunpack.c.l.b16 %v309
        %v342 = vpack.c.b16 %v327, %v326
        %v343 = vpack.c.b16 %v329, %v328
        %v344 = vpack.c.b16 %v331, %v330
        %v345 = vpack.c.b16 %v333, %v332
        %v346 = vpack.c.b16 %v335, %v334
        %v347 = vpack.c.b16 %v337, %v336
        %v348 = vpack.c.b16 %v339, %v338
        %v349 = vpack.c.b16 %v341, %v340
        %358 = vmatpush.bf16.msra.mxu0 %v349
        %359 = vmatpush.bf16.msra.mxu0 %v348
        %360 = vmatpush.bf16.msra.mxu0 %v347
        %361 = vmatpush.bf16.msra.mxu0 %v346
        %362 = vmatpush.bf16.msra.mxu0 %v345
        %363 = vmatpush.bf16.msra.mxu0 %v344
        %364 = vmatpush.bf16.msra.mxu0 %v343
        %365 = vmatpush.bf16.msra.mxu0 %v342
        %366 = vmatmul.bf16.gmra.mxu0 %v289
        %v367 = vpop.f32.mrf.mxu0
        %v368 = vadd.f32 0.0, %v367
        %v369 = vpop.f32.mrf.mxu0
        %v370 = vadd.f32 0.0, %v369
        %371 = vmatmul.bf16.gmra.mxu0 %v290
        %v372 = vpop.f32.mrf.mxu0
        %v373 = vadd.f32 0.0, %v372
        %v374 = vpop.f32.mrf.mxu0
        %v375 = vadd.f32 0.0, %v374
        %376 = vmatmul.bf16.gmra.mxu0 %v291
        %v377 = vpop.f32.mrf.mxu0
        %v378 = vadd.f32 0.0, %v377
        %v379 = vpop.f32.mrf.mxu0
        %v380 = vadd.f32 0.0, %v379
        %381 = vmatmul.bf16.gmra.mxu0 %v292
        %v382 = vpop.f32.mrf.mxu0
        %v383 = vadd.f32 0.0, %v382
        %v384 = vpop.f32.mrf.mxu0
        %v385 = vadd.f32 0.0, %v384
        %386 = vdwg.mxu0
        %v403 = vunpack.c.l.b16 %v208
        %v404 = vunpack.c.l.b16 %v209
        %v405 = vunpack.c.l.b16 %v210
        %v406 = vunpack.c.l.b16 %v211
        %v407 = vunpack.c.l.b16 %v212
        %v408 = vunpack.c.l.b16 %v213
        %v409 = vunpack.c.l.b16 %v214
        %v410 = vunpack.c.l.b16 %v215
        %v411 = vunpack.c.l.b16 %v216
        %v412 = vunpack.c.l.b16 %v217
        %v413 = vunpack.c.l.b16 %v218
        %v414 = vunpack.c.l.b16 %v219
        %v415 = vunpack.c.l.b16 %v220
        %v416 = vunpack.c.l.b16 %v221
        %v417 = vunpack.c.l.b16 %v222
        %v418 = vunpack.c.l.b16 %v223
        %v419 = vpack.c.b16 %v404, %v403
        %v420 = vpack.c.b16 %v406, %v405
        %v421 = vpack.c.b16 %v408, %v407
        %v422 = vpack.c.b16 %v410, %v409
        %v423 = vpack.c.b16 %v412, %v411
        %v424 = vpack.c.b16 %v414, %v413
        %v425 = vpack.c.b16 %v416, %v415
        %v426 = vpack.c.b16 %v418, %v417
        %435 = vmatpush.bf16.msra.mxu0 %v426
        %436 = vmatpush.bf16.msra.mxu0 %v425
        %437 = vmatpush.bf16.msra.mxu0 %v424
        %438 = vmatpush.bf16.msra.mxu0 %v423
        %439 = vmatpush.bf16.msra.mxu0 %v422
        %440 = vmatpush.bf16.msra.mxu0 %v421
        %441 = vmatpush.bf16.msra.mxu0 %v420
        %442 = vmatpush.bf16.msra.mxu0 %v419
        %443 = vmatmul.bf16.gmra.mxu0 %v204
        %v444 = vpop.f32.mrf.mxu0
        %v445 = vadd.f32 %v368, %v444
        %v446 = vpop.f32.mrf.mxu0
        %v447 = vadd.f32 %v370, %v446
        %448 = vmatmul.bf16.gmra.mxu0 %v205
        %v449 = vpop.f32.mrf.mxu0
        %v450 = vadd.f32 %v373, %v449
        %v451 = vpop.f32.mrf.mxu0
        %v452 = vadd.f32 %v375, %v451
        %453 = vmatmul.bf16.gmra.mxu0 %v206
        %v454 = vpop.f32.mrf.mxu0
        %v455 = vadd.f32 %v378, %v454
        %v456 = vpop.f32.mrf.mxu0
        %v457 = vadd.f32 %v380, %v456
        %458 = vmatmul.bf16.gmra.mxu0 %v207
        %v459 = vpop.f32.mrf.mxu0
        %v460 = vadd.f32 %v383, %v459
        %v461 = vpop.f32.mrf.mxu0
        %v462 = vadd.f32 %v385, %v461
        %463 = vdwg.mxu0
        %v464 = vld [vmem:[%s182] sm:$0xe]
        %v465 = vld [vmem:[%s182 + $0x8] sm:$0xe]
        %v466 = vld [vmem:[%s182 + $0x10] sm:$0xe]
        %v467 = vld [vmem:[%s182 + $0x18] sm:$0xe]
        %v468 = vld [vmem:[%s182 + $0x20] sm:$0xe]
        %v469 = vld [vmem:[%s182 + $0x28] sm:$0xe]
        %v470 = vld [vmem:[%s182 + $0x30] sm:$0xe]
        %v471 = vld [vmem:[%s182 + $0x38] sm:$0xe]
        %v472 = vunpack.c.l.bf16 %v464
        %v473 = vunpack.c.l.bf16 %v465
        %v474 = vunpack.c.l.bf16 %v466
        %v475 = vunpack.c.l.bf16 %v467
        %v476 = vunpack.c.l.bf16 %v468
        %v477 = vunpack.c.l.bf16 %v469
        %v478 = vunpack.c.l.bf16 %v470
        %v479 = vunpack.c.l.bf16 %v471
        %vm488 = vcmask 1045504
        %v489 = vrot.slane %v472, 2
        %v490 = vrot.slane %v232, 2
        %v491 = vsel %vm488, %v489, %v490
        %v492 = vrot.slane %v473, 2
        %v493 = vrot.slane %v233, 2
        %v494 = vsel %vm488, %v492, %v493
        %v495 = vrot.slane %v474, 2
        %v496 = vrot.slane %v234, 2
        %v497 = vsel %vm488, %v495, %v496
        %v498 = vrot.slane %v475, 2
        %v499 = vrot.slane %v235, 2
        %v500 = vsel %vm488, %v498, %v499
        %v501 = vrot.slane %v476, 2
        %v502 = vrot.slane %v236, 2
        %v503 = vsel %vm488, %v501, %v502
        %v504 = vrot.slane %v477, 2
        %v505 = vrot.slane %v237, 2
        %v506 = vsel %vm488, %v504, %v505
        %v507 = vrot.slane %v478, 2
        %v508 = vrot.slane %v238, 2
        %v509 = vsel %vm488, %v507, %v508
        %v510 = vrot.slane %v479, 2
        %v511 = vrot.slane %v239, 2
        %v512 = vsel %vm488, %v510, %v511
        %v521 = vpack.c.bf16 %v494, %v491
        %v522 = vpack.c.bf16 %v500, %v497
        %v523 = vpack.c.bf16 %v506, %v503
        %v524 = vpack.c.bf16 %v512, %v509
        %s525 = scalar_lea.vmem [#allocation3], 128
        %v526 = vld [vmem:[%s525] sm:$0xf]
        %v527 = vld [vmem:[%s525 + $0x4] sm:$0xf]
        %v528 = vld [vmem:[%s525 + $0x8] sm:$0xf]
        %v529 = vld [vmem:[%s525 + $0xc] sm:$0xf]
        %v530 = vld [vmem:[%s525 + $0x10] sm:$0xf]
        %v531 = vld [vmem:[%s525 + $0x14] sm:$0xf]
        %v532 = vld [vmem:[%s525 + $0x18] sm:$0xf]
        %v533 = vld [vmem:[%s525 + $0x1c] sm:$0xf]
        %v534 = vld [vmem:[%s525 + $0x20] sm:$0xf]
        %v535 = vld [vmem:[%s525 + $0x24] sm:$0xf]
        %v536 = vld [vmem:[%s525 + $0x28] sm:$0xf]
        %v537 = vld [vmem:[%s525 + $0x2c] sm:$0xf]
        %v538 = vld [vmem:[%s525 + $0x30] sm:$0xf]
        %v539 = vld [vmem:[%s525 + $0x34] sm:$0xf]
        %v540 = vld [vmem:[%s525 + $0x38] sm:$0xf]
        %v541 = vld [vmem:[%s525 + $0x3c] sm:$0xf]
        %v558 = vunpack.c.l.b16 %v526
        %v559 = vunpack.c.l.b16 %v527
        %v560 = vunpack.c.l.b16 %v528
        %v561 = vunpack.c.l.b16 %v529
        %v562 = vunpack.c.l.b16 %v530
        %v563 = vunpack.c.l.b16 %v531
        %v564 = vunpack.c.l.b16 %v532
        %v565 = vunpack.c.l.b16 %v533
        %v566 = vunpack.c.l.b16 %v534
        %v567 = vunpack.c.l.b16 %v535
        %v568 = vunpack.c.l.b16 %v536
        %v569 = vunpack.c.l.b16 %v537
        %v570 = vunpack.c.l.b16 %v538
        %v571 = vunpack.c.l.b16 %v539
        %v572 = vunpack.c.l.b16 %v540
        %v573 = vunpack.c.l.b16 %v541
        %v574 = vpack.c.b16 %v559, %v558
        %v575 = vpack.c.b16 %v561, %v560
        %v576 = vpack.c.b16 %v563, %v562
        %v577 = vpack.c.b16 %v565, %v564
        %v578 = vpack.c.b16 %v567, %v566
        %v579 = vpack.c.b16 %v569, %v568
        %v580 = vpack.c.b16 %v571, %v570
        %v581 = vpack.c.b16 %v573, %v572
        %590 = vmatpush.bf16.msra.mxu0 %v581
        %591 = vmatpush.bf16.msra.mxu0 %v580
        %592 = vmatpush.bf16.msra.mxu0 %v579
        %593 = vmatpush.bf16.msra.mxu0 %v578
        %594 = vmatpush.bf16.msra.mxu0 %v577
        %595 = vmatpush.bf16.msra.mxu0 %v576
        %596 = vmatpush.bf16.msra.mxu0 %v575
        %597 = vmatpush.bf16.msra.mxu0 %v574
        %598 = vmatmul.bf16.gmra.mxu0 %v521
        %v599 = vpop.f32.mrf.mxu0
        %v600 = vadd.f32 0.0, %v599
        %v601 = vpop.f32.mrf.mxu0
        %v602 = vadd.f32 0.0, %v601
        %603 = vmatmul.bf16.gmra.mxu0 %v522
        %v604 = vpop.f32.mrf.mxu0
        %v605 = vadd.f32 0.0, %v604
        %v606 = vpop.f32.mrf.mxu0
        %v607 = vadd.f32 0.0, %v606
        %608 = vmatmul.bf16.gmra.mxu0 %v523
        %v609 = vpop.f32.mrf.mxu0
        %v610 = vadd.f32 0.0, %v609
        %v611 = vpop.f32.mrf.mxu0
        %v612 = vadd.f32 0.0, %v611
        %613 = vmatmul.bf16.gmra.mxu0 %v524
        %v614 = vpop.f32.mrf.mxu0
        %v615 = vadd.f32 0.0, %v614
        %v616 = vpop.f32.mrf.mxu0
        %v617 = vadd.f32 0.0, %v616
        %618 = vdwg.mxu0
        %v619 = vadd.f32 %v445, %v600
        %v620 = vadd.f32 %v447, %v602
        %v621 = vadd.f32 %v450, %v605
        %v622 = vadd.f32 %v452, %v607
        %v623 = vadd.f32 %v455, %v610
        %v624 = vadd.f32 %v457, %v612
        %v625 = vadd.f32 %v460, %v615
        %v626 = vadd.f32 %v462, %v617
        %s627 = scalar_lea.vmem %s182, 8
        %v628 = vld [vmem:[%s627] sm:$0xf]
        %v629 = vld [vmem:[%s627 + $0x8] sm:$0xf]
        %v630 = vld [vmem:[%s627 + $0x10] sm:$0xf]
        %v631 = vld [vmem:[%s627 + $0x18] sm:$0xf]
        %v632 = vld [vmem:[%s627 + $0x20] sm:$0xf]
        %v633 = vld [vmem:[%s627 + $0x28] sm:$0xf]
        %v634 = vld [vmem:[%s627 + $0x30] sm:$0xf]
        %v635 = vld [vmem:[%s627 + $0x38] sm:$0xf]
        %v636 = vunpack.c.l.bf16 %v628
        %v637 = vunpack.c.l.bf16 %v629
        %v638 = vunpack.c.l.bf16 %v630
        %v639 = vunpack.c.l.bf16 %v631
        %v640 = vunpack.c.l.bf16 %v632
        %v641 = vunpack.c.l.bf16 %v633
        %v642 = vunpack.c.l.bf16 %v634
        %v643 = vunpack.c.l.bf16 %v635
        %v644 = vpack.c.bf16 %v637, %v636
        %v645 = vpack.c.bf16 %v639, %v638
        %v646 = vpack.c.bf16 %v641, %v640
        %v647 = vpack.c.bf16 %v643, %v642
        %s648 = scalar_lea.vmem [#allocation3], 192
        %v649 = vld [vmem:[%s648] sm:$0xf]
        %v650 = vld [vmem:[%s648 + $0x4] sm:$0xf]
        %v651 = vld [vmem:[%s648 + $0x8] sm:$0xf]
        %v652 = vld [vmem:[%s648 + $0xc] sm:$0xf]
        %v653 = vld [vmem:[%s648 + $0x10] sm:$0xf]
        %v654 = vld [vmem:[%s648 + $0x14] sm:$0xf]
        %v655 = vld [vmem:[%s648 + $0x18] sm:$0xf]
        %v656 = vld [vmem:[%s648 + $0x1c] sm:$0xf]
        %v657 = vld [vmem:[%s648 + $0x20] sm:$0xf]
        %v658 = vld [vmem:[%s648 + $0x24] sm:$0xf]
        %v659 = vld [vmem:[%s648 + $0x28] sm:$0xf]
        %v660 = vld [vmem:[%s648 + $0x2c] sm:$0xf]
        %v661 = vld [vmem:[%s648 + $0x30] sm:$0xf]
        %v662 = vld [vmem:[%s648 + $0x34] sm:$0xf]
        %v663 = vld [vmem:[%s648 + $0x38] sm:$0xf]
        %v664 = vld [vmem:[%s648 + $0x3c] sm:$0xf]
        %v681 = vunpack.c.l.b16 %v649
        %v682 = vunpack.c.l.b16 %v650
        %v683 = vunpack.c.l.b16 %v651
        %v684 = vunpack.c.l.b16 %v652
        %v685 = vunpack.c.l.b16 %v653
        %v686 = vunpack.c.l.b16 %v654
        %v687 = vunpack.c.l.b16 %v655
        %v688 = vunpack.c.l.b16 %v656
        %v689 = vunpack.c.l.b16 %v657
        %v690 = vunpack.c.l.b16 %v658
        %v691 = vunpack.c.l.b16 %v659
        %v692 = vunpack.c.l.b16 %v660
        %v693 = vunpack.c.l.b16 %v661
        %v694 = vunpack.c.l.b16 %v662
        %v695 = vunpack.c.l.b16 %v663
        %v696 = vunpack.c.l.b16 %v664
        %v697 = vpack.c.b16 %v682, %v681
        %v698 = vpack.c.b16 %v684, %v683
        %v699 = vpack.c.b16 %v686, %v685
        %v700 = vpack.c.b16 %v688, %v687
        %v701 = vpack.c.b16 %v690, %v689
        %v702 = vpack.c.b16 %v692, %v691
        %v703 = vpack.c.b16 %v694, %v693
        %v704 = vpack.c.b16 %v696, %v695
        %713 = vmatpush.bf16.msra.mxu0 %v704
        %714 = vmatpush.bf16.msra.mxu0 %v703
        %715 = vmatpush.bf16.msra.mxu0 %v702
        %716 = vmatpush.bf16.msra.mxu0 %v701
        %717 = vmatpush.bf16.msra.mxu0 %v700
        %718 = vmatpush.bf16.msra.mxu0 %v699
        %719 = vmatpush.bf16.msra.mxu0 %v698
        %720 = vmatpush.bf16.msra.mxu0 %v697
        %721 = vmatmul.bf16.gmra.mxu0 %v644
        %v722 = vpop.f32.mrf.mxu0
        %v723 = vadd.f32 0.0, %v722
        %v724 = vpop.f32.mrf.mxu0
        %v725 = vadd.f32 0.0, %v724
        %726 = vmatmul.bf16.gmra.mxu0 %v645
        %v727 = vpop.f32.mrf.mxu0
        %v728 = vadd.f32 0.0, %v727
        %v729 = vpop.f32.mrf.mxu0
        %v730 = vadd.f32 0.0, %v729
        %731 = vmatmul.bf16.gmra.mxu0 %v646
        %v732 = vpop.f32.mrf.mxu0
        %v733 = vadd.f32 0.0, %v732
        %v734 = vpop.f32.mrf.mxu0
        %v735 = vadd.f32 0.0, %v734
        %736 = vmatmul.bf16.gmra.mxu0 %v647
        %v737 = vpop.f32.mrf.mxu0
        %v738 = vadd.f32 0.0, %v737
        %v739 = vpop.f32.mrf.mxu0
        %v740 = vadd.f32 0.0, %v739
        %741 = vdwg.mxu0
        %v742 = vadd.f32 %v619, %v723
        %v743 = vadd.f32 %v620, %v725
        %v744 = vadd.f32 %v621, %v728
        %v745 = vadd.f32 %v622, %v730
        %v746 = vadd.f32 %v623, %v733
        %v747 = vadd.f32 %v624, %v735
        %v748 = vadd.f32 %v625, %v738
        %v749 = vadd.f32 %v626, %v740
        %v750 = vld [vmem:[%s627] sm:$0xf]
        %v751 = vld [vmem:[%s627 + $0x4] sm:$0x1]
        %v752 = vld [vmem:[%s627 + $0x8] sm:$0xf]
        %v753 = vld [vmem:[%s627 + $0xc] sm:$0x1]
        %v754 = vld [vmem:[%s627 + $0x10] sm:$0xf]
        %v755 = vld [vmem:[%s627 + $0x14] sm:$0x1]
        %v756 = vld [vmem:[%s627 + $0x18] sm:$0xf]
        %v757 = vld [vmem:[%s627 + $0x1c] sm:$0x1]
        %v758 = vld [vmem:[%s627 + $0x20] sm:$0xf]
        %v759 = vld [vmem:[%s627 + $0x24] sm:$0x1]
        %v760 = vld [vmem:[%s627 + $0x28] sm:$0xf]
        %v761 = vld [vmem:[%s627 + $0x2c] sm:$0x1]
        %v762 = vld [vmem:[%s627 + $0x30] sm:$0xf]
        %v763 = vld [vmem:[%s627 + $0x34] sm:$0x1]
        %v764 = vld [vmem:[%s627 + $0x38] sm:$0xf]
        %v765 = vld [vmem:[%s627 + $0x3c] sm:$0x1]
        %v766 = vunpack.c.l.bf16 %v750
        %v767 = vunpack.c.l.bf16 %v751
        %v768 = vunpack.c.l.bf16 %v752
        %v769 = vunpack.c.l.bf16 %v753
        %v770 = vunpack.c.l.bf16 %v754
        %v771 = vunpack.c.l.bf16 %v755
        %v772 = vunpack.c.l.bf16 %v756
        %v773 = vunpack.c.l.bf16 %v757
        %v774 = vunpack.c.l.bf16 %v758
        %v775 = vunpack.c.l.bf16 %v759
        %v776 = vunpack.c.l.bf16 %v760
        %v777 = vunpack.c.l.bf16 %v761
        %v778 = vunpack.c.l.bf16 %v762
        %v779 = vunpack.c.l.bf16 %v763
        %v780 = vunpack.c.l.bf16 %v764
        %v781 = vunpack.c.l.bf16 %v765
        %v798 = vrot.slane %v766, 1
        %v799 = vrot.slane %v767, 1
        %v800 = vsel %vm256, %v798, %v799
        %v801 = vrot.slane %v768, 1
        %v802 = vrot.slane %v769, 1
        %v803 = vsel %vm256, %v801, %v802
        %v804 = vrot.slane %v770, 1
        %v805 = vrot.slane %v771, 1
        %v806 = vsel %vm256, %v804, %v805
        %v807 = vrot.slane %v772, 1
        %v808 = vrot.slane %v773, 1
        %v809 = vsel %vm256, %v807, %v808
        %v810 = vrot.slane %v774, 1
        %v811 = vrot.slane %v775, 1
        %v812 = vsel %vm256, %v810, %v811
        %v813 = vrot.slane %v776, 1
        %v814 = vrot.slane %v777, 1
        %v815 = vsel %vm256, %v813, %v814
        %v816 = vrot.slane %v778, 1
        %v817 = vrot.slane %v779, 1
        %v818 = vsel %vm256, %v816, %v817
        %v819 = vrot.slane %v780, 1
        %v820 = vrot.slane %v781, 1
        %v821 = vsel %vm256, %v819, %v820
        %v830 = vpack.c.bf16 %v803, %v800
        %v831 = vpack.c.bf16 %v809, %v806
        %v832 = vpack.c.bf16 %v815, %v812
        %v833 = vpack.c.bf16 %v821, %v818
        %s834 = scalar_lea.vmem [#allocation3], 256
        %v835 = vld [vmem:[%s834] sm:$0xf]
        %v836 = vld [vmem:[%s834 + $0x4] sm:$0xf]
        %v837 = vld [vmem:[%s834 + $0x8] sm:$0xf]
        %v838 = vld [vmem:[%s834 + $0xc] sm:$0xf]
        %v839 = vld [vmem:[%s834 + $0x10] sm:$0xf]
        %v840 = vld [vmem:[%s834 + $0x14] sm:$0xf]
        %v841 = vld [vmem:[%s834 + $0x18] sm:$0xf]
        %v842 = vld [vmem:[%s834 + $0x1c] sm:$0xf]
        %v843 = vld [vmem:[%s834 + $0x20] sm:$0xf]
        %v844 = vld [vmem:[%s834 + $0x24] sm:$0xf]
        %v845 = vld [vmem:[%s834 + $0x28] sm:$0xf]
        %v846 = vld [vmem:[%s834 + $0x2c] sm:$0xf]
        %v847 = vld [vmem:[%s834 + $0x30] sm:$0xf]
        %v848 = vld [vmem:[%s834 + $0x34] sm:$0xf]
        %v849 = vld [vmem:[%s834 + $0x38] sm:$0xf]
        %v850 = vld [vmem:[%s834 + $0x3c] sm:$0xf]
        %v867 = vunpack.c.l.b16 %v835
        %v868 = vunpack.c.l.b16 %v836
        %v869 = vunpack.c.l.b16 %v837
        %v870 = vunpack.c.l.b16 %v838
        %v871 = vunpack.c.l.b16 %v839
        %v872 = vunpack.c.l.b16 %v840
        %v873 = vunpack.c.l.b16 %v841
        %v874 = vunpack.c.l.b16 %v842
        %v875 = vunpack.c.l.b16 %v843
        %v876 = vunpack.c.l.b16 %v844
        %v877 = vunpack.c.l.b16 %v845
        %v878 = vunpack.c.l.b16 %v846
        %v879 = vunpack.c.l.b16 %v847
        %v880 = vunpack.c.l.b16 %v848
        %v881 = vunpack.c.l.b16 %v849
        %v882 = vunpack.c.l.b16 %v850
        %v883 = vpack.c.b16 %v868, %v867
        %v884 = vpack.c.b16 %v870, %v869
        %v885 = vpack.c.b16 %v872, %v871
        %v886 = vpack.c.b16 %v874, %v873
        %v887 = vpack.c.b16 %v876, %v875
        %v888 = vpack.c.b16 %v878, %v877
        %v889 = vpack.c.b16 %v880, %v879
        %v890 = vpack.c.b16 %v882, %v881
        %899 = vmatpush.bf16.msra.mxu0 %v890
        %900 = vmatpush.bf16.msra.mxu0 %v889
        %901 = vmatpush.bf16.msra.mxu0 %v888
        %902 = vmatpush.bf16.msra.mxu0 %v887
        %903 = vmatpush.bf16.msra.mxu0 %v886
        %904 = vmatpush.bf16.msra.mxu0 %v885
        %905 = vmatpush.bf16.msra.mxu0 %v884
        %906 = vmatpush.bf16.msra.mxu0 %v883
        %907 = vmatmul.bf16.gmra.mxu0 %v830
        %v908 = vpop.f32.mrf.mxu0
        %v909 = vadd.f32 0.0, %v908
        %v910 = vpop.f32.mrf.mxu0
        %v911 = vadd.f32 0.0, %v910
        %912 = vmatmul.bf16.gmra.mxu0 %v831
        %v913 = vpop.f32.mrf.mxu0
        %v914 = vadd.f32 0.0, %v913
        %v915 = vpop.f32.mrf.mxu0
        %v916 = vadd.f32 0.0, %v915
        %917 = vmatmul.bf16.gmra.mxu0 %v832
        %v918 = vpop.f32.mrf.mxu0
        %v919 = vadd.f32 0.0, %v918
        %v920 = vpop.f32.mrf.mxu0
        %v921 = vadd.f32 0.0, %v920
        %922 = vmatmul.bf16.gmra.mxu0 %v833
        %v923 = vpop.f32.mrf.mxu0
        %v924 = vadd.f32 0.0, %v923
        %v925 = vpop.f32.mrf.mxu0
        %v926 = vadd.f32 0.0, %v925
        %927 = vdwg.mxu0
        %v928 = vadd.f32 %v742, %v909
        %v929 = vadd.f32 %v743, %v911
        %v930 = vadd.f32 %v744, %v914
        %v931 = vadd.f32 %v745, %v916
        %v932 = vadd.f32 %v746, %v919
        %v933 = vadd.f32 %v747, %v921
        %v934 = vadd.f32 %v748, %v924
        %v935 = vadd.f32 %v749, %v926
        %v936 = vld [vmem:[%s627] sm:$0xe]
        %v937 = vld [vmem:[%s627 + $0x8] sm:$0xe]
        %v938 = vld [vmem:[%s627 + $0x10] sm:$0xe]
        %v939 = vld [vmem:[%s627 + $0x18] sm:$0xe]
        %v940 = vld [vmem:[%s627 + $0x20] sm:$0xe]
        %v941 = vld [vmem:[%s627 + $0x28] sm:$0xe]
        %v942 = vld [vmem:[%s627 + $0x30] sm:$0xe]
        %v943 = vld [vmem:[%s627 + $0x38] sm:$0xe]
        %v944 = vunpack.c.l.bf16 %v936
        %v945 = vunpack.c.l.bf16 %v937
        %v946 = vunpack.c.l.bf16 %v938
        %v947 = vunpack.c.l.bf16 %v939
        %v948 = vunpack.c.l.bf16 %v940
        %v949 = vunpack.c.l.bf16 %v941
        %v950 = vunpack.c.l.bf16 %v942
        %v951 = vunpack.c.l.bf16 %v943
        %v960 = vrot.slane %v944, 2
        %v961 = vrot.slane %v767, 2
        %v962 = vsel %vm488, %v960, %v961
        %v963 = vrot.slane %v945, 2
        %v964 = vrot.slane %v769, 2
        %v965 = vsel %vm488, %v963, %v964
        %v966 = vrot.slane %v946, 2
        %v967 = vrot.slane %v771, 2
        %v968 = vsel %vm488, %v966, %v967
        %v969 = vrot.slane %v947, 2
        %v970 = vrot.slane %v773, 2
        %v971 = vsel %vm488, %v969, %v970
        %v972 = vrot.slane %v948, 2
        %v973 = vrot.slane %v775, 2
        %v974 = vsel %vm488, %v972, %v973
        %v975 = vrot.slane %v949, 2
        %v976 = vrot.slane %v777, 2
        %v977 = vsel %vm488, %v975, %v976
        %v978 = vrot.slane %v950, 2
        %v979 = vrot.slane %v779, 2
        %v980 = vsel %vm488, %v978, %v979
        %v981 = vrot.slane %v951, 2
        %v982 = vrot.slane %v781, 2
        %v983 = vsel %vm488, %v981, %v982
        %v992 = vpack.c.bf16 %v965, %v962
        %v993 = vpack.c.bf16 %v971, %v968
        %v994 = vpack.c.bf16 %v977, %v974
        %v995 = vpack.c.bf16 %v983, %v980
        %s996 = scalar_lea.vmem [#allocation3], 320
        %v997 = vld [vmem:[%s996] sm:$0xf]
        %v998 = vld [vmem:[%s996 + $0x4] sm:$0xf]
        %v999 = vld [vmem:[%s996 + $0x8] sm:$0xf]
        %v1000 = vld [vmem:[%s996 + $0xc] sm:$0xf]
        %v1001 = vld [vmem:[%s996 + $0x10] sm:$0xf]
        %v1002 = vld [vmem:[%s996 + $0x14] sm:$0xf]
        %v1003 = vld [vmem:[%s996 + $0x18] sm:$0xf]
        %v1004 = vld [vmem:[%s996 + $0x1c] sm:$0xf]
        %v1005 = vld [vmem:[%s996 + $0x20] sm:$0xf]
        %v1006 = vld [vmem:[%s996 + $0x24] sm:$0xf]
        %v1007 = vld [vmem:[%s996 + $0x28] sm:$0xf]
        %v1008 = vld [vmem:[%s996 + $0x2c] sm:$0xf]
        %v1009 = vld [vmem:[%s996 + $0x30] sm:$0xf]
        %v1010 = vld [vmem:[%s996 + $0x34] sm:$0xf]
        %v1011 = vld [vmem:[%s996 + $0x38] sm:$0xf]
        %v1012 = vld [vmem:[%s996 + $0x3c] sm:$0xf]
        %v1029 = vunpack.c.l.b16 %v997
        %v1030 = vunpack.c.l.b16 %v998
        %v1031 = vunpack.c.l.b16 %v999
        %v1032 = vunpack.c.l.b16 %v1000
        %v1033 = vunpack.c.l.b16 %v1001
        %v1034 = vunpack.c.l.b16 %v1002
        %v1035 = vunpack.c.l.b16 %v1003
        %v1036 = vunpack.c.l.b16 %v1004
        %v1037 = vunpack.c.l.b16 %v1005
        %v1038 = vunpack.c.l.b16 %v1006
        %v1039 = vunpack.c.l.b16 %v1007
        %v1040 = vunpack.c.l.b16 %v1008
        %v1041 = vunpack.c.l.b16 %v1009
        %v1042 = vunpack.c.l.b16 %v1010
        %v1043 = vunpack.c.l.b16 %v1011
        %v1044 = vunpack.c.l.b16 %v1012
        %v1045 = vpack.c.b16 %v1030, %v1029
        %v1046 = vpack.c.b16 %v1032, %v1031
        %v1047 = vpack.c.b16 %v1034, %v1033
        %v1048 = vpack.c.b16 %v1036, %v1035
        %v1049 = vpack.c.b16 %v1038, %v1037
        %v1050 = vpack.c.b16 %v1040, %v1039
        %v1051 = vpack.c.b16 %v1042, %v1041
        %v1052 = vpack.c.b16 %v1044, %v1043
        %1061 = vmatpush.bf16.msra.mxu0 %v1052
        %1062 = vmatpush.bf16.msra.mxu0 %v1051
        %1063 = vmatpush.bf16.msra.mxu0 %v1050
        %1064 = vmatpush.bf16.msra.mxu0 %v1049
        %1065 = vmatpush.bf16.msra.mxu0 %v1048
        %1066 = vmatpush.bf16.msra.mxu0 %v1047
        %1067 = vmatpush.bf16.msra.mxu0 %v1046
        %1068 = vmatpush.bf16.msra.mxu0 %v1045
        %1069 = vmatmul.bf16.gmra.mxu0 %v992
        %v1070 = vpop.f32.mrf.mxu0
        %v1071 = vadd.f32 0.0, %v1070
        %v1072 = vpop.f32.mrf.mxu0
        %v1073 = vadd.f32 0.0, %v1072
        %1074 = vmatmul.bf16.gmra.mxu0 %v993
        %v1075 = vpop.f32.mrf.mxu0
        %v1076 = vadd.f32 0.0, %v1075
        %v1077 = vpop.f32.mrf.mxu0
        %v1078 = vadd.f32 0.0, %v1077
        %1079 = vmatmul.bf16.gmra.mxu0 %v994
        %v1080 = vpop.f32.mrf.mxu0
        %v1081 = vadd.f32 0.0, %v1080
        %v1082 = vpop.f32.mrf.mxu0
        %v1083 = vadd.f32 0.0, %v1082
        %1084 = vmatmul.bf16.gmra.mxu0 %v995
        %v1085 = vpop.f32.mrf.mxu0
        %v1086 = vadd.f32 0.0, %v1085
        %v1087 = vpop.f32.mrf.mxu0
        %v1088 = vadd.f32 0.0, %v1087
        %1089 = vdwg.mxu0
        %v1090 = vadd.f32 %v928, %v1071
        %v1091 = vadd.f32 %v929, %v1073
        %v1092 = vadd.f32 %v930, %v1076
        %v1093 = vadd.f32 %v931, %v1078
        %v1094 = vadd.f32 %v932, %v1081
        %v1095 = vadd.f32 %v933, %v1083
        %v1096 = vadd.f32 %v934, %v1086
        %v1097 = vadd.f32 %v935, %v1088
        %s1098 = scalar_lea.vmem %s182, 16
        %v1099 = vld [vmem:[%s1098] sm:$0xf]
        %v1100 = vld [vmem:[%s1098 + $0x8] sm:$0xf]
        %v1101 = vld [vmem:[%s1098 + $0x10] sm:$0xf]
        %v1102 = vld [vmem:[%s1098 + $0x18] sm:$0xf]
        %v1103 = vld [vmem:[%s1098 + $0x20] sm:$0xf]
        %v1104 = vld [vmem:[%s1098 + $0x28] sm:$0xf]
        %v1105 = vld [vmem:[%s1098 + $0x30] sm:$0xf]
        %v1106 = vld [vmem:[%s1098 + $0x38] sm:$0xf]
        %v1107 = vunpack.c.l.bf16 %v1099
        %v1108 = vunpack.c.l.bf16 %v1100
        %v1109 = vunpack.c.l.bf16 %v1101
        %v1110 = vunpack.c.l.bf16 %v1102
        %v1111 = vunpack.c.l.bf16 %v1103
        %v1112 = vunpack.c.l.bf16 %v1104
        %v1113 = vunpack.c.l.bf16 %v1105
        %v1114 = vunpack.c.l.bf16 %v1106
        %v1115 = vpack.c.bf16 %v1108, %v1107
        %v1116 = vpack.c.bf16 %v1110, %v1109
        %v1117 = vpack.c.bf16 %v1112, %v1111
        %v1118 = vpack.c.bf16 %v1114, %v1113
        %s1119 = scalar_lea.vmem [#allocation3], 384
        %v1120 = vld [vmem:[%s1119] sm:$0xf]
        %v1121 = vld [vmem:[%s1119 + $0x4] sm:$0xf]
        %v1122 = vld [vmem:[%s1119 + $0x8] sm:$0xf]
        %v1123 = vld [vmem:[%s1119 + $0xc] sm:$0xf]
        %v1124 = vld [vmem:[%s1119 + $0x10] sm:$0xf]
        %v1125 = vld [vmem:[%s1119 + $0x14] sm:$0xf]
        %v1126 = vld [vmem:[%s1119 + $0x18] sm:$0xf]
        %v1127 = vld [vmem:[%s1119 + $0x1c] sm:$0xf]
        %v1128 = vld [vmem:[%s1119 + $0x20] sm:$0xf]
        %v1129 = vld [vmem:[%s1119 + $0x24] sm:$0xf]
        %v1130 = vld [vmem:[%s1119 + $0x28] sm:$0xf]
        %v1131 = vld [vmem:[%s1119 + $0x2c] sm:$0xf]
        %v1132 = vld [vmem:[%s1119 + $0x30] sm:$0xf]
        %v1133 = vld [vmem:[%s1119 + $0x34] sm:$0xf]
        %v1134 = vld [vmem:[%s1119 + $0x38] sm:$0xf]
        %v1135 = vld [vmem:[%s1119 + $0x3c] sm:$0xf]
        %v1152 = vunpack.c.l.b16 %v1120
        %v1153 = vunpack.c.l.b16 %v1121
        %v1154 = vunpack.c.l.b16 %v1122
        %v1155 = vunpack.c.l.b16 %v1123
        %v1156 = vunpack.c.l.b16 %v1124
        %v1157 = vunpack.c.l.b16 %v1125
        %v1158 = vunpack.c.l.b16 %v1126
        %v1159 = vunpack.c.l.b16 %v1127
        %v1160 = vunpack.c.l.b16 %v1128
        %v1161 = vunpack.c.l.b16 %v1129
        %v1162 = vunpack.c.l.b16 %v1130
        %v1163 = vunpack.c.l.b16 %v1131
        %v1164 = vunpack.c.l.b16 %v1132
        %v1165 = vunpack.c.l.b16 %v1133
        %v1166 = vunpack.c.l.b16 %v1134
        %v1167 = vunpack.c.l.b16 %v1135
        %v1168 = vpack.c.b16 %v1153, %v1152
        %v1169 = vpack.c.b16 %v1155, %v1154
        %v1170 = vpack.c.b16 %v1157, %v1156
        %v1171 = vpack.c.b16 %v1159, %v1158
        %v1172 = vpack.c.b16 %v1161, %v1160
        %v1173 = vpack.c.b16 %v1163, %v1162
        %v1174 = vpack.c.b16 %v1165, %v1164
        %v1175 = vpack.c.b16 %v1167, %v1166
        %1184 = vmatpush.bf16.msra.mxu0 %v1175
        %1185 = vmatpush.bf16.msra.mxu0 %v1174
        %1186 = vmatpush.bf16.msra.mxu0 %v1173
        %1187 = vmatpush.bf16.msra.mxu0 %v1172
        %1188 = vmatpush.bf16.msra.mxu0 %v1171
        %1189 = vmatpush.bf16.msra.mxu0 %v1170
        %1190 = vmatpush.bf16.msra.mxu0 %v1169
        %1191 = vmatpush.bf16.msra.mxu0 %v1168
        %1192 = vmatmul.bf16.gmra.mxu0 %v1115
        %v1193 = vpop.f32.mrf.mxu0
        %v1194 = vadd.f32 0.0, %v1193
        %v1195 = vpop.f32.mrf.mxu0
        %v1196 = vadd.f32 0.0, %v1195
        %1197 = vmatmul.bf16.gmra.mxu0 %v1116
        %v1198 = vpop.f32.mrf.mxu0
        %v1199 = vadd.f32 0.0, %v1198
        %v1200 = vpop.f32.mrf.mxu0
        %v1201 = vadd.f32 0.0, %v1200
        %1202 = vmatmul.bf16.gmra.mxu0 %v1117
        %v1203 = vpop.f32.mrf.mxu0
        %v1204 = vadd.f32 0.0, %v1203
        %v1205 = vpop.f32.mrf.mxu0
        %v1206 = vadd.f32 0.0, %v1205
        %1207 = vmatmul.bf16.gmra.mxu0 %v1118
        %v1208 = vpop.f32.mrf.mxu0
        %v1209 = vadd.f32 0.0, %v1208
        %v1210 = vpop.f32.mrf.mxu0
        %v1211 = vadd.f32 0.0, %v1210
        %1212 = vdwg.mxu0
        %v1213 = vadd.f32 %v1090, %v1194
        %v1214 = vadd.f32 %v1091, %v1196
        %v1215 = vadd.f32 %v1092, %v1199
        %v1216 = vadd.f32 %v1093, %v1201
        %v1217 = vadd.f32 %v1094, %v1204
        %v1218 = vadd.f32 %v1095, %v1206
        %v1219 = vadd.f32 %v1096, %v1209
        %v1220 = vadd.f32 %v1097, %v1211
        %v1221 = vld [vmem:[%s1098] sm:$0xf]
        %v1222 = vld [vmem:[%s1098 + $0x4] sm:$0x1]
        %v1223 = vld [vmem:[%s1098 + $0x8] sm:$0xf]
        %v1224 = vld [vmem:[%s1098 + $0xc] sm:$0x1]
        %v1225 = vld [vmem:[%s1098 + $0x10] sm:$0xf]
        %v1226 = vld [vmem:[%s1098 + $0x14] sm:$0x1]
        %v1227 = vld [vmem:[%s1098 + $0x18] sm:$0xf]
        %v1228 = vld [vmem:[%s1098 + $0x1c] sm:$0x1]
        %v1229 = vld [vmem:[%s1098 + $0x20] sm:$0xf]
        %v1230 = vld [vmem:[%s1098 + $0x24] sm:$0x1]
        %v1231 = vld [vmem:[%s1098 + $0x28] sm:$0xf]
        %v1232 = vld [vmem:[%s1098 + $0x2c] sm:$0x1]
        %v1233 = vld [vmem:[%s1098 + $0x30] sm:$0xf]
        %v1234 = vld [vmem:[%s1098 + $0x34] sm:$0x1]
        %v1235 = vld [vmem:[%s1098 + $0x38] sm:$0xf]
        %v1236 = vld [vmem:[%s1098 + $0x3c] sm:$0x1]
        %v1237 = vunpack.c.l.bf16 %v1221
        %v1238 = vunpack.c.l.bf16 %v1222
        %v1239 = vunpack.c.l.bf16 %v1223
        %v1240 = vunpack.c.l.bf16 %v1224
        %v1241 = vunpack.c.l.bf16 %v1225
        %v1242 = vunpack.c.l.bf16 %v1226
        %v1243 = vunpack.c.l.bf16 %v1227
        %v1244 = vunpack.c.l.bf16 %v1228
        %v1245 = vunpack.c.l.bf16 %v1229
        %v1246 = vunpack.c.l.bf16 %v1230
        %v1247 = vunpack.c.l.bf16 %v1231
        %v1248 = vunpack.c.l.bf16 %v1232
        %v1249 = vunpack.c.l.bf16 %v1233
        %v1250 = vunpack.c.l.bf16 %v1234
        %v1251 = vunpack.c.l.bf16 %v1235
        %v1252 = vunpack.c.l.bf16 %v1236
        %v1269 = vrot.slane %v1237, 1
        %v1270 = vrot.slane %v1238, 1
        %v1271 = vsel %vm256, %v1269, %v1270
        %v1272 = vrot.slane %v1239, 1
        %v1273 = vrot.slane %v1240, 1
        %v1274 = vsel %vm256, %v1272, %v1273
        %v1275 = vrot.slane %v1241, 1
        %v1276 = vrot.slane %v1242, 1
        %v1277 = vsel %vm256, %v1275, %v1276
        %v1278 = vrot.slane %v1243, 1
        %v1279 = vrot.slane %v1244, 1
        %v1280 = vsel %vm256, %v1278, %v1279
        %v1281 = vrot.slane %v1245, 1
        %v1282 = vrot.slane %v1246, 1
        %v1283 = vsel %vm256, %v1281, %v1282
        %v1284 = vrot.slane %v1247, 1
        %v1285 = vrot.slane %v1248, 1
        %v1286 = vsel %vm256, %v1284, %v1285
        %v1287 = vrot.slane %v1249, 1
        %v1288 = vrot.slane %v1250, 1
        %v1289 = vsel %vm256, %v1287, %v1288
        %v1290 = vrot.slane %v1251, 1
        %v1291 = vrot.slane %v1252, 1
        %v1292 = vsel %vm256, %v1290, %v1291
        %v1301 = vpack.c.bf16 %v1274, %v1271
        %v1302 = vpack.c.bf16 %v1280, %v1277
        %v1303 = vpack.c.bf16 %v1286, %v1283
        %v1304 = vpack.c.bf16 %v1292, %v1289
        %s1305 = scalar_lea.vmem [#allocation3], 448
        %v1306 = vld [vmem:[%s1305] sm:$0xf]
        %v1307 = vld [vmem:[%s1305 + $0x4] sm:$0xf]
        %v1308 = vld [vmem:[%s1305 + $0x8] sm:$0xf]
        %v1309 = vld [vmem:[%s1305 + $0xc] sm:$0xf]
        %v1310 = vld [vmem:[%s1305 + $0x10] sm:$0xf]
        %v1311 = vld [vmem:[%s1305 + $0x14] sm:$0xf]
        %v1312 = vld [vmem:[%s1305 + $0x18] sm:$0xf]
        %v1313 = vld [vmem:[%s1305 + $0x1c] sm:$0xf]
        %v1314 = vld [vmem:[%s1305 + $0x20] sm:$0xf]
        %v1315 = vld [vmem:[%s1305 + $0x24] sm:$0xf]
        %v1316 = vld [vmem:[%s1305 + $0x28] sm:$0xf]
        %v1317 = vld [vmem:[%s1305 + $0x2c] sm:$0xf]
        %v1318 = vld [vmem:[%s1305 + $0x30] sm:$0xf]
        %v1319 = vld [vmem:[%s1305 + $0x34] sm:$0xf]
        %v1320 = vld [vmem:[%s1305 + $0x38] sm:$0xf]
        %v1321 = vld [vmem:[%s1305 + $0x3c] sm:$0xf]
        %v1338 = vunpack.c.l.b16 %v1306
        %v1339 = vunpack.c.l.b16 %v1307
        %v1340 = vunpack.c.l.b16 %v1308
        %v1341 = vunpack.c.l.b16 %v1309
        %v1342 = vunpack.c.l.b16 %v1310
        %v1343 = vunpack.c.l.b16 %v1311
        %v1344 = vunpack.c.l.b16 %v1312
        %v1345 = vunpack.c.l.b16 %v1313
        %v1346 = vunpack.c.l.b16 %v1314
        %v1347 = vunpack.c.l.b16 %v1315
        %v1348 = vunpack.c.l.b16 %v1316
        %v1349 = vunpack.c.l.b16 %v1317
        %v1350 = vunpack.c.l.b16 %v1318
        %v1351 = vunpack.c.l.b16 %v1319
        %v1352 = vunpack.c.l.b16 %v1320
        %v1353 = vunpack.c.l.b16 %v1321
        %v1354 = vpack.c.b16 %v1339, %v1338
        %v1355 = vpack.c.b16 %v1341, %v1340
        %v1356 = vpack.c.b16 %v1343, %v1342
        %v1357 = vpack.c.b16 %v1345, %v1344
        %v1358 = vpack.c.b16 %v1347, %v1346
        %v1359 = vpack.c.b16 %v1349, %v1348
        %v1360 = vpack.c.b16 %v1351, %v1350
        %v1361 = vpack.c.b16 %v1353, %v1352
        %1370 = vmatpush.bf16.msra.mxu0 %v1361
        %1371 = vmatpush.bf16.msra.mxu0 %v1360
        %1372 = vmatpush.bf16.msra.mxu0 %v1359
        %1373 = vmatpush.bf16.msra.mxu0 %v1358
        %1374 = vmatpush.bf16.msra.mxu0 %v1357
        %1375 = vmatpush.bf16.msra.mxu0 %v1356
        %1376 = vmatpush.bf16.msra.mxu0 %v1355
        %1377 = vmatpush.bf16.msra.mxu0 %v1354
        %1378 = vmatmul.bf16.gmra.mxu0 %v1301
        %v1379 = vpop.f32.mrf.mxu0
        %v1380 = vadd.f32 0.0, %v1379
        %v1381 = vpop.f32.mrf.mxu0
        %v1382 = vadd.f32 0.0, %v1381
        %1383 = vmatmul.bf16.gmra.mxu0 %v1302
        %v1384 = vpop.f32.mrf.mxu0
        %v1385 = vadd.f32 0.0, %v1384
        %v1386 = vpop.f32.mrf.mxu0
        %v1387 = vadd.f32 0.0, %v1386
        %1388 = vmatmul.bf16.gmra.mxu0 %v1303
        %v1389 = vpop.f32.mrf.mxu0
        %v1390 = vadd.f32 0.0, %v1389
        %v1391 = vpop.f32.mrf.mxu0
        %v1392 = vadd.f32 0.0, %v1391
        %1393 = vmatmul.bf16.gmra.mxu0 %v1304
        %v1394 = vpop.f32.mrf.mxu0
        %v1395 = vadd.f32 0.0, %v1394
        %v1396 = vpop.f32.mrf.mxu0
        %v1397 = vadd.f32 0.0, %v1396
        %1398 = vdwg.mxu0
        %v1399 = vadd.f32 %v1213, %v1380
        %v1400 = vadd.f32 %v1214, %v1382
        %v1401 = vadd.f32 %v1215, %v1385
        %v1402 = vadd.f32 %v1216, %v1387
        %v1403 = vadd.f32 %v1217, %v1390
        %v1404 = vadd.f32 %v1218, %v1392
        %v1405 = vadd.f32 %v1219, %v1395
        %v1406 = vadd.f32 %v1220, %v1397
        %v1407 = vld [vmem:[%s1098] sm:$0xe]
        %v1408 = vld [vmem:[%s1098 + $0x8] sm:$0xe]
        %v1409 = vld [vmem:[%s1098 + $0x10] sm:$0xe]
        %v1410 = vld [vmem:[%s1098 + $0x18] sm:$0xe]
        %v1411 = vld [vmem:[%s1098 + $0x20] sm:$0xe]
        %v1412 = vld [vmem:[%s1098 + $0x28] sm:$0xe]
        %v1413 = vld [vmem:[%s1098 + $0x30] sm:$0xe]
        %v1414 = vld [vmem:[%s1098 + $0x38] sm:$0xe]
        %v1415 = vunpack.c.l.bf16 %v1407
        %v1416 = vunpack.c.l.bf16 %v1408
        %v1417 = vunpack.c.l.bf16 %v1409
        %v1418 = vunpack.c.l.bf16 %v1410
        %v1419 = vunpack.c.l.bf16 %v1411
        %v1420 = vunpack.c.l.bf16 %v1412
        %v1421 = vunpack.c.l.bf16 %v1413
        %v1422 = vunpack.c.l.bf16 %v1414
        %v1431 = vrot.slane %v1415, 2
        %v1432 = vrot.slane %v1238, 2
        %v1433 = vsel %vm488, %v1431, %v1432
        %v1434 = vrot.slane %v1416, 2
        %v1435 = vrot.slane %v1240, 2
        %v1436 = vsel %vm488, %v1434, %v1435
        %v1437 = vrot.slane %v1417, 2
        %v1438 = vrot.slane %v1242, 2
        %v1439 = vsel %vm488, %v1437, %v1438
        %v1440 = vrot.slane %v1418, 2
        %v1441 = vrot.slane %v1244, 2
        %v1442 = vsel %vm488, %v1440, %v1441
        %v1443 = vrot.slane %v1419, 2
        %v1444 = vrot.slane %v1246, 2
        %v1445 = vsel %vm488, %v1443, %v1444
        %v1446 = vrot.slane %v1420, 2
        %v1447 = vrot.slane %v1248, 2
        %v1448 = vsel %vm488, %v1446, %v1447
        %v1449 = vrot.slane %v1421, 2
        %v1450 = vrot.slane %v1250, 2
        %v1451 = vsel %vm488, %v1449, %v1450
        %v1452 = vrot.slane %v1422, 2
        %v1453 = vrot.slane %v1252, 2
        %v1454 = vsel %vm488, %v1452, %v1453
        %v1463 = vpack.c.bf16 %v1436, %v1433
        %v1464 = vpack.c.bf16 %v1442, %v1439
        %v1465 = vpack.c.bf16 %v1448, %v1445
        %v1466 = vpack.c.bf16 %v1454, %v1451
        %s1467 = scalar_lea.vmem [#allocation3], 512
        %v1468 = vld [vmem:[%s1467] sm:$0xf]
        %v1469 = vld [vmem:[%s1467 + $0x4] sm:$0xf]
        %v1470 = vld [vmem:[%s1467 + $0x8] sm:$0xf]
        %v1471 = vld [vmem:[%s1467 + $0xc] sm:$0xf]
        %v1472 = vld [vmem:[%s1467 + $0x10] sm:$0xf]
        %v1473 = vld [vmem:[%s1467 + $0x14] sm:$0xf]
        %v1474 = vld [vmem:[%s1467 + $0x18] sm:$0xf]
        %v1475 = vld [vmem:[%s1467 + $0x1c] sm:$0xf]
        %v1476 = vld [vmem:[%s1467 + $0x20] sm:$0xf]
        %v1477 = vld [vmem:[%s1467 + $0x24] sm:$0xf]
        %v1478 = vld [vmem:[%s1467 + $0x28] sm:$0xf]
        %v1479 = vld [vmem:[%s1467 + $0x2c] sm:$0xf]
        %v1480 = vld [vmem:[%s1467 + $0x30] sm:$0xf]
        %v1481 = vld [vmem:[%s1467 + $0x34] sm:$0xf]
        %v1482 = vld [vmem:[%s1467 + $0x38] sm:$0xf]
        %v1483 = vld [vmem:[%s1467 + $0x3c] sm:$0xf]
        %v1500 = vunpack.c.l.b16 %v1468
        %v1501 = vunpack.c.l.b16 %v1469
        %v1502 = vunpack.c.l.b16 %v1470
        %v1503 = vunpack.c.l.b16 %v1471
        %v1504 = vunpack.c.l.b16 %v1472
        %v1505 = vunpack.c.l.b16 %v1473
        %v1506 = vunpack.c.l.b16 %v1474
        %v1507 = vunpack.c.l.b16 %v1475
        %v1508 = vunpack.c.l.b16 %v1476
        %v1509 = vunpack.c.l.b16 %v1477
        %v1510 = vunpack.c.l.b16 %v1478
        %v1511 = vunpack.c.l.b16 %v1479
        %v1512 = vunpack.c.l.b16 %v1480
        %v1513 = vunpack.c.l.b16 %v1481
        %v1514 = vunpack.c.l.b16 %v1482
        %v1515 = vunpack.c.l.b16 %v1483
        %v1516 = vpack.c.b16 %v1501, %v1500
        %v1517 = vpack.c.b16 %v1503, %v1502
        %v1518 = vpack.c.b16 %v1505, %v1504
        %v1519 = vpack.c.b16 %v1507, %v1506
        %v1520 = vpack.c.b16 %v1509, %v1508
        %v1521 = vpack.c.b16 %v1511, %v1510
        %v1522 = vpack.c.b16 %v1513, %v1512
        %v1523 = vpack.c.b16 %v1515, %v1514
        %1532 = vmatpush.bf16.msra.mxu0 %v1523
        %1533 = vmatpush.bf16.msra.mxu0 %v1522
        %1534 = vmatpush.bf16.msra.mxu0 %v1521
        %1535 = vmatpush.bf16.msra.mxu0 %v1520
        %1536 = vmatpush.bf16.msra.mxu0 %v1519
        %1537 = vmatpush.bf16.msra.mxu0 %v1518
        %1538 = vmatpush.bf16.msra.mxu0 %v1517
        %1539 = vmatpush.bf16.msra.mxu0 %v1516
        %1540 = vmatmul.bf16.gmra.mxu0 %v1463
        %v1541 = vpop.f32.mrf.mxu0
        %v1542 = vadd.f32 0.0, %v1541
        %v1543 = vpop.f32.mrf.mxu0
        %v1544 = vadd.f32 0.0, %v1543
        %1545 = vmatmul.bf16.gmra.mxu0 %v1464
        %v1546 = vpop.f32.mrf.mxu0
        %v1547 = vadd.f32 0.0, %v1546
        %v1548 = vpop.f32.mrf.mxu0
        %v1549 = vadd.f32 0.0, %v1548
        %1550 = vmatmul.bf16.gmra.mxu0 %v1465
        %v1551 = vpop.f32.mrf.mxu0
        %v1552 = vadd.f32 0.0, %v1551
        %v1553 = vpop.f32.mrf.mxu0
        %v1554 = vadd.f32 0.0, %v1553
        %1555 = vmatmul.bf16.gmra.mxu0 %v1466
        %v1556 = vpop.f32.mrf.mxu0
        %v1557 = vadd.f32 0.0, %v1556
        %v1558 = vpop.f32.mrf.mxu0
        %v1559 = vadd.f32 0.0, %v1558
        %1560 = vdwg.mxu0
        %v1561 = vadd.f32 %v1399, %v1542
        %v1562 = vadd.f32 %v1400, %v1544
        %v1563 = vadd.f32 %v1401, %v1547
        %v1564 = vadd.f32 %v1402, %v1549
        %v1565 = vadd.f32 %v1403, %v1552
        %v1566 = vadd.f32 %v1404, %v1554
        %v1567 = vadd.f32 %v1405, %v1557
        %v1568 = vadd.f32 %v1406, %v1559
        %v1569 = vld [vmem:[%s2] sm:$0x1]
        %v1571 = vperm.slane %v1569, 0
        %v1573 = vadd.f32 %v1561, %v1571
        %v1574 = vadd.f32 %v1562, %v1571
        %v1575 = vadd.f32 %v1563, %v1571
        %v1576 = vadd.f32 %v1564, %v1571
        %v1577 = vadd.f32 %v1565, %v1571
        %v1578 = vadd.f32 %v1566, %v1571
        %v1579 = vadd.f32 %v1567, %v1571
        %v1580 = vadd.f32 %v1568, %v1571
        %v1581 = vmax.f32 %v1573, 0.0
        %v1582 = vmax.f32 %v1574, 0.0
        %v1583 = vmax.f32 %v1575, 0.0
        %v1584 = vmax.f32 %v1576, 0.0
        %v1585 = vmax.f32 %v1577, 0.0
        %v1586 = vmax.f32 %v1578, 0.0
        %v1587 = vmax.f32 %v1579, 0.0
        %v1588 = vmax.f32 %v1580, 0.0
        %v1589 = vmax.f32 %v1581, %v1582
        %1590 = vst [vmem:[#allocation2] sm:$0xff] %v1589
        %v1591 = vmax.f32 %v1583, %v1584
        %1592 = vst [vmem:[#allocation2 + $0x8] sm:$0xff] %v1591
        %v1593 = vmax.f32 %v1585, %v1586
        %1594 = vst [vmem:[#allocation2 + $0x10] sm:$0xff] %v1593
        %v1595 = vmax.f32 %v1587, %v1588
        %1596 = vst [vmem:[#allocation2 + $0x18] sm:$0xff] %v1595
        %v1597 = vld [vmem:[#allocation2] ss:$2 sm:$0xff]
        %s1598 = scalar_lea.vmem [#allocation2], 16
        %v1599 = vld [vmem:[%s1598] ss:$2 sm:$0xff]
        %s1600 = scalar_lea.vmem [#allocation2], 1
        %v1601 = vld [vmem:[%s1600] ss:$2 sm:$0xff]
        %s1602 = scalar_lea.vmem [#allocation2], 17
        %v1603 = vld [vmem:[%s1602] ss:$2 sm:$0xff]
        %v1604 = vmax.f32 %v1597, %v1601
        %v1605 = vmax.f32 %v1599, %v1603
        %v1606 = vpack.c.bf16 %v1604, %v1604
        %v1607 = vpack.c.bf16 %v1605, %v1605
        %1608 = vst [vmem:[%s187] sm:$0xf] %v1606
        %1609 = vst [vmem:[%s187 + $0x4] sm:$0xf] %v1607
        %p1610 = scmp.lt.s32.totalorder %s15, 1
        %s1611 = scalar_select %p1610, %s15, 1
        %s1612 = smul.addr %s1611, 2
        %s1613 = smul.addr %s1612, 4
        %s1614 = scalar_lea.vmem %s3, %s1613
        // Predicated region
        $region37: #{griddy_forward.8} parent=31 // pred_check
          %p1615 = pneg %p101
        $region38: #{griddy_forward.8} parent=31 // pred_check_branch
          %1617 = sbr.rel (%p1615) target = $region40
        $region39: #{griddy_forward.8} parent=31 // pred_region
          _
        $region40: #{griddy_forward.8} parent=31 // pred_fallthru
          _
      $region32: #{griddy_forward.8} parent=5 // pred_fallthru
        _
      %p1618 = scmp.le.s32.totalorder 2, %s10
      // Predicated region
      $region41: #{griddy_forward.8} parent=5 // pred_check
        %p1619 = pneg %p1618
      $region42: #{griddy_forward.8} parent=5 // pred_check_branch
        %1621 = sbr.rel (%p1619) target = $region44
      $region43: #{griddy_forward.8} parent=5 // pred_region
        %s1622 = ssub.s32 %s10, 2
        // Predicated region
        $region45: #{griddy_forward.8} parent=43 // pred_check
          %p1623 = pneg %p107
        $region46: #{griddy_forward.8} parent=43 // pred_check_branch
          %1625 = sbr.rel (%p1623) target = $region48
        $region47: #{griddy_forward.8} parent=43 // pred_region
          %p1626 = scmp.lt.s32.totalorder %s16, 1
          %s1627 = scalar_select %p1626, %s16, 1
          %s1628 = smul.addr %s1627, 2
          %s1629 = smul.addr %s1628, 4
          %s1630 = scalar_lea.vmem %s3, %s1629
        $region48: #{griddy_forward.8} parent=43 // pred_fallthru
          _
      $region44: #{griddy_forward.8} parent=5 // pred_fallthru
        _
    $region6: #{griddy_forward.8} parent=1 // loop_footer
      %s14 = sadd.s32 1, %s10
    $region7: #{griddy_forward.8} parent=1 // loop_footer_branch
      %9 = sbr.rel target = $region3
    $region8: #{griddy_forward.8} parent=1 // loop_exit
      _
    %1631 = vsyncpa [#allocation4], 1
    %s1632 = scalar_lea.sflag [#allocation4], 1
    %1633 = vsyncpa %s1632, 1

// kernel: griddy_forward.6
$region0: #{griddy_forward.6}
  #allocation0 [shape = 'u32[]', space=smem, size = 0x4, offset = 0x4, fixed_abs, tag = 'smem constant byte address 0x4 - core index']
  #allocation1 [shape = 'u32[72,128]{1,0:T(1,128)}', space=vmem, size = 0x9000, scoped, tag = 'internal scratch']
  #allocation2 [shape = 'f32[128,128]{1,0:T(8,128)}', space=vmem, size = 0x10000, scoped, tag = 'scratch operand']
  %s0 = inlined_call_operand.vmem [shape: bf16[2,18,18,128], index: 0, kind: input, shape index: {}]
  %s1 = inlined_call_operand.vmem [shape: bf16[9,128,128], index: 1, kind: input, shape index: {}]
  %s2 = inlined_call_operand.vmem [shape: f32[1,128], index: 2, kind: input, shape index: {}]
  %s3 = inlined_call_operand.vmem [shape: bf16[2,64,128], index: 3, kind: output, shape index: {}]
  %s4 = sld [smem:[#allocation0]]
  $region45: #{griddy_forward.6} parent=0
    _
  %s6 = ssub.s32 1, %s4
  %s7 = scalar_select 0, %s6, %s4
  loop: start=0, step=1, limit=4
  $region2: #{griddy_forward.6} parent=0 // loop_pre_header
    _
  $region3: #{griddy_forward.6} parent=0 // loop_header
    %s9 = sphi 0, %s13
    %p10 = scmp.ge.s32.totalorder %s9, 4
    %s19 = sphi 0, %s21
    %s22 = sphi 0, %s19
    %s23 = sphi 0, %s22
    %s39 = sphi 0, %s23
    %s43 = sphi 0, %s43
    %s45 = sphi 0, %s43
    %s46 = sphi 0, %s45
    %s60 = sphi 0, %s46
    %s64 = sphi 0, %s64
    %s66 = sphi 0, %s64
    %s67 = sphi 0, %s66
    %s81 = sphi 0, %s67
    %s87 = sphi 0, %s89
    %s90 = sphi 0, %s87
    %s91 = sphi 0, %s90
    %s107 = sphi 0, %s91
  $region4: #{griddy_forward.6} parent=0 // loop_header_branch
    %12 = sbr.rel (%p10) target = $region8
  $region5: #{griddy_forward.6} parent=0 // loop_body
    %s14 = ssub.s32 %s9, 1
    %s15 = ssub.s32 %s9, 2
    %s16 = sadd.s32 %s9, 1
    %s17 = ssub.s32 %s9, %s16
    %p18 = scmp.eq.s32.totalorder %s17, 0
    %s20 = sadd.s32 %s19, 1
    %s21 = scalar_select %p18, %s19, %s20
    %p24 = pneg %p18
    %p25 = scmp.eq.s32.totalorder %s9, 1
    %p26 = por %p24, %p25
    %p27 = scmp.ne.s32.totalorder %s19, %s22
    %p28 = scmp.eq.s32.totalorder %s9, 0
    %p29 = por %p27, %p28
    %p30 = scmp.ne.s32.totalorder %s19, %s22
    %p31 = scmp.eq.s32.totalorder %s14, 1
    %p32 = por %p30, %p31
    %p33 = scmp.ne.s32.totalorder %s22, %s23
    %p34 = scmp.eq.s32.totalorder %s14, 0
    %p35 = por %p33, %p34
    %p36 = scmp.ne.s32.totalorder %s22, %s23
    %p37 = scmp.eq.s32.totalorder %s15, 1
    %p38 = por %p36, %p37
    %p40 = scmp.ne.s32.totalorder %s23, %s39
    %p41 = scmp.eq.s32.totalorder %s15, 0
    %p42 = por %p40, %p41
    %s44 = sadd.s32 %s43, 1
    %p47 = scmp.eq.s32.totalorder %s9, 1
    %p48 = scmp.ne.s32.totalorder %s43, %s45
    %p49 = scmp.eq.s32.totalorder %s9, 0
    %p50 = por %p48, %p49
    %p51 = scmp.ne.s32.totalorder %s43, %s45
    %p52 = scmp.eq.s32.totalorder %s14, 1
    %p53 = por %p51, %p52
    %p54 = scmp.ne.s32.totalorder %s45, %s46
    %p55 = scmp.eq.s32.totalorder %s14, 0
    %p56 = por %p54, %p55
    %p57 = scmp.ne.s32.totalorder %s45, %s46
    %p58 = scmp.eq.s32.totalorder %s15, 1
    %p59 = por %p57, %p58
    %p61 = scmp.ne.s32.totalorder %s46, %s60
    %p62 = scmp.eq.s32.totalorder %s15, 0
    %p63 = por %p61, %p62
    %s65 = sadd.s32 %s64, 1
    %p68 = scmp.eq.s32.totalorder %s9, 1
    %p69 = scmp.ne.s32.totalorder %s64, %s66
    %p70 = scmp.eq.s32.totalorder %s9, 0
    %p71 = por %p69, %p70
    %p72 = scmp.ne.s32.totalorder %s64, %s66
    %p73 = scmp.eq.s32.totalorder %s14, 1
    %p74 = por %p72, %p73
    %p75 = scmp.ne.s32.totalorder %s66, %s67
    %p76 = scmp.eq.s32.totalorder %s14, 0
    %p77 = por %p75, %p76
    %p78 = scmp.ne.s32.totalorder %s66, %s67
    %p79 = scmp.eq.s32.totalorder %s15, 1
    %p80 = por %p78, %p79
    %p82 = scmp.ne.s32.totalorder %s67, %s81
    %p83 = scmp.eq.s32.totalorder %s15, 0
    %p84 = por %p82, %p83
    %s85 = ssub.s32 %s9, %s16
    %p86 = scmp.eq.s32.totalorder %s85, 0
    %s88 = sadd.s32 %s87, 1
    %s89 = scalar_select %p86, %s87, %s88
    %p92 = pneg %p86
    %p93 = scmp.eq.s32.totalorder %s9, 1
    %p94 = por %p92, %p93
    %p95 = scmp.ne.s32.totalorder %s87, %s90
    %p96 = scmp.eq.s32.totalorder %s9, 0
    %p97 = por %p95, %p96
    %p98 = scmp.ne.s32.totalorder %s87, %s90
    %p99 = scmp.eq.s32.totalorder %s14, 1
    %p100 = por %p98, %p99
    %p101 = scmp.ne.s32.totalorder %s90, %s91
    %p102 = scmp.eq.s32.totalorder %s14, 0
    %p103 = por %p101, %p102
    %p104 = scmp.ne.s32.totalorder %s90, %s91
    %p105 = scmp.eq.s32.totalorder %s15, 1
    %p106 = por %p104, %p105
    %p108 = scmp.ne.s32.totalorder %s91, %s107
    %p109 = scmp.eq.s32.totalorder %s15, 0
    %p110 = por %p108, %p109
    %p111 = scmp.le.s32.totalorder 1, %s9
    %p112 = scmp.lt.s32.totalorder %s9, 3
    %p113 = pnand %p111, %p112
    %p114 = pneg %p113
    // Predicated region
    $region9: #{griddy_forward.6} parent=5 // pred_check
      _
    $region10: #{griddy_forward.6} parent=5 // pred_check_branch
      %116 = sbr.rel (%p113) target = $region12
    $region11: #{griddy_forward.6} parent=5 // pred_region
      %s117 = ssub.s32 %s9, 1
      // Predicated region
      $region13: #{griddy_forward.6} parent=11 // pred_check
        %p118 = pneg %p56
      $region14: #{griddy_forward.6} parent=11 // pred_check_branch
        %120 = sbr.rel (%p118) target = $region16
      $region15: #{griddy_forward.6} parent=11 // pred_region
        _
      $region16: #{griddy_forward.6} parent=11 // pred_fallthru
        _
      // Predicated region
      $region17: #{griddy_forward.6} parent=11 // pred_check
        %p121 = pneg %p77
      $region18: #{griddy_forward.6} parent=11 // pred_check_branch
        %123 = sbr.rel (%p121) target = $region20
      $region19: #{griddy_forward.6} parent=11 // pred_region
        _
      $region20: #{griddy_forward.6} parent=11 // pred_fallthru
        _
    $region12: #{griddy_forward.6} parent=5 // pred_fallthru
      _
    %p124 = scmp.lt.s32.totalorder %s9, 2
    // Predicated region
    $region21: #{griddy_forward.6} parent=5 // pred_check
      %p125 = pneg %p124
    $region22: #{griddy_forward.6} parent=5 // pred_check_branch
      %127 = sbr.rel (%p125) target = $region24
    $region23: #{griddy_forward.6} parent=5 // pred_region
      // Predicated region
      $region25: #{griddy_forward.6} parent=23 // pred_check
        %p128 = pneg %p29
      $region26: #{griddy_forward.6} parent=23 // pred_check_branch
        %130 = sbr.rel (%p128) target = $region28
      $region27: #{griddy_forward.6} parent=23 // pred_region
        %p131 = scmp.lt.s32.totalorder %s9, 1
        %s132 = scalar_select %p131, %s9, 1
        %s133 = smul.addr %s132, 54
        %s134 = smul.addr %s133, 4
        %s135 = scalar_lea.vmem %s0, %s134
      $region28: #{griddy_forward.6} parent=23 // pred_fallthru
        _
    $region24: #{griddy_forward.6} parent=5 // pred_fallthru
      _
    %p136 = scmp.le.s32.totalorder 1, %s9
    %p137 = scmp.lt.s32.totalorder %s9, 3
    %p138 = pnand %p136, %p137
    %p139 = pneg %p138
    // Predicated region
    $region29: #{griddy_forward.6} parent=5 // pred_check
      _
    $region30: #{griddy_forward.6} parent=5 // pred_check_branch
      %141 = sbr.rel (%p138) target = $region32
    $region31: #{griddy_forward.6} parent=5 // pred_region
      %s142 = ssub.s32 %s9, 1
      %p143 = scmp.lt.s32.totalorder %s14, 1
      %s144 = scalar_select %p143, %s14, 1
      %s145 = smul.addr %s144, 54
      %s146 = smul.addr %s145, 4
      %s147 = scalar_lea.vmem %s0, %s146
      %p148 = pneg %p35
      %p149 = pneg %p32
      %p150 = pneg %p56
      %p151 = pneg %p53
      %p152 = pneg %p77
      %p153 = pneg %p74
      %p154 = pneg %p103
      %p155 = pneg %p100
      %p156 = scmp.lt.s32.totalorder %s14, 1
      %s157 = scalar_select %p156, %s14, 1
      %s158 = smul.addr %s157, 8
      %s159 = smul.addr %s158, 4
      %s160 = scalar_lea.vmem %s3, %s159
      %p161 = scmp.lt.s32.totalorder %s14, 1
      %s162 = scalar_select %p161, %s14, 1
      %s163 = smul.addr %s162, 54
      %s164 = smul.addr %s163, 4
      %s165 = scalar_lea.vmem %s0, %s164
      %p166 = scmp.lt.s32.totalorder %s14, 1
      %s167 = scalar_select %p166, %s14, 1
      %s168 = smul.addr %s167, 8
      %s169 = smul.addr %s168, 4
      %s170 = scalar_lea.vmem %s3, %s169
      %v171 = vld [vmem:[%s165] sm:$0xf]
      %v172 = vld [vmem:[%s165 + $0x4] sm:$0xf]
      %v173 = vld [vmem:[%s165 + $0xc] sm:$0xf]
      %v174 = vld [vmem:[%s165 + $0x10] sm:$0xf]
      %v175 = vld [vmem:[%s165 + $0x18] sm:$0xf]
      %v176 = vld [vmem:[%s165 + $0x1c] sm:$0xf]
      %v177 = vld [vmem:[%s165 + $0x24] sm:$0xf]
      %v178 = vld [vmem:[%s165 + $0x28] sm:$0xf]
      %v179 = vld [vmem:[%s165 + $0x30] sm:$0xf]
      %v180 = vld [vmem:[%s165 + $0x34] sm:$0xf]
      %v181 = vld [vmem:[%s165 + $0x3c] sm:$0xf]
      %v182 = vld [vmem:[%s165 + $0x40] sm:$0xf]
      %v183 = vld [vmem:[%s165 + $0x48] sm:$0xf]
      %v184 = vld [vmem:[%s165 + $0x4c] sm:$0xf]
      %v185 = vld [vmem:[%s165 + $0x54] sm:$0xf]
      %v186 = vld [vmem:[%s165 + $0x58] sm:$0xf]
      %v187 = vld [vmem:[%s165 + $0x60] sm:$0xf]
      %v188 = vld [vmem:[%s165 + $0x64] sm:$0xf]
      %v189 = vld [vmem:[%s165 + $0x6c] sm:$0xf]
      %v190 = vld [vmem:[%s165 + $0x70] sm:$0xf]
      %v191 = vld [vmem:[%s165 + $0x78] sm:$0xf]
      %v192 = vld [vmem:[%s165 + $0x7c] sm:$0xf]
      %v193 = vld [vmem:[%s165 + $0x84] sm:$0xf]
      %v194 = vld [vmem:[%s165 + $0x88] sm:$0xf]
      %v195 = vld [vmem:[%s165 + $0x90] sm:$0xf]
      %v196 = vld [vmem:[%s165 + $0x94] sm:$0xf]
      %v197 = vld [vmem:[%s165 + $0x9c] sm:$0xf]
      %v198 = vld [vmem:[%s165 + $0xa0] sm:$0xf]
      %v199 = vld [vmem:[%s165 + $0xa8] sm:$0xf]
      %v200 = vld [vmem:[%s165 + $0xac] sm:$0xf]
      %v201 = vld [vmem:[%s165 + $0xb4] sm:$0xf]
      %v202 = vld [vmem:[%s165 + $0xb8] sm:$0xf]
      %v203 = vunpack.c.l.bf16 %v171
      %v204 = vunpack.c.l.bf16 %v172
      %v205 = vunpack.c.l.bf16 %v173
      %v206 = vunpack.c.l.bf16 %v174
      %v207 = vunpack.c.l.bf16 %v175
      %v208 = vunpack.c.l.bf16 %v176
      %v209 = vunpack.c.l.bf16 %v177
      %v210 = vunpack.c.l.bf16 %v178
      %v211 = vunpack.c.l.bf16 %v179
      %v212 = vunpack.c.l.bf16 %v180
      %v213 = vunpack.c.l.bf16 %v181
      %v214 = vunpack.c.l.bf16 %v182
      %v215 = vunpack.c.l.bf16 %v183
      %v216 = vunpack.c.l.bf16 %v184
      %v217 = vunpack.c.l.bf16 %v185
      %v218 = vunpack.c.l.bf16 %v186
      %v219 = vunpack.c.l.bf16 %v187
      %v220 = vunpack.c.l.bf16 %v188
      %v221 = vunpack.c.l.bf16 %v189
      %v222 = vunpack.c.l.bf16 %v190
      %v223 = vunpack.c.l.bf16 %v191
      %v224 = vunpack.c.l.bf16 %v192
      %v225 = vunpack.c.l.bf16 %v193
      %v226 = vunpack.c.l.bf16 %v194
      %v227 = vunpack.c.l.bf16 %v195
      %v228 = vunpack.c.l.bf16 %v196
      %v229 = vunpack.c.l.bf16 %v197
      %v230 = vunpack.c.l.bf16 %v198
      %v231 = vunpack.c.l.bf16 %v199
      %v232 = vunpack.c.l.bf16 %v200
      %v233 = vunpack.c.l.bf16 %v201
      %v234 = vunpack.c.l.bf16 %v202
      %v235 = vpack.c.bf16 %v204, %v203
      %v236 = vpack.c.bf16 %v206, %v205
      %v237 = vpack.c.bf16 %v208, %v207
      %v238 = vpack.c.bf16 %v210, %v209
      %v239 = vpack.c.bf16 %v212, %v211
      %v240 = vpack.c.bf16 %v214, %v213
      %v241 = vpack.c.bf16 %v216, %v215
      %v242 = vpack.c.bf16 %v218, %v217
      %v243 = vpack.c.bf16 %v220, %v219
      %v244 = vpack.c.bf16 %v222, %v221
      %v245 = vpack.c.bf16 %v224, %v223
      %v246 = vpack.c.bf16 %v226, %v225
      %v247 = vpack.c.bf16 %v228, %v227
      %v248 = vpack.c.bf16 %v230, %v229
      %v249 = vpack.c.bf16 %v232, %v231
      %v250 = vpack.c.bf16 %v234, %v233
      %v251 = vld [vmem:[%s1] sm:$0xf]
      %v252 = vld [vmem:[%s1 + $0x4] sm:$0xf]
      %v253 = vld [vmem:[%s1 + $0x8] sm:$0xf]
      %v254 = vld [vmem:[%s1 + $0xc] sm:$0xf]
      %v255 = vld [vmem:[%s1 + $0x10] sm:$0xf]
      %v256 = vld [vmem:[%s1 + $0x14] sm:$0xf]
      %v257 = vld [vmem:[%s1 + $0x18] sm:$0xf]
      %v258 = vld [vmem:[%s1 + $0x1c] sm:$0xf]
      %v259 = vld [vmem:[%s1 + $0x20] sm:$0xf]
      %v260 = vld [vmem:[%s1 + $0x24] sm:$0xf]
      %v261 = vld [vmem:[%s1 + $0x28] sm:$0xf]
      %v262 = vld [vmem:[%s1 + $0x2c] sm:$0xf]
      %v263 = vld [vmem:[%s1 + $0x30] sm:$0xf]
      %v264 = vld [vmem:[%s1 + $0x34] sm:$0xf]
      %v265 = vld [vmem:[%s1 + $0x38] sm:$0xf]
      %v266 = vld [vmem:[%s1 + $0x3c] sm:$0xf]
      %v267 = vld [vmem:[%s165 + $0x8] sm:$0x1]
      %v268 = vld [vmem:[%s165 + $0x14] sm:$0x1]
      %v269 = vld [vmem:[%s165 + $0x20] sm:$0x1]
      %v270 = vld [vmem:[%s165 + $0x2c] sm:$0x1]
      %v271 = vld [vmem:[%s165 + $0x38] sm:$0x1]
      %v272 = vld [vmem:[%s165 + $0x44] sm:$0x1]
      %v273 = vld [vmem:[%s165 + $0x50] sm:$0x1]
      %v274 = vld [vmem:[%s165 + $0x5c] sm:$0x1]
      %v275 = vld [vmem:[%s165 + $0x68] sm:$0x1]
      %v276 = vld [vmem:[%s165 + $0x74] sm:$0x1]
      %v277 = vld [vmem:[%s165 + $0x80] sm:$0x1]
      %v278 = vld [vmem:[%s165 + $0x8c] sm:$0x1]
      %v279 = vld [vmem:[%s165 + $0x98] sm:$0x1]
      %v280 = vld [vmem:[%s165 + $0xa4] sm:$0x1]
      %v281 = vld [vmem:[%s165 + $0xb0] sm:$0x1]
      %v282 = vld [vmem:[%s165 + $0xbc] sm:$0x1]
      %v283 = vunpack.c.l.bf16 %v267
      %v284 = vunpack.c.l.bf16 %v268
      %v285 = vunpack.c.l.bf16 %v269
      %v286 = vunpack.c.l.bf16 %v270
      %v287 = vunpack.c.l.bf16 %v271
      %v288 = vunpack.c.l.bf16 %v272
      %v289 = vunpack.c.l.bf16 %v273
      %v290 = vunpack.c.l.bf16 %v274
      %v291 = vunpack.c.l.bf16 %v275
      %v292 = vunpack.c.l.bf16 %v276
      %v293 = vunpack.c.l.bf16 %v277
      %v294 = vunpack.c.l.bf16 %v278
      %v295 = vunpack.c.l.bf16 %v279
      %v296 = vunpack.c.l.bf16 %v280
      %v297 = vunpack.c.l.bf16 %v281
      %v298 = vunpack.c.l.bf16 %v282
      %vm347 = vcmask 1046528
      %v348 = vrot.slane %v203, 1
      %v349 = vrot.slane %v204, 1
      %v350 = vsel %vm347, %v348, %v349
      %v351 = vrot.slane %v283, 1
      %v352 = vsel %vm347, %v349, %v351
      %v353 = vrot.slane %v205, 1
      %v354 = vrot.slane %v206, 1
      %v355 = vsel %vm347, %v353, %v354
      %v356 = vrot.slane %v284, 1
      %v357 = vsel %vm347, %v354, %v356
      %v358 = vrot.slane %v207, 1
      %v359 = vrot.slane %v208, 1
      %v360 = vsel %vm347, %v358, %v359
      %v361 = vrot.slane %v285, 1
      %v362 = vsel %vm347, %v359, %v361
      %v363 = vrot.slane %v209, 1
      %v364 = vrot.slane %v210, 1
      %v365 = vsel %vm347, %v363, %v364
      %v366 = vrot.slane %v286, 1
      %v367 = vsel %vm347, %v364, %v366
      %v368 = vrot.slane %v211, 1
      %v369 = vrot.slane %v212, 1
      %v370 = vsel %vm347, %v368, %v369
      %v371 = vrot.slane %v287, 1
      %v372 = vsel %vm347, %v369, %v371
      %v373 = vrot.slane %v213, 1
      %v374 = vrot.slane %v214, 1
      %v375 = vsel %vm347, %v373, %v374
      %v376 = vrot.slane %v288, 1
      %v377 = vsel %vm347, %v374, %v376
      %v378 = vrot.slane %v215, 1
      %v379 = vrot.slane %v216, 1
      %v380 = vsel %vm347, %v378, %v379
      %v381 = vrot.slane %v289, 1
      %v382 = vsel %vm347, %v379, %v381
      %v383 = vrot.slane %v217, 1
      %v384 = vrot.slane %v218, 1
      %v385 = vsel %vm347, %v383, %v384
      %v386 = vrot.slane %v290, 1
      %v387 = vsel %vm347, %v384, %v386
      %v388 = vrot.slane %v219, 1
      %v389 = vrot.slane %v220, 1
      %v390 = vsel %vm347, %v388, %v389
      %v391 = vrot.slane %v291, 1
      %v392 = vsel %vm347, %v389, %v391
      %v393 = vrot.slane %v221, 1
      %v394 = vrot.slane %v222, 1
      %v395 = vsel %vm347, %v393, %v394
      %v396 = vrot.slane %v292, 1
      %v397 = vsel %vm347, %v394, %v396
      %v398 = vrot.slane %v223, 1
      %v399 = vrot.slane %v224, 1
      %v400 = vsel %vm347, %v398, %v399
      %v401 = vrot.slane %v293, 1
      %v402 = vsel %vm347, %v399, %v401
      %v403 = vrot.slane %v225, 1
      %v404 = vrot.slane %v226, 1
      %v405 = vsel %vm347, %v403, %v404
      %v406 = vrot.slane %v294, 1
      %v407 = vsel %vm347, %v404, %v406
      %v408 = vrot.slane %v227, 1
      %v409 = vrot.slane %v228, 1
      %v410 = vsel %vm347, %v408, %v409
      %v411 = vrot.slane %v295, 1
      %v412 = vsel %vm347, %v409, %v411
      %v413 = vrot.slane %v229, 1
      %v414 = vrot.slane %v230, 1
      %v415 = vsel %vm347, %v413, %v414
      %v416 = vrot.slane %v296, 1
      %v417 = vsel %vm347, %v414, %v416
      %v418 = vrot.slane %v231, 1
      %v419 = vrot.slane %v232, 1
      %v420 = vsel %vm347, %v418, %v419
      %v421 = vrot.slane %v297, 1
      %v422 = vsel %vm347, %v419, %v421
      %v423 = vrot.slane %v233, 1
      %v424 = vrot.slane %v234, 1
      %v425 = vsel %vm347, %v423, %v424
      %v426 = vrot.slane %v298, 1
      %v427 = vsel %vm347, %v424, %v426
      %v460 = vpack.c.bf16 %v352, %v350
      %v461 = vpack.c.bf16 %v357, %v355
      %v462 = vpack.c.bf16 %v362, %v360
      %v463 = vpack.c.bf16 %v367, %v365
      %v464 = vpack.c.bf16 %v372, %v370
      %v465 = vpack.c.bf16 %v377, %v375
      %v466 = vpack.c.bf16 %v382, %v380
      %v467 = vpack.c.bf16 %v387, %v385
      %v468 = vpack.c.bf16 %v392, %v390
      %v469 = vpack.c.bf16 %v397, %v395
      %v470 = vpack.c.bf16 %v402, %v400
      %v471 = vpack.c.bf16 %v407, %v405
      %v472 = vpack.c.bf16 %v412, %v410
      %v473 = vpack.c.bf16 %v417, %v415
      %v474 = vpack.c.bf16 %v422, %v420
      %v475 = vpack.c.bf16 %v427, %v425
      %s476 = scalar_lea.vmem %s1, 64
      %v477 = vld [vmem:[%s476] sm:$0xf]
      %v478 = vld [vmem:[%s476 + $0x4] sm:$0xf]
      %v479 = vld [vmem:[%s476 + $0x8] sm:$0xf]
      %v480 = vld [vmem:[%s476 + $0xc] sm:$0xf]
      %v481 = vld [vmem:[%s476 + $0x10] sm:$0xf]
      %v482 = vld [vmem:[%s476 + $0x14] sm:$0xf]
      %v483 = vld [vmem:[%s476 + $0x18] sm:$0xf]
      %v484 = vld [vmem:[%s476 + $0x1c] sm:$0xf]
      %v485 = vld [vmem:[%s476 + $0x20] sm:$0xf]
      %v486 = vld [vmem:[%s476 + $0x24] sm:$0xf]
      %v487 = vld [vmem:[%s476 + $0x28] sm:$0xf]
      %v488 = vld [vmem:[%s476 + $0x2c] sm:$0xf]
      %v489 = vld [vmem:[%s476 + $0x30] sm:$0xf]
      %v490 = vld [vmem:[%s476 + $0x34] sm:$0xf]
      %v491 = vld [vmem:[%s476 + $0x38] sm:$0xf]
      %v492 = vld [vmem:[%s476 + $0x3c] sm:$0xf]
      %v509 = vunpack.c.l.b16 %v477
      %v510 = vunpack.c.l.b16 %v478
      %v511 = vunpack.c.l.b16 %v479
      %v512 = vunpack.c.l.b16 %v480
      %v513 = vunpack.c.l.b16 %v481
      %v514 = vunpack.c.l.b16 %v482
      %v515 = vunpack.c.l.b16 %v483
      %v516 = vunpack.c.l.b16 %v484
      %v517 = vunpack.c.l.b16 %v485
      %v518 = vunpack.c.l.b16 %v486
      %v519 = vunpack.c.l.b16 %v487
      %v520 = vunpack.c.l.b16 %v488
      %v521 = vunpack.c.l.b16 %v489
      %v522 = vunpack.c.l.b16 %v490
      %v523 = vunpack.c.l.b16 %v491
      %v524 = vunpack.c.l.b16 %v492
      %v525 = vpack.c.b16 %v510, %v509
      %v526 = vpack.c.b16 %v512, %v511
      %v527 = vpack.c.b16 %v514, %v513
      %v528 = vpack.c.b16 %v516, %v515
      %v529 = vpack.c.b16 %v518, %v517
      %v530 = vpack.c.b16 %v520, %v519
      %v531 = vpack.c.b16 %v522, %v521
      %v532 = vpack.c.b16 %v524, %v523
      %541 = vmatpush.bf16.msra.mxu0 %v532
      %542 = vmatpush.bf16.msra.mxu0 %v531
      %543 = vmatpush.bf16.msra.mxu0 %v530
      %544 = vmatpush.bf16.msra.mxu0 %v529
      %545 = vmatpush.bf16.msra.mxu0 %v528
      %546 = vmatpush.bf16.msra.mxu0 %v527
      %547 = vmatpush.bf16.msra.mxu0 %v526
      %548 = vmatpush.bf16.msra.mxu0 %v525
      %549 = vmatmul.bf16.gmra.mxu0 %v460
      %v550 = vpop.f32.mrf.mxu0
      %v551 = vadd.f32 0.0, %v550
      %v552 = vpop.f32.mrf.mxu0
      %v553 = vadd.f32 0.0, %v552
      %554 = vmatmul.bf16.gmra.mxu0 %v461
      %v555 = vpop.f32.mrf.mxu0
      %v556 = vadd.f32 0.0, %v555
      %v557 = vpop.f32.mrf.mxu0
      %v558 = vadd.f32 0.0, %v557
      %559 = vmatmul.bf16.gmra.mxu0 %v462
      %v560 = vpop.f32.mrf.mxu0
      %v561 = vadd.f32 0.0, %v560
      %v562 = vpop.f32.mrf.mxu0
      %v563 = vadd.f32 0.0, %v562
      %564 = vmatmul.bf16.gmra.mxu0 %v463
      %v565 = vpop.f32.mrf.mxu0
      %v566 = vadd.f32 0.0, %v565
      %v567 = vpop.f32.mrf.mxu0
      %v568 = vadd.f32 0.0, %v567
      %569 = vmatmul.bf16.gmra.mxu0 %v464
      %v570 = vpop.f32.mrf.mxu0
      %v571 = vadd.f32 0.0, %v570
      %v572 = vpop.f32.mrf.mxu0
      %v573 = vadd.f32 0.0, %v572
      %574 = vmatmul.bf16.gmra.mxu0 %v465
      %v575 = vpop.f32.mrf.mxu0
      %v576 = vadd.f32 0.0, %v575
      %v577 = vpop.f32.mrf.mxu0
      %v578 = vadd.f32 0.0, %v577
      %579 = vmatmul.bf16.gmra.mxu0 %v466
      %v580 = vpop.f32.mrf.mxu0
      %v581 = vadd.f32 0.0, %v580
      %v582 = vpop.f32.mrf.mxu0
      %v583 = vadd.f32 0.0, %v582
      %584 = vmatmul.bf16.gmra.mxu0 %v467
      %v585 = vpop.f32.mrf.mxu0
      %v586 = vadd.f32 0.0, %v585
      %v587 = vpop.f32.mrf.mxu0
      %v588 = vadd.f32 0.0, %v587
      %589 = vmatmul.bf16.gmra.mxu0 %v468
      %v590 = vpop.f32.mrf.mxu0
      %v591 = vadd.f32 0.0, %v590
      %v592 = vpop.f32.mrf.mxu0
      %v593 = vadd.f32 0.0, %v592
      %594 = vmatmul.bf16.gmra.mxu0 %v469
      %v595 = vpop.f32.mrf.mxu0
      %v596 = vadd.f32 0.0, %v595
      %v597 = vpop.f32.mrf.mxu0
      %v598 = vadd.f32 0.0, %v597
      %599 = vmatmul.bf16.gmra.mxu0 %v470
      %v600 = vpop.f32.mrf.mxu0
      %v601 = vadd.f32 0.0, %v600
      %v602 = vpop.f32.mrf.mxu0
      %v603 = vadd.f32 0.0, %v602
      %604 = vmatmul.bf16.gmra.mxu0 %v471
      %v605 = vpop.f32.mrf.mxu0
      %v606 = vadd.f32 0.0, %v605
      %v607 = vpop.f32.mrf.mxu0
      %v608 = vadd.f32 0.0, %v607
      %609 = vmatmul.bf16.gmra.mxu0 %v472
      %v610 = vpop.f32.mrf.mxu0
      %v611 = vadd.f32 0.0, %v610
      %v612 = vpop.f32.mrf.mxu0
      %v613 = vadd.f32 0.0, %v612
      %614 = vmatmul.bf16.gmra.mxu0 %v473
      %v615 = vpop.f32.mrf.mxu0
      %v616 = vadd.f32 0.0, %v615
      %v617 = vpop.f32.mrf.mxu0
      %v618 = vadd.f32 0.0, %v617
      %619 = vmatmul.bf16.gmra.mxu0 %v474
      %v620 = vpop.f32.mrf.mxu0
      %v621 = vadd.f32 0.0, %v620
      %v622 = vpop.f32.mrf.mxu0
      %v623 = vadd.f32 0.0, %v622
      %624 = vmatmul.bf16.gmra.mxu0 %v475
      %v625 = vpop.f32.mrf.mxu0
      %v626 = vadd.f32 0.0, %v625
      %v627 = vpop.f32.mrf.mxu0
      %v628 = vadd.f32 0.0, %v627
      %629 = vdwg.mxu0
      %v646 = vunpack.c.l.b16 %v251
      %v647 = vunpack.c.l.b16 %v252
      %v648 = vunpack.c.l.b16 %v253
      %v649 = vunpack.c.l.b16 %v254
      %v650 = vunpack.c.l.b16 %v255
      %v651 = vunpack.c.l.b16 %v256
      %v652 = vunpack.c.l.b16 %v257
      %v653 = vunpack.c.l.b16 %v258
      %v654 = vunpack.c.l.b16 %v259
      %v655 = vunpack.c.l.b16 %v260
      %v656 = vunpack.c.l.b16 %v261
      %v657 = vunpack.c.l.b16 %v262
      %v658 = vunpack.c.l.b16 %v263
      %v659 = vunpack.c.l.b16 %v264
      %v660 = vunpack.c.l.b16 %v265
      %v661 = vunpack.c.l.b16 %v266
      %v662 = vpack.c.b16 %v647, %v646
      %v663 = vpack.c.b16 %v649, %v648
      %v664 = vpack.c.b16 %v651, %v650
      %v665 = vpack.c.b16 %v653, %v652
      %v666 = vpack.c.b16 %v655, %v654
      %v667 = vpack.c.b16 %v657, %v656
      %v668 = vpack.c.b16 %v659, %v658
      %v669 = vpack.c.b16 %v661, %v660
      %678 = vmatpush.bf16.msra.mxu0 %v669
      %679 = vmatpush.bf16.msra.mxu0 %v668
      %680 = vmatpush.bf16.msra.mxu0 %v667
      %681 = vmatpush.bf16.msra.mxu0 %v666
      %682 = vmatpush.bf16.msra.mxu0 %v665
      %683 = vmatpush.bf16.msra.mxu0 %v664
      %684 = vmatpush.bf16.msra.mxu0 %v663
      %685 = vmatpush.bf16.msra.mxu0 %v662
      %686 = vmatmul.bf16.gmra.mxu0 %v235
      %v687 = vpop.f32.mrf.mxu0
      %v688 = vadd.f32 %v551, %v687
      %v689 = vpop.f32.mrf.mxu0
      %v690 = vadd.f32 %v553, %v689
      %691 = vmatmul.bf16.gmra.mxu0 %v236
      %v692 = vpop.f32.mrf.mxu0
      %v693 = vadd.f32 %v556, %v692
      %v694 = vpop.f32.mrf.mxu0
      %v695 = vadd.f32 %v558, %v694
      %696 = vmatmul.bf16.gmra.mxu0 %v237
      %v697 = vpop.f32.mrf.mxu0
      %v698 = vadd.f32 %v561, %v697
      %v699 = vpop.f32.mrf.mxu0
      %v700 = vadd.f32 %v563, %v699
      %701 = vmatmul.bf16.gmra.mxu0 %v238
      %v702 = vpop.f32.mrf.mxu0
      %v703 = vadd.f32 %v566, %v702
      %v704 = vpop.f32.mrf.mxu0
      %v705 = vadd.f32 %v568, %v704
      %706 = vmatmul.bf16.gmra.mxu0 %v239
      %v707 = vpop.f32.mrf.mxu0
      %v708 = vadd.f32 %v571, %v707
      %v709 = vpop.f32.mrf.mxu0
      %v710 = vadd.f32 %v573, %v709
      %711 = vmatmul.bf16.gmra.mxu0 %v240
      %v712 = vpop.f32.mrf.mxu0
      %v713 = vadd.f32 %v576, %v712
      %v714 = vpop.f32.mrf.mxu0
      %v715 = vadd.f32 %v578, %v714
      %716 = vmatmul.bf16.gmra.mxu0 %v241
      %v717 = vpop.f32.mrf.mxu0
      %v718 = vadd.f32 %v581, %v717
      %v719 = vpop.f32.mrf.mxu0
      %v720 = vadd.f32 %v583, %v719
      %721 = vmatmul.bf16.gmra.mxu0 %v242
      %v722 = vpop.f32.mrf.mxu0
      %v723 = vadd.f32 %v586, %v722
      %v724 = vpop.f32.mrf.mxu0
      %v725 = vadd.f32 %v588, %v724
      %726 = vmatmul.bf16.gmra.mxu0 %v243
      %v727 = vpop.f32.mrf.mxu0
      %v728 = vadd.f32 %v591, %v727
      %v729 = vpop.f32.mrf.mxu0
      %v730 = vadd.f32 %v593, %v729
      %731 = vmatmul.bf16.gmra.mxu0 %v244
      %v732 = vpop.f32.mrf.mxu0
      %v733 = vadd.f32 %v596, %v732
      %v734 = vpop.f32.mrf.mxu0
      %v735 = vadd.f32 %v598, %v734
      %736 = vmatmul.bf16.gmra.mxu0 %v245
      %v737 = vpop.f32.mrf.mxu0
      %v738 = vadd.f32 %v601, %v737
      %v739 = vpop.f32.mrf.mxu0
      %v740 = vadd.f32 %v603, %v739
      %741 = vmatmul.bf16.gmra.mxu0 %v246
      %v742 = vpop.f32.mrf.mxu0
      %v743 = vadd.f32 %v606, %v742
      %v744 = vpop.f32.mrf.mxu0
      %v745 = vadd.f32 %v608, %v744
      %746 = vmatmul.bf16.gmra.mxu0 %v247
      %v747 = vpop.f32.mrf.mxu0
      %v748 = vadd.f32 %v611, %v747
      %v749 = vpop.f32.mrf.mxu0
      %v750 = vadd.f32 %v613, %v749
      %751 = vmatmul.bf16.gmra.mxu0 %v248
      %v752 = vpop.f32.mrf.mxu0
      %v753 = vadd.f32 %v616, %v752
      %v754 = vpop.f32.mrf.mxu0
      %v755 = vadd.f32 %v618, %v754
      %756 = vmatmul.bf16.gmra.mxu0 %v249
      %v757 = vpop.f32.mrf.mxu0
      %v758 = vadd.f32 %v621, %v757
      %v759 = vpop.f32.mrf.mxu0
      %v760 = vadd.f32 %v623, %v759
      %761 = vmatmul.bf16.gmra.mxu0 %v250
      %v762 = vpop.f32.mrf.mxu0
      %v763 = vadd.f32 %v626, %v762
      %v764 = vpop.f32.mrf.mxu0
      %v765 = vadd.f32 %v628, %v764
      %766 = vdwg.mxu0
      %v767 = vld [vmem:[%s165] sm:$0xe]
      %v768 = vld [vmem:[%s165 + $0xc] sm:$0xe]
      %v769 = vld [vmem:[%s165 + $0x18] sm:$0xe]
      %v770 = vld [vmem:[%s165 + $0x24] sm:$0xe]
      %v771 = vld [vmem:[%s165 + $0x30] sm:$0xe]
      %v772 = vld [vmem:[%s165 + $0x3c] sm:$0xe]
      %v773 = vld [vmem:[%s165 + $0x48] sm:$0xe]
      %v774 = vld [vmem:[%s165 + $0x54] sm:$0xe]
      %v775 = vld [vmem:[%s165 + $0x60] sm:$0xe]
      %v776 = vld [vmem:[%s165 + $0x6c] sm:$0xe]
      %v777 = vld [vmem:[%s165 + $0x78] sm:$0xe]
      %v778 = vld [vmem:[%s165 + $0x84] sm:$0xe]
      %v779 = vld [vmem:[%s165 + $0x90] sm:$0xe]
      %v780 = vld [vmem:[%s165 + $0x9c] sm:$0xe]
      %v781 = vld [vmem:[%s165 + $0xa8] sm:$0xe]
      %v782 = vld [vmem:[%s165 + $0xb4] sm:$0xe]
      %v783 = vunpack.c.l.bf16 %v767
      %v784 = vunpack.c.l.bf16 %v768
      %v785 = vunpack.c.l.bf16 %v769
      %v786 = vunpack.c.l.bf16 %v770
      %v787 = vunpack.c.l.bf16 %v771
      %v788 = vunpack.c.l.bf16 %v772
      %v789 = vunpack.c.l.bf16 %v773
      %v790 = vunpack.c.l.bf16 %v774
      %v791 = vunpack.c.l.bf16 %v775
      %v792 = vunpack.c.l.bf16 %v776
      %v793 = vunpack.c.l.bf16 %v777
      %v794 = vunpack.c.l.bf16 %v778
      %v795 = vunpack.c.l.bf16 %v779
      %v796 = vunpack.c.l.bf16 %v780
      %v797 = vunpack.c.l.bf16 %v781
      %v798 = vunpack.c.l.bf16 %v782
      %vm815 = vcmask 1045504
      %v816 = vrot.slane %v783, 2
      %v817 = vrot.slane %v204, 2
      %v818 = vsel %vm815, %v816, %v817
      %v819 = vrot.slane %v283, 2
      %v820 = vsel %vm815, %v817, %v819
      %v821 = vrot.slane %v784, 2
      %v822 = vrot.slane %v206, 2
      %v823 = vsel %vm815, %v821, %v822
      %v824 = vrot.slane %v284, 2
      %v825 = vsel %vm815, %v822, %v824
      %v826 = vrot.slane %v785, 2
      %v827 = vrot.slane %v208, 2
      %v828 = vsel %vm815, %v826, %v827
      %v829 = vrot.slane %v285, 2
      %v830 = vsel %vm815, %v827, %v829
      %v831 = vrot.slane %v786, 2
      %v832 = vrot.slane %v210, 2
      %v833 = vsel %vm815, %v831, %v832
      %v834 = vrot.slane %v286, 2
      %v835 = vsel %vm815, %v832, %v834
      %v836 = vrot.slane %v787, 2
      %v837 = vrot.slane %v212, 2
      %v838 = vsel %vm815, %v836, %v837
      %v839 = vrot.slane %v287, 2
      %v840 = vsel %vm815, %v837, %v839
      %v841 = vrot.slane %v788, 2
      %v842 = vrot.slane %v214, 2
      %v843 = vsel %vm815, %v841, %v842
      %v844 = vrot.slane %v288, 2
      %v845 = vsel %vm815, %v842, %v844
      %v846 = vrot.slane %v789, 2
      %v847 = vrot.slane %v216, 2
      %v848 = vsel %vm815, %v846, %v847
      %v849 = vrot.slane %v289, 2
      %v850 = vsel %vm815, %v847, %v849
      %v851 = vrot.slane %v790, 2
      %v852 = vrot.slane %v218, 2
      %v853 = vsel %vm815, %v851, %v852
      %v854 = vrot.slane %v290, 2
      %v855 = vsel %vm815, %v852, %v854
      %v856 = vrot.slane %v791, 2
      %v857 = vrot.slane %v220, 2
      %v858 = vsel %vm815, %v856, %v857
      %v859 = vrot.slane %v291, 2
      %v860 = vsel %vm815, %v857, %v859
      %v861 = vrot.slane %v792, 2
      %v862 = vrot.slane %v222, 2
      %v863 = vsel %vm815, %v861, %v862
      %v864 = vrot.slane %v292, 2
      %v865 = vsel %vm815, %v862, %v864
      %v866 = vrot.slane %v793, 2
      %v867 = vrot.slane %v224, 2
      %v868 = vsel %vm815, %v866, %v867
      %v869 = vrot.slane %v293, 2
      %v870 = vsel %vm815, %v867, %v869
      %v871 = vrot.slane %v794, 2
      %v872 = vrot.slane %v226, 2
      %v873 = vsel %vm815, %v871, %v872
      %v874 = vrot.slane %v294, 2
      %v875 = vsel %vm815, %v872, %v874
      %v876 = vrot.slane %v795, 2
      %v877 = vrot.slane %v228, 2
      %v878 = vsel %vm815, %v876, %v877
      %v879 = vrot.slane %v295, 2
      %v880 = vsel %vm815, %v877, %v879
      %v881 = vrot.slane %v796, 2
      %v882 = vrot.slane %v230, 2
      %v883 = vsel %vm815, %v881, %v882
      %v884 = vrot.slane %v296, 2
      %v885 = vsel %vm815, %v882, %v884
      %v886 = vrot.slane %v797, 2
      %v887 = vrot.slane %v232, 2
      %v888 = vsel %vm815, %v886, %v887
      %v889 = vrot.slane %v297, 2
      %v890 = vsel %vm815, %v887, %v889
      %v891 = vrot.slane %v798, 2
      %v892 = vrot.slane %v234, 2
      %v893 = vsel %vm815, %v891, %v892
      %v894 = vrot.slane %v298, 2
      %v895 = vsel %vm815, %v892, %v894
      %v928 = vpack.c.bf16 %v820, %v818
      %v929 = vpack.c.bf16 %v825, %v823
      %v930 = vpack.c.bf16 %v830, %v828
      %v931 = vpack.c.bf16 %v835, %v833
      %v932 = vpack.c.bf16 %v840, %v838
      %v933 = vpack.c.bf16 %v845, %v843
      %v934 = vpack.c.bf16 %v850, %v848
      %v935 = vpack.c.bf16 %v855, %v853
      %v936 = vpack.c.bf16 %v860, %v858
      %v937 = vpack.c.bf16 %v865, %v863
      %v938 = vpack.c.bf16 %v870, %v868
      %v939 = vpack.c.bf16 %v875, %v873
      %v940 = vpack.c.bf16 %v880, %v878
      %v941 = vpack.c.bf16 %v885, %v883
      %v942 = vpack.c.bf16 %v890, %v888
      %v943 = vpack.c.bf16 %v895, %v893
      %s944 = scalar_lea.vmem %s1, 128
      %v945 = vld [vmem:[%s944] sm:$0xf]
      %v946 = vld [vmem:[%s944 + $0x4] sm:$0xf]
      %v947 = vld [vmem:[%s944 + $0x8] sm:$0xf]
      %v948 = vld [vmem:[%s944 + $0xc] sm:$0xf]
      %v949 = vld [vmem:[%s944 + $0x10] sm:$0xf]
      %v950 = vld [vmem:[%s944 + $0x14] sm:$0xf]
      %v951 = vld [vmem:[%s944 + $0x18] sm:$0xf]
      %v952 = vld [vmem:[%s944 + $0x1c] sm:$0xf]
      %v953 = vld [vmem:[%s944 + $0x20] sm:$0xf]
      %v954 = vld [vmem:[%s944 + $0x24] sm:$0xf]
      %v955 = vld [vmem:[%s944 + $0x28] sm:$0xf]
      %v956 = vld [vmem:[%s944 + $0x2c] sm:$0xf]
      %v957 = vld [vmem:[%s944 + $0x30] sm:$0xf]
      %v958 = vld [vmem:[%s944 + $0x34] sm:$0xf]
      %v959 = vld [vmem:[%s944 + $0x38] sm:$0xf]
      %v960 = vld [vmem:[%s944 + $0x3c] sm:$0xf]
      %v977 = vunpack.c.l.b16 %v945
      %v978 = vunpack.c.l.b16 %v946
      %v979 = vunpack.c.l.b16 %v947
      %v980 = vunpack.c.l.b16 %v948
      %v981 = vunpack.c.l.b16 %v949
      %v982 = vunpack.c.l.b16 %v950
      %v983 = vunpack.c.l.b16 %v951
      %v984 = vunpack.c.l.b16 %v952
      %v985 = vunpack.c.l.b16 %v953
      %v986 = vunpack.c.l.b16 %v954
      %v987 = vunpack.c.l.b16 %v955
      %v988 = vunpack.c.l.b16 %v956
      %v989 = vunpack.c.l.b16 %v957
      %v990 = vunpack.c.l.b16 %v958
      %v991 = vunpack.c.l.b16 %v959
      %v992 = vunpack.c.l.b16 %v960
      %v993 = vpack.c.b16 %v978, %v977
      %v994 = vpack.c.b16 %v980, %v979
      %v995 = vpack.c.b16 %v982, %v981
      %v996 = vpack.c.b16 %v984, %v983
      %v997 = vpack.c.b16 %v986, %v985
      %v998 = vpack.c.b16 %v988, %v987
      %v999 = vpack.c.b16 %v990, %v989
      %v1000 = vpack.c.b16 %v992, %v991
      %1009 = vmatpush.bf16.msra.mxu0 %v1000
      %1010 = vmatpush.bf16.msra.mxu0 %v999
      %1011 = vmatpush.bf16.msra.mxu0 %v998
      %1012 = vmatpush.bf16.msra.mxu0 %v997
      %1013 = vmatpush.bf16.msra.mxu0 %v996
      %1014 = vmatpush.bf16.msra.mxu0 %v995
      %1015 = vmatpush.bf16.msra.mxu0 %v994
      %1016 = vmatpush.bf16.msra.mxu0 %v993
      %1017 = vmatmul.bf16.gmra.mxu0 %v928
      %v1018 = vpop.f32.mrf.mxu0
      %v1019 = vadd.f32 0.0, %v1018
      %v1020 = vpop.f32.mrf.mxu0
      %v1021 = vadd.f32 0.0, %v1020
      %1022 = vmatmul.bf16.gmra.mxu0 %v929
      %v1023 = vpop.f32.mrf.mxu0
      %v1024 = vadd.f32 0.0, %v1023
      %v1025 = vpop.f32.mrf.mxu0
      %v1026 = vadd.f32 0.0, %v1025
      %1027 = vmatmul.bf16.gmra.mxu0 %v930
      %v1028 = vpop.f32.mrf.mxu0
      %v1029 = vadd.f32 0.0, %v1028
      %v1030 = vpop.f32.mrf.mxu0
      %v1031 = vadd.f32 0.0, %v1030
      %1032 = vmatmul.bf16.gmra.mxu0 %v931
      %v1033 = vpop.f32.mrf.mxu0
      %v1034 = vadd.f32 0.0, %v1033
      %v1035 = vpop.f32.mrf.mxu0
      %v1036 = vadd.f32 0.0, %v1035
      %1037 = vmatmul.bf16.gmra.mxu0 %v932
      %v1038 = vpop.f32.mrf.mxu0
      %v1039 = vadd.f32 0.0, %v1038
      %v1040 = vpop.f32.mrf.mxu0
      %v1041 = vadd.f32 0.0, %v1040
      %1042 = vmatmul.bf16.gmra.mxu0 %v933
      %v1043 = vpop.f32.mrf.mxu0
      %v1044 = vadd.f32 0.0, %v1043
      %v1045 = vpop.f32.mrf.mxu0
      %v1046 = vadd.f32 0.0, %v1045
      %1047 = vmatmul.bf16.gmra.mxu0 %v934
      %v1048 = vpop.f32.mrf.mxu0
      %v1049 = vadd.f32 0.0, %v1048
      %v1050 = vpop.f32.mrf.mxu0
      %v1051 = vadd.f32 0.0, %v1050
      %1052 = vmatmul.bf16.gmra.mxu0 %v935
      %v1053 = vpop.f32.mrf.mxu0
      %v1054 = vadd.f32 0.0, %v1053
      %v1055 = vpop.f32.mrf.mxu0
      %v1056 = vadd.f32 0.0, %v1055
      %1057 = vmatmul.bf16.gmra.mxu0 %v936
      %v1058 = vpop.f32.mrf.mxu0
      %v1059 = vadd.f32 0.0, %v1058
      %v1060 = vpop.f32.mrf.mxu0
      %v1061 = vadd.f32 0.0, %v1060
      %1062 = vmatmul.bf16.gmra.mxu0 %v937
      %v1063 = vpop.f32.mrf.mxu0
      %v1064 = vadd.f32 0.0, %v1063
      %v1065 = vpop.f32.mrf.mxu0
      %v1066 = vadd.f32 0.0, %v1065
      %1067 = vmatmul.bf16.gmra.mxu0 %v938
      %v1068 = vpop.f32.mrf.mxu0
      %v1069 = vadd.f32 0.0, %v1068
      %v1070 = vpop.f32.mrf.mxu0
      %v1071 = vadd.f32 0.0, %v1070
      %1072 = vmatmul.bf16.gmra.mxu0 %v939
      %v1073 = vpop.f32.mrf.mxu0
      %v1074 = vadd.f32 0.0, %v1073
      %v1075 = vpop.f32.mrf.mxu0
      %v1076 = vadd.f32 0.0, %v1075
      %1077 = vmatmul.bf16.gmra.mxu0 %v940
      %v1078 = vpop.f32.mrf.mxu0
      %v1079 = vadd.f32 0.0, %v1078
      %v1080 = vpop.f32.mrf.mxu0
      %v1081 = vadd.f32 0.0, %v1080
      %1082 = vmatmul.bf16.gmra.mxu0 %v941
      %v1083 = vpop.f32.mrf.mxu0
      %v1084 = vadd.f32 0.0, %v1083
      %v1085 = vpop.f32.mrf.mxu0
      %v1086 = vadd.f32 0.0, %v1085
      %1087 = vmatmul.bf16.gmra.mxu0 %v942
      %v1088 = vpop.f32.mrf.mxu0
      %v1089 = vadd.f32 0.0, %v1088
      %v1090 = vpop.f32.mrf.mxu0
      %v1091 = vadd.f32 0.0, %v1090
      %1092 = vmatmul.bf16.gmra.mxu0 %v943
      %v1093 = vpop.f32.mrf.mxu0
      %v1094 = vadd.f32 0.0, %v1093
      %v1095 = vpop.f32.mrf.mxu0
      %v1096 = vadd.f32 0.0, %v1095
      %1097 = vdwg.mxu0
      %v1098 = vadd.f32 %v688, %v1019
      %v1099 = vadd.f32 %v690, %v1021
      %v1100 = vadd.f32 %v693, %v1024
      %v1101 = vadd.f32 %v695, %v1026
      %v1102 = vadd.f32 %v698, %v1029
      %v1103 = vadd.f32 %v700, %v1031
      %v1104 = vadd.f32 %v703, %v1034
      %v1105 = vadd.f32 %v705, %v1036
      %v1106 = vadd.f32 %v708, %v1039
      %v1107 = vadd.f32 %v710, %v1041
      %v1108 = vadd.f32 %v713, %v1044
      %v1109 = vadd.f32 %v715, %v1046
      %v1110 = vadd.f32 %v718, %v1049
      %v1111 = vadd.f32 %v720, %v1051
      %v1112 = vadd.f32 %v723, %v1054
      %v1113 = vadd.f32 %v725, %v1056
      %v1114 = vadd.f32 %v728, %v1059
      %v1115 = vadd.f32 %v730, %v1061
      %v1116 = vadd.f32 %v733, %v1064
      %v1117 = vadd.f32 %v735, %v1066
      %v1118 = vadd.f32 %v738, %v1069
      %v1119 = vadd.f32 %v740, %v1071
      %v1120 = vadd.f32 %v743, %v1074
      %v1121 = vadd.f32 %v745, %v1076
      %v1122 = vadd.f32 %v748, %v1079
      %v1123 = vadd.f32 %v750, %v1081
      %v1124 = vadd.f32 %v753, %v1084
      %v1125 = vadd.f32 %v755, %v1086
      %v1126 = vadd.f32 %v758, %v1089
      %v1127 = vadd.f32 %v760, %v1091
      %v1128 = vadd.f32 %v763, %v1094
      %v1129 = vadd.f32 %v765, %v1096
      %s1130 = scalar_lea.vmem %s165, 12
      %v1131 = vld [vmem:[%s1130] sm:$0xf]
      %v1132 = vld [vmem:[%s1130 + $0x4] sm:$0xf]
      %v1133 = vld [vmem:[%s1130 + $0xc] sm:$0xf]
      %v1134 = vld [vmem:[%s1130 + $0x10] sm:$0xf]
      %v1135 = vld [vmem:[%s1130 + $0x18] sm:$0xf]
      %v1136 = vld [vmem:[%s1130 + $0x1c] sm:$0xf]
      %v1137 = vld [vmem:[%s1130 + $0x24] sm:$0xf]
      %v1138 = vld [vmem:[%s1130 + $0x28] sm:$0xf]
      %v1139 = vld [vmem:[%s1130 + $0x30] sm:$0xf]
      %v1140 = vld [vmem:[%s1130 + $0x34] sm:$0xf]
      %v1141 = vld [vmem:[%s1130 + $0x3c] sm:$0xf]
      %v1142 = vld [vmem:[%s1130 + $0x40] sm:$0xf]
      %v1143 = vld [vmem:[%s1130 + $0x48] sm:$0xf]
      %v1144 = vld [vmem:[%s1130 + $0x4c] sm:$0xf]
      %v1145 = vld [vmem:[%s1130 + $0x54] sm:$0xf]
      %v1146 = vld [vmem:[%s1130 + $0x58] sm:$0xf]
      %v1147 = vld [vmem:[%s1130 + $0x60] sm:$0xf]
      %v1148 = vld [vmem:[%s1130 + $0x64] sm:$0xf]
      %v1149 = vld [vmem:[%s1130 + $0x6c] sm:$0xf]
      %v1150 = vld [vmem:[%s1130 + $0x70] sm:$0xf]
      %v1151 = vld [vmem:[%s1130 + $0x78] sm:$0xf]
      %v1152 = vld [vmem:[%s1130 + $0x7c] sm:$0xf]
      %v1153 = vld [vmem:[%s1130 + $0x84] sm:$0xf]
      %v1154 = vld [vmem:[%s1130 + $0x88] sm:$0xf]
      %v1155 = vld [vmem:[%s1130 + $0x90] sm:$0xf]
      %v1156 = vld [vmem:[%s1130 + $0x94] sm:$0xf]
      %v1157 = vld [vmem:[%s1130 + $0x9c] sm:$0xf]
      %v1158 = vld [vmem:[%s1130 + $0xa0] sm:$0xf]
      %v1159 = vld [vmem:[%s1130 + $0xa8] sm:$0xf]
      %v1160 = vld [vmem:[%s1130 + $0xac] sm:$0xf]
      %v1161 = vld [vmem:[%s1130 + $0xb4] sm:$0xf]
      %v1162 = vld [vmem:[%s1130 + $0xb8] sm:$0xf]
      %v1163 = vunpack.c.l.bf16 %v1131
      %v1164 = vunpack.c.l.bf16 %v1132
      %v1165 = vunpack.c.l.bf16 %v1133
      %v1166 = vunpack.c.l.bf16 %v1134
      %v1167 = vunpack.c.l.bf16 %v1135
      %v1168 = vunpack.c.l.bf16 %v1136
      %v1169 = vunpack.c.l.bf16 %v1137
      %v1170 = vunpack.c.l.bf16 %v1138
      %v1171 = vunpack.c.l.bf16 %v1139
      %v1172 = vunpack.c.l.bf16 %v1140
      %v1173 = vunpack.c.l.bf16 %v1141
      %v1174 = vunpack.c.l.bf16 %v1142
      %v1175 = vunpack.c.l.bf16 %v1143
      %v1176 = vunpack.c.l.bf16 %v1144
      %v1177 = vunpack.c.l.bf16 %v1145
      %v1178 = vunpack.c.l.bf16 %v1146
      %v1179 = vunpack.c.l.bf16 %v1147
      %v1180 = vunpack.c.l.bf16 %v1148
      %v1181 = vunpack.c.l.bf16 %v1149
      %v1182 = vunpack.c.l.bf16 %v1150
      %v1183 = vunpack.c.l.bf16 %v1151
      %v1184 = vunpack.c.l.bf16 %v1152
      %v1185 = vunpack.c.l.bf16 %v1153
      %v1186 = vunpack.c.l.bf16 %v1154
      %v1187 = vunpack.c.l.bf16 %v1155
      %v1188 = vunpack.c.l.bf16 %v1156
      %v1189 = vunpack.c.l.bf16 %v1157
      %v1190 = vunpack.c.l.bf16 %v1158
      %v1191 = vunpack.c.l.bf16 %v1159
      %v1192 = vunpack.c.l.bf16 %v1160
      %v1193 = vunpack.c.l.bf16 %v1161
      %v1194 = vunpack.c.l.bf16 %v1162
      %v1195 = vpack.c.bf16 %v1164, %v1163
      %v1196 = vpack.c.bf16 %v1166, %v1165
      %v1197 = vpack.c.bf16 %v1168, %v1167
      %v1198 = vpack.c.bf16 %v1170, %v1169
      %v1199 = vpack.c.bf16 %v1172, %v1171
      %v1200 = vpack.c.bf16 %v1174, %v1173
      %v1201 = vpack.c.bf16 %v1176, %v1175
      %v1202 = vpack.c.bf16 %v1178, %v1177
      %v1203 = vpack.c.bf16 %v1180, %v1179
      %v1204 = vpack.c.bf16 %v1182, %v1181
      %v1205 = vpack.c.bf16 %v1184, %v1183
      %v1206 = vpack.c.bf16 %v1186, %v1185
      %v1207 = vpack.c.bf16 %v1188, %v1187
      %v1208 = vpack.c.bf16 %v1190, %v1189
      %v1209 = vpack.c.bf16 %v1192, %v1191
      %v1210 = vpack.c.bf16 %v1194, %v1193
      %s1211 = scalar_lea.vmem %s1, 192
      %v1212 = vld [vmem:[%s1211] sm:$0xf]
      %v1213 = vld [vmem:[%s1211 + $0x4] sm:$0xf]
      %v1214 = vld [vmem:[%s1211 + $0x8] sm:$0xf]
      %v1215 = vld [vmem:[%s1211 + $0xc] sm:$0xf]
      %v1216 = vld [vmem:[%s1211 + $0x10] sm:$0xf]
      %v1217 = vld [vmem:[%s1211 + $0x14] sm:$0xf]
      %v1218 = vld [vmem:[%s1211 + $0x18] sm:$0xf]
      %v1219 = vld [vmem:[%s1211 + $0x1c] sm:$0xf]
      %v1220 = vld [vmem:[%s1211 + $0x20] sm:$0xf]
      %v1221 = vld [vmem:[%s1211 + $0x24] sm:$0xf]
      %v1222 = vld [vmem:[%s1211 + $0x28] sm:$0xf]
      %v1223 = vld [vmem:[%s1211 + $0x2c] sm:$0xf]
      %v1224 = vld [vmem:[%s1211 + $0x30] sm:$0xf]
      %v1225 = vld [vmem:[%s1211 + $0x34] sm:$0xf]
      %v1226 = vld [vmem:[%s1211 + $0x38] sm:$0xf]
      %v1227 = vld [vmem:[%s1211 + $0x3c] sm:$0xf]
      %v1244 = vunpack.c.l.b16 %v1212
      %v1245 = vunpack.c.l.b16 %v1213
      %v1246 = vunpack.c.l.b16 %v1214
      %v1247 = vunpack.c.l.b16 %v1215
      %v1248 = vunpack.c.l.b16 %v1216
      %v1249 = vunpack.c.l.b16 %v1217
      %v1250 = vunpack.c.l.b16 %v1218
      %v1251 = vunpack.c.l.b16 %v1219
      %v1252 = vunpack.c.l.b16 %v1220
      %v1253 = vunpack.c.l.b16 %v1221
      %v1254 = vunpack.c.l.b16 %v1222
      %v1255 = vunpack.c.l.b16 %v1223
      %v1256 = vunpack.c.l.b16 %v1224
      %v1257 = vunpack.c.l.b16 %v1225
      %v1258 = vunpack.c.l.b16 %v1226
      %v1259 = vunpack.c.l.b16 %v1227
      %v1260 = vpack.c.b16 %v1245, %v1244
      %v1261 = vpack.c.b16 %v1247, %v1246
      %v1262 = vpack.c.b16 %v1249, %v1248
      %v1263 = vpack.c.b16 %v1251, %v1250
      %v1264 = vpack.c.b16 %v1253, %v1252
      %v1265 = vpack.c.b16 %v1255, %v1254
      %v1266 = vpack.c.b16 %v1257, %v1256
      %v1267 = vpack.c.b16 %v1259, %v1258
      %1276 = vmatpush.bf16.msra.mxu0 %v1267
      %1277 = vmatpush.bf16.msra.mxu0 %v1266
      %1278 = vmatpush.bf16.msra.mxu0 %v1265
      %1279 = vmatpush.bf16.msra.mxu0 %v1264
      %1280 = vmatpush.bf16.msra.mxu0 %v1263
      %1281 = vmatpush.bf16.msra.mxu0 %v1262
      %1282 = vmatpush.bf16.msra.mxu0 %v1261
      %1283 = vmatpush.bf16.msra.mxu0 %v1260
      %1284 = vmatmul.bf16.gmra.mxu0 %v1195
      %v1285 = vpop.f32.mrf.mxu0
      %v1286 = vadd.f32 0.0, %v1285
      %v1287 = vpop.f32.mrf.mxu0
      %v1288 = vadd.f32 0.0, %v1287
      %1289 = vmatmul.bf16.gmra.mxu0 %v1196
      %v1290 = vpop.f32.mrf.mxu0
      %v1291 = vadd.f32 0.0, %v1290
      %v1292 = vpop.f32.mrf.mxu0
      %v1293 = vadd.f32 0.0, %v1292
      %1294 = vmatmul.bf16.gmra.mxu0 %v1197
      %v1295 = vpop.f32.mrf.mxu0
      %v1296 = vadd.f32 0.0, %v1295
      %v1297 = vpop.f32.mrf.mxu0
      %v1298 = vadd.f32 0.0, %v1297
      %1299 = vmatmul.bf16.gmra.mxu0 %v1198
      %v1300 = vpop.f32.mrf.mxu0
      %v1301 = vadd.f32 0.0, %v1300
      %v1302 = vpop.f32.mrf.mxu0
      %v1303 = vadd.f32 0.0, %v1302
      %1304 = vmatmul.bf16.gmra.mxu0 %v1199
      %v1305 = vpop.f32.mrf.mxu0
      %v1306 = vadd.f32 0.0, %v1305
      %v1307 = vpop.f32.mrf.mxu0
      %v1308 = vadd.f32 0.0, %v1307
      %1309 = vmatmul.bf16.gmra.mxu0 %v1200
      %v1310 = vpop.f32.mrf.mxu0
      %v1311 = vadd.f32 0.0, %v1310
      %v1312 = vpop.f32.mrf.mxu0
      %v1313 = vadd.f32 0.0, %v1312
      %1314 = vmatmul.bf16.gmra.mxu0 %v1201
      %v1315 = vpop.f32.mrf.mxu0
      %v1316 = vadd.f32 0.0, %v1315
      %v1317 = vpop.f32.mrf.mxu0
      %v1318 = vadd.f32 0.0, %v1317
      %1319 = vmatmul.bf16.gmra.mxu0 %v1202
      %v1320 = vpop.f32.mrf.mxu0
      %v1321 = vadd.f32 0.0, %v1320
      %v1322 = vpop.f32.mrf.mxu0
      %v1323 = vadd.f32 0.0, %v1322
      %1324 = vmatmul.bf16.gmra.mxu0 %v1203
      %v1325 = vpop.f32.mrf.mxu0
      %v1326 = vadd.f32 0.0, %v1325
      %v1327 = vpop.f32.mrf.mxu0
      %v1328 = vadd.f32 0.0, %v1327
      %1329 = vmatmul.bf16.gmra.mxu0 %v1204
      %v1330 = vpop.f32.mrf.mxu0
      %v1331 = vadd.f32 0.0, %v1330
      %v1332 = vpop.f32.mrf.mxu0
      %v1333 = vadd.f32 0.0, %v1332
      %1334 = vmatmul.bf16.gmra.mxu0 %v1205
      %v1335 = vpop.f32.mrf.mxu0
      %v1336 = vadd.f32 0.0, %v1335
      %v1337 = vpop.f32.mrf.mxu0
      %v1338 = vadd.f32 0.0, %v1337
      %1339 = vmatmul.bf16.gmra.mxu0 %v1206
      %v1340 = vpop.f32.mrf.mxu0
      %v1341 = vadd.f32 0.0, %v1340
      %v1342 = vpop.f32.mrf.mxu0
      %v1343 = vadd.f32 0.0, %v1342
      %1344 = vmatmul.bf16.gmra.mxu0 %v1207
      %v1345 = vpop.f32.mrf.mxu0
      %v1346 = vadd.f32 0.0, %v1345
      %v1347 = vpop.f32.mrf.mxu0
      %v1348 = vadd.f32 0.0, %v1347
      %1349 = vmatmul.bf16.gmra.mxu0 %v1208
      %v1350 = vpop.f32.mrf.mxu0
      %v1351 = vadd.f32 0.0, %v1350
      %v1352 = vpop.f32.mrf.mxu0
      %v1353 = vadd.f32 0.0, %v1352
      %1354 = vmatmul.bf16.gmra.mxu0 %v1209
      %v1355 = vpop.f32.mrf.mxu0
      %v1356 = vadd.f32 0.0, %v1355
      %v1357 = vpop.f32.mrf.mxu0
      %v1358 = vadd.f32 0.0, %v1357
      %1359 = vmatmul.bf16.gmra.mxu0 %v1210
      %v1360 = vpop.f32.mrf.mxu0
      %v1361 = vadd.f32 0.0, %v1360
      %v1362 = vpop.f32.mrf.mxu0
      %v1363 = vadd.f32 0.0, %v1362
      %1364 = vdwg.mxu0
      %v1365 = vadd.f32 %v1098, %v1286
      %v1366 = vadd.f32 %v1099, %v1288
      %v1367 = vadd.f32 %v1100, %v1291
      %v1368 = vadd.f32 %v1101, %v1293
      %v1369 = vadd.f32 %v1102, %v1296
      %v1370 = vadd.f32 %v1103, %v1298
      %v1371 = vadd.f32 %v1104, %v1301
      %v1372 = vadd.f32 %v1105, %v1303
      %v1373 = vadd.f32 %v1106, %v1306
      %v1374 = vadd.f32 %v1107, %v1308
      %v1375 = vadd.f32 %v1108, %v1311
      %v1376 = vadd.f32 %v1109, %v1313
      %v1377 = vadd.f32 %v1110, %v1316
      %v1378 = vadd.f32 %v1111, %v1318
      %v1379 = vadd.f32 %v1112, %v1321
      %v1380 = vadd.f32 %v1113, %v1323
      %v1381 = vadd.f32 %v1114, %v1326
      %v1382 = vadd.f32 %v1115, %v1328
      %v1383 = vadd.f32 %v1116, %v1331
      %v1384 = vadd.f32 %v1117, %v1333
      %v1385 = vadd.f32 %v1118, %v1336
      %v1386 = vadd.f32 %v1119, %v1338
      %v1387 = vadd.f32 %v1120, %v1341
      %v1388 = vadd.f32 %v1121, %v1343
      %v1389 = vadd.f32 %v1122, %v1346
      %v1390 = vadd.f32 %v1123, %v1348
      %v1391 = vadd.f32 %v1124, %v1351
      %v1392 = vadd.f32 %v1125, %v1353
      %v1393 = vadd.f32 %v1126, %v1356
      %v1394 = vadd.f32 %v1127, %v1358
      %v1395 = vadd.f32 %v1128, %v1361
      %v1396 = vadd.f32 %v1129, %v1363
      %v1397 = vld [vmem:[%s1130] sm:$0xf]
      %v1398 = vld [vmem:[%s1130 + $0x4] sm:$0xf]
      %v1399 = vld [vmem:[%s1130 + $0x8] sm:$0x1]
      %v1400 = vld [vmem:[%s1130 + $0xc] sm:$0xf]
      %v1401 = vld [vmem:[%s1130 + $0x10] sm:$0xf]
      %v1402 = vld [vmem:[%s1130 + $0x14] sm:$0x1]
      %v1403 = vld [vmem:[%s1130 + $0x18] sm:$0xf]
      %v1404 = vld [vmem:[%s1130 + $0x1c] sm:$0xf]
      %v1405 = vld [vmem:[%s1130 + $0x20] sm:$0x1]
      %v1406 = vld [vmem:[%s1130 + $0x24] sm:$0xf]
      %v1407 = vld [vmem:[%s1130 + $0x28] sm:$0xf]
      %v1408 = vld [vmem:[%s1130 + $0x2c] sm:$0x1]
      %v1409 = vld [vmem:[%s1130 + $0x30] sm:$0xf]
      %v1410 = vld [vmem:[%s1130 + $0x34] sm:$0xf]
      %v1411 = vld [vmem:[%s1130 + $0x38] sm:$0x1]
      %v1412 = vld [vmem:[%s1130 + $0x3c] sm:$0xf]
      %v1413 = vld [vmem:[%s1130 + $0x40] sm:$0xf]
      %v1414 = vld [vmem:[%s1130 + $0x44] sm:$0x1]
      %v1415 = vld [vmem:[%s1130 + $0x48] sm:$0xf]
      %v1416 = vld [vmem:[%s1130 + $0x4c] sm:$0xf]
      %v1417 = vld [vmem:[%s1130 + $0x50] sm:$0x1]
      %v1418 = vld [vmem:[%s1130 + $0x54] sm:$0xf]
      %v1419 = vld [vmem:[%s1130 + $0x58] sm:$0xf]
      %v1420 = vld [vmem:[%s1130 + $0x5c] sm:$0x1]
      %v1421 = vld [vmem:[%s1130 + $0x60] sm:$0xf]
      %v1422 = vld [vmem:[%s1130 + $0x64] sm:$0xf]
      %v1423 = vld [vmem:[%s1130 + $0x68] sm:$0x1]
      %v1424 = vld [vmem:[%s1130 + $0x6c] sm:$0xf]
      %v1425 = vld [vmem:[%s1130 + $0x70] sm:$0xf]
      %v1426 = vld [vmem:[%s1130 + $0x74] sm:$0x1]
      %v1427 = vld [vmem:[%s1130 + $0x78] sm:$0xf]
      %v1428 = vld [vmem:[%s1130 + $0x7c] sm:$0xf]
      %v1429 = vld [vmem:[%s1130 + $0x80] sm:$0x1]
      %v1430 = vld [vmem:[%s1130 + $0x84] sm:$0xf]
      %v1431 = vld [vmem:[%s1130 + $0x88] sm:$0xf]
      %v1432 = vld [vmem:[%s1130 + $0x8c] sm:$0x1]
      %v1433 = vld [vmem:[%s1130 + $0x90] sm:$0xf]
      %v1434 = vld [vmem:[%s1130 + $0x94] sm:$0xf]
      %v1435 = vld [vmem:[%s1130 + $0x98] sm:$0x1]
      %v1436 = vld [vmem:[%s1130 + $0x9c] sm:$0xf]
      %v1437 = vld [vmem:[%s1130 + $0xa0] sm:$0xf]
      %v1438 = vld [vmem:[%s1130 + $0xa4] sm:$0x1]
      %v1439 = vld [vmem:[%s1130 + $0xa8] sm:$0xf]
      %v1440 = vld [vmem:[%s1130 + $0xac] sm:$0xf]
      %v1441 = vld [vmem:[%s1130 + $0xb0] sm:$0x1]
      %v1442 = vld [vmem:[%s1130 + $0xb4] sm:$0xf]
      %v1443 = vld [vmem:[%s1130 + $0xb8] sm:$0xf]
      %v1444 = vld [vmem:[%s1130 + $0xbc] sm:$0x1]
      %v1445 = vunpack.c.l.bf16 %v1397
      %v1446 = vunpack.c.l.bf16 %v1398
      %v1447 = vunpack.c.l.bf16 %v1399
      %v1448 = vunpack.c.l.bf16 %v1400
      %v1449 = vunpack.c.l.bf16 %v1401
      %v1450 = vunpack.c.l.bf16 %v1402
      %v1451 = vunpack.c.l.bf16 %v1403
      %v1452 = vunpack.c.l.bf16 %v1404
      %v1453 = vunpack.c.l.bf16 %v1405
      %v1454 = vunpack.c.l.bf16 %v1406
      %v1455 = vunpack.c.l.bf16 %v1407
      %v1456 = vunpack.c.l.bf16 %v1408
      %v1457 = vunpack.c.l.bf16 %v1409
      %v1458 = vunpack.c.l.bf16 %v1410
      %v1459 = vunpack.c.l.bf16 %v1411
      %v1460 = vunpack.c.l.bf16 %v1412
      %v1461 = vunpack.c.l.bf16 %v1413
      %v1462 = vunpack.c.l.bf16 %v1414
      %v1463 = vunpack.c.l.bf16 %v1415
      %v1464 = vunpack.c.l.bf16 %v1416
      %v1465 = vunpack.c.l.bf16 %v1417
      %v1466 = vunpack.c.l.bf16 %v1418
      %v1467 = vunpack.c.l.bf16 %v1419
      %v1468 = vunpack.c.l.bf16 %v1420
      %v1469 = vunpack.c.l.bf16 %v1421
      %v1470 = vunpack.c.l.bf16 %v1422
      %v1471 = vunpack.c.l.bf16 %v1423
      %v1472 = vunpack.c.l.bf16 %v1424
      %v1473 = vunpack.c.l.bf16 %v1425
      %v1474 = vunpack.c.l.bf16 %v1426
      %v1475 = vunpack.c.l.bf16 %v1427
      %v1476 = vunpack.c.l.bf16 %v1428
      %v1477 = vunpack.c.l.bf16 %v1429
      %v1478 = vunpack.c.l.bf16 %v1430
      %v1479 = vunpack.c.l.bf16 %v1431
      %v1480 = vunpack.c.l.bf16 %v1432
      %v1481 = vunpack.c.l.bf16 %v1433
      %v1482 = vunpack.c.l.bf16 %v1434
      %v1483 = vunpack.c.l.bf16 %v1435
      %v1484 = vunpack.c.l.bf16 %v1436
      %v1485 = vunpack.c.l.bf16 %v1437
      %v1486 = vunpack.c.l.bf16 %v1438
      %v1487 = vunpack.c.l.bf16 %v1439
      %v1488 = vunpack.c.l.bf16 %v1440
      %v1489 = vunpack.c.l.bf16 %v1441
      %v1490 = vunpack.c.l.bf16 %v1442
      %v1491 = vunpack.c.l.bf16 %v1443
      %v1492 = vunpack.c.l.bf16 %v1444
      %v1541 = vrot.slane %v1445, 1
      %v1542 = vrot.slane %v1446, 1
      %v1543 = vsel %vm347, %v1541, %v1542
      %v1544 = vrot.slane %v1447, 1
      %v1545 = vsel %vm347, %v1542, %v1544
      %v1546 = vrot.slane %v1448, 1
      %v1547 = vrot.slane %v1449, 1
      %v1548 = vsel %vm347, %v1546, %v1547
      %v1549 = vrot.slane %v1450, 1
      %v1550 = vsel %vm347, %v1547, %v1549
      %v1551 = vrot.slane %v1451, 1
      %v1552 = vrot.slane %v1452, 1
      %v1553 = vsel %vm347, %v1551, %v1552
      %v1554 = vrot.slane %v1453, 1
      %v1555 = vsel %vm347, %v1552, %v1554
      %v1556 = vrot.slane %v1454, 1
      %v1557 = vrot.slane %v1455, 1
      %v1558 = vsel %vm347, %v1556, %v1557
      %v1559 = vrot.slane %v1456, 1
      %v1560 = vsel %vm347, %v1557, %v1559
      %v1561 = vrot.slane %v1457, 1
      %v1562 = vrot.slane %v1458, 1
      %v1563 = vsel %vm347, %v1561, %v1562
      %v1564 = vrot.slane %v1459, 1
      %v1565 = vsel %vm347, %v1562, %v1564
      %v1566 = vrot.slane %v1460, 1
      %v1567 = vrot.slane %v1461, 1
      %v1568 = vsel %vm347, %v1566, %v1567
      %v1569 = vrot.slane %v1462, 1
      %v1570 = vsel %vm347, %v1567, %v1569
      %v1571 = vrot.slane %v1463, 1
      %v1572 = vrot.slane %v1464, 1
      %v1573 = vsel %vm347, %v1571, %v1572
      %v1574 = vrot.slane %v1465, 1
      %v1575 = vsel %vm347, %v1572, %v1574
      %v1576 = vrot.slane %v1466, 1
      %v1577 = vrot.slane %v1467, 1
      %v1578 = vsel %vm347, %v1576, %v1577
      %v1579 = vrot.slane %v1468, 1
      %v1580 = vsel %vm347, %v1577, %v1579
      %v1581 = vrot.slane %v1469, 1
      %v1582 = vrot.slane %v1470, 1
      %v1583 = vsel %vm347, %v1581, %v1582
      %v1584 = vrot.slane %v1471, 1
      %v1585 = vsel %vm347, %v1582, %v1584
      %v1586 = vrot.slane %v1472, 1
      %v1587 = vrot.slane %v1473, 1
      %v1588 = vsel %vm347, %v1586, %v1587
      %v1589 = vrot.slane %v1474, 1
      %v1590 = vsel %vm347, %v1587, %v1589
      %v1591 = vrot.slane %v1475, 1
      %v1592 = vrot.slane %v1476, 1
      %v1593 = vsel %vm347, %v1591, %v1592
      %v1594 = vrot.slane %v1477, 1
      %v1595 = vsel %vm347, %v1592, %v1594
      %v1596 = vrot.slane %v1478, 1
      %v1597 = vrot.slane %v1479, 1
      %v1598 = vsel %vm347, %v1596, %v1597
      %v1599 = vrot.slane %v1480, 1
      %v1600 = vsel %vm347, %v1597, %v1599
      %v1601 = vrot.slane %v1481, 1
      %v1602 = vrot.slane %v1482, 1
      %v1603 = vsel %vm347, %v1601, %v1602
      %v1604 = vrot.slane %v1483, 1
      %v1605 = vsel %vm347, %v1602, %v1604
      %v1606 = vrot.slane %v1484, 1
      %v1607 = vrot.slane %v1485, 1
      %v1608 = vsel %vm347, %v1606, %v1607
      %v1609 = vrot.slane %v1486, 1
      %v1610 = vsel %vm347, %v1607, %v1609
      %v1611 = vrot.slane %v1487, 1
      %v1612 = vrot.slane %v1488, 1
      %v1613 = vsel %vm347, %v1611, %v1612
      %v1614 = vrot.slane %v1489, 1
      %v1615 = vsel %vm347, %v1612, %v1614
      %v1616 = vrot.slane %v1490, 1
      %v1617 = vrot.slane %v1491, 1
      %v1618 = vsel %vm347, %v1616, %v1617
      %v1619 = vrot.slane %v1492, 1
      %v1620 = vsel %vm347, %v1617, %v1619
      %v1653 = vpack.c.bf16 %v1545, %v1543
      %v1654 = vpack.c.bf16 %v1550, %v1548
      %v1655 = vpack.c.bf16 %v1555, %v1553
      %v1656 = vpack.c.bf16 %v1560, %v1558
      %v1657 = vpack.c.bf16 %v1565, %v1563
      %v1658 = vpack.c.bf16 %v1570, %v1568
      %v1659 = vpack.c.bf16 %v1575, %v1573
      %v1660 = vpack.c.bf16 %v1580, %v1578
      %v1661 = vpack.c.bf16 %v1585, %v1583
      %v1662 = vpack.c.bf16 %v1590, %v1588
      %v1663 = vpack.c.bf16 %v1595, %v1593
      %v1664 = vpack.c.bf16 %v1600, %v1598
      %v1665 = vpack.c.bf16 %v1605, %v1603
      %v1666 = vpack.c.bf16 %v1610, %v1608
      %v1667 = vpack.c.bf16 %v1615, %v1613
      %v1668 = vpack.c.bf16 %v1620, %v1618
      %s1669 = scalar_lea.vmem %s1, 256
      %v1670 = vld [vmem:[%s1669] sm:$0xf]
      %v1671 = vld [vmem:[%s1669 + $0x4] sm:$0xf]
      %v1672 = vld [vmem:[%s1669 + $0x8] sm:$0xf]
      %v1673 = vld [vmem:[%s1669 + $0xc] sm:$0xf]
      %v1674 = vld [vmem:[%s1669 + $0x10] sm:$0xf]
      %v1675 = vld [vmem:[%s1669 + $0x14] sm:$0xf]
      %v1676 = vld [vmem:[%s1669 + $0x18] sm:$0xf]
      %v1677 = vld [vmem:[%s1669 + $0x1c] sm:$0xf]
      %v1678 = vld [vmem:[%s1669 + $0x20] sm:$0xf]
      %v1679 = vld [vmem:[%s1669 + $0x24] sm:$0xf]
      %v1680 = vld [vmem:[%s1669 + $0x28] sm:$0xf]
      %v1681 = vld [vmem:[%s1669 + $0x2c] sm:$0xf]
      %v1682 = vld [vmem:[%s1669 + $0x30] sm:$0xf]
      %v1683 = vld [vmem:[%s1669 + $0x34] sm:$0xf]
      %v1684 = vld [vmem:[%s1669 + $0x38] sm:$0xf]
      %v1685 = vld [vmem:[%s1669 + $0x3c] sm:$0xf]
      %v1702 = vunpack.c.l.b16 %v1670
      %v1703 = vunpack.c.l.b16 %v1671
      %v1704 = vunpack.c.l.b16 %v1672
      %v1705 = vunpack.c.l.b16 %v1673
      %v1706 = vunpack.c.l.b16 %v1674
      %v1707 = vunpack.c.l.b16 %v1675
      %v1708 = vunpack.c.l.b16 %v1676
      %v1709 = vunpack.c.l.b16 %v1677
      %v1710 = vunpack.c.l.b16 %v1678
      %v1711 = vunpack.c.l.b16 %v1679
      %v1712 = vunpack.c.l.b16 %v1680
      %v1713 = vunpack.c.l.b16 %v1681
      %v1714 = vunpack.c.l.b16 %v1682
      %v1715 = vunpack.c.l.b16 %v1683
      %v1716 = vunpack.c.l.b16 %v1684
      %v1717 = vunpack.c.l.b16 %v1685
      %v1718 = vpack.c.b16 %v1703, %v1702
      %v1719 = vpack.c.b16 %v1705, %v1704
      %v1720 = vpack.c.b16 %v1707, %v1706
      %v1721 = vpack.c.b16 %v1709, %v1708
      %v1722 = vpack.c.b16 %v1711, %v1710
      %v1723 = vpack.c.b16 %v1713, %v1712
      %v1724 = vpack.c.b16 %v1715, %v1714
      %v1725 = vpack.c.b16 %v1717, %v1716
      %1734 = vmatpush.bf16.msra.mxu0 %v1725
      %1735 = vmatpush.bf16.msra.mxu0 %v1724
      %1736 = vmatpush.bf16.msra.mxu0 %v1723
      %1737 = vmatpush.bf16.msra.mxu0 %v1722
      %1738 = vmatpush.bf16.msra.mxu0 %v1721
      %1739 = vmatpush.bf16.msra.mxu0 %v1720
      %1740 = vmatpush.bf16.msra.mxu0 %v1719
      %1741 = vmatpush.bf16.msra.mxu0 %v1718
      %1742 = vmatmul.bf16.gmra.mxu0 %v1653
      %v1743 = vpop.f32.mrf.mxu0
      %v1744 = vadd.f32 0.0, %v1743
      %v1745 = vpop.f32.mrf.mxu0
      %v1746 = vadd.f32 0.0, %v1745
      %1747 = vmatmul.bf16.gmra.mxu0 %v1654
      %v1748 = vpop.f32.mrf.mxu0
      %v1749 = vadd.f32 0.0, %v1748
      %v1750 = vpop.f32.mrf.mxu0
      %v1751 = vadd.f32 0.0, %v1750
      %1752 = vmatmul.bf16.gmra.mxu0 %v1655
      %v1753 = vpop.f32.mrf.mxu0
      %v1754 = vadd.f32 0.0, %v1753
      %v1755 = vpop.f32.mrf.mxu0
      %v1756 = vadd.f32 0.0, %v1755
      %1757 = vmatmul.bf16.gmra.mxu0 %v1656
      %v1758 = vpop.f32.mrf.mxu0
      %v1759 = vadd.f32 0.0, %v1758
      %v1760 = vpop.f32.mrf.mxu0
      %v1761 = vadd.f32 0.0, %v1760
      %1762 = vmatmul.bf16.gmra.mxu0 %v1657
      %v1763 = vpop.f32.mrf.mxu0
      %v1764 = vadd.f32 0.0, %v1763
      %v1765 = vpop.f32.mrf.mxu0
      %v1766 = vadd.f32 0.0, %v1765
      %1767 = vmatmul.bf16.gmra.mxu0 %v1658
      %v1768 = vpop.f32.mrf.mxu0
      %v1769 = vadd.f32 0.0, %v1768
      %v1770 = vpop.f32.mrf.mxu0
      %v1771 = vadd.f32 0.0, %v1770
      %1772 = vmatmul.bf16.gmra.mxu0 %v1659
      %v1773 = vpop.f32.mrf.mxu0
      %v1774 = vadd.f32 0.0, %v1773
      %v1775 = vpop.f32.mrf.mxu0
      %v1776 = vadd.f32 0.0, %v1775
      %1777 = vmatmul.bf16.gmra.mxu0 %v1660
      %v1778 = vpop.f32.mrf.mxu0
      %v1779 = vadd.f32 0.0, %v1778
      %v1780 = vpop.f32.mrf.mxu0
      %v1781 = vadd.f32 0.0, %v1780
      %1782 = vmatmul.bf16.gmra.mxu0 %v1661
      %v1783 = vpop.f32.mrf.mxu0
      %v1784 = vadd.f32 0.0, %v1783
      %v1785 = vpop.f32.mrf.mxu0
      %v1786 = vadd.f32 0.0, %v1785
      %1787 = vmatmul.bf16.gmra.mxu0 %v1662
      %v1788 = vpop.f32.mrf.mxu0
      %v1789 = vadd.f32 0.0, %v1788
      %v1790 = vpop.f32.mrf.mxu0
      %v1791 = vadd.f32 0.0, %v1790
      %1792 = vmatmul.bf16.gmra.mxu0 %v1663
      %v1793 = vpop.f32.mrf.mxu0
      %v1794 = vadd.f32 0.0, %v1793
      %v1795 = vpop.f32.mrf.mxu0
      %v1796 = vadd.f32 0.0, %v1795
      %1797 = vmatmul.bf16.gmra.mxu0 %v1664
      %v1798 = vpop.f32.mrf.mxu0
      %v1799 = vadd.f32 0.0, %v1798
      %v1800 = vpop.f32.mrf.mxu0
      %v1801 = vadd.f32 0.0, %v1800
      %1802 = vmatmul.bf16.gmra.mxu0 %v1665
      %v1803 = vpop.f32.mrf.mxu0
      %v1804 = vadd.f32 0.0, %v1803
      %v1805 = vpop.f32.mrf.mxu0
      %v1806 = vadd.f32 0.0, %v1805
      %1807 = vmatmul.bf16.gmra.mxu0 %v1666
      %v1808 = vpop.f32.mrf.mxu0
      %v1809 = vadd.f32 0.0, %v1808
      %v1810 = vpop.f32.mrf.mxu0
      %v1811 = vadd.f32 0.0, %v1810
      %1812 = vmatmul.bf16.gmra.mxu0 %v1667
      %v1813 = vpop.f32.mrf.mxu0
      %v1814 = vadd.f32 0.0, %v1813
      %v1815 = vpop.f32.mrf.mxu0
      %v1816 = vadd.f32 0.0, %v1815
      %1817 = vmatmul.bf16.gmra.mxu0 %v1668
      %v1818 = vpop.f32.mrf.mxu0
      %v1819 = vadd.f32 0.0, %v1818
      %v1820 = vpop.f32.mrf.mxu0
      %v1821 = vadd.f32 0.0, %v1820
      %1822 = vdwg.mxu0
      %v1823 = vadd.f32 %v1365, %v1744
      %v1824 = vadd.f32 %v1366, %v1746
      %v1825 = vadd.f32 %v1367, %v1749
      %v1826 = vadd.f32 %v1368, %v1751
      %v1827 = vadd.f32 %v1369, %v1754
      %v1828 = vadd.f32 %v1370, %v1756
      %v1829 = vadd.f32 %v1371, %v1759
      %v1830 = vadd.f32 %v1372, %v1761
      %v1831 = vadd.f32 %v1373, %v1764
      %v1832 = vadd.f32 %v1374, %v1766
      %v1833 = vadd.f32 %v1375, %v1769
      %v1834 = vadd.f32 %v1376, %v1771
      %v1835 = vadd.f32 %v1377, %v1774
      %v1836 = vadd.f32 %v1378, %v1776
      %v1837 = vadd.f32 %v1379, %v1779
      %v1838 = vadd.f32 %v1380, %v1781
      %v1839 = vadd.f32 %v1381, %v1784
      %v1840 = vadd.f32 %v1382, %v1786
      %v1841 = vadd.f32 %v1383, %v1789
      %v1842 = vadd.f32 %v1384, %v1791
      %v1843 = vadd.f32 %v1385, %v1794
      %v1844 = vadd.f32 %v1386, %v1796
      %v1845 = vadd.f32 %v1387, %v1799
      %v1846 = vadd.f32 %v1388, %v1801
      %v1847 = vadd.f32 %v1389, %v1804
      %v1848 = vadd.f32 %v1390, %v1806
      %v1849 = vadd.f32 %v1391, %v1809
      %v1850 = vadd.f32 %v1392, %v1811
      %v1851 = vadd.f32 %v1393, %v1814
      %v1852 = vadd.f32 %v1394, %v1816
      %v1853 = vadd.f32 %v1395, %v1819
      %v1854 = vadd.f32 %v1396, %v1821
      %v1855 = vld [vmem:[%s1130] sm:$0xe]
      %v1856 = vld [vmem:[%s1130 + $0xc] sm:$0xe]
      %v1857 = vld [vmem:[%s1130 + $0x18] sm:$0xe]
      %v1858 = vld [vmem:[%s1130 + $0x24] sm:$0xe]
      %v1859 = vld [vmem:[%s1130 + $0x30] sm:$0xe]
      %v1860 = vld [vmem:[%s1130 + $0x3c] sm:$0xe]
      %v1861 = vld [vmem:[%s1130 + $0x48] sm:$0xe]
      %v1862 = vld [vmem:[%s1130 + $0x54] sm:$0xe]
      %v1863 = vld [vmem:[%s1130 + $0x60] sm:$0xe]
      %v1864 = vld [vmem:[%s1130 + $0x6c] sm:$0xe]
      %v1865 = vld [vmem:[%s1130 + $0x78] sm:$0xe]
      %v1866 = vld [vmem:[%s1130 + $0x84] sm:$0xe]
      %v1867 = vld [vmem:[%s1130 + $0x90] sm:$0xe]
      %v1868 = vld [vmem:[%s1130 + $0x9c] sm:$0xe]
      %v1869 = vld [vmem:[%s1130 + $0xa8] sm:$0xe]
      %v1870 = vld [vmem:[%s1130 + $0xb4] sm:$0xe]
      %v1871 = vunpack.c.l.bf16 %v1855
      %v1872 = vunpack.c.l.bf16 %v1856
      %v1873 = vunpack.c.l.bf16 %v1857
      %v1874 = vunpack.c.l.bf16 %v1858
      %v1875 = vunpack.c.l.bf16 %v1859
      %v1876 = vunpack.c.l.bf16 %v1860
      %v1877 = vunpack.c.l.bf16 %v1861
      %v1878 = vunpack.c.l.bf16 %v1862
      %v1879 = vunpack.c.l.bf16 %v1863
      %v1880 = vunpack.c.l.bf16 %v1864
      %v1881 = vunpack.c.l.bf16 %v1865
      %v1882 = vunpack.c.l.bf16 %v1866
      %v1883 = vunpack.c.l.bf16 %v1867
      %v1884 = vunpack.c.l.bf16 %v1868
      %v1885 = vunpack.c.l.bf16 %v1869
      %v1886 = vunpack.c.l.bf16 %v1870
      %v1903 = vrot.slane %v1871, 2
      %v1904 = vrot.slane %v1446, 2
      %v1905 = vsel %vm815, %v1903, %v1904
      %v1906 = vrot.slane %v1447, 2
      %v1907 = vsel %vm815, %v1904, %v1906
      %v1908 = vrot.slane %v1872, 2
      %v1909 = vrot.slane %v1449, 2
      %v1910 = vsel %vm815, %v1908, %v1909
      %v1911 = vrot.slane %v1450, 2
      %v1912 = vsel %vm815, %v1909, %v1911
      %v1913 = vrot.slane %v1873, 2
      %v1914 = vrot.slane %v1452, 2
      %v1915 = vsel %vm815, %v1913, %v1914
      %v1916 = vrot.slane %v1453, 2
      %v1917 = vsel %vm815, %v1914, %v1916
      %v1918 = vrot.slane %v1874, 2
      %v1919 = vrot.slane %v1455, 2
      %v1920 = vsel %vm815, %v1918, %v1919
      %v1921 = vrot.slane %v1456, 2
      %v1922 = vsel %vm815, %v1919, %v1921
      %v1923 = vrot.slane %v1875, 2
      %v1924 = vrot.slane %v1458, 2
      %v1925 = vsel %vm815, %v1923, %v1924
      %v1926 = vrot.slane %v1459, 2
      %v1927 = vsel %vm815, %v1924, %v1926
      %v1928 = vrot.slane %v1876, 2
      %v1929 = vrot.slane %v1461, 2
      %v1930 = vsel %vm815, %v1928, %v1929
      %v1931 = vrot.slane %v1462, 2
      %v1932 = vsel %vm815, %v1929, %v1931
      %v1933 = vrot.slane %v1877, 2
      %v1934 = vrot.slane %v1464, 2
      %v1935 = vsel %vm815, %v1933, %v1934
      %v1936 = vrot.slane %v1465, 2
      %v1937 = vsel %vm815, %v1934, %v1936
      %v1938 = vrot.slane %v1878, 2
      %v1939 = vrot.slane %v1467, 2
      %v1940 = vsel %vm815, %v1938, %v1939
      %v1941 = vrot.slane %v1468, 2
      %v1942 = vsel %vm815, %v1939, %v1941
      %v1943 = vrot.slane %v1879, 2
      %v1944 = vrot.slane %v1470, 2
      %v1945 = vsel %vm815, %v1943, %v1944
      %v1946 = vrot.slane %v1471, 2
      %v1947 = vsel %vm815, %v1944, %v1946
      %v1948 = vrot.slane %v1880, 2
      %v1949 = vrot.slane %v1473, 2
      %v1950 = vsel %vm815, %v1948, %v1949
      %v1951 = vrot.slane %v1474, 2
      %v1952 = vsel %vm815, %v1949, %v1951
      %v1953 = vrot.slane %v1881, 2
      %v1954 = vrot.slane %v1476, 2
      %v1955 = vsel %vm815, %v1953, %v1954
      %v1956 = vrot.slane %v1477, 2
      %v1957 = vsel %vm815, %v1954, %v1956
      %v1958 = vrot.slane %v1882, 2
      %v1959 = vrot.slane %v1479, 2
      %v1960 = vsel %vm815, %v1958, %v1959
      %v1961 = vrot.slane %v1480, 2
      %v1962 = vsel %vm815, %v1959, %v1961
      %v1963 = vrot.slane %v1883, 2
      %v1964 = vrot.slane %v1482, 2
      %v1965 = vsel %vm815, %v1963, %v1964
      %v1966 = vrot.slane %v1483, 2
      %v1967 = vsel %vm815, %v1964, %v1966
      %v1968 = vrot.slane %v1884, 2
      %v1969 = vrot.slane %v1485, 2
      %v1970 = vsel %vm815, %v1968, %v1969
      %v1971 = vrot.slane %v1486, 2
      %v1972 = vsel %vm815, %v1969, %v1971
      %v1973 = vrot.slane %v1885, 2
      %v1974 = vrot.slane %v1488, 2
      %v1975 = vsel %vm815, %v1973, %v1974
      %v1976 = vrot.slane %v1489, 2
      %v1977 = vsel %vm815, %v1974, %v1976
      %v1978 = vrot.slane %v1886, 2
      %v1979 = vrot.slane %v1491, 2
      %v1980 = vsel %vm815, %v1978, %v1979
      %v1981 = vrot.slane %v1492, 2
      %v1982 = vsel %vm815, %v1979, %v1981
      %v2015 = vpack.c.bf16 %v1907, %v1905
      %v2016 = vpack.c.bf16 %v1912, %v1910
      %v2017 = vpack.c.bf16 %v1917, %v1915
      %v2018 = vpack.c.bf16 %v1922, %v1920
      %v2019 = vpack.c.bf16 %v1927, %v1925
      %v2020 = vpack.c.bf16 %v1932, %v1930
      %v2021 = vpack.c.bf16 %v1937, %v1935
      %v2022 = vpack.c.bf16 %v1942, %v1940
      %v2023 = vpack.c.bf16 %v1947, %v1945
      %v2024 = vpack.c.bf16 %v1952, %v1950
      %v2025 = vpack.c.bf16 %v1957, %v1955
      %v2026 = vpack.c.bf16 %v1962, %v1960
      %v2027 = vpack.c.bf16 %v1967, %v1965
      %v2028 = vpack.c.bf16 %v1972, %v1970
      %v2029 = vpack.c.bf16 %v1977, %v1975
      %v2030 = vpack.c.bf16 %v1982, %v1980
      %s2031 = scalar_lea.vmem %s1, 320
      %v2032 = vld [vmem:[%s2031] sm:$0xf]
      %v2033 = vld [vmem:[%s2031 + $0x4] sm:$0xf]
      %v2034 = vld [vmem:[%s2031 + $0x8] sm:$0xf]
      %v2035 = vld [vmem:[%s2031 + $0xc] sm:$0xf]
      %v2036 = vld [vmem:[%s2031 + $0x10] sm:$0xf]
      %v2037 = vld [vmem:[%s2031 + $0x14] sm:$0xf]
      %v2038 = vld [vmem:[%s2031 + $0x18] sm:$0xf]
      %v2039 = vld [vmem:[%s2031 + $0x1c] sm:$0xf]
      %v2040 = vld [vmem:[%s2031 + $0x20] sm:$0xf]
      %v2041 = vld [vmem:[%s2031 + $0x24] sm:$0xf]
      %v2042 = vld [vmem:[%s2031 + $0x28] sm:$0xf]
      %v2043 = vld [vmem:[%s2031 + $0x2c] sm:$0xf]
      %v2044 = vld [vmem:[%s2031 + $0x30] sm:$0xf]
      %v2045 = vld [vmem:[%s2031 + $0x34] sm:$0xf]
      %v2046 = vld [vmem:[%s2031 + $0x38] sm:$0xf]
      %v2047 = vld [vmem:[%s2031 + $0x3c] sm:$0xf]
      %v2064 = vunpack.c.l.b16 %v2032
      %v2065 = vunpack.c.l.b16 %v2033
      %v2066 = vunpack.c.l.b16 %v2034
      %v2067 = vunpack.c.l.b16 %v2035
      %v2068 = vunpack.c.l.b16 %v2036
      %v2069 = vunpack.c.l.b16 %v2037
      %v2070 = vunpack.c.l.b16 %v2038
      %v2071 = vunpack.c.l.b16 %v2039
      %v2072 = vunpack.c.l.b16 %v2040
      %v2073 = vunpack.c.l.b16 %v2041
      %v2074 = vunpack.c.l.b16 %v2042
      %v2075 = vunpack.c.l.b16 %v2043
      %v2076 = vunpack.c.l.b16 %v2044
      %v2077 = vunpack.c.l.b16 %v2045
      %v2078 = vunpack.c.l.b16 %v2046
      %v2079 = vunpack.c.l.b16 %v2047
      %v2080 = vpack.c.b16 %v2065, %v2064
      %v2081 = vpack.c.b16 %v2067, %v2066
      %v2082 = vpack.c.b16 %v2069, %v2068
      %v2083 = vpack.c.b16 %v2071, %v2070
      %v2084 = vpack.c.b16 %v2073, %v2072
      %v2085 = vpack.c.b16 %v2075, %v2074
      %v2086 = vpack.c.b16 %v2077, %v2076
      %v2087 = vpack.c.b16 %v2079, %v2078
      %2096 = vmatpush.bf16.msra.mxu0 %v2087
      %2097 = vmatpush.bf16.msra.mxu0 %v2086
      %2098 = vmatpush.bf16.msra.mxu0 %v2085
      %2099 = vmatpush.bf16.msra.mxu0 %v2084
      %2100 = vmatpush.bf16.msra.mxu0 %v2083
      %2101 = vmatpush.bf16.msra.mxu0 %v2082
      %2102 = vmatpush.bf16.msra.mxu0 %v2081
      %2103 = vmatpush.bf16.msra.mxu0 %v2080
      %2104 = vmatmul.bf16.gmra.mxu0 %v2015
      %v2105 = vpop.f32.mrf.mxu0
      %v2106 = vadd.f32 0.0, %v2105
      %v2107 = vpop.f32.mrf.mxu0
      %v2108 = vadd.f32 0.0, %v2107
      %2109 = vmatmul.bf16.gmra.mxu0 %v2016
      %v2110 = vpop.f32.mrf.mxu0
      %v2111 = vadd.f32 0.0, %v2110
      %v2112 = vpop.f32.mrf.mxu0
      %v2113 = vadd.f32 0.0, %v2112
      %2114 = vmatmul.bf16.gmra.mxu0 %v2017
      %v2115 = vpop.f32.mrf.mxu0
      %v2116 = vadd.f32 0.0, %v2115
      %v2117 = vpop.f32.mrf.mxu0
      %v2118 = vadd.f32 0.0, %v2117
      %2119 = vmatmul.bf16.gmra.mxu0 %v2018
      %v2120 = vpop.f32.mrf.mxu0
      %v2121 = vadd.f32 0.0, %v2120
      %v2122 = vpop.f32.mrf.mxu0
      %v2123 = vadd.f32 0.0, %v2122
      %2124 = vmatmul.bf16.gmra.mxu0 %v2019
      %v2125 = vpop.f32.mrf.mxu0
      %v2126 = vadd.f32 0.0, %v2125
      %v2127 = vpop.f32.mrf.mxu0
      %v2128 = vadd.f32 0.0, %v2127
      %2129 = vmatmul.bf16.gmra.mxu0 %v2020
      %v2130 = vpop.f32.mrf.mxu0
      %v2131 = vadd.f32 0.0, %v2130
      %v2132 = vpop.f32.mrf.mxu0
      %v2133 = vadd.f32 0.0, %v2132
      %2134 = vmatmul.bf16.gmra.mxu0 %v2021
      %v2135 = vpop.f32.mrf.mxu0
      %v2136 = vadd.f32 0.0, %v2135
      %v2137 = vpop.f32.mrf.mxu0
      %v2138 = vadd.f32 0.0, %v2137
      %2139 = vmatmul.bf16.gmra.mxu0 %v2022
      %v2140 = vpop.f32.mrf.mxu0
      %v2141 = vadd.f32 0.0, %v2140
      %v2142 = vpop.f32.mrf.mxu0
      %v2143 = vadd.f32 0.0, %v2142
      %2144 = vmatmul.bf16.gmra.mxu0 %v2023
      %v2145 = vpop.f32.mrf.mxu0
      %v2146 = vadd.f32 0.0, %v2145
      %v2147 = vpop.f32.mrf.mxu0
      %v2148 = vadd.f32 0.0, %v2147
      %2149 = vmatmul.bf16.gmra.mxu0 %v2024
      %v2150 = vpop.f32.mrf.mxu0
      %v2151 = vadd.f32 0.0, %v2150
      %v2152 = vpop.f32.mrf.mxu0
      %v2153 = vadd.f32 0.0, %v2152
      %2154 = vmatmul.bf16.gmra.mxu0 %v2025
      %v2155 = vpop.f32.mrf.mxu0
      %v2156 = vadd.f32 0.0, %v2155
      %v2157 = vpop.f32.mrf.mxu0
      %v2158 = vadd.f32 0.0, %v2157
      %2159 = vmatmul.bf16.gmra.mxu0 %v2026
      %v2160 = vpop.f32.mrf.mxu0
      %v2161 = vadd.f32 0.0, %v2160
      %v2162 = vpop.f32.mrf.mxu0
      %v2163 = vadd.f32 0.0, %v2162
      %2164 = vmatmul.bf16.gmra.mxu0 %v2027
      %v2165 = vpop.f32.mrf.mxu0
      %v2166 = vadd.f32 0.0, %v2165
      %v2167 = vpop.f32.mrf.mxu0
      %v2168 = vadd.f32 0.0, %v2167
      %2169 = vmatmul.bf16.gmra.mxu0 %v2028
      %v2170 = vpop.f32.mrf.mxu0
      %v2171 = vadd.f32 0.0, %v2170
      %v2172 = vpop.f32.mrf.mxu0
      %v2173 = vadd.f32 0.0, %v2172
      %2174 = vmatmul.bf16.gmra.mxu0 %v2029
      %v2175 = vpop.f32.mrf.mxu0
      %v2176 = vadd.f32 0.0, %v2175
      %v2177 = vpop.f32.mrf.mxu0
      %v2178 = vadd.f32 0.0, %v2177
      %2179 = vmatmul.bf16.gmra.mxu0 %v2030
      %v2180 = vpop.f32.mrf.mxu0
      %v2181 = vadd.f32 0.0, %v2180
      %v2182 = vpop.f32.mrf.mxu0
      %v2183 = vadd.f32 0.0, %v2182
      %2184 = vdwg.mxu0
      %v2185 = vadd.f32 %v1823, %v2106
      %v2186 = vadd.f32 %v1824, %v2108
      %v2187 = vadd.f32 %v1825, %v2111
      %v2188 = vadd.f32 %v1826, %v2113
      %v2189 = vadd.f32 %v1827, %v2116
      %v2190 = vadd.f32 %v1828, %v2118
      %v2191 = vadd.f32 %v1829, %v2121
      %v2192 = vadd.f32 %v1830, %v2123
      %v2193 = vadd.f32 %v1831, %v2126
      %v2194 = vadd.f32 %v1832, %v2128
      %v2195 = vadd.f32 %v1833, %v2131
      %v2196 = vadd.f32 %v1834, %v2133
      %v2197 = vadd.f32 %v1835, %v2136
      %v2198 = vadd.f32 %v1836, %v2138
      %v2199 = vadd.f32 %v1837, %v2141
      %v2200 = vadd.f32 %v1838, %v2143
      %v2201 = vadd.f32 %v1839, %v2146
      %v2202 = vadd.f32 %v1840, %v2148
      %v2203 = vadd.f32 %v1841, %v2151
      %v2204 = vadd.f32 %v1842, %v2153
      %v2205 = vadd.f32 %v1843, %v2156
      %v2206 = vadd.f32 %v1844, %v2158
      %v2207 = vadd.f32 %v1845, %v2161
      %v2208 = vadd.f32 %v1846, %v2163
      %v2209 = vadd.f32 %v1847, %v2166
      %v2210 = vadd.f32 %v1848, %v2168
      %v2211 = vadd.f32 %v1849, %v2171
      %v2212 = vadd.f32 %v1850, %v2173
      %v2213 = vadd.f32 %v1851, %v2176
      %v2214 = vadd.f32 %v1852, %v2178
      %v2215 = vadd.f32 %v1853, %v2181
      %v2216 = vadd.f32 %v1854, %v2183
      %s2217 = scalar_lea.vmem %s165, 24
      %v2218 = vld [vmem:[%s2217] sm:$0xf]
      %v2219 = vld [vmem:[%s2217 + $0x4] sm:$0xf]
      %v2220 = vld [vmem:[%s2217 + $0xc] sm:$0xf]
      %v2221 = vld [vmem:[%s2217 + $0x10] sm:$0xf]
      %v2222 = vld [vmem:[%s2217 + $0x18] sm:$0xf]
      %v2223 = vld [vmem:[%s2217 + $0x1c] sm:$0xf]
      %v2224 = vld [vmem:[%s2217 + $0x24] sm:$0xf]
      %v2225 = vld [vmem:[%s2217 + $0x28] sm:$0xf]
      %v2226 = vld [vmem:[%s2217 + $0x30] sm:$0xf]
      %v2227 = vld [vmem:[%s2217 + $0x34] sm:$0xf]
      %v2228 = vld [vmem:[%s2217 + $0x3c] sm:$0xf]
      %v2229 = vld [vmem:[%s2217 + $0x40] sm:$0xf]
      %v2230 = vld [vmem:[%s2217 + $0x48] sm:$0xf]
      %v2231 = vld [vmem:[%s2217 + $0x4c] sm:$0xf]
      %v2232 = vld [vmem:[%s2217 + $0x54] sm:$0xf]
      %v2233 = vld [vmem:[%s2217 + $0x58] sm:$0xf]
      %v2234 = vld [vmem:[%s2217 + $0x60] sm:$0xf]
      %v2235 = vld [vmem:[%s2217 + $0x64] sm:$0xf]
      %v2236 = vld [vmem:[%s2217 + $0x6c] sm:$0xf]
      %v2237 = vld [vmem:[%s2217 + $0x70] sm:$0xf]
      %v2238 = vld [vmem:[%s2217 + $0x78] sm:$0xf]
      %v2239 = vld [vmem:[%s2217 + $0x7c] sm:$0xf]
      %v2240 = vld [vmem:[%s2217 + $0x84] sm:$0xf]
      %v2241 = vld [vmem:[%s2217 + $0x88] sm:$0xf]
      %v2242 = vld [vmem:[%s2217 + $0x90] sm:$0xf]
      %v2243 = vld [vmem:[%s2217 + $0x94] sm:$0xf]
      %v2244 = vld [vmem:[%s2217 + $0x9c] sm:$0xf]
      %v2245 = vld [vmem:[%s2217 + $0xa0] sm:$0xf]
      %v2246 = vld [vmem:[%s2217 + $0xa8] sm:$0xf]
      %v2247 = vld [vmem:[%s2217 + $0xac] sm:$0xf]
      %v2248 = vld [vmem:[%s2217 + $0xb4] sm:$0xf]
      %v2249 = vld [vmem:[%s2217 + $0xb8] sm:$0xf]
      %v2250 = vunpack.c.l.bf16 %v2218
      %v2251 = vunpack.c.l.bf16 %v2219
      %v2252 = vunpack.c.l.bf16 %v2220
      %v2253 = vunpack.c.l.bf16 %v2221
      %v2254 = vunpack.c.l.bf16 %v2222
      %v2255 = vunpack.c.l.bf16 %v2223
      %v2256 = vunpack.c.l.bf16 %v2224
      %v2257 = vunpack.c.l.bf16 %v2225
      %v2258 = vunpack.c.l.bf16 %v2226
      %v2259 = vunpack.c.l.bf16 %v2227
      %v2260 = vunpack.c.l.bf16 %v2228
      %v2261 = vunpack.c.l.bf16 %v2229
      %v2262 = vunpack.c.l.bf16 %v2230
      %v2263 = vunpack.c.l.bf16 %v2231
      %v2264 = vunpack.c.l.bf16 %v2232
      %v2265 = vunpack.c.l.bf16 %v2233
      %v2266 = vunpack.c.l.bf16 %v2234
      %v2267 = vunpack.c.l.bf16 %v2235
      %v2268 = vunpack.c.l.bf16 %v2236
      %v2269 = vunpack.c.l.bf16 %v2237
      %v2270 = vunpack.c.l.bf16 %v2238
      %v2271 = vunpack.c.l.bf16 %v2239
      %v2272 = vunpack.c.l.bf16 %v2240
      %v2273 = vunpack.c.l.bf16 %v2241
      %v2274 = vunpack.c.l.bf16 %v2242
      %v2275 = vunpack.c.l.bf16 %v2243
      %v2276 = vunpack.c.l.bf16 %v2244
      %v2277 = vunpack.c.l.bf16 %v2245
      %v2278 = vunpack.c.l.bf16 %v2246
      %v2279 = vunpack.c.l.bf16 %v2247
      %v2280 = vunpack.c.l.bf16 %v2248
      %v2281 = vunpack.c.l.bf16 %v2249
      %v2282 = vpack.c.bf16 %v2251, %v2250
      %v2283 = vpack.c.bf16 %v2253, %v2252
      %v2284 = vpack.c.bf16 %v2255, %v2254
      %v2285 = vpack.c.bf16 %v2257, %v2256
      %v2286 = vpack.c.bf16 %v2259, %v2258
      %v2287 = vpack.c.bf16 %v2261, %v2260
      %v2288 = vpack.c.bf16 %v2263, %v2262
      %v2289 = vpack.c.bf16 %v2265, %v2264
      %v2290 = vpack.c.bf16 %v2267, %v2266
      %v2291 = vpack.c.bf16 %v2269, %v2268
      %v2292 = vpack.c.bf16 %v2271, %v2270
      %v2293 = vpack.c.bf16 %v2273, %v2272
      %v2294 = vpack.c.bf16 %v2275, %v2274
      %v2295 = vpack.c.bf16 %v2277, %v2276
      %v2296 = vpack.c.bf16 %v2279, %v2278
      %v2297 = vpack.c.bf16 %v2281, %v2280
      %s2298 = scalar_lea.vmem %s1, 384
      %v2299 = vld [vmem:[%s2298] sm:$0xf]
      %v2300 = vld [vmem:[%s2298 + $0x4] sm:$0xf]
      %v2301 = vld [vmem:[%s2298 + $0x8] sm:$0xf]
      %v2302 = vld [vmem:[%s2298 + $0xc] sm:$0xf]
      %v2303 = vld [vmem:[%s2298 + $0x10] sm:$0xf]
      %v2304 = vld [vmem:[%s2298 + $0x14] sm:$0xf]
      %v2305 = vld [vmem:[%s2298 + $0x18] sm:$0xf]
      %v2306 = vld [vmem:[%s2298 + $0x1c] sm:$0xf]
      %v2307 = vld [vmem:[%s2298 + $0x20] sm:$0xf]
      %v2308 = vld [vmem:[%s2298 + $0x24] sm:$0xf]
      %v2309 = vld [vmem:[%s2298 + $0x28] sm:$0xf]
      %v2310 = vld [vmem:[%s2298 + $0x2c] sm:$0xf]
      %v2311 = vld [vmem:[%s2298 + $0x30] sm:$0xf]
      %v2312 = vld [vmem:[%s2298 + $0x34] sm:$0xf]
      %v2313 = vld [vmem:[%s2298 + $0x38] sm:$0xf]
      %v2314 = vld [vmem:[%s2298 + $0x3c] sm:$0xf]
      %v2331 = vunpack.c.l.b16 %v2299
      %v2332 = vunpack.c.l.b16 %v2300
      %v2333 = vunpack.c.l.b16 %v2301
      %v2334 = vunpack.c.l.b16 %v2302
      %v2335 = vunpack.c.l.b16 %v2303
      %v2336 = vunpack.c.l.b16 %v2304
      %v2337 = vunpack.c.l.b16 %v2305
      %v2338 = vunpack.c.l.b16 %v2306
      %v2339 = vunpack.c.l.b16 %v2307
      %v2340 = vunpack.c.l.b16 %v2308
      %v2341 = vunpack.c.l.b16 %v2309
      %v2342 = vunpack.c.l.b16 %v2310
      %v2343 = vunpack.c.l.b16 %v2311
      %v2344 = vunpack.c.l.b16 %v2312
      %v2345 = vunpack.c.l.b16 %v2313
      %v2346 = vunpack.c.l.b16 %v2314
      %v2347 = vpack.c.b16 %v2332, %v2331
      %v2348 = vpack.c.b16 %v2334, %v2333
      %v2349 = vpack.c.b16 %v2336, %v2335
      %v2350 = vpack.c.b16 %v2338, %v2337
      %v2351 = vpack.c.b16 %v2340, %v2339
      %v2352 = vpack.c.b16 %v2342, %v2341
      %v2353 = vpack.c.b16 %v2344, %v2343
      %v2354 = vpack.c.b16 %v2346, %v2345
      %2363 = vmatpush.bf16.msra.mxu0 %v2354
      %2364 = vmatpush.bf16.msra.mxu0 %v2353
      %2365 = vmatpush.bf16.msra.mxu0 %v2352
      %2366 = vmatpush.bf16.msra.mxu0 %v2351
      %2367 = vmatpush.bf16.msra.mxu0 %v2350
      %2368 = vmatpush.bf16.msra.mxu0 %v2349
      %2369 = vmatpush.bf16.msra.mxu0 %v2348
      %2370 = vmatpush.bf16.msra.mxu0 %v2347
      %2371 = vmatmul.bf16.gmra.mxu0 %v2282
      %v2372 = vpop.f32.mrf.mxu0
      %v2373 = vadd.f32 0.0, %v2372
      %v2374 = vpop.f32.mrf.mxu0
      %v2375 = vadd.f32 0.0, %v2374
      %2376 = vmatmul.bf16.gmra.mxu0 %v2283
      %v2377 = vpop.f32.mrf.mxu0
      %v2378 = vadd.f32 0.0, %v2377
      %v2379 = vpop.f32.mrf.mxu0
      %v2380 = vadd.f32 0.0, %v2379
      %2381 = vmatmul.bf16.gmra.mxu0 %v2284
      %v2382 = vpop.f32.mrf.mxu0
      %v2383 = vadd.f32 0.0, %v2382
      %v2384 = vpop.f32.mrf.mxu0
      %v2385 = vadd.f32 0.0, %v2384
      %2386 = vmatmul.bf16.gmra.mxu0 %v2285
      %v2387 = vpop.f32.mrf.mxu0
      %v2388 = vadd.f32 0.0, %v2387
      %v2389 = vpop.f32.mrf.mxu0
      %v2390 = vadd.f32 0.0, %v2389
      %2391 = vmatmul.bf16.gmra.mxu0 %v2286
      %v2392 = vpop.f32.mrf.mxu0
      %v2393 = vadd.f32 0.0, %v2392
      %v2394 = vpop.f32.mrf.mxu0
      %v2395 = vadd.f32 0.0, %v2394
      %2396 = vmatmul.bf16.gmra.mxu0 %v2287
      %v2397 = vpop.f32.mrf.mxu0
      %v2398 = vadd.f32 0.0, %v2397
      %v2399 = vpop.f32.mrf.mxu0
      %v2400 = vadd.f32 0.0, %v2399
      %2401 = vmatmul.bf16.gmra.mxu0 %v2288
      %v2402 = vpop.f32.mrf.mxu0
      %v2403 = vadd.f32 0.0, %v2402
      %v2404 = vpop.f32.mrf.mxu0
      %v2405 = vadd.f32 0.0, %v2404
      %2406 = vmatmul.bf16.gmra.mxu0 %v2289
      %v2407 = vpop.f32.mrf.mxu0
      %v2408 = vadd.f32 0.0, %v2407
      %v2409 = vpop.f32.mrf.mxu0
      %v2410 = vadd.f32 0.0, %v2409
      %2411 = vmatmul.bf16.gmra.mxu0 %v2290
      %v2412 = vpop.f32.mrf.mxu0
      %v2413 = vadd.f32 0.0, %v2412
      %v2414 = vpop.f32.mrf.mxu0
      %v2415 = vadd.f32 0.0, %v2414
      %2416 = vmatmul.bf16.gmra.mxu0 %v2291
      %v2417 = vpop.f32.mrf.mxu0
      %v2418 = vadd.f32 0.0, %v2417
      %v2419 = vpop.f32.mrf.mxu0
      %v2420 = vadd.f32 0.0, %v2419
      %2421 = vmatmul.bf16.gmra.mxu0 %v2292
      %v2422 = vpop.f32.mrf.mxu0
      %v2423 = vadd.f32 0.0, %v2422
      %v2424 = vpop.f32.mrf.mxu0
      %v2425 = vadd.f32 0.0, %v2424
      %2426 = vmatmul.bf16.gmra.mxu0 %v2293
      %v2427 = vpop.f32.mrf.mxu0
      %v2428 = vadd.f32 0.0, %v2427
      %v2429 = vpop.f32.mrf.mxu0
      %v2430 = vadd.f32 0.0, %v2429
      %2431 = vmatmul.bf16.gmra.mxu0 %v2294
      %v2432 = vpop.f32.mrf.mxu0
      %v2433 = vadd.f32 0.0, %v2432
      %v2434 = vpop.f32.mrf.mxu0
      %v2435 = vadd.f32 0.0, %v2434
      %2436 = vmatmul.bf16.gmra.mxu0 %v2295
      %v2437 = vpop.f32.mrf.mxu0
      %v2438 = vadd.f32 0.0, %v2437
      %v2439 = vpop.f32.mrf.mxu0
      %v2440 = vadd.f32 0.0, %v2439
      %2441 = vmatmul.bf16.gmra.mxu0 %v2296
      %v2442 = vpop.f32.mrf.mxu0
      %v2443 = vadd.f32 0.0, %v2442
      %v2444 = vpop.f32.mrf.mxu0
      %v2445 = vadd.f32 0.0, %v2444
      %2446 = vmatmul.bf16.gmra.mxu0 %v2297
      %v2447 = vpop.f32.mrf.mxu0
      %v2448 = vadd.f32 0.0, %v2447
      %v2449 = vpop.f32.mrf.mxu0
      %v2450 = vadd.f32 0.0, %v2449
      %2451 = vdwg.mxu0
      %v2452 = vadd.f32 %v2185, %v2373
      %v2453 = vadd.f32 %v2186, %v2375
      %v2454 = vadd.f32 %v2187, %v2378
      %v2455 = vadd.f32 %v2188, %v2380
      %v2456 = vadd.f32 %v2189, %v2383
      %v2457 = vadd.f32 %v2190, %v2385
      %v2458 = vadd.f32 %v2191, %v2388
      %v2459 = vadd.f32 %v2192, %v2390
      %v2460 = vadd.f32 %v2193, %v2393
      %v2461 = vadd.f32 %v2194, %v2395
      %v2462 = vadd.f32 %v2195, %v2398
      %v2463 = vadd.f32 %v2196, %v2400
      %v2464 = vadd.f32 %v2197, %v2403
      %v2465 = vadd.f32 %v2198, %v2405
      %v2466 = vadd.f32 %v2199, %v2408
      %v2467 = vadd.f32 %v2200, %v2410
      %v2468 = vadd.f32 %v2201, %v2413
      %v2469 = vadd.f32 %v2202, %v2415
      %v2470 = vadd.f32 %v2203, %v2418
      %v2471 = vadd.f32 %v2204, %v2420
      %v2472 = vadd.f32 %v2205, %v2423
      %v2473 = vadd.f32 %v2206, %v2425
      %v2474 = vadd.f32 %v2207, %v2428
      %v2475 = vadd.f32 %v2208, %v2430
      %v2476 = vadd.f32 %v2209, %v2433
      %v2477 = vadd.f32 %v2210, %v2435
      %v2478 = vadd.f32 %v2211, %v2438
      %v2479 = vadd.f32 %v2212, %v2440
      %v2480 = vadd.f32 %v2213, %v2443
      %v2481 = vadd.f32 %v2214, %v2445
      %v2482 = vadd.f32 %v2215, %v2448
      %v2483 = vadd.f32 %v2216, %v2450
      %v2484 = vld [vmem:[%s2217] sm:$0xf]
      %v2485 = vld [vmem:[%s2217 + $0x4] sm:$0xf]
      %v2486 = vld [vmem:[%s2217 + $0x8] sm:$0x1]
      %v2487 = vld [vmem:[%s2217 + $0xc] sm:$0xf]
      %v2488 = vld [vmem:[%s2217 + $0x10] sm:$0xf]
      %v2489 = vld [vmem:[%s2217 + $0x14] sm:$0x1]
      %v2490 = vld [vmem:[%s2217 + $0x18] sm:$0xf]
      %v2491 = vld [vmem:[%s2217 + $0x1c] sm:$0xf]
      %v2492 = vld [vmem:[%s2217 + $0x20] sm:$0x1]
      %v2493 = vld [vmem:[%s2217 + $0x24] sm:$0xf]
      %v2494 = vld [vmem:[%s2217 + $0x28] sm:$0xf]
      %v2495 = vld [vmem:[%s2217 + $0x2c] sm:$0x1]
      %v2496 = vld [vmem:[%s2217 + $0x30] sm:$0xf]
      %v2497 = vld [vmem:[%s2217 + $0x34] sm:$0xf]
      %v2498 = vld [vmem:[%s2217 + $0x38] sm:$0x1]
      %v2499 = vld [vmem:[%s2217 + $0x3c] sm:$0xf]
      %v2500 = vld [vmem:[%s2217 + $0x40] sm:$0xf]
      %v2501 = vld [vmem:[%s2217 + $0x44] sm:$0x1]
      %v2502 = vld [vmem:[%s2217 + $0x48] sm:$0xf]
      %v2503 = vld [vmem:[%s2217 + $0x4c] sm:$0xf]
      %v2504 = vld [vmem:[%s2217 + $0x50] sm:$0x1]
      %v2505 = vld [vmem:[%s2217 + $0x54] sm:$0xf]
      %v2506 = vld [vmem:[%s2217 + $0x58] sm:$0xf]
      %v2507 = vld [vmem:[%s2217 + $0x5c] sm:$0x1]
      %v2508 = vld [vmem:[%s2217 + $0x60] sm:$0xf]
      %v2509 = vld [vmem:[%s2217 + $0x64] sm:$0xf]
      %v2510 = vld [vmem:[%s2217 + $0x68] sm:$0x1]
      %v2511 = vld [vmem:[%s2217 + $0x6c] sm:$0xf]
      %v2512 = vld [vmem:[%s2217 + $0x70] sm:$0xf]
      %v2513 = vld [vmem:[%s2217 + $0x74] sm:$0x1]
      %v2514 = vld [vmem:[%s2217 + $0x78] sm:$0xf]
      %v2515 = vld [vmem:[%s2217 + $0x7c] sm:$0xf]
      %v2516 = vld [vmem:[%s2217 + $0x80] sm:$0x1]
      %v2517 = vld [vmem:[%s2217 + $0x84] sm:$0xf]
      %v2518 = vld [vmem:[%s2217 + $0x88] sm:$0xf]
      %v2519 = vld [vmem:[%s2217 + $0x8c] sm:$0x1]
      %v2520 = vld [vmem:[%s2217 + $0x90] sm:$0xf]
      %v2521 = vld [vmem:[%s2217 + $0x94] sm:$0xf]
      %v2522 = vld [vmem:[%s2217 + $0x98] sm:$0x1]
      %v2523 = vld [vmem:[%s2217 + $0x9c] sm:$0xf]
      %v2524 = vld [vmem:[%s2217 + $0xa0] sm:$0xf]
      %v2525 = vld [vmem:[%s2217 + $0xa4] sm:$0x1]
      %v2526 = vld [vmem:[%s2217 + $0xa8] sm:$0xf]
      %v2527 = vld [vmem:[%s2217 + $0xac] sm:$0xf]
      %v2528 = vld [vmem:[%s2217 + $0xb0] sm:$0x1]
      %v2529 = vld [vmem:[%s2217 + $0xb4] sm:$0xf]
      %v2530 = vld [vmem:[%s2217 + $0xb8] sm:$0xf]
      %v2531 = vld [vmem:[%s2217 + $0xbc] sm:$0x1]
      %v2532 = vunpack.c.l.bf16 %v2484
      %v2533 = vunpack.c.l.bf16 %v2485
      %v2534 = vunpack.c.l.bf16 %v2486
      %v2535 = vunpack.c.l.bf16 %v2487
      %v2536 = vunpack.c.l.bf16 %v2488
      %v2537 = vunpack.c.l.bf16 %v2489
      %v2538 = vunpack.c.l.bf16 %v2490
      %v2539 = vunpack.c.l.bf16 %v2491
      %v2540 = vunpack.c.l.bf16 %v2492
      %v2541 = vunpack.c.l.bf16 %v2493
      %v2542 = vunpack.c.l.bf16 %v2494
      %v2543 = vunpack.c.l.bf16 %v2495
      %v2544 = vunpack.c.l.bf16 %v2496
      %v2545 = vunpack.c.l.bf16 %v2497
      %v2546 = vunpack.c.l.bf16 %v2498
      %v2547 = vunpack.c.l.bf16 %v2499
      %v2548 = vunpack.c.l.bf16 %v2500
      %v2549 = vunpack.c.l.bf16 %v2501
      %v2550 = vunpack.c.l.bf16 %v2502
      %v2551 = vunpack.c.l.bf16 %v2503
      %v2552 = vunpack.c.l.bf16 %v2504
      %v2553 = vunpack.c.l.bf16 %v2505
      %v2554 = vunpack.c.l.bf16 %v2506
      %v2555 = vunpack.c.l.bf16 %v2507
      %v2556 = vunpack.c.l.bf16 %v2508
      %v2557 = vunpack.c.l.bf16 %v2509
      %v2558 = vunpack.c.l.bf16 %v2510
      %v2559 = vunpack.c.l.bf16 %v2511
      %v2560 = vunpack.c.l.bf16 %v2512
      %v2561 = vunpack.c.l.bf16 %v2513
      %v2562 = vunpack.c.l.bf16 %v2514
      %v2563 = vunpack.c.l.bf16 %v2515
      %v2564 = vunpack.c.l.bf16 %v2516
      %v2565 = vunpack.c.l.bf16 %v2517
      %v2566 = vunpack.c.l.bf16 %v2518
      %v2567 = vunpack.c.l.bf16 %v2519
      %v2568 = vunpack.c.l.bf16 %v2520
      %v2569 = vunpack.c.l.bf16 %v2521
      %v2570 = vunpack.c.l.bf16 %v2522
      %v2571 = vunpack.c.l.bf16 %v2523
      %v2572 = vunpack.c.l.bf16 %v2524
      %v2573 = vunpack.c.l.bf16 %v2525
      %v2574 = vunpack.c.l.bf16 %v2526
      %v2575 = vunpack.c.l.bf16 %v2527
      %v2576 = vunpack.c.l.bf16 %v2528
      %v2577 = vunpack.c.l.bf16 %v2529
      %v2578 = vunpack.c.l.bf16 %v2530
      %v2579 = vunpack.c.l.bf16 %v2531
      %v2628 = vrot.slane %v2532, 1
      %v2629 = vrot.slane %v2533, 1
      %v2630 = vsel %vm347, %v2628, %v2629
      %v2631 = vrot.slane %v2534, 1
      %v2632 = vsel %vm347, %v2629, %v2631
      %v2633 = vrot.slane %v2535, 1
      %v2634 = vrot.slane %v2536, 1
      %v2635 = vsel %vm347, %v2633, %v2634
      %v2636 = vrot.slane %v2537, 1
      %v2637 = vsel %vm347, %v2634, %v2636
      %v2638 = vrot.slane %v2538, 1
      %v2639 = vrot.slane %v2539, 1
      %v2640 = vsel %vm347, %v2638, %v2639
      %v2641 = vrot.slane %v2540, 1
      %v2642 = vsel %vm347, %v2639, %v2641
      %v2643 = vrot.slane %v2541, 1
      %v2644 = vrot.slane %v2542, 1
      %v2645 = vsel %vm347, %v2643, %v2644
      %v2646 = vrot.slane %v2543, 1
      %v2647 = vsel %vm347, %v2644, %v2646
      %v2648 = vrot.slane %v2544, 1
      %v2649 = vrot.slane %v2545, 1
      %v2650 = vsel %vm347, %v2648, %v2649
      %v2651 = vrot.slane %v2546, 1
      %v2652 = vsel %vm347, %v2649, %v2651
      %v2653 = vrot.slane %v2547, 1
      %v2654 = vrot.slane %v2548, 1
      %v2655 = vsel %vm347, %v2653, %v2654
      %v2656 = vrot.slane %v2549, 1
      %v2657 = vsel %vm347, %v2654, %v2656
      %v2658 = vrot.slane %v2550, 1
      %v2659 = vrot.slane %v2551, 1
      %v2660 = vsel %vm347, %v2658, %v2659
      %v2661 = vrot.slane %v2552, 1
      %v2662 = vsel %vm347, %v2659, %v2661
      %v2663 = vrot.slane %v2553, 1
      %v2664 = vrot.slane %v2554, 1
      %v2665 = vsel %vm347, %v2663, %v2664
      %v2666 = vrot.slane %v2555, 1
      %v2667 = vsel %vm347, %v2664, %v2666
      %v2668 = vrot.slane %v2556, 1
      %v2669 = vrot.slane %v2557, 1
      %v2670 = vsel %vm347, %v2668, %v2669
      %v2671 = vrot.slane %v2558, 1
      %v2672 = vsel %vm347, %v2669, %v2671
      %v2673 = vrot.slane %v2559, 1
      %v2674 = vrot.slane %v2560, 1
      %v2675 = vsel %vm347, %v2673, %v2674
      %v2676 = vrot.slane %v2561, 1
      %v2677 = vsel %vm347, %v2674, %v2676
      %v2678 = vrot.slane %v2562, 1
      %v2679 = vrot.slane %v2563, 1
      %v2680 = vsel %vm347, %v2678, %v2679
      %v2681 = vrot.slane %v2564, 1
      %v2682 = vsel %vm347, %v2679, %v2681
      %v2683 = vrot.slane %v2565, 1
      %v2684 = vrot.slane %v2566, 1
      %v2685 = vsel %vm347, %v2683, %v2684
      %v2686 = vrot.slane %v2567, 1
      %v2687 = vsel %vm347, %v2684, %v2686
      %v2688 = vrot.slane %v2568, 1
      %v2689 = vrot.slane %v2569, 1
      %v2690 = vsel %vm347, %v2688, %v2689
      %v2691 = vrot.slane %v2570, 1
      %v2692 = vsel %vm347, %v2689, %v2691
      %v2693 = vrot.slane %v2571, 1
      %v2694 = vrot.slane %v2572, 1
      %v2695 = vsel %vm347, %v2693, %v2694
      %v2696 = vrot.slane %v2573, 1
      %v2697 = vsel %vm347, %v2694, %v2696
      %v2698 = vrot.slane %v2574, 1
      %v2699 = vrot.slane %v2575, 1
      %v2700 = vsel %vm347, %v2698, %v2699
      %v2701 = vrot.slane %v2576, 1
      %v2702 = vsel %vm347, %v2699, %v2701
      %v2703 = vrot.slane %v2577, 1
      %v2704 = vrot.slane %v2578, 1
      %v2705 = vsel %vm347, %v2703, %v2704
      %v2706 = vrot.slane %v2579, 1
      %v2707 = vsel %vm347, %v2704, %v2706
      %v2740 = vpack.c.bf16 %v2632, %v2630
      %v2741 = vpack.c.bf16 %v2637, %v2635
      %v2742 = vpack.c.bf16 %v2642, %v2640
      %v2743 = vpack.c.bf16 %v2647, %v2645
      %v2744 = vpack.c.bf16 %v2652, %v2650
      %v2745 = vpack.c.bf16 %v2657, %v2655
      %v2746 = vpack.c.bf16 %v2662, %v2660
      %v2747 = vpack.c.bf16 %v2667, %v2665
      %v2748 = vpack.c.bf16 %v2672, %v2670
      %v2749 = vpack.c.bf16 %v2677, %v2675
      %v2750 = vpack.c.bf16 %v2682, %v2680
      %v2751 = vpack.c.bf16 %v2687, %v2685
      %v2752 = vpack.c.bf16 %v2692, %v2690
      %v2753 = vpack.c.bf16 %v2697, %v2695
      %v2754 = vpack.c.bf16 %v2702, %v2700
      %v2755 = vpack.c.bf16 %v2707, %v2705
      %s2756 = scalar_lea.vmem %s1, 448
      %v2757 = vld [vmem:[%s2756] sm:$0xf]
      %v2758 = vld [vmem:[%s2756 + $0x4] sm:$0xf]
      %v2759 = vld [vmem:[%s2756 + $0x8] sm:$0xf]
      %v2760 = vld [vmem:[%s2756 + $0xc] sm:$0xf]
      %v2761 = vld [vmem:[%s2756 + $0x10] sm:$0xf]
      %v2762 = vld [vmem:[%s2756 + $0x14] sm:$0xf]
      %v2763 = vld [vmem:[%s2756 + $0x18] sm:$0xf]
      %v2764 = vld [vmem:[%s2756 + $0x1c] sm:$0xf]
      %v2765 = vld [vmem:[%s2756 + $0x20] sm:$0xf]
      %v2766 = vld [vmem:[%s2756 + $0x24] sm:$0xf]
      %v2767 = vld [vmem:[%s2756 + $0x28] sm:$0xf]
      %v2768 = vld [vmem:[%s2756 + $0x2c] sm:$0xf]
      %v2769 = vld [vmem:[%s2756 + $0x30] sm:$0xf]
      %v2770 = vld [vmem:[%s2756 + $0x34] sm:$0xf]
      %v2771 = vld [vmem:[%s2756 + $0x38] sm:$0xf]
      %v2772 = vld [vmem:[%s2756 + $0x3c] sm:$0xf]
      %v2789 = vunpack.c.l.b16 %v2757
      %v2790 = vunpack.c.l.b16 %v2758
      %v2791 = vunpack.c.l.b16 %v2759
      %v2792 = vunpack.c.l.b16 %v2760
      %v2793 = vunpack.c.l.b16 %v2761
      %v2794 = vunpack.c.l.b16 %v2762
      %v2795 = vunpack.c.l.b16 %v2763
      %v2796 = vunpack.c.l.b16 %v2764
      %v2797 = vunpack.c.l.b16 %v2765
      %v2798 = vunpack.c.l.b16 %v2766
      %v2799 = vunpack.c.l.b16 %v2767
      %v2800 = vunpack.c.l.b16 %v2768
      %v2801 = vunpack.c.l.b16 %v2769
      %v2802 = vunpack.c.l.b16 %v2770
      %v2803 = vunpack.c.l.b16 %v2771
      %v2804 = vunpack.c.l.b16 %v2772
      %v2805 = vpack.c.b16 %v2790, %v2789
      %v2806 = vpack.c.b16 %v2792, %v2791
      %v2807 = vpack.c.b16 %v2794, %v2793
      %v2808 = vpack.c.b16 %v2796, %v2795
      %v2809 = vpack.c.b16 %v2798, %v2797
      %v2810 = vpack.c.b16 %v2800, %v2799
      %v2811 = vpack.c.b16 %v2802, %v2801
      %v2812 = vpack.c.b16 %v2804, %v2803
      %2821 = vmatpush.bf16.msra.mxu0 %v2812
      %2822 = vmatpush.bf16.msra.mxu0 %v2811
      %2823 = vmatpush.bf16.msra.mxu0 %v2810
      %2824 = vmatpush.bf16.msra.mxu0 %v2809
      %2825 = vmatpush.bf16.msra.mxu0 %v2808
      %2826 = vmatpush.bf16.msra.mxu0 %v2807
      %2827 = vmatpush.bf16.msra.mxu0 %v2806
      %2828 = vmatpush.bf16.msra.mxu0 %v2805
      %2829 = vmatmul.bf16.gmra.mxu0 %v2740
      %v2830 = vpop.f32.mrf.mxu0
      %v2831 = vadd.f32 0.0, %v2830
      %v2832 = vpop.f32.mrf.mxu0
      %v2833 = vadd.f32 0.0, %v2832
      %2834 = vmatmul.bf16.gmra.mxu0 %v2741
      %v2835 = vpop.f32.mrf.mxu0
      %v2836 = vadd.f32 0.0, %v2835
      %v2837 = vpop.f32.mrf.mxu0
      %v2838 = vadd.f32 0.0, %v2837
      %2839 = vmatmul.bf16.gmra.mxu0 %v2742
      %v2840 = vpop.f32.mrf.mxu0
      %v2841 = vadd.f32 0.0, %v2840
      %v2842 = vpop.f32.mrf.mxu0
      %v2843 = vadd.f32 0.0, %v2842
      %2844 = vmatmul.bf16.gmra.mxu0 %v2743
      %v2845 = vpop.f32.mrf.mxu0
      %v2846 = vadd.f32 0.0, %v2845
      %v2847 = vpop.f32.mrf.mxu0
      %v2848 = vadd.f32 0.0, %v2847
      %2849 = vmatmul.bf16.gmra.mxu0 %v2744
      %v2850 = vpop.f32.mrf.mxu0
      %v2851 = vadd.f32 0.0, %v2850
      %v2852 = vpop.f32.mrf.mxu0
      %v2853 = vadd.f32 0.0, %v2852
      %2854 = vmatmul.bf16.gmra.mxu0 %v2745
      %v2855 = vpop.f32.mrf.mxu0
      %v2856 = vadd.f32 0.0, %v2855
      %v2857 = vpop.f32.mrf.mxu0
      %v2858 = vadd.f32 0.0, %v2857
      %2859 = vmatmul.bf16.gmra.mxu0 %v2746
      %v2860 = vpop.f32.mrf.mxu0
      %v2861 = vadd.f32 0.0, %v2860
      %v2862 = vpop.f32.mrf.mxu0
      %v2863 = vadd.f32 0.0, %v2862
      %2864 = vmatmul.bf16.gmra.mxu0 %v2747
      %v2865 = vpop.f32.mrf.mxu0
      %v2866 = vadd.f32 0.0, %v2865
      %v2867 = vpop.f32.mrf.mxu0
      %v2868 = vadd.f32 0.0, %v2867
      %2869 = vmatmul.bf16.gmra.mxu0 %v2748
      %v2870 = vpop.f32.mrf.mxu0
      %v2871 = vadd.f32 0.0, %v2870
      %v2872 = vpop.f32.mrf.mxu0
      %v2873 = vadd.f32 0.0, %v2872
      %2874 = vmatmul.bf16.gmra.mxu0 %v2749
      %v2875 = vpop.f32.mrf.mxu0
      %v2876 = vadd.f32 0.0, %v2875
      %v2877 = vpop.f32.mrf.mxu0
      %v2878 = vadd.f32 0.0, %v2877
      %2879 = vmatmul.bf16.gmra.mxu0 %v2750
      %v2880 = vpop.f32.mrf.mxu0
      %v2881 = vadd.f32 0.0, %v2880
      %v2882 = vpop.f32.mrf.mxu0
      %v2883 = vadd.f32 0.0, %v2882
      %2884 = vmatmul.bf16.gmra.mxu0 %v2751
      %v2885 = vpop.f32.mrf.mxu0
      %v2886 = vadd.f32 0.0, %v2885
      %v2887 = vpop.f32.mrf.mxu0
      %v2888 = vadd.f32 0.0, %v2887
      %2889 = vmatmul.bf16.gmra.mxu0 %v2752
      %v2890 = vpop.f32.mrf.mxu0
      %v2891 = vadd.f32 0.0, %v2890
      %v2892 = vpop.f32.mrf.mxu0
      %v2893 = vadd.f32 0.0, %v2892
      %2894 = vmatmul.bf16.gmra.mxu0 %v2753
      %v2895 = vpop.f32.mrf.mxu0
      %v2896 = vadd.f32 0.0, %v2895
      %v2897 = vpop.f32.mrf.mxu0
      %v2898 = vadd.f32 0.0, %v2897
      %2899 = vmatmul.bf16.gmra.mxu0 %v2754
      %v2900 = vpop.f32.mrf.mxu0
      %v2901 = vadd.f32 0.0, %v2900
      %v2902 = vpop.f32.mrf.mxu0
      %v2903 = vadd.f32 0.0, %v2902
      %2904 = vmatmul.bf16.gmra.mxu0 %v2755
      %v2905 = vpop.f32.mrf.mxu0
      %v2906 = vadd.f32 0.0, %v2905
      %v2907 = vpop.f32.mrf.mxu0
      %v2908 = vadd.f32 0.0, %v2907
      %2909 = vdwg.mxu0
      %v2910 = vadd.f32 %v2452, %v2831
      %v2911 = vadd.f32 %v2453, %v2833
      %v2912 = vadd.f32 %v2454, %v2836
      %v2913 = vadd.f32 %v2455, %v2838
      %v2914 = vadd.f32 %v2456, %v2841
      %v2915 = vadd.f32 %v2457, %v2843
      %v2916 = vadd.f32 %v2458, %v2846
      %v2917 = vadd.f32 %v2459, %v2848
      %v2918 = vadd.f32 %v2460, %v2851
      %v2919 = vadd.f32 %v2461, %v2853
      %v2920 = vadd.f32 %v2462, %v2856
      %v2921 = vadd.f32 %v2463, %v2858
      %v2922 = vadd.f32 %v2464, %v2861
      %v2923 = vadd.f32 %v2465, %v2863
      %v2924 = vadd.f32 %v2466, %v2866
      %v2925 = vadd.f32 %v2467, %v2868
      %v2926 = vadd.f32 %v2468, %v2871
      %v2927 = vadd.f32 %v2469, %v2873
      %v2928 = vadd.f32 %v2470, %v2876
      %v2929 = vadd.f32 %v2471, %v2878
      %v2930 = vadd.f32 %v2472, %v2881
      %v2931 = vadd.f32 %v2473, %v2883
      %v2932 = vadd.f32 %v2474, %v2886
      %v2933 = vadd.f32 %v2475, %v2888
      %v2934 = vadd.f32 %v2476, %v2891
      %v2935 = vadd.f32 %v2477, %v2893
      %v2936 = vadd.f32 %v2478, %v2896
      %v2937 = vadd.f32 %v2479, %v2898
      %v2938 = vadd.f32 %v2480, %v2901
      %v2939 = vadd.f32 %v2481, %v2903
      %v2940 = vadd.f32 %v2482, %v2906
      %v2941 = vadd.f32 %v2483, %v2908
      %v2942 = vld [vmem:[%s2217] sm:$0xe]
      %v2943 = vld [vmem:[%s2217 + $0xc] sm:$0xe]
      %v2944 = vld [vmem:[%s2217 + $0x18] sm:$0xe]
      %v2945 = vld [vmem:[%s2217 + $0x24] sm:$0xe]
      %v2946 = vld [vmem:[%s2217 + $0x30] sm:$0xe]
      %v2947 = vld [vmem:[%s2217 + $0x3c] sm:$0xe]
      %v2948 = vld [vmem:[%s2217 + $0x48] sm:$0xe]
      %v2949 = vld [vmem:[%s2217 + $0x54] sm:$0xe]
      %v2950 = vld [vmem:[%s2217 + $0x60] sm:$0xe]
      %v2951 = vld [vmem:[%s2217 + $0x6c] sm:$0xe]
      %v2952 = vld [vmem:[%s2217 + $0x78] sm:$0xe]
      %v2953 = vld [vmem:[%s2217 + $0x84] sm:$0xe]
      %v2954 = vld [vmem:[%s2217 + $0x90] sm:$0xe]
      %v2955 = vld [vmem:[%s2217 + $0x9c] sm:$0xe]
      %v2956 = vld [vmem:[%s2217 + $0xa8] sm:$0xe]
      %v2957 = vld [vmem:[%s2217 + $0xb4] sm:$0xe]
      %v2958 = vunpack.c.l.bf16 %v2942
      %v2959 = vunpack.c.l.bf16 %v2943
      %v2960 = vunpack.c.l.bf16 %v2944
      %v2961 = vunpack.c.l.bf16 %v2945
      %v2962 = vunpack.c.l.bf16 %v2946
      %v2963 = vunpack.c.l.bf16 %v2947
      %v2964 = vunpack.c.l.bf16 %v2948
      %v2965 = vunpack.c.l.bf16 %v2949
      %v2966 = vunpack.c.l.bf16 %v2950
      %v2967 = vunpack.c.l.bf16 %v2951
      %v2968 = vunpack.c.l.bf16 %v2952
      %v2969 = vunpack.c.l.bf16 %v2953
      %v2970 = vunpack.c.l.bf16 %v2954
      %v2971 = vunpack.c.l.bf16 %v2955
      %v2972 = vunpack.c.l.bf16 %v2956
      %v2973 = vunpack.c.l.bf16 %v2957
      %v2990 = vrot.slane %v2958, 2
      %v2991 = vrot.slane %v2533, 2
      %v2992 = vsel %vm815, %v2990, %v2991
      %v2993 = vrot.slane %v2534, 2
      %v2994 = vsel %vm815, %v2991, %v2993
      %v2995 = vrot.slane %v2959, 2
      %v2996 = vrot.slane %v2536, 2
      %v2997 = vsel %vm815, %v2995, %v2996
      %v2998 = vrot.slane %v2537, 2
      %v2999 = vsel %vm815, %v2996, %v2998
      %v3000 = vrot.slane %v2960, 2
      %v3001 = vrot.slane %v2539, 2
      %v3002 = vsel %vm815, %v3000, %v3001
      %v3003 = vrot.slane %v2540, 2
      %v3004 = vsel %vm815, %v3001, %v3003
      %v3005 = vrot.slane %v2961, 2
      %v3006 = vrot.slane %v2542, 2
      %v3007 = vsel %vm815, %v3005, %v3006
      %v3008 = vrot.slane %v2543, 2
      %v3009 = vsel %vm815, %v3006, %v3008
      %v3010 = vrot.slane %v2962, 2
      %v3011 = vrot.slane %v2545, 2
      %v3012 = vsel %vm815, %v3010, %v3011
      %v3013 = vrot.slane %v2546, 2
      %v3014 = vsel %vm815, %v3011, %v3013
      %v3015 = vrot.slane %v2963, 2
      %v3016 = vrot.slane %v2548, 2
      %v3017 = vsel %vm815, %v3015, %v3016
      %v3018 = vrot.slane %v2549, 2
      %v3019 = vsel %vm815, %v3016, %v3018
      %v3020 = vrot.slane %v2964, 2
      %v3021 = vrot.slane %v2551, 2
      %v3022 = vsel %vm815, %v3020, %v3021
      %v3023 = vrot.slane %v2552, 2
      %v3024 = vsel %vm815, %v3021, %v3023
      %v3025 = vrot.slane %v2965, 2
      %v3026 = vrot.slane %v2554, 2
      %v3027 = vsel %vm815, %v3025, %v3026
      %v3028 = vrot.slane %v2555, 2
      %v3029 = vsel %vm815, %v3026, %v3028
      %v3030 = vrot.slane %v2966, 2
      %v3031 = vrot.slane %v2557, 2
      %v3032 = vsel %vm815, %v3030, %v3031
      %v3033 = vrot.slane %v2558, 2
      %v3034 = vsel %vm815, %v3031, %v3033
      %v3035 = vrot.slane %v2967, 2
      %v3036 = vrot.slane %v2560, 2
      %v3037 = vsel %vm815, %v3035, %v3036
      %v3038 = vrot.slane %v2561, 2
      %v3039 = vsel %vm815, %v3036, %v3038
      %v3040 = vrot.slane %v2968, 2
      %v3041 = vrot.slane %v2563, 2
      %v3042 = vsel %vm815, %v3040, %v3041
      %v3043 = vrot.slane %v2564, 2
      %v3044 = vsel %vm815, %v3041, %v3043
      %v3045 = vrot.slane %v2969, 2
      %v3046 = vrot.slane %v2566, 2
      %v3047 = vsel %vm815, %v3045, %v3046
      %v3048 = vrot.slane %v2567, 2
      %v3049 = vsel %vm815, %v3046, %v3048
      %v3050 = vrot.slane %v2970, 2
      %v3051 = vrot.slane %v2569, 2
      %v3052 = vsel %vm815, %v3050, %v3051
      %v3053 = vrot.slane %v2570, 2
      %v3054 = vsel %vm815, %v3051, %v3053
      %v3055 = vrot.slane %v2971, 2
      %v3056 = vrot.slane %v2572, 2
      %v3057 = vsel %vm815, %v3055, %v3056
      %v3058 = vrot.slane %v2573, 2
      %v3059 = vsel %vm815, %v3056, %v3058
      %v3060 = vrot.slane %v2972, 2
      %v3061 = vrot.slane %v2575, 2
      %v3062 = vsel %vm815, %v3060, %v3061
      %v3063 = vrot.slane %v2576, 2
      %v3064 = vsel %vm815, %v3061, %v3063
      %v3065 = vrot.slane %v2973, 2
      %v3066 = vrot.slane %v2578, 2
      %v3067 = vsel %vm815, %v3065, %v3066
      %v3068 = vrot.slane %v2579, 2
      %v3069 = vsel %vm815, %v3066, %v3068
      %v3102 = vpack.c.bf16 %v2994, %v2992
      %v3103 = vpack.c.bf16 %v2999, %v2997
      %v3104 = vpack.c.bf16 %v3004, %v3002
      %v3105 = vpack.c.bf16 %v3009, %v3007
      %v3106 = vpack.c.bf16 %v3014, %v3012
      %v3107 = vpack.c.bf16 %v3019, %v3017
      %v3108 = vpack.c.bf16 %v3024, %v3022
      %v3109 = vpack.c.bf16 %v3029, %v3027
      %v3110 = vpack.c.bf16 %v3034, %v3032
      %v3111 = vpack.c.bf16 %v3039, %v3037
      %v3112 = vpack.c.bf16 %v3044, %v3042
      %v3113 = vpack.c.bf16 %v3049, %v3047
      %v3114 = vpack.c.bf16 %v3054, %v3052
      %v3115 = vpack.c.bf16 %v3059, %v3057
      %v3116 = vpack.c.bf16 %v3064, %v3062
      %v3117 = vpack.c.bf16 %v3069, %v3067
      %s3118 = scalar_lea.vmem %s1, 512
      %v3119 = vld [vmem:[%s3118] sm:$0xf]
      %v3120 = vld [vmem:[%s3118 + $0x4] sm:$0xf]
      %v3121 = vld [vmem:[%s3118 + $0x8] sm:$0xf]
      %v3122 = vld [vmem:[%s3118 + $0xc] sm:$0xf]
      %v3123 = vld [vmem:[%s3118 + $0x10] sm:$0xf]
      %v3124 = vld [vmem:[%s3118 + $0x14] sm:$0xf]
      %v3125 = vld [vmem:[%s3118 + $0x18] sm:$0xf]
      %v3126 = vld [vmem:[%s3118 + $0x1c] sm:$0xf]
      %v3127 = vld [vmem:[%s3118 + $0x20] sm:$0xf]
      %v3128 = vld [vmem:[%s3118 + $0x24] sm:$0xf]
      %v3129 = vld [vmem:[%s3118 + $0x28] sm:$0xf]
      %v3130 = vld [vmem:[%s3118 + $0x2c] sm:$0xf]
      %v3131 = vld [vmem:[%s3118 + $0x30] sm:$0xf]
      %v3132 = vld [vmem:[%s3118 + $0x34] sm:$0xf]
      %v3133 = vld [vmem:[%s3118 + $0x38] sm:$0xf]
      %v3134 = vld [vmem:[%s3118 + $0x3c] sm:$0xf]
      %v3151 = vunpack.c.l.b16 %v3119
      %v3152 = vunpack.c.l.b16 %v3120
      %v3153 = vunpack.c.l.b16 %v3121
      %v3154 = vunpack.c.l.b16 %v3122
      %v3155 = vunpack.c.l.b16 %v3123
      %v3156 = vunpack.c.l.b16 %v3124
      %v3157 = vunpack.c.l.b16 %v3125
      %v3158 = vunpack.c.l.b16 %v3126
      %v3159 = vunpack.c.l.b16 %v3127
      %v3160 = vunpack.c.l.b16 %v3128
      %v3161 = vunpack.c.l.b16 %v3129
      %v3162 = vunpack.c.l.b16 %v3130
      %v3163 = vunpack.c.l.b16 %v3131
      %v3164 = vunpack.c.l.b16 %v3132
      %v3165 = vunpack.c.l.b16 %v3133
      %v3166 = vunpack.c.l.b16 %v3134
      %v3167 = vpack.c.b16 %v3152, %v3151
      %v3168 = vpack.c.b16 %v3154, %v3153
      %v3169 = vpack.c.b16 %v3156, %v3155
      %v3170 = vpack.c.b16 %v3158, %v3157
      %v3171 = vpack.c.b16 %v3160, %v3159
      %v3172 = vpack.c.b16 %v3162, %v3161
      %v3173 = vpack.c.b16 %v3164, %v3163
      %v3174 = vpack.c.b16 %v3166, %v3165
      %3183 = vmatpush.bf16.msra.mxu0 %v3174
      %3184 = vmatpush.bf16.msra.mxu0 %v3173
      %3185 = vmatpush.bf16.msra.mxu0 %v3172
      %3186 = vmatpush.bf16.msra.mxu0 %v3171
      %3187 = vmatpush.bf16.msra.mxu0 %v3170
      %3188 = vmatpush.bf16.msra.mxu0 %v3169
      %3189 = vmatpush.bf16.msra.mxu0 %v3168
      %3190 = vmatpush.bf16.msra.mxu0 %v3167
      %3191 = vmatmul.bf16.gmra.mxu0 %v3102
      %v3192 = vpop.f32.mrf.mxu0
      %v3193 = vadd.f32 0.0, %v3192
      %v3194 = vpop.f32.mrf.mxu0
      %v3195 = vadd.f32 0.0, %v3194
      %3196 = vmatmul.bf16.gmra.mxu0 %v3103
      %v3197 = vpop.f32.mrf.mxu0
      %v3198 = vadd.f32 0.0, %v3197
      %v3199 = vpop.f32.mrf.mxu0
      %v3200 = vadd.f32 0.0, %v3199
      %3201 = vmatmul.bf16.gmra.mxu0 %v3104
      %v3202 = vpop.f32.mrf.mxu0
      %v3203 = vadd.f32 0.0, %v3202
      %v3204 = vpop.f32.mrf.mxu0
      %v3205 = vadd.f32 0.0, %v3204
      %3206 = vmatmul.bf16.gmra.mxu0 %v3105
      %v3207 = vpop.f32.mrf.mxu0
      %v3208 = vadd.f32 0.0, %v3207
      %v3209 = vpop.f32.mrf.mxu0
      %v3210 = vadd.f32 0.0, %v3209
      %3211 = vmatmul.bf16.gmra.mxu0 %v3106
      %v3212 = vpop.f32.mrf.mxu0
      %v3213 = vadd.f32 0.0, %v3212
      %v3214 = vpop.f32.mrf.mxu0
      %v3215 = vadd.f32 0.0, %v3214
      %3216 = vmatmul.bf16.gmra.mxu0 %v3107
      %v3217 = vpop.f32.mrf.mxu0
      %v3218 = vadd.f32 0.0, %v3217
      %v3219 = vpop.f32.mrf.mxu0
      %v3220 = vadd.f32 0.0, %v3219
      %3221 = vmatmul.bf16.gmra.mxu0 %v3108
      %v3222 = vpop.f32.mrf.mxu0
      %v3223 = vadd.f32 0.0, %v3222
      %v3224 = vpop.f32.mrf.mxu0
      %v3225 = vadd.f32 0.0, %v3224
      %3226 = vmatmul.bf16.gmra.mxu0 %v3109
      %v3227 = vpop.f32.mrf.mxu0
      %v3228 = vadd.f32 0.0, %v3227
      %v3229 = vpop.f32.mrf.mxu0
      %v3230 = vadd.f32 0.0, %v3229
      %3231 = vmatmul.bf16.gmra.mxu0 %v3110
      %v3232 = vpop.f32.mrf.mxu0
      %v3233 = vadd.f32 0.0, %v3232
      %v3234 = vpop.f32.mrf.mxu0
      %v3235 = vadd.f32 0.0, %v3234
      %3236 = vmatmul.bf16.gmra.mxu0 %v3111
      %v3237 = vpop.f32.mrf.mxu0
      %v3238 = vadd.f32 0.0, %v3237
      %v3239 = vpop.f32.mrf.mxu0
      %v3240 = vadd.f32 0.0, %v3239
      %3241 = vmatmul.bf16.gmra.mxu0 %v3112
      %v3242 = vpop.f32.mrf.mxu0
      %v3243 = vadd.f32 0.0, %v3242
      %v3244 = vpop.f32.mrf.mxu0
      %v3245 = vadd.f32 0.0, %v3244
      %3246 = vmatmul.bf16.gmra.mxu0 %v3113
      %v3247 = vpop.f32.mrf.mxu0
      %v3248 = vadd.f32 0.0, %v3247
      %v3249 = vpop.f32.mrf.mxu0
      %v3250 = vadd.f32 0.0, %v3249
      %3251 = vmatmul.bf16.gmra.mxu0 %v3114
      %v3252 = vpop.f32.mrf.mxu0
      %v3253 = vadd.f32 0.0, %v3252
      %v3254 = vpop.f32.mrf.mxu0
      %v3255 = vadd.f32 0.0, %v3254
      %3256 = vmatmul.bf16.gmra.mxu0 %v3115
      %v3257 = vpop.f32.mrf.mxu0
      %v3258 = vadd.f32 0.0, %v3257
      %v3259 = vpop.f32.mrf.mxu0
      %v3260 = vadd.f32 0.0, %v3259
      %3261 = vmatmul.bf16.gmra.mxu0 %v3116
      %v3262 = vpop.f32.mrf.mxu0
      %v3263 = vadd.f32 0.0, %v3262
      %v3264 = vpop.f32.mrf.mxu0
      %v3265 = vadd.f32 0.0, %v3264
      %3266 = vmatmul.bf16.gmra.mxu0 %v3117
      %v3267 = vpop.f32.mrf.mxu0
      %v3268 = vadd.f32 0.0, %v3267
      %v3269 = vpop.f32.mrf.mxu0
      %v3270 = vadd.f32 0.0, %v3269
      %3271 = vdwg.mxu0
      %v3272 = vadd.f32 %v2910, %v3193
      %v3273 = vadd.f32 %v2911, %v3195
      %v3274 = vadd.f32 %v2912, %v3198
      %v3275 = vadd.f32 %v2913, %v3200
      %v3276 = vadd.f32 %v2914, %v3203
      %v3277 = vadd.f32 %v2915, %v3205
      %v3278 = vadd.f32 %v2916, %v3208
      %v3279 = vadd.f32 %v2917, %v3210
      %v3280 = vadd.f32 %v2918, %v3213
      %v3281 = vadd.f32 %v2919, %v3215
      %v3282 = vadd.f32 %v2920, %v3218
      %v3283 = vadd.f32 %v2921, %v3220
      %v3284 = vadd.f32 %v2922, %v3223
      %v3285 = vadd.f32 %v2923, %v3225
      %v3286 = vadd.f32 %v2924, %v3228
      %v3287 = vadd.f32 %v2925, %v3230
      %v3288 = vadd.f32 %v2926, %v3233
      %v3289 = vadd.f32 %v2927, %v3235
      %v3290 = vadd.f32 %v2928, %v3238
      %v3291 = vadd.f32 %v2929, %v3240
      %v3292 = vadd.f32 %v2930, %v3243
      %v3293 = vadd.f32 %v2931, %v3245
      %v3294 = vadd.f32 %v2932, %v3248
      %v3295 = vadd.f32 %v2933, %v3250
      %v3296 = vadd.f32 %v2934, %v3253
      %v3297 = vadd.f32 %v2935, %v3255
      %v3298 = vadd.f32 %v2936, %v3258
      %v3299 = vadd.f32 %v2937, %v3260
      %v3300 = vadd.f32 %v2938, %v3263
      %v3301 = vadd.f32 %v2939, %v3265
      %v3302 = vadd.f32 %v2940, %v3268
      %v3303 = vadd.f32 %v2941, %v3270
      %v3304 = vld [vmem:[%s2] sm:$0x1]
      %v3306 = vperm.slane %v3304, 0
      %v3308 = vadd.f32 %v3272, %v3306
      %v3309 = vadd.f32 %v3273, %v3306
      %v3310 = vadd.f32 %v3274, %v3306
      %v3311 = vadd.f32 %v3275, %v3306
      %v3312 = vadd.f32 %v3276, %v3306
      %v3313 = vadd.f32 %v3277, %v3306
      %v3314 = vadd.f32 %v3278, %v3306
      %v3315 = vadd.f32 %v3279, %v3306
      %v3316 = vadd.f32 %v3280, %v3306
      %v3317 = vadd.f32 %v3281, %v3306
      %v3318 = vadd.f32 %v3282, %v3306
      %v3319 = vadd.f32 %v3283, %v3306
      %v3320 = vadd.f32 %v3284, %v3306
      %v3321 = vadd.f32 %v3285, %v3306
      %v3322 = vadd.f32 %v3286, %v3306
      %v3323 = vadd.f32 %v3287, %v3306
      %v3324 = vadd.f32 %v3288, %v3306
      %v3325 = vadd.f32 %v3289, %v3306
      %v3326 = vadd.f32 %v3290, %v3306
      %v3327 = vadd.f32 %v3291, %v3306
      %v3328 = vadd.f32 %v3292, %v3306
      %v3329 = vadd.f32 %v3293, %v3306
      %v3330 = vadd.f32 %v3294, %v3306
      %v3331 = vadd.f32 %v3295, %v3306
      %v3332 = vadd.f32 %v3296, %v3306
      %v3333 = vadd.f32 %v3297, %v3306
      %v3334 = vadd.f32 %v3298, %v3306
      %v3335 = vadd.f32 %v3299, %v3306
      %v3336 = vadd.f32 %v3300, %v3306
      %v3337 = vadd.f32 %v3301, %v3306
      %v3338 = vadd.f32 %v3302, %v3306
      %v3339 = vadd.f32 %v3303, %v3306
      %v3340 = vmax.f32 %v3308, 0.0
      %v3341 = vmax.f32 %v3309, 0.0
      %v3342 = vmax.f32 %v3310, 0.0
      %v3343 = vmax.f32 %v3311, 0.0
      %v3344 = vmax.f32 %v3312, 0.0
      %v3345 = vmax.f32 %v3313, 0.0
      %v3346 = vmax.f32 %v3314, 0.0
      %v3347 = vmax.f32 %v3315, 0.0
      %v3348 = vmax.f32 %v3316, 0.0
      %v3349 = vmax.f32 %v3317, 0.0
      %v3350 = vmax.f32 %v3318, 0.0
      %v3351 = vmax.f32 %v3319, 0.0
      %v3352 = vmax.f32 %v3320, 0.0
      %v3353 = vmax.f32 %v3321, 0.0
      %v3354 = vmax.f32 %v3322, 0.0
      %v3355 = vmax.f32 %v3323, 0.0
      %v3356 = vmax.f32 %v3324, 0.0
      %v3357 = vmax.f32 %v3325, 0.0
      %v3358 = vmax.f32 %v3326, 0.0
      %v3359 = vmax.f32 %v3327, 0.0
      %v3360 = vmax.f32 %v3328, 0.0
      %v3361 = vmax.f32 %v3329, 0.0
      %v3362 = vmax.f32 %v3330, 0.0
      %v3363 = vmax.f32 %v3331, 0.0
      %v3364 = vmax.f32 %v3332, 0.0
      %v3365 = vmax.f32 %v3333, 0.0
      %v3366 = vmax.f32 %v3334, 0.0
      %v3367 = vmax.f32 %v3335, 0.0
      %v3368 = vmax.f32 %v3336, 0.0
      %v3369 = vmax.f32 %v3337, 0.0
      %v3370 = vmax.f32 %v3338, 0.0
      %v3371 = vmax.f32 %v3339, 0.0
      %v3372 = vmax.f32 %v3340, %v3342
      %v3373 = vmax.f32 %v3341, %v3343
      %3374 = vst [vmem:[#allocation2] sm:$0xff] %v3372
      %3375 = vst [vmem:[#allocation2 + $0x8] sm:$0xff] %v3373
      %v3376 = vmax.f32 %v3344, %v3346
      %v3377 = vmax.f32 %v3345, %v3347
      %3378 = vst [vmem:[#allocation2 + $0x10] sm:$0xff] %v3376
      %3379 = vst [vmem:[#allocation2 + $0x18] sm:$0xff] %v3377
      %v3380 = vmax.f32 %v3348, %v3350
      %v3381 = vmax.f32 %v3349, %v3351
      %3382 = vst [vmem:[#allocation2 + $0x20] sm:$0xff] %v3380
      %3383 = vst [vmem:[#allocation2 + $0x28] sm:$0xff] %v3381
      %v3384 = vmax.f32 %v3352, %v3354
      %v3385 = vmax.f32 %v3353, %v3355
      %3386 = vst [vmem:[#allocation2 + $0x30] sm:$0xff] %v3384
      %3387 = vst [vmem:[#allocation2 + $0x38] sm:$0xff] %v3385
      %v3388 = vmax.f32 %v3356, %v3358
      %v3389 = vmax.f32 %v3357, %v3359
      %3390 = vst [vmem:[#allocation2 + $0x40] sm:$0xff] %v3388
      %3391 = vst [vmem:[#allocation2 + $0x48] sm:$0xff] %v3389
      %v3392 = vmax.f32 %v3360, %v3362
      %v3393 = vmax.f32 %v3361, %v3363
      %3394 = vst [vmem:[#allocation2 + $0x50] sm:$0xff] %v3392
      %3395 = vst [vmem:[#allocation2 + $0x58] sm:$0xff] %v3393
      %v3396 = vmax.f32 %v3364, %v3366
      %v3397 = vmax.f32 %v3365, %v3367
      %3398 = vst [vmem:[#allocation2 + $0x60] sm:$0xff] %v3396
      %3399 = vst [vmem:[#allocation2 + $0x68] sm:$0xff] %v3397
      %v3400 = vmax.f32 %v3368, %v3370
      %v3401 = vmax.f32 %v3369, %v3371
      %3402 = vst [vmem:[#allocation2 + $0x70] sm:$0xff] %v3400
      %3403 = vst [vmem:[#allocation2 + $0x78] sm:$0xff] %v3401
      %v3404 = vld [vmem:[#allocation2] ss:$2 sm:$0xff]
      %s3405 = scalar_lea.vmem [#allocation2], 16
      %v3406 = vld [vmem:[%s3405] ss:$2 sm:$0xff]
      %s3407 = scalar_lea.vmem [#allocation2], 32
      %v3408 = vld [vmem:[%s3407] ss:$2 sm:$0xff]
      %s3409 = scalar_lea.vmem [#allocation2], 48
      %v3410 = vld [vmem:[%s3409] ss:$2 sm:$0xff]
      %s3411 = scalar_lea.vmem [#allocation2], 64
      %v3412 = vld [vmem:[%s3411] ss:$2 sm:$0xff]
      %s3413 = scalar_lea.vmem [#allocation2], 80
      %v3414 = vld [vmem:[%s3413] ss:$2 sm:$0xff]
      %s3415 = scalar_lea.vmem [#allocation2], 96
      %v3416 = vld [vmem:[%s3415] ss:$2 sm:$0xff]
      %s3417 = scalar_lea.vmem [#allocation2], 112
      %v3418 = vld [vmem:[%s3417] ss:$2 sm:$0xff]
      %s3419 = scalar_lea.vmem [#allocation2], 1
      %v3420 = vld [vmem:[%s3419] ss:$2 sm:$0xff]
      %s3421 = scalar_lea.vmem [#allocation2], 17
      %v3422 = vld [vmem:[%s3421] ss:$2 sm:$0xff]
      %s3423 = scalar_lea.vmem [#allocation2], 33
      %v3424 = vld [vmem:[%s3423] ss:$2 sm:$0xff]
      %s3425 = scalar_lea.vmem [#allocation2], 49
      %v3426 = vld [vmem:[%s3425] ss:$2 sm:$0xff]
      %s3427 = scalar_lea.vmem [#allocation2], 65
      %v3428 = vld [vmem:[%s3427] ss:$2 sm:$0xff]
      %s3429 = scalar_lea.vmem [#allocation2], 81
      %v3430 = vld [vmem:[%s3429] ss:$2 sm:$0xff]
      %s3431 = scalar_lea.vmem [#allocation2], 97
      %v3432 = vld [vmem:[%s3431] ss:$2 sm:$0xff]
      %s3433 = scalar_lea.vmem [#allocation2], 113
      %v3434 = vld [vmem:[%s3433] ss:$2 sm:$0xff]
      %v3435 = vmax.f32 %v3404, %v3420
      %v3436 = vmax.f32 %v3406, %v3422
      %v3437 = vmax.f32 %v3408, %v3424
      %v3438 = vmax.f32 %v3410, %v3426
      %v3439 = vmax.f32 %v3412, %v3428
      %v3440 = vmax.f32 %v3414, %v3430
      %v3441 = vmax.f32 %v3416, %v3432
      %v3442 = vmax.f32 %v3418, %v3434
      %v3443 = vpack.c.bf16 %v3435, %v3435
      %v3444 = vpack.c.bf16 %v3436, %v3436
      %v3445 = vpack.c.bf16 %v3437, %v3437
      %v3446 = vpack.c.bf16 %v3438, %v3438
      %v3447 = vpack.c.bf16 %v3439, %v3439
      %v3448 = vpack.c.bf16 %v3440, %v3440
      %v3449 = vpack.c.bf16 %v3441, %v3441
      %v3450 = vpack.c.bf16 %v3442, %v3442
      %3451 = vst [vmem:[%s170] sm:$0xf] %v3443
      %3452 = vst [vmem:[%s170 + $0x4] sm:$0xf] %v3444
      %3453 = vst [vmem:[%s170 + $0x8] sm:$0xf] %v3445
      %3454 = vst [vmem:[%s170 + $0xc] sm:$0xf] %v3446
      %3455 = vst [vmem:[%s170 + $0x10] sm:$0xf] %v3447
      %3456 = vst [vmem:[%s170 + $0x14] sm:$0xf] %v3448
      %3457 = vst [vmem:[%s170 + $0x18] sm:$0xf] %v3449
      %3458 = vst [vmem:[%s170 + $0x1c] sm:$0xf] %v3450
      %p3459 = scmp.lt.s32.totalorder %s14, 1
      %s3460 = scalar_select %p3459, %s14, 1
      %s3461 = smul.addr %s3460, 8
      %s3462 = smul.addr %s3461, 4
      %s3463 = scalar_lea.vmem %s3, %s3462
      // Predicated region
      $region33: #{griddy_forward.6} parent=31 // pred_check
        %p3464 = pneg %p100
      $region34: #{griddy_forward.6} parent=31 // pred_check_branch
        %3466 = sbr.rel (%p3464) target = $region36
      $region35: #{griddy_forward.6} parent=31 // pred_region
        _
      $region36: #{griddy_forward.6} parent=31 // pred_fallthru
        _
    $region32: #{griddy_forward.6} parent=5 // pred_fallthru
      _
    %p3467 = scmp.le.s32.totalorder 2, %s9
    // Predicated region
    $region37: #{griddy_forward.6} parent=5 // pred_check
      %p3468 = pneg %p3467
    $region38: #{griddy_forward.6} parent=5 // pred_check_branch
      %3470 = sbr.rel (%p3468) target = $region40
    $region39: #{griddy_forward.6} parent=5 // pred_region
      %s3471 = ssub.s32 %s9, 2
      // Predicated region
      $region41: #{griddy_forward.6} parent=39 // pred_check
        %p3472 = pneg %p106
      $region42: #{griddy_forward.6} parent=39 // pred_check_branch
        %3474 = sbr.rel (%p3472) target = $region44
      $region43: #{griddy_forward.6} parent=39 // pred_region
        %p3475 = scmp.lt.s32.totalorder %s15, 1
        %s3476 = scalar_select %p3475, %s15, 1
        %s3477 = smul.addr %s3476, 8
        %s3478 = smul.addr %s3477, 4
        %s3479 = scalar_lea.vmem %s3, %s3478
      $region44: #{griddy_forward.6} parent=39 // pred_fallthru
        _
    $region40: #{griddy_forward.6} parent=5 // pred_fallthru
      _
  $region6: #{griddy_forward.6} parent=0 // loop_footer
    %s13 = sadd.s32 1, %s9
  $region7: #{griddy_forward.6} parent=0 // loop_footer_branch
    %8 = sbr.rel target = $region3
  $region8: #{griddy_forward.6} parent=0 // loop_exit
    _

// kernel: griddy_forward.5
$region0: #{griddy_forward.5}
  #allocation0 [shape = 'u32[]', space=smem, size = 0x4, offset = 0x4, fixed_abs, tag = 'smem constant byte address 0x4 - core index']
  #allocation1 [shape = 'u32[72,128]{1,0:T(1,128)}', space=vmem, size = 0x9000, scoped, tag = 'internal scratch']
  %s0 = inlined_call_operand.vmem [shape: bf16[2,18,18,128], index: 0, kind: input, shape index: {}]
  %s1 = inlined_call_operand.vmem [shape: bf16[9,128,128], index: 1, kind: input, shape index: {}]
  %s2 = inlined_call_operand.vmem [shape: f32[1,128], index: 2, kind: input, shape index: {}]
  %s3 = inlined_call_operand.vmem [shape: bf16[2,256,128], index: 3, kind: output, shape index: {}]
  %s4 = sld [smem:[#allocation0]]
  $region45: #{griddy_forward.5} parent=0
    _
  %s6 = ssub.s32 1, %s4
  %s7 = scalar_select 0, %s6, %s4
  loop: start=0, step=1, limit=4
  $region2: #{griddy_forward.5} parent=0 // loop_pre_header
    _
  $region3: #{griddy_forward.5} parent=0 // loop_header
    %s9 = sphi 0, %s13
    %p10 = scmp.ge.s32.totalorder %s9, 4
    %s19 = sphi 0, %s21
    %s22 = sphi 0, %s19
    %s23 = sphi 0, %s22
    %s39 = sphi 0, %s23
    %s43 = sphi 0, %s43
    %s45 = sphi 0, %s43
    %s46 = sphi 0, %s45
    %s60 = sphi 0, %s46
    %s64 = sphi 0, %s64
    %s66 = sphi 0, %s64
    %s67 = sphi 0, %s66
    %s81 = sphi 0, %s67
    %s87 = sphi 0, %s89
    %s90 = sphi 0, %s87
    %s91 = sphi 0, %s90
    %s107 = sphi 0, %s91
  $region4: #{griddy_forward.5} parent=0 // loop_header_branch
    %12 = sbr.rel (%p10) target = $region8
  $region5: #{griddy_forward.5} parent=0 // loop_body
    %s14 = ssub.s32 %s9, 1
    %s15 = ssub.s32 %s9, 2
    %s16 = sadd.s32 %s9, 1
    %s17 = ssub.s32 %s9, %s16
    %p18 = scmp.eq.s32.totalorder %s17, 0
    %s20 = sadd.s32 %s19, 1
    %s21 = scalar_select %p18, %s19, %s20
    %p24 = pneg %p18
    %p25 = scmp.eq.s32.totalorder %s9, 1
    %p26 = por %p24, %p25
    %p27 = scmp.ne.s32.totalorder %s19, %s22
    %p28 = scmp.eq.s32.totalorder %s9, 0
    %p29 = por %p27, %p28
    %p30 = scmp.ne.s32.totalorder %s19, %s22
    %p31 = scmp.eq.s32.totalorder %s14, 1
    %p32 = por %p30, %p31
    %p33 = scmp.ne.s32.totalorder %s22, %s23
    %p34 = scmp.eq.s32.totalorder %s14, 0
    %p35 = por %p33, %p34
    %p36 = scmp.ne.s32.totalorder %s22, %s23
    %p37 = scmp.eq.s32.totalorder %s15, 1
    %p38 = por %p36, %p37
    %p40 = scmp.ne.s32.totalorder %s23, %s39
    %p41 = scmp.eq.s32.totalorder %s15, 0
    %p42 = por %p40, %p41
    %s44 = sadd.s32 %s43, 1
    %p47 = scmp.eq.s32.totalorder %s9, 1
    %p48 = scmp.ne.s32.totalorder %s43, %s45
    %p49 = scmp.eq.s32.totalorder %s9, 0
    %p50 = por %p48, %p49
    %p51 = scmp.ne.s32.totalorder %s43, %s45
    %p52 = scmp.eq.s32.totalorder %s14, 1
    %p53 = por %p51, %p52
    %p54 = scmp.ne.s32.totalorder %s45, %s46
    %p55 = scmp.eq.s32.totalorder %s14, 0
    %p56 = por %p54, %p55
    %p57 = scmp.ne.s32.totalorder %s45, %s46
    %p58 = scmp.eq.s32.totalorder %s15, 1
    %p59 = por %p57, %p58
    %p61 = scmp.ne.s32.totalorder %s46, %s60
    %p62 = scmp.eq.s32.totalorder %s15, 0
    %p63 = por %p61, %p62
    %s65 = sadd.s32 %s64, 1
    %p68 = scmp.eq.s32.totalorder %s9, 1
    %p69 = scmp.ne.s32.totalorder %s64, %s66
    %p70 = scmp.eq.s32.totalorder %s9, 0
    %p71 = por %p69, %p70
    %p72 = scmp.ne.s32.totalorder %s64, %s66
    %p73 = scmp.eq.s32.totalorder %s14, 1
    %p74 = por %p72, %p73
    %p75 = scmp.ne.s32.totalorder %s66, %s67
    %p76 = scmp.eq.s32.totalorder %s14, 0
    %p77 = por %p75, %p76
    %p78 = scmp.ne.s32.totalorder %s66, %s67
    %p79 = scmp.eq.s32.totalorder %s15, 1
    %p80 = por %p78, %p79
    %p82 = scmp.ne.s32.totalorder %s67, %s81
    %p83 = scmp.eq.s32.totalorder %s15, 0
    %p84 = por %p82, %p83
    %s85 = ssub.s32 %s9, %s16
    %p86 = scmp.eq.s32.totalorder %s85, 0
    %s88 = sadd.s32 %s87, 1
    %s89 = scalar_select %p86, %s87, %s88
    %p92 = pneg %p86
    %p93 = scmp.eq.s32.totalorder %s9, 1
    %p94 = por %p92, %p93
    %p95 = scmp.ne.s32.totalorder %s87, %s90
    %p96 = scmp.eq.s32.totalorder %s9, 0
    %p97 = por %p95, %p96
    %p98 = scmp.ne.s32.totalorder %s87, %s90
    %p99 = scmp.eq.s32.totalorder %s14, 1
    %p100 = por %p98, %p99
    %p101 = scmp.ne.s32.totalorder %s90, %s91
    %p102 = scmp.eq.s32.totalorder %s14, 0
    %p103 = por %p101, %p102
    %p104 = scmp.ne.s32.totalorder %s90, %s91
    %p105 = scmp.eq.s32.totalorder %s15, 1
    %p106 = por %p104, %p105
    %p108 = scmp.ne.s32.totalorder %s91, %s107
    %p109 = scmp.eq.s32.totalorder %s15, 0
    %p110 = por %p108, %p109
    %p111 = scmp.le.s32.totalorder 1, %s9
    %p112 = scmp.lt.s32.totalorder %s9, 3
    %p113 = pnand %p111, %p112
    %p114 = pneg %p113
    // Predicated region
    $region9: #{griddy_forward.5} parent=5 // pred_check
      _
    $region10: #{griddy_forward.5} parent=5 // pred_check_branch
      %116 = sbr.rel (%p113) target = $region12
    $region11: #{griddy_forward.5} parent=5 // pred_region
      %s117 = ssub.s32 %s9, 1
      // Predicated region
      $region13: #{griddy_forward.5} parent=11 // pred_check
        %p118 = pneg %p56
      $region14: #{griddy_forward.5} parent=11 // pred_check_branch
        %120 = sbr.rel (%p118) target = $region16
      $region15: #{griddy_forward.5} parent=11 // pred_region
        _
      $region16: #{griddy_forward.5} parent=11 // pred_fallthru
        _
      // Predicated region
      $region17: #{griddy_forward.5} parent=11 // pred_check
        %p121 = pneg %p77
      $region18: #{griddy_forward.5} parent=11 // pred_check_branch
        %123 = sbr.rel (%p121) target = $region20
      $region19: #{griddy_forward.5} parent=11 // pred_region
        _
      $region20: #{griddy_forward.5} parent=11 // pred_fallthru
        _
    $region12: #{griddy_forward.5} parent=5 // pred_fallthru
      _
    %p124 = scmp.lt.s32.totalorder %s9, 2
    // Predicated region
    $region21: #{griddy_forward.5} parent=5 // pred_check
      %p125 = pneg %p124
    $region22: #{griddy_forward.5} parent=5 // pred_check_branch
      %127 = sbr.rel (%p125) target = $region24
    $region23: #{griddy_forward.5} parent=5 // pred_region
      // Predicated region
      $region25: #{griddy_forward.5} parent=23 // pred_check
        %p128 = pneg %p29
      $region26: #{griddy_forward.5} parent=23 // pred_check_branch
        %130 = sbr.rel (%p128) target = $region28
      $region27: #{griddy_forward.5} parent=23 // pred_region
        %p131 = scmp.lt.s32.totalorder %s9, 1
        %s132 = scalar_select %p131, %s9, 1
        %s133 = smul.addr %s132, 54
        %s134 = smul.addr %s133, 4
        %s135 = scalar_lea.vmem %s0, %s134
      $region28: #{griddy_forward.5} parent=23 // pred_fallthru
        _
    $region24: #{griddy_forward.5} parent=5 // pred_fallthru
      _
    %p136 = scmp.le.s32.totalorder 1, %s9
    %p137 = scmp.lt.s32.totalorder %s9, 3
    %p138 = pnand %p136, %p137
    %p139 = pneg %p138
    // Predicated region
    $region29: #{griddy_forward.5} parent=5 // pred_check
      _
    $region30: #{griddy_forward.5} parent=5 // pred_check_branch
      %141 = sbr.rel (%p138) target = $region32
    $region31: #{griddy_forward.5} parent=5 // pred_region
      %s142 = ssub.s32 %s9, 1
      %p143 = scmp.lt.s32.totalorder %s14, 1
      %s144 = scalar_select %p143, %s14, 1
      %s145 = smul.addr %s144, 54
      %s146 = smul.addr %s145, 4
      %s147 = scalar_lea.vmem %s0, %s146
      %p148 = pneg %p35
      %p149 = pneg %p32
      %p150 = pneg %p56
      %p151 = pneg %p53
      %p152 = pneg %p77
      %p153 = pneg %p74
      %p154 = pneg %p103
      %p155 = pneg %p100
      %p156 = scmp.lt.s32.totalorder %s14, 1
      %s157 = scalar_select %p156, %s14, 1
      %s158 = smul.addr %s157, 32
      %s159 = smul.addr %s158, 4
      %s160 = scalar_lea.vmem %s3, %s159
      %p161 = scmp.lt.s32.totalorder %s14, 1
      %s162 = scalar_select %p161, %s14, 1
      %s163 = smul.addr %s162, 54
      %s164 = smul.addr %s163, 4
      %s165 = scalar_lea.vmem %s0, %s164
      %p166 = scmp.lt.s32.totalorder %s14, 1
      %s167 = scalar_select %p166, %s14, 1
      %s168 = smul.addr %s167, 32
      %s169 = smul.addr %s168, 4
      %s170 = scalar_lea.vmem %s3, %s169
      %v171 = vld [vmem:[%s165] sm:$0xf]
      %v172 = vld [vmem:[%s165 + $0x4] sm:$0xf]
      %v173 = vld [vmem:[%s165 + $0xc] sm:$0xf]
      %v174 = vld [vmem:[%s165 + $0x10] sm:$0xf]
      %v175 = vld [vmem:[%s165 + $0x18] sm:$0xf]
      %v176 = vld [vmem:[%s165 + $0x1c] sm:$0xf]
      %v177 = vld [vmem:[%s165 + $0x24] sm:$0xf]
      %v178 = vld [vmem:[%s165 + $0x28] sm:$0xf]
      %v179 = vld [vmem:[%s165 + $0x30] sm:$0xf]
      %v180 = vld [vmem:[%s165 + $0x34] sm:$0xf]
      %v181 = vld [vmem:[%s165 + $0x3c] sm:$0xf]
      %v182 = vld [vmem:[%s165 + $0x40] sm:$0xf]
      %v183 = vld [vmem:[%s165 + $0x48] sm:$0xf]
      %v184 = vld [vmem:[%s165 + $0x4c] sm:$0xf]
      %v185 = vld [vmem:[%s165 + $0x54] sm:$0xf]
      %v186 = vld [vmem:[%s165 + $0x58] sm:$0xf]
      %v187 = vld [vmem:[%s165 + $0x60] sm:$0xf]
      %v188 = vld [vmem:[%s165 + $0x64] sm:$0xf]
      %v189 = vld [vmem:[%s165 + $0x6c] sm:$0xf]
      %v190 = vld [vmem:[%s165 + $0x70] sm:$0xf]
      %v191 = vld [vmem:[%s165 + $0x78] sm:$0xf]
      %v192 = vld [vmem:[%s165 + $0x7c] sm:$0xf]
      %v193 = vld [vmem:[%s165 + $0x84] sm:$0xf]
      %v194 = vld [vmem:[%s165 + $0x88] sm:$0xf]
      %v195 = vld [vmem:[%s165 + $0x90] sm:$0xf]
      %v196 = vld [vmem:[%s165 + $0x94] sm:$0xf]
      %v197 = vld [vmem:[%s165 + $0x9c] sm:$0xf]
      %v198 = vld [vmem:[%s165 + $0xa0] sm:$0xf]
      %v199 = vld [vmem:[%s165 + $0xa8] sm:$0xf]
      %v200 = vld [vmem:[%s165 + $0xac] sm:$0xf]
      %v201 = vld [vmem:[%s165 + $0xb4] sm:$0xf]
      %v202 = vld [vmem:[%s165 + $0xb8] sm:$0xf]
      %v203 = vunpack.c.l.bf16 %v171
      %v204 = vunpack.c.l.bf16 %v172
      %v205 = vunpack.c.l.bf16 %v173
      %v206 = vunpack.c.l.bf16 %v174
      %v207 = vunpack.c.l.bf16 %v175
      %v208 = vunpack.c.l.bf16 %v176
      %v209 = vunpack.c.l.bf16 %v177
      %v210 = vunpack.c.l.bf16 %v178
      %v211 = vunpack.c.l.bf16 %v179
      %v212 = vunpack.c.l.bf16 %v180
      %v213 = vunpack.c.l.bf16 %v181
      %v214 = vunpack.c.l.bf16 %v182
      %v215 = vunpack.c.l.bf16 %v183
      %v216 = vunpack.c.l.bf16 %v184
      %v217 = vunpack.c.l.bf16 %v185
      %v218 = vunpack.c.l.bf16 %v186
      %v219 = vunpack.c.l.bf16 %v187
      %v220 = vunpack.c.l.bf16 %v188
      %v221 = vunpack.c.l.bf16 %v189
      %v222 = vunpack.c.l.bf16 %v190
      %v223 = vunpack.c.l.bf16 %v191
      %v224 = vunpack.c.l.bf16 %v192
      %v225 = vunpack.c.l.bf16 %v193
      %v226 = vunpack.c.l.bf16 %v194
      %v227 = vunpack.c.l.bf16 %v195
      %v228 = vunpack.c.l.bf16 %v196
      %v229 = vunpack.c.l.bf16 %v197
      %v230 = vunpack.c.l.bf16 %v198
      %v231 = vunpack.c.l.bf16 %v199
      %v232 = vunpack.c.l.bf16 %v200
      %v233 = vunpack.c.l.bf16 %v201
      %v234 = vunpack.c.l.bf16 %v202
      %v235 = vpack.c.bf16 %v204, %v203
      %v236 = vpack.c.bf16 %v206, %v205
      %v237 = vpack.c.bf16 %v208, %v207
      %v238 = vpack.c.bf16 %v210, %v209
      %v239 = vpack.c.bf16 %v212, %v211
      %v240 = vpack.c.bf16 %v214, %v213
      %v241 = vpack.c.bf16 %v216, %v215
      %v242 = vpack.c.bf16 %v218, %v217
      %v243 = vpack.c.bf16 %v220, %v219
      %v244 = vpack.c.bf16 %v222, %v221
      %v245 = vpack.c.bf16 %v224, %v223
      %v246 = vpack.c.bf16 %v226, %v225
      %v247 = vpack.c.bf16 %v228, %v227
      %v248 = vpack.c.bf16 %v230, %v229
      %v249 = vpack.c.bf16 %v232, %v231
      %v250 = vpack.c.bf16 %v234, %v233
      %v251 = vld [vmem:[%s1] sm:$0xf]
      %v252 = vld [vmem:[%s1 + $0x4] sm:$0xf]
      %v253 = vld [vmem:[%s1 + $0x8] sm:$0xf]
      %v254 = vld [vmem:[%s1 + $0xc] sm:$0xf]
      %v255 = vld [vmem:[%s1 + $0x10] sm:$0xf]
      %v256 = vld [vmem:[%s1 + $0x14] sm:$0xf]
      %v257 = vld [vmem:[%s1 + $0x18] sm:$0xf]
      %v258 = vld [vmem:[%s1 + $0x1c] sm:$0xf]
      %v259 = vld [vmem:[%s1 + $0x20] sm:$0xf]
      %v260 = vld [vmem:[%s1 + $0x24] sm:$0xf]
      %v261 = vld [vmem:[%s1 + $0x28] sm:$0xf]
      %v262 = vld [vmem:[%s1 + $0x2c] sm:$0xf]
      %v263 = vld [vmem:[%s1 + $0x30] sm:$0xf]
      %v264 = vld [vmem:[%s1 + $0x34] sm:$0xf]
      %v265 = vld [vmem:[%s1 + $0x38] sm:$0xf]
      %v266 = vld [vmem:[%s1 + $0x3c] sm:$0xf]
      %v267 = vld [vmem:[%s165 + $0x8] sm:$0x1]
      %v268 = vld [vmem:[%s165 + $0x14] sm:$0x1]
      %v269 = vld [vmem:[%s165 + $0x20] sm:$0x1]
      %v270 = vld [vmem:[%s165 + $0x2c] sm:$0x1]
      %v271 = vld [vmem:[%s165 + $0x38] sm:$0x1]
      %v272 = vld [vmem:[%s165 + $0x44] sm:$0x1]
      %v273 = vld [vmem:[%s165 + $0x50] sm:$0x1]
      %v274 = vld [vmem:[%s165 + $0x5c] sm:$0x1]
      %v275 = vld [vmem:[%s165 + $0x68] sm:$0x1]
      %v276 = vld [vmem:[%s165 + $0x74] sm:$0x1]
      %v277 = vld [vmem:[%s165 + $0x80] sm:$0x1]
      %v278 = vld [vmem:[%s165 + $0x8c] sm:$0x1]
      %v279 = vld [vmem:[%s165 + $0x98] sm:$0x1]
      %v280 = vld [vmem:[%s165 + $0xa4] sm:$0x1]
      %v281 = vld [vmem:[%s165 + $0xb0] sm:$0x1]
      %v282 = vld [vmem:[%s165 + $0xbc] sm:$0x1]
      %v283 = vunpack.c.l.bf16 %v267
      %v284 = vunpack.c.l.bf16 %v268
      %v285 = vunpack.c.l.bf16 %v269
      %v286 = vunpack.c.l.bf16 %v270
      %v287 = vunpack.c.l.bf16 %v271
      %v288 = vunpack.c.l.bf16 %v272
      %v289 = vunpack.c.l.bf16 %v273
      %v290 = vunpack.c.l.bf16 %v274
      %v291 = vunpack.c.l.bf16 %v275
      %v292 = vunpack.c.l.bf16 %v276
      %v293 = vunpack.c.l.bf16 %v277
      %v294 = vunpack.c.l.bf16 %v278
      %v295 = vunpack.c.l.bf16 %v279
      %v296 = vunpack.c.l.bf16 %v280
      %v297 = vunpack.c.l.bf16 %v281
      %v298 = vunpack.c.l.bf16 %v282
      %vm347 = vcmask 1046528
      %v348 = vrot.slane %v203, 1
      %v349 = vrot.slane %v204, 1
      %v350 = vsel %vm347, %v348, %v349
      %v351 = vrot.slane %v283, 1
      %v352 = vsel %vm347, %v349, %v351
      %v353 = vrot.slane %v205, 1
      %v354 = vrot.slane %v206, 1
      %v355 = vsel %vm347, %v353, %v354
      %v356 = vrot.slane %v284, 1
      %v357 = vsel %vm347, %v354, %v356
      %v358 = vrot.slane %v207, 1
      %v359 = vrot.slane %v208, 1
      %v360 = vsel %vm347, %v358, %v359
      %v361 = vrot.slane %v285, 1
      %v362 = vsel %vm347, %v359, %v361
      %v363 = vrot.slane %v209, 1
      %v364 = vrot.slane %v210, 1
      %v365 = vsel %vm347, %v363, %v364
      %v366 = vrot.slane %v286, 1
      %v367 = vsel %vm347, %v364, %v366
      %v368 = vrot.slane %v211, 1
      %v369 = vrot.slane %v212, 1
      %v370 = vsel %vm347, %v368, %v369
      %v371 = vrot.slane %v287, 1
      %v372 = vsel %vm347, %v369, %v371
      %v373 = vrot.slane %v213, 1
      %v374 = vrot.slane %v214, 1
      %v375 = vsel %vm347, %v373, %v374
      %v376 = vrot.slane %v288, 1
      %v377 = vsel %vm347, %v374, %v376
      %v378 = vrot.slane %v215, 1
      %v379 = vrot.slane %v216, 1
      %v380 = vsel %vm347, %v378, %v379
      %v381 = vrot.slane %v289, 1
      %v382 = vsel %vm347, %v379, %v381
      %v383 = vrot.slane %v217, 1
      %v384 = vrot.slane %v218, 1
      %v385 = vsel %vm347, %v383, %v384
      %v386 = vrot.slane %v290, 1
      %v387 = vsel %vm347, %v384, %v386
      %v388 = vrot.slane %v219, 1
      %v389 = vrot.slane %v220, 1
      %v390 = vsel %vm347, %v388, %v389
      %v391 = vrot.slane %v291, 1
      %v392 = vsel %vm347, %v389, %v391
      %v393 = vrot.slane %v221, 1
      %v394 = vrot.slane %v222, 1
      %v395 = vsel %vm347, %v393, %v394
      %v396 = vrot.slane %v292, 1
      %v397 = vsel %vm347, %v394, %v396
      %v398 = vrot.slane %v223, 1
      %v399 = vrot.slane %v224, 1
      %v400 = vsel %vm347, %v398, %v399
      %v401 = vrot.slane %v293, 1
      %v402 = vsel %vm347, %v399, %v401
      %v403 = vrot.slane %v225, 1
      %v404 = vrot.slane %v226, 1
      %v405 = vsel %vm347, %v403, %v404
      %v406 = vrot.slane %v294, 1
      %v407 = vsel %vm347, %v404, %v406
      %v408 = vrot.slane %v227, 1
      %v409 = vrot.slane %v228, 1
      %v410 = vsel %vm347, %v408, %v409
      %v411 = vrot.slane %v295, 1
      %v412 = vsel %vm347, %v409, %v411
      %v413 = vrot.slane %v229, 1
      %v414 = vrot.slane %v230, 1
      %v415 = vsel %vm347, %v413, %v414
      %v416 = vrot.slane %v296, 1
      %v417 = vsel %vm347, %v414, %v416
      %v418 = vrot.slane %v231, 1
      %v419 = vrot.slane %v232, 1
      %v420 = vsel %vm347, %v418, %v419
      %v421 = vrot.slane %v297, 1
      %v422 = vsel %vm347, %v419, %v421
      %v423 = vrot.slane %v233, 1
      %v424 = vrot.slane %v234, 1
      %v425 = vsel %vm347, %v423, %v424
      %v426 = vrot.slane %v298, 1
      %v427 = vsel %vm347, %v424, %v426
      %v460 = vpack.c.bf16 %v352, %v350
      %v461 = vpack.c.bf16 %v357, %v355
      %v462 = vpack.c.bf16 %v362, %v360
      %v463 = vpack.c.bf16 %v367, %v365
      %v464 = vpack.c.bf16 %v372, %v370
      %v465 = vpack.c.bf16 %v377, %v375
      %v466 = vpack.c.bf16 %v382, %v380
      %v467 = vpack.c.bf16 %v387, %v385
      %v468 = vpack.c.bf16 %v392, %v390
      %v469 = vpack.c.bf16 %v397, %v395
      %v470 = vpack.c.bf16 %v402, %v400
      %v471 = vpack.c.bf16 %v407, %v405
      %v472 = vpack.c.bf16 %v412, %v410
      %v473 = vpack.c.bf16 %v417, %v415
      %v474 = vpack.c.bf16 %v422, %v420
      %v475 = vpack.c.bf16 %v427, %v425
      %s476 = scalar_lea.vmem %s1, 64
      %v477 = vld [vmem:[%s476] sm:$0xf]
      %v478 = vld [vmem:[%s476 + $0x4] sm:$0xf]
      %v479 = vld [vmem:[%s476 + $0x8] sm:$0xf]
      %v480 = vld [vmem:[%s476 + $0xc] sm:$0xf]
      %v481 = vld [vmem:[%s476 + $0x10] sm:$0xf]
      %v482 = vld [vmem:[%s476 + $0x14] sm:$0xf]
      %v483 = vld [vmem:[%s476 + $0x18] sm:$0xf]
      %v484 = vld [vmem:[%s476 + $0x1c] sm:$0xf]
      %v485 = vld [vmem:[%s476 + $0x20] sm:$0xf]
      %v486 = vld [vmem:[%s476 + $0x24] sm:$0xf]
      %v487 = vld [vmem:[%s476 + $0x28] sm:$0xf]
      %v488 = vld [vmem:[%s476 + $0x2c] sm:$0xf]
      %v489 = vld [vmem:[%s476 + $0x30] sm:$0xf]
      %v490 = vld [vmem:[%s476 + $0x34] sm:$0xf]
      %v491 = vld [vmem:[%s476 + $0x38] sm:$0xf]
      %v492 = vld [vmem:[%s476 + $0x3c] sm:$0xf]
      %v509 = vunpack.c.l.b16 %v477
      %v510 = vunpack.c.l.b16 %v478
      %v511 = vunpack.c.l.b16 %v479
      %v512 = vunpack.c.l.b16 %v480
      %v513 = vunpack.c.l.b16 %v481
      %v514 = vunpack.c.l.b16 %v482
      %v515 = vunpack.c.l.b16 %v483
      %v516 = vunpack.c.l.b16 %v484
      %v517 = vunpack.c.l.b16 %v485
      %v518 = vunpack.c.l.b16 %v486
      %v519 = vunpack.c.l.b16 %v487
      %v520 = vunpack.c.l.b16 %v488
      %v521 = vunpack.c.l.b16 %v489
      %v522 = vunpack.c.l.b16 %v490
      %v523 = vunpack.c.l.b16 %v491
      %v524 = vunpack.c.l.b16 %v492
      %v525 = vpack.c.b16 %v510, %v509
      %v526 = vpack.c.b16 %v512, %v511
      %v527 = vpack.c.b16 %v514, %v513
      %v528 = vpack.c.b16 %v516, %v515
      %v529 = vpack.c.b16 %v518, %v517
      %v530 = vpack.c.b16 %v520, %v519
      %v531 = vpack.c.b16 %v522, %v521
      %v532 = vpack.c.b16 %v524, %v523
      %541 = vmatpush.bf16.msra.mxu0 %v532
      %542 = vmatpush.bf16.msra.mxu0 %v531
      %543 = vmatpush.bf16.msra.mxu0 %v530
      %544 = vmatpush.bf16.msra.mxu0 %v529
      %545 = vmatpush.bf16.msra.mxu0 %v528
      %546 = vmatpush.bf16.msra.mxu0 %v527
      %547 = vmatpush.bf16.msra.mxu0 %v526
      %548 = vmatpush.bf16.msra.mxu0 %v525
      %549 = vmatmul.bf16.gmra.mxu0 %v460
      %v550 = vpop.f32.mrf.mxu0
      %v551 = vadd.f32 0.0, %v550
      %v552 = vpop.f32.mrf.mxu0
      %v553 = vadd.f32 0.0, %v552
      %554 = vmatmul.bf16.gmra.mxu0 %v461
      %v555 = vpop.f32.mrf.mxu0
      %v556 = vadd.f32 0.0, %v555
      %v557 = vpop.f32.mrf.mxu0
      %v558 = vadd.f32 0.0, %v557
      %559 = vmatmul.bf16.gmra.mxu0 %v462
      %v560 = vpop.f32.mrf.mxu0
      %v561 = vadd.f32 0.0, %v560
      %v562 = vpop.f32.mrf.mxu0
      %v563 = vadd.f32 0.0, %v562
      %564 = vmatmul.bf16.gmra.mxu0 %v463
      %v565 = vpop.f32.mrf.mxu0
      %v566 = vadd.f32 0.0, %v565
      %v567 = vpop.f32.mrf.mxu0
      %v568 = vadd.f32 0.0, %v567
      %569 = vmatmul.bf16.gmra.mxu0 %v464
      %v570 = vpop.f32.mrf.mxu0
      %v571 = vadd.f32 0.0, %v570
      %v572 = vpop.f32.mrf.mxu0
      %v573 = vadd.f32 0.0, %v572
      %574 = vmatmul.bf16.gmra.mxu0 %v465
      %v575 = vpop.f32.mrf.mxu0
      %v576 = vadd.f32 0.0, %v575
      %v577 = vpop.f32.mrf.mxu0
      %v578 = vadd.f32 0.0, %v577
      %579 = vmatmul.bf16.gmra.mxu0 %v466
      %v580 = vpop.f32.mrf.mxu0
      %v581 = vadd.f32 0.0, %v580
      %v582 = vpop.f32.mrf.mxu0
      %v583 = vadd.f32 0.0, %v582
      %584 = vmatmul.bf16.gmra.mxu0 %v467
      %v585 = vpop.f32.mrf.mxu0
      %v586 = vadd.f32 0.0, %v585
      %v587 = vpop.f32.mrf.mxu0
      %v588 = vadd.f32 0.0, %v587
      %589 = vmatmul.bf16.gmra.mxu0 %v468
      %v590 = vpop.f32.mrf.mxu0
      %v591 = vadd.f32 0.0, %v590
      %v592 = vpop.f32.mrf.mxu0
      %v593 = vadd.f32 0.0, %v592
      %594 = vmatmul.bf16.gmra.mxu0 %v469
      %v595 = vpop.f32.mrf.mxu0
      %v596 = vadd.f32 0.0, %v595
      %v597 = vpop.f32.mrf.mxu0
      %v598 = vadd.f32 0.0, %v597
      %599 = vmatmul.bf16.gmra.mxu0 %v470
      %v600 = vpop.f32.mrf.mxu0
      %v601 = vadd.f32 0.0, %v600
      %v602 = vpop.f32.mrf.mxu0
      %v603 = vadd.f32 0.0, %v602
      %604 = vmatmul.bf16.gmra.mxu0 %v471
      %v605 = vpop.f32.mrf.mxu0
      %v606 = vadd.f32 0.0, %v605
      %v607 = vpop.f32.mrf.mxu0
      %v608 = vadd.f32 0.0, %v607
      %609 = vmatmul.bf16.gmra.mxu0 %v472
      %v610 = vpop.f32.mrf.mxu0
      %v611 = vadd.f32 0.0, %v610
      %v612 = vpop.f32.mrf.mxu0
      %v613 = vadd.f32 0.0, %v612
      %614 = vmatmul.bf16.gmra.mxu0 %v473
      %v615 = vpop.f32.mrf.mxu0
      %v616 = vadd.f32 0.0, %v615
      %v617 = vpop.f32.mrf.mxu0
      %v618 = vadd.f32 0.0, %v617
      %619 = vmatmul.bf16.gmra.mxu0 %v474
      %v620 = vpop.f32.mrf.mxu0
      %v621 = vadd.f32 0.0, %v620
      %v622 = vpop.f32.mrf.mxu0
      %v623 = vadd.f32 0.0, %v622
      %624 = vmatmul.bf16.gmra.mxu0 %v475
      %v625 = vpop.f32.mrf.mxu0
      %v626 = vadd.f32 0.0, %v625
      %v627 = vpop.f32.mrf.mxu0
      %v628 = vadd.f32 0.0, %v627
      %629 = vdwg.mxu0
      %v646 = vunpack.c.l.b16 %v251
      %v647 = vunpack.c.l.b16 %v252
      %v648 = vunpack.c.l.b16 %v253
      %v649 = vunpack.c.l.b16 %v254
      %v650 = vunpack.c.l.b16 %v255
      %v651 = vunpack.c.l.b16 %v256
      %v652 = vunpack.c.l.b16 %v257
      %v653 = vunpack.c.l.b16 %v258
      %v654 = vunpack.c.l.b16 %v259
      %v655 = vunpack.c.l.b16 %v260
      %v656 = vunpack.c.l.b16 %v261
      %v657 = vunpack.c.l.b16 %v262
      %v658 = vunpack.c.l.b16 %v263
      %v659 = vunpack.c.l.b16 %v264
      %v660 = vunpack.c.l.b16 %v265
      %v661 = vunpack.c.l.b16 %v266
      %v662 = vpack.c.b16 %v647, %v646
      %v663 = vpack.c.b16 %v649, %v648
      %v664 = vpack.c.b16 %v651, %v650
      %v665 = vpack.c.b16 %v653, %v652
      %v666 = vpack.c.b16 %v655, %v654
      %v667 = vpack.c.b16 %v657, %v656
      %v668 = vpack.c.b16 %v659, %v658
      %v669 = vpack.c.b16 %v661, %v660
      %678 = vmatpush.bf16.msra.mxu0 %v669
      %679 = vmatpush.bf16.msra.mxu0 %v668
      %680 = vmatpush.bf16.msra.mxu0 %v667
      %681 = vmatpush.bf16.msra.mxu0 %v666
      %682 = vmatpush.bf16.msra.mxu0 %v665
      %683 = vmatpush.bf16.msra.mxu0 %v664
      %684 = vmatpush.bf16.msra.mxu0 %v663
      %685 = vmatpush.bf16.msra.mxu0 %v662
      %686 = vmatmul.bf16.gmra.mxu0 %v235
      %v687 = vpop.f32.mrf.mxu0
      %v688 = vadd.f32 %v551, %v687
      %v689 = vpop.f32.mrf.mxu0
      %v690 = vadd.f32 %v553, %v689
      %691 = vmatmul.bf16.gmra.mxu0 %v236
      %v692 = vpop.f32.mrf.mxu0
      %v693 = vadd.f32 %v556, %v692
      %v694 = vpop.f32.mrf.mxu0
      %v695 = vadd.f32 %v558, %v694
      %696 = vmatmul.bf16.gmra.mxu0 %v237
      %v697 = vpop.f32.mrf.mxu0
      %v698 = vadd.f32 %v561, %v697
      %v699 = vpop.f32.mrf.mxu0
      %v700 = vadd.f32 %v563, %v699
      %701 = vmatmul.bf16.gmra.mxu0 %v238
      %v702 = vpop.f32.mrf.mxu0
      %v703 = vadd.f32 %v566, %v702
      %v704 = vpop.f32.mrf.mxu0
      %v705 = vadd.f32 %v568, %v704
      %706 = vmatmul.bf16.gmra.mxu0 %v239
      %v707 = vpop.f32.mrf.mxu0
      %v708 = vadd.f32 %v571, %v707
      %v709 = vpop.f32.mrf.mxu0
      %v710 = vadd.f32 %v573, %v709
      %711 = vmatmul.bf16.gmra.mxu0 %v240
      %v712 = vpop.f32.mrf.mxu0
      %v713 = vadd.f32 %v576, %v712
      %v714 = vpop.f32.mrf.mxu0
      %v715 = vadd.f32 %v578, %v714
      %716 = vmatmul.bf16.gmra.mxu0 %v241
      %v717 = vpop.f32.mrf.mxu0
      %v718 = vadd.f32 %v581, %v717
      %v719 = vpop.f32.mrf.mxu0
      %v720 = vadd.f32 %v583, %v719
      %721 = vmatmul.bf16.gmra.mxu0 %v242
      %v722 = vpop.f32.mrf.mxu0
      %v723 = vadd.f32 %v586, %v722
      %v724 = vpop.f32.mrf.mxu0
      %v725 = vadd.f32 %v588, %v724
      %726 = vmatmul.bf16.gmra.mxu0 %v243
      %v727 = vpop.f32.mrf.mxu0
      %v728 = vadd.f32 %v591, %v727
      %v729 = vpop.f32.mrf.mxu0
      %v730 = vadd.f32 %v593, %v729
      %731 = vmatmul.bf16.gmra.mxu0 %v244
      %v732 = vpop.f32.mrf.mxu0
      %v733 = vadd.f32 %v596, %v732
      %v734 = vpop.f32.mrf.mxu0
      %v735 = vadd.f32 %v598, %v734
      %736 = vmatmul.bf16.gmra.mxu0 %v245
      %v737 = vpop.f32.mrf.mxu0
      %v738 = vadd.f32 %v601, %v737
      %v739 = vpop.f32.mrf.mxu0
      %v740 = vadd.f32 %v603, %v739
      %741 = vmatmul.bf16.gmra.mxu0 %v246
      %v742 = vpop.f32.mrf.mxu0
      %v743 = vadd.f32 %v606, %v742
      %v744 = vpop.f32.mrf.mxu0
      %v745 = vadd.f32 %v608, %v744
      %746 = vmatmul.bf16.gmra.mxu0 %v247
      %v747 = vpop.f32.mrf.mxu0
      %v748 = vadd.f32 %v611, %v747
      %v749 = vpop.f32.mrf.mxu0
      %v750 = vadd.f32 %v613, %v749
      %751 = vmatmul.bf16.gmra.mxu0 %v248
      %v752 = vpop.f32.mrf.mxu0
      %v753 = vadd.f32 %v616, %v752
      %v754 = vpop.f32.mrf.mxu0
      %v755 = vadd.f32 %v618, %v754
      %756 = vmatmul.bf16.gmra.mxu0 %v249
      %v757 = vpop.f32.mrf.mxu0
      %v758 = vadd.f32 %v621, %v757
      %v759 = vpop.f32.mrf.mxu0
      %v760 = vadd.f32 %v623, %v759
      %761 = vmatmul.bf16.gmra.mxu0 %v250
      %v762 = vpop.f32.mrf.mxu0
      %v763 = vadd.f32 %v626, %v762
      %v764 = vpop.f32.mrf.mxu0
      %v765 = vadd.f32 %v628, %v764
      %766 = vdwg.mxu0
      %v767 = vld [vmem:[%s165] sm:$0xe]
      %v768 = vld [vmem:[%s165 + $0xc] sm:$0xe]
      %v769 = vld [vmem:[%s165 + $0x18] sm:$0xe]
      %v770 = vld [vmem:[%s165 + $0x24] sm:$0xe]
      %v771 = vld [vmem:[%s165 + $0x30] sm:$0xe]
      %v772 = vld [vmem:[%s165 + $0x3c] sm:$0xe]
      %v773 = vld [vmem:[%s165 + $0x48] sm:$0xe]
      %v774 = vld [vmem:[%s165 + $0x54] sm:$0xe]
      %v775 = vld [vmem:[%s165 + $0x60] sm:$0xe]
      %v776 = vld [vmem:[%s165 + $0x6c] sm:$0xe]
      %v777 = vld [vmem:[%s165 + $0x78] sm:$0xe]
      %v778 = vld [vmem:[%s165 + $0x84] sm:$0xe]
      %v779 = vld [vmem:[%s165 + $0x90] sm:$0xe]
      %v780 = vld [vmem:[%s165 + $0x9c] sm:$0xe]
      %v781 = vld [vmem:[%s165 + $0xa8] sm:$0xe]
      %v782 = vld [vmem:[%s165 + $0xb4] sm:$0xe]
      %v783 = vunpack.c.l.bf16 %v767
      %v784 = vunpack.c.l.bf16 %v768
      %v785 = vunpack.c.l.bf16 %v769
      %v786 = vunpack.c.l.bf16 %v770
      %v787 = vunpack.c.l.bf16 %v771
      %v788 = vunpack.c.l.bf16 %v772
      %v789 = vunpack.c.l.bf16 %v773
      %v790 = vunpack.c.l.bf16 %v774
      %v791 = vunpack.c.l.bf16 %v775
      %v792 = vunpack.c.l.bf16 %v776
      %v793 = vunpack.c.l.bf16 %v777
      %v794 = vunpack.c.l.bf16 %v778
      %v795 = vunpack.c.l.bf16 %v779
      %v796 = vunpack.c.l.bf16 %v780
      %v797 = vunpack.c.l.bf16 %v781
      %v798 = vunpack.c.l.bf16 %v782
      %vm815 = vcmask 1045504
      %v816 = vrot.slane %v783, 2
      %v817 = vrot.slane %v204, 2
      %v818 = vsel %vm815, %v816, %v817
      %v819 = vrot.slane %v283, 2
      %v820 = vsel %vm815, %v817, %v819
      %v821 = vrot.slane %v784, 2
      %v822 = vrot.slane %v206, 2
      %v823 = vsel %vm815, %v821, %v822
      %v824 = vrot.slane %v284, 2
      %v825 = vsel %vm815, %v822, %v824
      %v826 = vrot.slane %v785, 2
      %v827 = vrot.slane %v208, 2
      %v828 = vsel %vm815, %v826, %v827
      %v829 = vrot.slane %v285, 2
      %v830 = vsel %vm815, %v827, %v829
      %v831 = vrot.slane %v786, 2
      %v832 = vrot.slane %v210, 2
      %v833 = vsel %vm815, %v831, %v832
      %v834 = vrot.slane %v286, 2
      %v835 = vsel %vm815, %v832, %v834
      %v836 = vrot.slane %v787, 2
      %v837 = vrot.slane %v212, 2
      %v838 = vsel %vm815, %v836, %v837
      %v839 = vrot.slane %v287, 2
      %v840 = vsel %vm815, %v837, %v839
      %v841 = vrot.slane %v788, 2
      %v842 = vrot.slane %v214, 2
      %v843 = vsel %vm815, %v841, %v842
      %v844 = vrot.slane %v288, 2
      %v845 = vsel %vm815, %v842, %v844
      %v846 = vrot.slane %v789, 2
      %v847 = vrot.slane %v216, 2
      %v848 = vsel %vm815, %v846, %v847
      %v849 = vrot.slane %v289, 2
      %v850 = vsel %vm815, %v847, %v849
      %v851 = vrot.slane %v790, 2
      %v852 = vrot.slane %v218, 2
      %v853 = vsel %vm815, %v851, %v852
      %v854 = vrot.slane %v290, 2
      %v855 = vsel %vm815, %v852, %v854
      %v856 = vrot.slane %v791, 2
      %v857 = vrot.slane %v220, 2
      %v858 = vsel %vm815, %v856, %v857
      %v859 = vrot.slane %v291, 2
      %v860 = vsel %vm815, %v857, %v859
      %v861 = vrot.slane %v792, 2
      %v862 = vrot.slane %v222, 2
      %v863 = vsel %vm815, %v861, %v862
      %v864 = vrot.slane %v292, 2
      %v865 = vsel %vm815, %v862, %v864
      %v866 = vrot.slane %v793, 2
      %v867 = vrot.slane %v224, 2
      %v868 = vsel %vm815, %v866, %v867
      %v869 = vrot.slane %v293, 2
      %v870 = vsel %vm815, %v867, %v869
      %v871 = vrot.slane %v794, 2
      %v872 = vrot.slane %v226, 2
      %v873 = vsel %vm815, %v871, %v872
      %v874 = vrot.slane %v294, 2
      %v875 = vsel %vm815, %v872, %v874
      %v876 = vrot.slane %v795, 2
      %v877 = vrot.slane %v228, 2
      %v878 = vsel %vm815, %v876, %v877
      %v879 = vrot.slane %v295, 2
      %v880 = vsel %vm815, %v877, %v879
      %v881 = vrot.slane %v796, 2
      %v882 = vrot.slane %v230, 2
      %v883 = vsel %vm815, %v881, %v882
      %v884 = vrot.slane %v296, 2
      %v885 = vsel %vm815, %v882, %v884
      %v886 = vrot.slane %v797, 2
      %v887 = vrot.slane %v232, 2
      %v888 = vsel %vm815, %v886, %v887
      %v889 = vrot.slane %v297, 2
      %v890 = vsel %vm815, %v887, %v889
      %v891 = vrot.slane %v798, 2
      %v892 = vrot.slane %v234, 2
      %v893 = vsel %vm815, %v891, %v892
      %v894 = vrot.slane %v298, 2
      %v895 = vsel %vm815, %v892, %v894
      %v928 = vpack.c.bf16 %v820, %v818
      %v929 = vpack.c.bf16 %v825, %v823
      %v930 = vpack.c.bf16 %v830, %v828
      %v931 = vpack.c.bf16 %v835, %v833
      %v932 = vpack.c.bf16 %v840, %v838
      %v933 = vpack.c.bf16 %v845, %v843
      %v934 = vpack.c.bf16 %v850, %v848
      %v935 = vpack.c.bf16 %v855, %v853
      %v936 = vpack.c.bf16 %v860, %v858
      %v937 = vpack.c.bf16 %v865, %v863
      %v938 = vpack.c.bf16 %v870, %v868
      %v939 = vpack.c.bf16 %v875, %v873
      %v940 = vpack.c.bf16 %v880, %v878
      %v941 = vpack.c.bf16 %v885, %v883
      %v942 = vpack.c.bf16 %v890, %v888
      %v943 = vpack.c.bf16 %v895, %v893
      %s944 = scalar_lea.vmem %s1, 128
      %v945 = vld [vmem:[%s944] sm:$0xf]
      %v946 = vld [vmem:[%s944 + $0x4] sm:$0xf]
      %v947 = vld [vmem:[%s944 + $0x8] sm:$0xf]
      %v948 = vld [vmem:[%s944 + $0xc] sm:$0xf]
      %v949 = vld [vmem:[%s944 + $0x10] sm:$0xf]
      %v950 = vld [vmem:[%s944 + $0x14] sm:$0xf]
      %v951 = vld [vmem:[%s944 + $0x18] sm:$0xf]
      %v952 = vld [vmem:[%s944 + $0x1c] sm:$0xf]
      %v953 = vld [vmem:[%s944 + $0x20] sm:$0xf]
      %v954 = vld [vmem:[%s944 + $0x24] sm:$0xf]
      %v955 = vld [vmem:[%s944 + $0x28] sm:$0xf]
      %v956 = vld [vmem:[%s944 + $0x2c] sm:$0xf]
      %v957 = vld [vmem:[%s944 + $0x30] sm:$0xf]
      %v958 = vld [vmem:[%s944 + $0x34] sm:$0xf]
      %v959 = vld [vmem:[%s944 + $0x38] sm:$0xf]
      %v960 = vld [vmem:[%s944 + $0x3c] sm:$0xf]
      %v977 = vunpack.c.l.b16 %v945
      %v978 = vunpack.c.l.b16 %v946
      %v979 = vunpack.c.l.b16 %v947
      %v980 = vunpack.c.l.b16 %v948
      %v981 = vunpack.c.l.b16 %v949
      %v982 = vunpack.c.l.b16 %v950
      %v983 = vunpack.c.l.b16 %v951
      %v984 = vunpack.c.l.b16 %v952
      %v985 = vunpack.c.l.b16 %v953
      %v986 = vunpack.c.l.b16 %v954
      %v987 = vunpack.c.l.b16 %v955
      %v988 = vunpack.c.l.b16 %v956
      %v989 = vunpack.c.l.b16 %v957
      %v990 = vunpack.c.l.b16 %v958
      %v991 = vunpack.c.l.b16 %v959
      %v992 = vunpack.c.l.b16 %v960
      %v993 = vpack.c.b16 %v978, %v977
      %v994 = vpack.c.b16 %v980, %v979
      %v995 = vpack.c.b16 %v982, %v981
      %v996 = vpack.c.b16 %v984, %v983
      %v997 = vpack.c.b16 %v986, %v985
      %v998 = vpack.c.b16 %v988, %v987
      %v999 = vpack.c.b16 %v990, %v989
      %v1000 = vpack.c.b16 %v992, %v991
      %1009 = vmatpush.bf16.msra.mxu0 %v1000
      %1010 = vmatpush.bf16.msra.mxu0 %v999
      %1011 = vmatpush.bf16.msra.mxu0 %v998
      %1012 = vmatpush.bf16.msra.mxu0 %v997
      %1013 = vmatpush.bf16.msra.mxu0 %v996
      %1014 = vmatpush.bf16.msra.mxu0 %v995
      %1015 = vmatpush.bf16.msra.mxu0 %v994
      %1016 = vmatpush.bf16.msra.mxu0 %v993
      %1017 = vmatmul.bf16.gmra.mxu0 %v928
      %v1018 = vpop.f32.mrf.mxu0
      %v1019 = vadd.f32 0.0, %v1018
      %v1020 = vpop.f32.mrf.mxu0
      %v1021 = vadd.f32 0.0, %v1020
      %1022 = vmatmul.bf16.gmra.mxu0 %v929
      %v1023 = vpop.f32.mrf.mxu0
      %v1024 = vadd.f32 0.0, %v1023
      %v1025 = vpop.f32.mrf.mxu0
      %v1026 = vadd.f32 0.0, %v1025
      %1027 = vmatmul.bf16.gmra.mxu0 %v930
      %v1028 = vpop.f32.mrf.mxu0
      %v1029 = vadd.f32 0.0, %v1028
      %v1030 = vpop.f32.mrf.mxu0
      %v1031 = vadd.f32 0.0, %v1030
      %1032 = vmatmul.bf16.gmra.mxu0 %v931
      %v1033 = vpop.f32.mrf.mxu0
      %v1034 = vadd.f32 0.0, %v1033
      %v1035 = vpop.f32.mrf.mxu0
      %v1036 = vadd.f32 0.0, %v1035
      %1037 = vmatmul.bf16.gmra.mxu0 %v932
      %v1038 = vpop.f32.mrf.mxu0
      %v1039 = vadd.f32 0.0, %v1038
      %v1040 = vpop.f32.mrf.mxu0
      %v1041 = vadd.f32 0.0, %v1040
      %1042 = vmatmul.bf16.gmra.mxu0 %v933
      %v1043 = vpop.f32.mrf.mxu0
      %v1044 = vadd.f32 0.0, %v1043
      %v1045 = vpop.f32.mrf.mxu0
      %v1046 = vadd.f32 0.0, %v1045
      %1047 = vmatmul.bf16.gmra.mxu0 %v934
      %v1048 = vpop.f32.mrf.mxu0
      %v1049 = vadd.f32 0.0, %v1048
      %v1050 = vpop.f32.mrf.mxu0
      %v1051 = vadd.f32 0.0, %v1050
      %1052 = vmatmul.bf16.gmra.mxu0 %v935
      %v1053 = vpop.f32.mrf.mxu0
      %v1054 = vadd.f32 0.0, %v1053
      %v1055 = vpop.f32.mrf.mxu0
      %v1056 = vadd.f32 0.0, %v1055
      %1057 = vmatmul.bf16.gmra.mxu0 %v936
      %v1058 = vpop.f32.mrf.mxu0
      %v1059 = vadd.f32 0.0, %v1058
      %v1060 = vpop.f32.mrf.mxu0
      %v1061 = vadd.f32 0.0, %v1060
      %1062 = vmatmul.bf16.gmra.mxu0 %v937
      %v1063 = vpop.f32.mrf.mxu0
      %v1064 = vadd.f32 0.0, %v1063
      %v1065 = vpop.f32.mrf.mxu0
      %v1066 = vadd.f32 0.0, %v1065
      %1067 = vmatmul.bf16.gmra.mxu0 %v938
      %v1068 = vpop.f32.mrf.mxu0
      %v1069 = vadd.f32 0.0, %v1068
      %v1070 = vpop.f32.mrf.mxu0
      %v1071 = vadd.f32 0.0, %v1070
      %1072 = vmatmul.bf16.gmra.mxu0 %v939
      %v1073 = vpop.f32.mrf.mxu0
      %v1074 = vadd.f32 0.0, %v1073
      %v1075 = vpop.f32.mrf.mxu0
      %v1076 = vadd.f32 0.0, %v1075
      %1077 = vmatmul.bf16.gmra.mxu0 %v940
      %v1078 = vpop.f32.mrf.mxu0
      %v1079 = vadd.f32 0.0, %v1078
      %v1080 = vpop.f32.mrf.mxu0
      %v1081 = vadd.f32 0.0, %v1080
      %1082 = vmatmul.bf16.gmra.mxu0 %v941
      %v1083 = vpop.f32.mrf.mxu0
      %v1084 = vadd.f32 0.0, %v1083
      %v1085 = vpop.f32.mrf.mxu0
      %v1086 = vadd.f32 0.0, %v1085
      %1087 = vmatmul.bf16.gmra.mxu0 %v942
      %v1088 = vpop.f32.mrf.mxu0
      %v1089 = vadd.f32 0.0, %v1088
      %v1090 = vpop.f32.mrf.mxu0
      %v1091 = vadd.f32 0.0, %v1090
      %1092 = vmatmul.bf16.gmra.mxu0 %v943
      %v1093 = vpop.f32.mrf.mxu0
      %v1094 = vadd.f32 0.0, %v1093
      %v1095 = vpop.f32.mrf.mxu0
      %v1096 = vadd.f32 0.0, %v1095
      %1097 = vdwg.mxu0
      %v1098 = vadd.f32 %v688, %v1019
      %v1099 = vadd.f32 %v690, %v1021
      %v1100 = vadd.f32 %v693, %v1024
      %v1101 = vadd.f32 %v695, %v1026
      %v1102 = vadd.f32 %v698, %v1029
      %v1103 = vadd.f32 %v700, %v1031
      %v1104 = vadd.f32 %v703, %v1034
      %v1105 = vadd.f32 %v705, %v1036
      %v1106 = vadd.f32 %v708, %v1039
      %v1107 = vadd.f32 %v710, %v1041
      %v1108 = vadd.f32 %v713, %v1044
      %v1109 = vadd.f32 %v715, %v1046
      %v1110 = vadd.f32 %v718, %v1049
      %v1111 = vadd.f32 %v720, %v1051
      %v1112 = vadd.f32 %v723, %v1054
      %v1113 = vadd.f32 %v725, %v1056
      %v1114 = vadd.f32 %v728, %v1059
      %v1115 = vadd.f32 %v730, %v1061
      %v1116 = vadd.f32 %v733, %v1064
      %v1117 = vadd.f32 %v735, %v1066
      %v1118 = vadd.f32 %v738, %v1069
      %v1119 = vadd.f32 %v740, %v1071
      %v1120 = vadd.f32 %v743, %v1074
      %v1121 = vadd.f32 %v745, %v1076
      %v1122 = vadd.f32 %v748, %v1079
      %v1123 = vadd.f32 %v750, %v1081
      %v1124 = vadd.f32 %v753, %v1084
      %v1125 = vadd.f32 %v755, %v1086
      %v1126 = vadd.f32 %v758, %v1089
      %v1127 = vadd.f32 %v760, %v1091
      %v1128 = vadd.f32 %v763, %v1094
      %v1129 = vadd.f32 %v765, %v1096
      %s1130 = scalar_lea.vmem %s165, 12
      %v1131 = vld [vmem:[%s1130] sm:$0xf]
      %v1132 = vld [vmem:[%s1130 + $0x4] sm:$0xf]
      %v1133 = vld [vmem:[%s1130 + $0xc] sm:$0xf]
      %v1134 = vld [vmem:[%s1130 + $0x10] sm:$0xf]
      %v1135 = vld [vmem:[%s1130 + $0x18] sm:$0xf]
      %v1136 = vld [vmem:[%s1130 + $0x1c] sm:$0xf]
      %v1137 = vld [vmem:[%s1130 + $0x24] sm:$0xf]
      %v1138 = vld [vmem:[%s1130 + $0x28] sm:$0xf]
      %v1139 = vld [vmem:[%s1130 + $0x30] sm:$0xf]
      %v1140 = vld [vmem:[%s1130 + $0x34] sm:$0xf]
      %v1141 = vld [vmem:[%s1130 + $0x3c] sm:$0xf]
      %v1142 = vld [vmem:[%s1130 + $0x40] sm:$0xf]
      %v1143 = vld [vmem:[%s1130 + $0x48] sm:$0xf]
      %v1144 = vld [vmem:[%s1130 + $0x4c] sm:$0xf]
      %v1145 = vld [vmem:[%s1130 + $0x54] sm:$0xf]
      %v1146 = vld [vmem:[%s1130 + $0x58] sm:$0xf]
      %v1147 = vld [vmem:[%s1130 + $0x60] sm:$0xf]
      %v1148 = vld [vmem:[%s1130 + $0x64] sm:$0xf]
      %v1149 = vld [vmem:[%s1130 + $0x6c] sm:$0xf]
      %v1150 = vld [vmem:[%s1130 + $0x70] sm:$0xf]
      %v1151 = vld [vmem:[%s1130 + $0x78] sm:$0xf]
      %v1152 = vld [vmem:[%s1130 + $0x7c] sm:$0xf]
      %v1153 = vld [vmem:[%s1130 + $0x84] sm:$0xf]
      %v1154 = vld [vmem:[%s1130 + $0x88] sm:$0xf]
      %v1155 = vld [vmem:[%s1130 + $0x90] sm:$0xf]
      %v1156 = vld [vmem:[%s1130 + $0x94] sm:$0xf]
      %v1157 = vld [vmem:[%s1130 + $0x9c] sm:$0xf]
      %v1158 = vld [vmem:[%s1130 + $0xa0] sm:$0xf]
      %v1159 = vld [vmem:[%s1130 + $0xa8] sm:$0xf]
      %v1160 = vld [vmem:[%s1130 + $0xac] sm:$0xf]
      %v1161 = vld [vmem:[%s1130 + $0xb4] sm:$0xf]
      %v1162 = vld [vmem:[%s1130 + $0xb8] sm:$0xf]
      %v1163 = vunpack.c.l.bf16 %v1131
      %v1164 = vunpack.c.l.bf16 %v1132
      %v1165 = vunpack.c.l.bf16 %v1133
      %v1166 = vunpack.c.l.bf16 %v1134
      %v1167 = vunpack.c.l.bf16 %v1135
      %v1168 = vunpack.c.l.bf16 %v1136
      %v1169 = vunpack.c.l.bf16 %v1137
      %v1170 = vunpack.c.l.bf16 %v1138
      %v1171 = vunpack.c.l.bf16 %v1139
      %v1172 = vunpack.c.l.bf16 %v1140
      %v1173 = vunpack.c.l.bf16 %v1141
      %v1174 = vunpack.c.l.bf16 %v1142
      %v1175 = vunpack.c.l.bf16 %v1143
      %v1176 = vunpack.c.l.bf16 %v1144
      %v1177 = vunpack.c.l.bf16 %v1145
      %v1178 = vunpack.c.l.bf16 %v1146
      %v1179 = vunpack.c.l.bf16 %v1147
      %v1180 = vunpack.c.l.bf16 %v1148
      %v1181 = vunpack.c.l.bf16 %v1149
      %v1182 = vunpack.c.l.bf16 %v1150
      %v1183 = vunpack.c.l.bf16 %v1151
      %v1184 = vunpack.c.l.bf16 %v1152
      %v1185 = vunpack.c.l.bf16 %v1153
      %v1186 = vunpack.c.l.bf16 %v1154
      %v1187 = vunpack.c.l.bf16 %v1155
      %v1188 = vunpack.c.l.bf16 %v1156
      %v1189 = vunpack.c.l.bf16 %v1157
      %v1190 = vunpack.c.l.bf16 %v1158
      %v1191 = vunpack.c.l.bf16 %v1159
      %v1192 = vunpack.c.l.bf16 %v1160
      %v1193 = vunpack.c.l.bf16 %v1161
      %v1194 = vunpack.c.l.bf16 %v1162
      %v1195 = vpack.c.bf16 %v1164, %v1163
      %v1196 = vpack.c.bf16 %v1166, %v1165
      %v1197 = vpack.c.bf16 %v1168, %v1167
      %v1198 = vpack.c.bf16 %v1170, %v1169
      %v1199 = vpack.c.bf16 %v1172, %v1171
      %v1200 = vpack.c.bf16 %v1174, %v1173
      %v1201 = vpack.c.bf16 %v1176, %v1175
      %v1202 = vpack.c.bf16 %v1178, %v1177
      %v1203 = vpack.c.bf16 %v1180, %v1179
      %v1204 = vpack.c.bf16 %v1182, %v1181
      %v1205 = vpack.c.bf16 %v1184, %v1183
      %v1206 = vpack.c.bf16 %v1186, %v1185
      %v1207 = vpack.c.bf16 %v1188, %v1187
      %v1208 = vpack.c.bf16 %v1190, %v1189
      %v1209 = vpack.c.bf16 %v1192, %v1191
      %v1210 = vpack.c.bf16 %v1194, %v1193
      %s1211 = scalar_lea.vmem %s1, 192
      %v1212 = vld [vmem:[%s1211] sm:$0xf]
      %v1213 = vld [vmem:[%s1211 + $0x4] sm:$0xf]
      %v1214 = vld [vmem:[%s1211 + $0x8] sm:$0xf]
      %v1215 = vld [vmem:[%s1211 + $0xc] sm:$0xf]
      %v1216 = vld [vmem:[%s1211 + $0x10] sm:$0xf]
      %v1217 = vld [vmem:[%s1211 + $0x14] sm:$0xf]
      %v1218 = vld [vmem:[%s1211 + $0x18] sm:$0xf]
      %v1219 = vld [vmem:[%s1211 + $0x1c] sm:$0xf]
      %v1220 = vld [vmem:[%s1211 + $0x20] sm:$0xf]
      %v1221 = vld [vmem:[%s1211 + $0x24] sm:$0xf]
      %v1222 = vld [vmem:[%s1211 + $0x28] sm:$0xf]
      %v1223 = vld [vmem:[%s1211 + $0x2c] sm:$0xf]
      %v1224 = vld [vmem:[%s1211 + $0x30] sm:$0xf]
      %v1225 = vld [vmem:[%s1211 + $0x34] sm:$0xf]
      %v1226 = vld [vmem:[%s1211 + $0x38] sm:$0xf]
      %v1227 = vld [vmem:[%s1211 + $0x3c] sm:$0xf]
      %v1244 = vunpack.c.l.b16 %v1212
      %v1245 = vunpack.c.l.b16 %v1213
      %v1246 = vunpack.c.l.b16 %v1214
      %v1247 = vunpack.c.l.b16 %v1215
      %v1248 = vunpack.c.l.b16 %v1216
      %v1249 = vunpack.c.l.b16 %v1217
      %v1250 = vunpack.c.l.b16 %v1218
      %v1251 = vunpack.c.l.b16 %v1219
      %v1252 = vunpack.c.l.b16 %v1220
      %v1253 = vunpack.c.l.b16 %v1221
      %v1254 = vunpack.c.l.b16 %v1222
      %v1255 = vunpack.c.l.b16 %v1223
      %v1256 = vunpack.c.l.b16 %v1224
      %v1257 = vunpack.c.l.b16 %v1225
      %v1258 = vunpack.c.l.b16 %v1226
      %v1259 = vunpack.c.l.b16 %v1227
      %v1260 = vpack.c.b16 %v1245, %v1244
      %v1261 = vpack.c.b16 %v1247, %v1246
      %v1262 = vpack.c.b16 %v1249, %v1248
      %v1263 = vpack.c.b16 %v1251, %v1250
      %v1264 = vpack.c.b16 %v1253, %v1252
      %v1265 = vpack.c.b16 %v1255, %v1254
      %v1266 = vpack.c.b16 %v1257, %v1256
      %v1267 = vpack.c.b16 %v1259, %v1258
      %1276 = vmatpush.bf16.msra.mxu0 %v1267
      %1277 = vmatpush.bf16.msra.mxu0 %v1266
      %1278 = vmatpush.bf16.msra.mxu0 %v1265
      %1279 = vmatpush.bf16.msra.mxu0 %v1264
      %1280 = vmatpush.bf16.msra.mxu0 %v1263
      %1281 = vmatpush.bf16.msra.mxu0 %v1262
      %1282 = vmatpush.bf16.msra.mxu0 %v1261
      %1283 = vmatpush.bf16.msra.mxu0 %v1260
      %1284 = vmatmul.bf16.gmra.mxu0 %v1195
      %v1285 = vpop.f32.mrf.mxu0
      %v1286 = vadd.f32 0.0, %v1285
      %v1287 = vpop.f32.mrf.mxu0
      %v1288 = vadd.f32 0.0, %v1287
      %1289 = vmatmul.bf16.gmra.mxu0 %v1196
      %v1290 = vpop.f32.mrf.mxu0
      %v1291 = vadd.f32 0.0, %v1290
      %v1292 = vpop.f32.mrf.mxu0
      %v1293 = vadd.f32 0.0, %v1292
      %1294 = vmatmul.bf16.gmra.mxu0 %v1197
      %v1295 = vpop.f32.mrf.mxu0
      %v1296 = vadd.f32 0.0, %v1295
      %v1297 = vpop.f32.mrf.mxu0
      %v1298 = vadd.f32 0.0, %v1297
      %1299 = vmatmul.bf16.gmra.mxu0 %v1198
      %v1300 = vpop.f32.mrf.mxu0
      %v1301 = vadd.f32 0.0, %v1300
      %v1302 = vpop.f32.mrf.mxu0
      %v1303 = vadd.f32 0.0, %v1302
      %1304 = vmatmul.bf16.gmra.mxu0 %v1199
      %v1305 = vpop.f32.mrf.mxu0
      %v1306 = vadd.f32 0.0, %v1305
      %v1307 = vpop.f32.mrf.mxu0
      %v1308 = vadd.f32 0.0, %v1307
      %1309 = vmatmul.bf16.gmra.mxu0 %v1200
      %v1310 = vpop.f32.mrf.mxu0
      %v1311 = vadd.f32 0.0, %v1310
      %v1312 = vpop.f32.mrf.mxu0
      %v1313 = vadd.f32 0.0, %v1312
      %1314 = vmatmul.bf16.gmra.mxu0 %v1201
      %v1315 = vpop.f32.mrf.mxu0
      %v1316 = vadd.f32 0.0, %v1315
      %v1317 = vpop.f32.mrf.mxu0
      %v1318 = vadd.f32 0.0, %v1317
      %1319 = vmatmul.bf16.gmra.mxu0 %v1202
      %v1320 = vpop.f32.mrf.mxu0
      %v1321 = vadd.f32 0.0, %v1320
      %v1322 = vpop.f32.mrf.mxu0
      %v1323 = vadd.f32 0.0, %v1322
      %1324 = vmatmul.bf16.gmra.mxu0 %v1203
      %v1325 = vpop.f32.mrf.mxu0
      %v1326 = vadd.f32 0.0, %v1325
      %v1327 = vpop.f32.mrf.mxu0
      %v1328 = vadd.f32 0.0, %v1327
      %1329 = vmatmul.bf16.gmra.mxu0 %v1204
      %v1330 = vpop.f32.mrf.mxu0
      %v1331 = vadd.f32 0.0, %v1330
      %v1332 = vpop.f32.mrf.mxu0
      %v1333 = vadd.f32 0.0, %v1332
      %1334 = vmatmul.bf16.gmra.mxu0 %v1205
      %v1335 = vpop.f32.mrf.mxu0
      %v1336 = vadd.f32 0.0, %v1335
      %v1337 = vpop.f32.mrf.mxu0
      %v1338 = vadd.f32 0.0, %v1337
      %1339 = vmatmul.bf16.gmra.mxu0 %v1206
      %v1340 = vpop.f32.mrf.mxu0
      %v1341 = vadd.f32 0.0, %v1340
      %v1342 = vpop.f32.mrf.mxu0
      %v1343 = vadd.f32 0.0, %v1342
      %1344 = vmatmul.bf16.gmra.mxu0 %v1207
      %v1345 = vpop.f32.mrf.mxu0
      %v1346 = vadd.f32 0.0, %v1345
      %v1347 = vpop.f32.mrf.mxu0
      %v1348 = vadd.f32 0.0, %v1347
      %1349 = vmatmul.bf16.gmra.mxu0 %v1208
      %v1350 = vpop.f32.mrf.mxu0
      %v1351 = vadd.f32 0.0, %v1350
      %v1352 = vpop.f32.mrf.mxu0
      %v1353 = vadd.f32 0.0, %v1352
      %1354 = vmatmul.bf16.gmra.mxu0 %v1209
      %v1355 = vpop.f32.mrf.mxu0
      %v1356 = vadd.f32 0.0, %v1355
      %v1357 = vpop.f32.mrf.mxu0
      %v1358 = vadd.f32 0.0, %v1357
      %1359 = vmatmul.bf16.gmra.mxu0 %v1210
      %v1360 = vpop.f32.mrf.mxu0
      %v1361 = vadd.f32 0.0, %v1360
      %v1362 = vpop.f32.mrf.mxu0
      %v1363 = vadd.f32 0.0, %v1362
      %1364 = vdwg.mxu0
      %v1365 = vadd.f32 %v1098, %v1286
      %v1366 = vadd.f32 %v1099, %v1288
      %v1367 = vadd.f32 %v1100, %v1291
      %v1368 = vadd.f32 %v1101, %v1293
      %v1369 = vadd.f32 %v1102, %v1296
      %v1370 = vadd.f32 %v1103, %v1298
      %v1371 = vadd.f32 %v1104, %v1301
      %v1372 = vadd.f32 %v1105, %v1303
      %v1373 = vadd.f32 %v1106, %v1306
      %v1374 = vadd.f32 %v1107, %v1308
      %v1375 = vadd.f32 %v1108, %v1311
      %v1376 = vadd.f32 %v1109, %v1313
      %v1377 = vadd.f32 %v1110, %v1316
      %v1378 = vadd.f32 %v1111, %v1318
      %v1379 = vadd.f32 %v1112, %v1321
      %v1380 = vadd.f32 %v1113, %v1323
      %v1381 = vadd.f32 %v1114, %v1326
      %v1382 = vadd.f32 %v1115, %v1328
      %v1383 = vadd.f32 %v1116, %v1331
      %v1384 = vadd.f32 %v1117, %v1333
      %v1385 = vadd.f32 %v1118, %v1336
      %v1386 = vadd.f32 %v1119, %v1338
      %v1387 = vadd.f32 %v1120, %v1341
      %v1388 = vadd.f32 %v1121, %v1343
      %v1389 = vadd.f32 %v1122, %v1346
      %v1390 = vadd.f32 %v1123, %v1348
      %v1391 = vadd.f32 %v1124, %v1351
      %v1392 = vadd.f32 %v1125, %v1353
      %v1393 = vadd.f32 %v1126, %v1356
      %v1394 = vadd.f32 %v1127, %v1358
      %v1395 = vadd.f32 %v1128, %v1361
      %v1396 = vadd.f32 %v1129, %v1363
      %v1397 = vld [vmem:[%s1130] sm:$0xf]
      %v1398 = vld [vmem:[%s1130 + $0x4] sm:$0xf]
      %v1399 = vld [vmem:[%s1130 + $0x8] sm:$0x1]
      %v1400 = vld [vmem:[%s1130 + $0xc] sm:$0xf]
      %v1401 = vld [vmem:[%s1130 + $0x10] sm:$0xf]
      %v1402 = vld [vmem:[%s1130 + $0x14] sm:$0x1]
      %v1403 = vld [vmem:[%s1130 + $0x18] sm:$0xf]
      %v1404 = vld [vmem:[%s1130 + $0x1c] sm:$0xf]
      %v1405 = vld [vmem:[%s1130 + $0x20] sm:$0x1]
      %v1406 = vld [vmem:[%s1130 + $0x24] sm:$0xf]
      %v1407 = vld [vmem:[%s1130 + $0x28] sm:$0xf]
      %v1408 = vld [vmem:[%s1130 + $0x2c] sm:$0x1]
      %v1409 = vld [vmem:[%s1130 + $0x30] sm:$0xf]
      %v1410 = vld [vmem:[%s1130 + $0x34] sm:$0xf]
      %v1411 = vld [vmem:[%s1130 + $0x38] sm:$0x1]
      %v1412 = vld [vmem:[%s1130 + $0x3c] sm:$0xf]
      %v1413 = vld [vmem:[%s1130 + $0x40] sm:$0xf]
      %v1414 = vld [vmem:[%s1130 + $0x44] sm:$0x1]
      %v1415 = vld [vmem:[%s1130 + $0x48] sm:$0xf]
      %v1416 = vld [vmem:[%s1130 + $0x4c] sm:$0xf]
      %v1417 = vld [vmem:[%s1130 + $0x50] sm:$0x1]
      %v1418 = vld [vmem:[%s1130 + $0x54] sm:$0xf]
      %v1419 = vld [vmem:[%s1130 + $0x58] sm:$0xf]
      %v1420 = vld [vmem:[%s1130 + $0x5c] sm:$0x1]
      %v1421 = vld [vmem:[%s1130 + $0x60] sm:$0xf]
      %v1422 = vld [vmem:[%s1130 + $0x64] sm:$0xf]
      %v1423 = vld [vmem:[%s1130 + $0x68] sm:$0x1]
      %v1424 = vld [vmem:[%s1130 + $0x6c] sm:$0xf]
      %v1425 = vld [vmem:[%s1130 + $0x70] sm:$0xf]
      %v1426 = vld [vmem:[%s1130 + $0x74] sm:$0x1]
      %v1427 = vld [vmem:[%s1130 + $0x78] sm:$0xf]
      %v1428 = vld [vmem:[%s1130 + $0x7c] sm:$0xf]
      %v1429 = vld [vmem:[%s1130 + $0x80] sm:$0x1]
      %v1430 = vld [vmem:[%s1130 + $0x84] sm:$0xf]
      %v1431 = vld [vmem:[%s1130 + $0x88] sm:$0xf]
      %v1432 = vld [vmem:[%s1130 + $0x8c] sm:$0x1]
      %v1433 = vld [vmem:[%s1130 + $0x90] sm:$0xf]
      %v1434 = vld [vmem:[%s1130 + $0x94] sm:$0xf]
      %v1435 = vld [vmem:[%s1130 + $0x98] sm:$0x1]
      %v1436 = vld [vmem:[%s1130 + $0x9c] sm:$0xf]
      %v1437 = vld [vmem:[%s1130 + $0xa0] sm:$0xf]
      %v1438 = vld [vmem:[%s1130 + $0xa4] sm:$0x1]
      %v1439 = vld [vmem:[%s1130 + $0xa8] sm:$0xf]
      %v1440 = vld [vmem:[%s1130 + $0xac] sm:$0xf]
      %v1441 = vld [vmem:[%s1130 + $0xb0] sm:$0x1]
      %v1442 = vld [vmem:[%s1130 + $0xb4] sm:$0xf]
      %v1443 = vld [vmem:[%s1130 + $0xb8] sm:$0xf]
      %v1444 = vld [vmem:[%s1130 + $0xbc] sm:$0x1]
      %v1445 = vunpack.c.l.bf16 %v1397
      %v1446 = vunpack.c.l.bf16 %v1398
      %v1447 = vunpack.c.l.bf16 %v1399
      %v1448 = vunpack.c.l.bf16 %v1400
      %v1449 = vunpack.c.l.bf16 %v1401
      %v1450 = vunpack.c.l.bf16 %v1402
      %v1451 = vunpack.c.l.bf16 %v1403
      %v1452 = vunpack.c.l.bf16 %v1404
      %v1453 = vunpack.c.l.bf16 %v1405
      %v1454 = vunpack.c.l.bf16 %v1406
      %v1455 = vunpack.c.l.bf16 %v1407
      %v1456 = vunpack.c.l.bf16 %v1408
      %v1457 = vunpack.c.l.bf16 %v1409
      %v1458 = vunpack.c.l.bf16 %v1410
      %v1459 = vunpack.c.l.bf16 %v1411
      %v1460 = vunpack.c.l.bf16 %v1412
      %v1461 = vunpack.c.l.bf16 %v1413
      %v1462 = vunpack.c.l.bf16 %v1414
      %v1463 = vunpack.c.l.bf16 %v1415
      %v1464 = vunpack.c.l.bf16 %v1416
      %v1465 = vunpack.c.l.bf16 %v1417
      %v1466 = vunpack.c.l.bf16 %v1418
      %v1467 = vunpack.c.l.bf16 %v1419
      %v1468 = vunpack.c.l.bf16 %v1420
      %v1469 = vunpack.c.l.bf16 %v1421
      %v1470 = vunpack.c.l.bf16 %v1422
      %v1471 = vunpack.c.l.bf16 %v1423
      %v1472 = vunpack.c.l.bf16 %v1424
      %v1473 = vunpack.c.l.bf16 %v1425
      %v1474 = vunpack.c.l.bf16 %v1426
      %v1475 = vunpack.c.l.bf16 %v1427
      %v1476 = vunpack.c.l.bf16 %v1428
      %v1477 = vunpack.c.l.bf16 %v1429
      %v1478 = vunpack.c.l.bf16 %v1430
      %v1479 = vunpack.c.l.bf16 %v1431
      %v1480 = vunpack.c.l.bf16 %v1432
      %v1481 = vunpack.c.l.bf16 %v1433
      %v1482 = vunpack.c.l.bf16 %v1434
      %v1483 = vunpack.c.l.bf16 %v1435
      %v1484 = vunpack.c.l.bf16 %v1436
      %v1485 = vunpack.c.l.bf16 %v1437
      %v1486 = vunpack.c.l.bf16 %v1438
      %v1487 = vunpack.c.l.bf16 %v1439
      %v1488 = vunpack.c.l.bf16 %v1440
      %v1489 = vunpack.c.l.bf16 %v1441
      %v1490 = vunpack.c.l.bf16 %v1442
      %v1491 = vunpack.c.l.bf16 %v1443
      %v1492 = vunpack.c.l.bf16 %v1444
      %v1541 = vrot.slane %v1445, 1
      %v1542 = vrot.slane %v1446, 1
      %v1543 = vsel %vm347, %v1541, %v1542
      %v1544 = vrot.slane %v1447, 1
      %v1545 = vsel %vm347, %v1542, %v1544
      %v1546 = vrot.slane %v1448, 1
      %v1547 = vrot.slane %v1449, 1
      %v1548 = vsel %vm347, %v1546, %v1547
      %v1549 = vrot.slane %v1450, 1
      %v1550 = vsel %vm347, %v1547, %v1549
      %v1551 = vrot.slane %v1451, 1
      %v1552 = vrot.slane %v1452, 1
      %v1553 = vsel %vm347, %v1551, %v1552
      %v1554 = vrot.slane %v1453, 1
      %v1555 = vsel %vm347, %v1552, %v1554
      %v1556 = vrot.slane %v1454, 1
      %v1557 = vrot.slane %v1455, 1
      %v1558 = vsel %vm347, %v1556, %v1557
      %v1559 = vrot.slane %v1456, 1
      %v1560 = vsel %vm347, %v1557, %v1559
      %v1561 = vrot.slane %v1457, 1
      %v1562 = vrot.slane %v1458, 1
      %v1563 = vsel %vm347, %v1561, %v1562
      %v1564 = vrot.slane %v1459, 1
      %v1565 = vsel %vm347, %v1562, %v1564
      %v1566 = vrot.slane %v1460, 1
      %v1567 = vrot.slane %v1461, 1
      %v1568 = vsel %vm347, %v1566, %v1567
      %v1569 = vrot.slane %v1462, 1
      %v1570 = vsel %vm347, %v1567, %v1569
      %v1571 = vrot.slane %v1463, 1
      %v1572 = vrot.slane %v1464, 1
      %v1573 = vsel %vm347, %v1571, %v1572
      %v1574 = vrot.slane %v1465, 1
      %v1575 = vsel %vm347, %v1572, %v1574
      %v1576 = vrot.slane %v1466, 1
      %v1577 = vrot.slane %v1467, 1
      %v1578 = vsel %vm347, %v1576, %v1577
      %v1579 = vrot.slane %v1468, 1
      %v1580 = vsel %vm347, %v1577, %v1579
      %v1581 = vrot.slane %v1469, 1
      %v1582 = vrot.slane %v1470, 1
      %v1583 = vsel %vm347, %v1581, %v1582
      %v1584 = vrot.slane %v1471, 1
      %v1585 = vsel %vm347, %v1582, %v1584
      %v1586 = vrot.slane %v1472, 1
      %v1587 = vrot.slane %v1473, 1
      %v1588 = vsel %vm347, %v1586, %v1587
      %v1589 = vrot.slane %v1474, 1
      %v1590 = vsel %vm347, %v1587, %v1589
      %v1591 = vrot.slane %v1475, 1
      %v1592 = vrot.slane %v1476, 1
      %v1593 = vsel %vm347, %v1591, %v1592
      %v1594 = vrot.slane %v1477, 1
      %v1595 = vsel %vm347, %v1592, %v1594
      %v1596 = vrot.slane %v1478, 1
      %v1597 = vrot.slane %v1479, 1
      %v1598 = vsel %vm347, %v1596, %v1597
      %v1599 = vrot.slane %v1480, 1
      %v1600 = vsel %vm347, %v1597, %v1599
      %v1601 = vrot.slane %v1481, 1
      %v1602 = vrot.slane %v1482, 1
      %v1603 = vsel %vm347, %v1601, %v1602
      %v1604 = vrot.slane %v1483, 1
      %v1605 = vsel %vm347, %v1602, %v1604
      %v1606 = vrot.slane %v1484, 1
      %v1607 = vrot.slane %v1485, 1
      %v1608 = vsel %vm347, %v1606, %v1607
      %v1609 = vrot.slane %v1486, 1
      %v1610 = vsel %vm347, %v1607, %v1609
      %v1611 = vrot.slane %v1487, 1
      %v1612 = vrot.slane %v1488, 1
      %v1613 = vsel %vm347, %v1611, %v1612
      %v1614 = vrot.slane %v1489, 1
      %v1615 = vsel %vm347, %v1612, %v1614
      %v1616 = vrot.slane %v1490, 1
      %v1617 = vrot.slane %v1491, 1
      %v1618 = vsel %vm347, %v1616, %v1617
      %v1619 = vrot.slane %v1492, 1
      %v1620 = vsel %vm347, %v1617, %v1619
      %v1653 = vpack.c.bf16 %v1545, %v1543
      %v1654 = vpack.c.bf16 %v1550, %v1548
      %v1655 = vpack.c.bf16 %v1555, %v1553
      %v1656 = vpack.c.bf16 %v1560, %v1558
      %v1657 = vpack.c.bf16 %v1565, %v1563
      %v1658 = vpack.c.bf16 %v1570, %v1568
      %v1659 = vpack.c.bf16 %v1575, %v1573
      %v1660 = vpack.c.bf16 %v1580, %v1578
      %v1661 = vpack.c.bf16 %v1585, %v1583
      %v1662 = vpack.c.bf16 %v1590, %v1588
      %v1663 = vpack.c.bf16 %v1595, %v1593
      %v1664 = vpack.c.bf16 %v1600, %v1598
      %v1665 = vpack.c.bf16 %v1605, %v1603
      %v1666 = vpack.c.bf16 %v1610, %v1608
      %v1667 = vpack.c.bf16 %v1615, %v1613
      %v1668 = vpack.c.bf16 %v1620, %v1618
      %s1669 = scalar_lea.vmem %s1, 256
      %v1670 = vld [vmem:[%s1669] sm:$0xf]
      %v1671 = vld [vmem:[%s1669 + $0x4] sm:$0xf]
      %v1672 = vld [vmem:[%s1669 + $0x8] sm:$0xf]
      %v1673 = vld [vmem:[%s1669 + $0xc] sm:$0xf]
      %v1674 = vld [vmem:[%s1669 + $0x10] sm:$0xf]
      %v1675 = vld [vmem:[%s1669 + $0x14] sm:$0xf]
      %v1676 = vld [vmem:[%s1669 + $0x18] sm:$0xf]
      %v1677 = vld [vmem:[%s1669 + $0x1c] sm:$0xf]
      %v1678 = vld [vmem:[%s1669 + $0x20] sm:$0xf]
      %v1679 = vld [vmem:[%s1669 + $0x24] sm:$0xf]
      %v1680 = vld [vmem:[%s1669 + $0x28] sm:$0xf]
      %v1681 = vld [vmem:[%s1669 + $0x2c] sm:$0xf]
      %v1682 = vld [vmem:[%s1669 + $0x30] sm:$0xf]
      %v1683 = vld [vmem:[%s1669 + $0x34] sm:$0xf]
      %v1684 = vld [vmem:[%s1669 + $0x38] sm:$0xf]
      %v1685 = vld [vmem:[%s1669 + $0x3c] sm:$0xf]
      %v1702 = vunpack.c.l.b16 %v1670
      %v1703 = vunpack.c.l.b16 %v1671
      %v1704 = vunpack.c.l.b16 %v1672
      %v1705 = vunpack.c.l.b16 %v1673
      %v1706 = vunpack.c.l.b16 %v1674
      %v1707 = vunpack.c.l.b16 %v1675
      %v1708 = vunpack.c.l.b16 %v1676
      %v1709 = vunpack.c.l.b16 %v1677
      %v1710 = vunpack.c.l.b16 %v1678
      %v1711 = vunpack.c.l.b16 %v1679
      %v1712 = vunpack.c.l.b16 %v1680
      %v1713 = vunpack.c.l.b16 %v1681
      %v1714 = vunpack.c.l.b16 %v1682
      %v1715 = vunpack.c.l.b16 %v1683
      %v1716 = vunpack.c.l.b16 %v1684
      %v1717 = vunpack.c.l.b16 %v1685
      %v1718 = vpack.c.b16 %v1703, %v1702
      %v1719 = vpack.c.b16 %v1705, %v1704
      %v1720 = vpack.c.b16 %v1707, %v1706
      %v1721 = vpack.c.b16 %v1709, %v1708
      %v1722 = vpack.c.b16 %v1711, %v1710
      %v1723 = vpack.c.b16 %v1713, %v1712
      %v1724 = vpack.c.b16 %v1715, %v1714
      %v1725 = vpack.c.b16 %v1717, %v1716
      %1734 = vmatpush.bf16.msra.mxu0 %v1725
      %1735 = vmatpush.bf16.msra.mxu0 %v1724
      %1736 = vmatpush.bf16.msra.mxu0 %v1723
      %1737 = vmatpush.bf16.msra.mxu0 %v1722
      %1738 = vmatpush.bf16.msra.mxu0 %v1721
      %1739 = vmatpush.bf16.msra.mxu0 %v1720
      %1740 = vmatpush.bf16.msra.mxu0 %v1719
      %1741 = vmatpush.bf16.msra.mxu0 %v1718
      %1742 = vmatmul.bf16.gmra.mxu0 %v1653
      %v1743 = vpop.f32.mrf.mxu0
      %v1744 = vadd.f32 0.0, %v1743
      %v1745 = vpop.f32.mrf.mxu0
      %v1746 = vadd.f32 0.0, %v1745
      %1747 = vmatmul.bf16.gmra.mxu0 %v1654
      %v1748 = vpop.f32.mrf.mxu0
      %v1749 = vadd.f32 0.0, %v1748
      %v1750 = vpop.f32.mrf.mxu0
      %v1751 = vadd.f32 0.0, %v1750
      %1752 = vmatmul.bf16.gmra.mxu0 %v1655
      %v1753 = vpop.f32.mrf.mxu0
      %v1754 = vadd.f32 0.0, %v1753
      %v1755 = vpop.f32.mrf.mxu0
      %v1756 = vadd.f32 0.0, %v1755
      %1757 = vmatmul.bf16.gmra.mxu0 %v1656
      %v1758 = vpop.f32.mrf.mxu0
      %v1759 = vadd.f32 0.0, %v1758
      %v1760 = vpop.f32.mrf.mxu0
      %v1761 = vadd.f32 0.0, %v1760
      %1762 = vmatmul.bf16.gmra.mxu0 %v1657
      %v1763 = vpop.f32.mrf.mxu0
      %v1764 = vadd.f32 0.0, %v1763
      %v1765 = vpop.f32.mrf.mxu0
      %v1766 = vadd.f32 0.0, %v1765
      %1767 = vmatmul.bf16.gmra.mxu0 %v1658
      %v1768 = vpop.f32.mrf.mxu0
      %v1769 = vadd.f32 0.0, %v1768
      %v1770 = vpop.f32.mrf.mxu0
      %v1771 = vadd.f32 0.0, %v1770
      %1772 = vmatmul.bf16.gmra.mxu0 %v1659
      %v1773 = vpop.f32.mrf.mxu0
      %v1774 = vadd.f32 0.0, %v1773
      %v1775 = vpop.f32.mrf.mxu0
      %v1776 = vadd.f32 0.0, %v1775
      %1777 = vmatmul.bf16.gmra.mxu0 %v1660
      %v1778 = vpop.f32.mrf.mxu0
      %v1779 = vadd.f32 0.0, %v1778
      %v1780 = vpop.f32.mrf.mxu0
      %v1781 = vadd.f32 0.0, %v1780
      %1782 = vmatmul.bf16.gmra.mxu0 %v1661
      %v1783 = vpop.f32.mrf.mxu0
      %v1784 = vadd.f32 0.0, %v1783
      %v1785 = vpop.f32.mrf.mxu0
      %v1786 = vadd.f32 0.0, %v1785
      %1787 = vmatmul.bf16.gmra.mxu0 %v1662
      %v1788 = vpop.f32.mrf.mxu0
      %v1789 = vadd.f32 0.0, %v1788
      %v1790 = vpop.f32.mrf.mxu0
      %v1791 = vadd.f32 0.0, %v1790
      %1792 = vmatmul.bf16.gmra.mxu0 %v1663
      %v1793 = vpop.f32.mrf.mxu0
      %v1794 = vadd.f32 0.0, %v1793
      %v1795 = vpop.f32.mrf.mxu0
      %v1796 = vadd.f32 0.0, %v1795
      %1797 = vmatmul.bf16.gmra.mxu0 %v1664
      %v1798 = vpop.f32.mrf.mxu0
      %v1799 = vadd.f32 0.0, %v1798
      %v1800 = vpop.f32.mrf.mxu0
      %v1801 = vadd.f32 0.0, %v1800
      %1802 = vmatmul.bf16.gmra.mxu0 %v1665
      %v1803 = vpop.f32.mrf.mxu0
      %v1804 = vadd.f32 0.0, %v1803
      %v1805 = vpop.f32.mrf.mxu0
      %v1806 = vadd.f32 0.0, %v1805
      %1807 = vmatmul.bf16.gmra.mxu0 %v1666
      %v1808 = vpop.f32.mrf.mxu0
      %v1809 = vadd.f32 0.0, %v1808
      %v1810 = vpop.f32.mrf.mxu0
      %v1811 = vadd.f32 0.0, %v1810
      %1812 = vmatmul.bf16.gmra.mxu0 %v1667
      %v1813 = vpop.f32.mrf.mxu0
      %v1814 = vadd.f32 0.0, %v1813
      %v1815 = vpop.f32.mrf.mxu0
      %v1816 = vadd.f32 0.0, %v1815
      %1817 = vmatmul.bf16.gmra.mxu0 %v1668
      %v1818 = vpop.f32.mrf.mxu0
      %v1819 = vadd.f32 0.0, %v1818
      %v1820 = vpop.f32.mrf.mxu0
      %v1821 = vadd.f32 0.0, %v1820
      %1822 = vdwg.mxu0
      %v1823 = vadd.f32 %v1365, %v1744
      %v1824 = vadd.f32 %v1366, %v1746
      %v1825 = vadd.f32 %v1367, %v1749
      %v1826 = vadd.f32 %v1368, %v1751
      %v1827 = vadd.f32 %v1369, %v1754
      %v1828 = vadd.f32 %v1370, %v1756
      %v1829 = vadd.f32 %v1371, %v1759
      %v1830 = vadd.f32 %v1372, %v1761
      %v1831 = vadd.f32 %v1373, %v1764
      %v1832 = vadd.f32 %v1374, %v1766
      %v1833 = vadd.f32 %v1375, %v1769
      %v1834 = vadd.f32 %v1376, %v1771
      %v1835 = vadd.f32 %v1377, %v1774
      %v1836 = vadd.f32 %v1378, %v1776
      %v1837 = vadd.f32 %v1379, %v1779
      %v1838 = vadd.f32 %v1380, %v1781
      %v1839 = vadd.f32 %v1381, %v1784
      %v1840 = vadd.f32 %v1382, %v1786
      %v1841 = vadd.f32 %v1383, %v1789
      %v1842 = vadd.f32 %v1384, %v1791
      %v1843 = vadd.f32 %v1385, %v1794
      %v1844 = vadd.f32 %v1386, %v1796
      %v1845 = vadd.f32 %v1387, %v1799
      %v1846 = vadd.f32 %v1388, %v1801
      %v1847 = vadd.f32 %v1389, %v1804
      %v1848 = vadd.f32 %v1390, %v1806
      %v1849 = vadd.f32 %v1391, %v1809
      %v1850 = vadd.f32 %v1392, %v1811
      %v1851 = vadd.f32 %v1393, %v1814
      %v1852 = vadd.f32 %v1394, %v1816
      %v1853 = vadd.f32 %v1395, %v1819
      %v1854 = vadd.f32 %v1396, %v1821
      %v1855 = vld [vmem:[%s1130] sm:$0xe]
      %v1856 = vld [vmem:[%s1130 + $0xc] sm:$0xe]
      %v1857 = vld [vmem:[%s1130 + $0x18] sm:$0xe]
      %v1858 = vld [vmem:[%s1130 + $0x24] sm:$0xe]
      %v1859 = vld [vmem:[%s1130 + $0x30] sm:$0xe]
      %v1860 = vld [vmem:[%s1130 + $0x3c] sm:$0xe]
      %v1861 = vld [vmem:[%s1130 + $0x48] sm:$0xe]
      %v1862 = vld [vmem:[%s1130 + $0x54] sm:$0xe]
      %v1863 = vld [vmem:[%s1130 + $0x60] sm:$0xe]
      %v1864 = vld [vmem:[%s1130 + $0x6c] sm:$0xe]
      %v1865 = vld [vmem:[%s1130 + $0x78] sm:$0xe]
      %v1866 = vld [vmem:[%s1130 + $0x84] sm:$0xe]
      %v1867 = vld [vmem:[%s1130 + $0x90] sm:$0xe]
      %v1868 = vld [vmem:[%s1130 + $0x9c] sm:$0xe]
      %v1869 = vld [vmem:[%s1130 + $0xa8] sm:$0xe]
      %v1870 = vld [vmem:[%s1130 + $0xb4] sm:$0xe]
      %v1871 = vunpack.c.l.bf16 %v1855
      %v1872 = vunpack.c.l.bf16 %v1856
      %v1873 = vunpack.c.l.bf16 %v1857
      %v1874 = vunpack.c.l.bf16 %v1858
      %v1875 = vunpack.c.l.bf16 %v1859
      %v1876 = vunpack.c.l.bf16 %v1860
      %v1877 = vunpack.c.l.bf16 %v1861
      %v1878 = vunpack.c.l.bf16 %v1862
      %v1879 = vunpack.c.l.bf16 %v1863
      %v1880 = vunpack.c.l.bf16 %v1864
      %v1881 = vunpack.c.l.bf16 %v1865
      %v1882 = vunpack.c.l.bf16 %v1866
      %v1883 = vunpack.c.l.bf16 %v1867
      %v1884 = vunpack.c.l.bf16 %v1868
      %v1885 = vunpack.c.l.bf16 %v1869
      %v1886 = vunpack.c.l.bf16 %v1870
      %v1903 = vrot.slane %v1871, 2
      %v1904 = vrot.slane %v1446, 2
      %v1905 = vsel %vm815, %v1903, %v1904
      %v1906 = vrot.slane %v1447, 2
      %v1907 = vsel %vm815, %v1904, %v1906
      %v1908 = vrot.slane %v1872, 2
      %v1909 = vrot.slane %v1449, 2
      %v1910 = vsel %vm815, %v1908, %v1909
      %v1911 = vrot.slane %v1450, 2
      %v1912 = vsel %vm815, %v1909, %v1911
      %v1913 = vrot.slane %v1873, 2
      %v1914 = vrot.slane %v1452, 2
      %v1915 = vsel %vm815, %v1913, %v1914
      %v1916 = vrot.slane %v1453, 2
      %v1917 = vsel %vm815, %v1914, %v1916
      %v1918 = vrot.slane %v1874, 2
      %v1919 = vrot.slane %v1455, 2
      %v1920 = vsel %vm815, %v1918, %v1919
      %v1921 = vrot.slane %v1456, 2
      %v1922 = vsel %vm815, %v1919, %v1921
      %v1923 = vrot.slane %v1875, 2
      %v1924 = vrot.slane %v1458, 2
      %v1925 = vsel %vm815, %v1923, %v1924
      %v1926 = vrot.slane %v1459, 2
      %v1927 = vsel %vm815, %v1924, %v1926
      %v1928 = vrot.slane %v1876, 2
      %v1929 = vrot.slane %v1461, 2
      %v1930 = vsel %vm815, %v1928, %v1929
      %v1931 = vrot.slane %v1462, 2
      %v1932 = vsel %vm815, %v1929, %v1931
      %v1933 = vrot.slane %v1877, 2
      %v1934 = vrot.slane %v1464, 2
      %v1935 = vsel %vm815, %v1933, %v1934
      %v1936 = vrot.slane %v1465, 2
      %v1937 = vsel %vm815, %v1934, %v1936
      %v1938 = vrot.slane %v1878, 2
      %v1939 = vrot.slane %v1467, 2
      %v1940 = vsel %vm815, %v1938, %v1939
      %v1941 = vrot.slane %v1468, 2
      %v1942 = vsel %vm815, %v1939, %v1941
      %v1943 = vrot.slane %v1879, 2
      %v1944 = vrot.slane %v1470, 2
      %v1945 = vsel %vm815, %v1943, %v1944
      %v1946 = vrot.slane %v1471, 2
      %v1947 = vsel %vm815, %v1944, %v1946
      %v1948 = vrot.slane %v1880, 2
      %v1949 = vrot.slane %v1473, 2
      %v1950 = vsel %vm815, %v1948, %v1949
      %v1951 = vrot.slane %v1474, 2
      %v1952 = vsel %vm815, %v1949, %v1951
      %v1953 = vrot.slane %v1881, 2
      %v1954 = vrot.slane %v1476, 2
      %v1955 = vsel %vm815, %v1953, %v1954
      %v1956 = vrot.slane %v1477, 2
      %v1957 = vsel %vm815, %v1954, %v1956
      %v1958 = vrot.slane %v1882, 2
      %v1959 = vrot.slane %v1479, 2
      %v1960 = vsel %vm815, %v1958, %v1959
      %v1961 = vrot.slane %v1480, 2
      %v1962 = vsel %vm815, %v1959, %v1961
      %v1963 = vrot.slane %v1883, 2
      %v1964 = vrot.slane %v1482, 2
      %v1965 = vsel %vm815, %v1963, %v1964
      %v1966 = vrot.slane %v1483, 2
      %v1967 = vsel %vm815, %v1964, %v1966
      %v1968 = vrot.slane %v1884, 2
      %v1969 = vrot.slane %v1485, 2
      %v1970 = vsel %vm815, %v1968, %v1969
      %v1971 = vrot.slane %v1486, 2
      %v1972 = vsel %vm815, %v1969, %v1971
      %v1973 = vrot.slane %v1885, 2
      %v1974 = vrot.slane %v1488, 2
      %v1975 = vsel %vm815, %v1973, %v1974
      %v1976 = vrot.slane %v1489, 2
      %v1977 = vsel %vm815, %v1974, %v1976
      %v1978 = vrot.slane %v1886, 2
      %v1979 = vrot.slane %v1491, 2
      %v1980 = vsel %vm815, %v1978, %v1979
      %v1981 = vrot.slane %v1492, 2
      %v1982 = vsel %vm815, %v1979, %v1981
      %v2015 = vpack.c.bf16 %v1907, %v1905
      %v2016 = vpack.c.bf16 %v1912, %v1910
      %v2017 = vpack.c.bf16 %v1917, %v1915
      %v2018 = vpack.c.bf16 %v1922, %v1920
      %v2019 = vpack.c.bf16 %v1927, %v1925
      %v2020 = vpack.c.bf16 %v1932, %v1930
      %v2021 = vpack.c.bf16 %v1937, %v1935
      %v2022 = vpack.c.bf16 %v1942, %v1940
      %v2023 = vpack.c.bf16 %v1947, %v1945
      %v2024 = vpack.c.bf16 %v1952, %v1950
      %v2025 = vpack.c.bf16 %v1957, %v1955
      %v2026 = vpack.c.bf16 %v1962, %v1960
      %v2027 = vpack.c.bf16 %v1967, %v1965
      %v2028 = vpack.c.bf16 %v1972, %v1970
      %v2029 = vpack.c.bf16 %v1977, %v1975
      %v2030 = vpack.c.bf16 %v1982, %v1980
      %s2031 = scalar_lea.vmem %s1, 320
      %v2032 = vld [vmem:[%s2031] sm:$0xf]
      %v2033 = vld [vmem:[%s2031 + $0x4] sm:$0xf]
      %v2034 = vld [vmem:[%s2031 + $0x8] sm:$0xf]
      %v2035 = vld [vmem:[%s2031 + $0xc] sm:$0xf]
      %v2036 = vld [vmem:[%s2031 + $0x10] sm:$0xf]
      %v2037 = vld [vmem:[%s2031 + $0x14] sm:$0xf]
      %v2038 = vld [vmem:[%s2031 + $0x18] sm:$0xf]
      %v2039 = vld [vmem:[%s2031 + $0x1c] sm:$0xf]
      %v2040 = vld [vmem:[%s2031 + $0x20] sm:$0xf]
      %v2041 = vld [vmem:[%s2031 + $0x24] sm:$0xf]
      %v2042 = vld [vmem:[%s2031 + $0x28] sm:$0xf]
      %v2043 = vld [vmem:[%s2031 + $0x2c] sm:$0xf]
      %v2044 = vld [vmem:[%s2031 + $0x30] sm:$0xf]
      %v2045 = vld [vmem:[%s2031 + $0x34] sm:$0xf]
      %v2046 = vld [vmem:[%s2031 + $0x38] sm:$0xf]
      %v2047 = vld [vmem:[%s2031 + $0x3c] sm:$0xf]
      %v2064 = vunpack.c.l.b16 %v2032
      %v2065 = vunpack.c.l.b16 %v2033
      %v2066 = vunpack.c.l.b16 %v2034
      %v2067 = vunpack.c.l.b16 %v2035
      %v2068 = vunpack.c.l.b16 %v2036
      %v2069 = vunpack.c.l.b16 %v2037
      %v2070 = vunpack.c.l.b16 %v2038
      %v2071 = vunpack.c.l.b16 %v2039
      %v2072 = vunpack.c.l.b16 %v2040
      %v2073 = vunpack.c.l.b16 %v2041
      %v2074 = vunpack.c.l.b16 %v2042
      %v2075 = vunpack.c.l.b16 %v2043
      %v2076 = vunpack.c.l.b16 %v2044
      %v2077 = vunpack.c.l.b16 %v2045
      %v2078 = vunpack.c.l.b16 %v2046
      %v2079 = vunpack.c.l.b16 %v2047
      %v2080 = vpack.c.b16 %v2065, %v2064
      %v2081 = vpack.c.b16 %v2067, %v2066
      %v2082 = vpack.c.b16 %v2069, %v2068
      %v2083 = vpack.c.b16 %v2071, %v2070
      %v2084 = vpack.c.b16 %v2073, %v2072
      %v2085 = vpack.c.b16 %v2075, %v2074
      %v2086 = vpack.c.b16 %v2077, %v2076
      %v2087 = vpack.c.b16 %v2079, %v2078
      %2096 = vmatpush.bf16.msra.mxu0 %v2087
      %2097 = vmatpush.bf16.msra.mxu0 %v2086
      %2098 = vmatpush.bf16.msra.mxu0 %v2085
      %2099 = vmatpush.bf16.msra.mxu0 %v2084
      %2100 = vmatpush.bf16.msra.mxu0 %v2083
      %2101 = vmatpush.bf16.msra.mxu0 %v2082
      %2102 = vmatpush.bf16.msra.mxu0 %v2081
      %2103 = vmatpush.bf16.msra.mxu0 %v2080
      %2104 = vmatmul.bf16.gmra.mxu0 %v2015
      %v2105 = vpop.f32.mrf.mxu0
      %v2106 = vadd.f32 0.0, %v2105
      %v2107 = vpop.f32.mrf.mxu0
      %v2108 = vadd.f32 0.0, %v2107
      %2109 = vmatmul.bf16.gmra.mxu0 %v2016
      %v2110 = vpop.f32.mrf.mxu0
      %v2111 = vadd.f32 0.0, %v2110
      %v2112 = vpop.f32.mrf.mxu0
      %v2113 = vadd.f32 0.0, %v2112
      %2114 = vmatmul.bf16.gmra.mxu0 %v2017
      %v2115 = vpop.f32.mrf.mxu0
      %v2116 = vadd.f32 0.0, %v2115
      %v2117 = vpop.f32.mrf.mxu0
      %v2118 = vadd.f32 0.0, %v2117
      %2119 = vmatmul.bf16.gmra.mxu0 %v2018
      %v2120 = vpop.f32.mrf.mxu0
      %v2121 = vadd.f32 0.0, %v2120
      %v2122 = vpop.f32.mrf.mxu0
      %v2123 = vadd.f32 0.0, %v2122
      %2124 = vmatmul.bf16.gmra.mxu0 %v2019
      %v2125 = vpop.f32.mrf.mxu0
      %v2126 = vadd.f32 0.0, %v2125
      %v2127 = vpop.f32.mrf.mxu0
      %v2128 = vadd.f32 0.0, %v2127
      %2129 = vmatmul.bf16.gmra.mxu0 %v2020
      %v2130 = vpop.f32.mrf.mxu0
      %v2131 = vadd.f32 0.0, %v2130
      %v2132 = vpop.f32.mrf.mxu0
      %v2133 = vadd.f32 0.0, %v2132
      %2134 = vmatmul.bf16.gmra.mxu0 %v2021
      %v2135 = vpop.f32.mrf.mxu0
      %v2136 = vadd.f32 0.0, %v2135
      %v2137 = vpop.f32.mrf.mxu0
      %v2138 = vadd.f32 0.0, %v2137
      %2139 = vmatmul.bf16.gmra.mxu0 %v2022
      %v2140 = vpop.f32.mrf.mxu0
      %v2141 = vadd.f32 0.0, %v2140
      %v2142 = vpop.f32.mrf.mxu0
      %v2143 = vadd.f32 0.0, %v2142
      %2144 = vmatmul.bf16.gmra.mxu0 %v2023
      %v2145 = vpop.f32.mrf.mxu0
      %v2146 = vadd.f32 0.0, %v2145
      %v2147 = vpop.f32.mrf.mxu0
      %v2148 = vadd.f32 0.0, %v2147
      %2149 = vmatmul.bf16.gmra.mxu0 %v2024
      %v2150 = vpop.f32.mrf.mxu0
      %v2151 = vadd.f32 0.0, %v2150
      %v2152 = vpop.f32.mrf.mxu0
      %v2153 = vadd.f32 0.0, %v2152
      %2154 = vmatmul.bf16.gmra.mxu0 %v2025
      %v2155 = vpop.f32.mrf.mxu0
      %v2156 = vadd.f32 0.0, %v2155
      %v2157 = vpop.f32.mrf.mxu0
      %v2158 = vadd.f32 0.0, %v2157
      %2159 = vmatmul.bf16.gmra.mxu0 %v2026
      %v2160 = vpop.f32.mrf.mxu0
      %v2161 = vadd.f32 0.0, %v2160
      %v2162 = vpop.f32.mrf.mxu0
      %v2163 = vadd.f32 0.0, %v2162
      %2164 = vmatmul.bf16.gmra.mxu0 %v2027
      %v2165 = vpop.f32.mrf.mxu0
      %v2166 = vadd.f32 0.0, %v2165
      %v2167 = vpop.f32.mrf.mxu0
      %v2168 = vadd.f32 0.0, %v2167
      %2169 = vmatmul.bf16.gmra.mxu0 %v2028
      %v2170 = vpop.f32.mrf.mxu0
      %v2171 = vadd.f32 0.0, %v2170
      %v2172 = vpop.f32.mrf.mxu0
      %v2173 = vadd.f32 0.0, %v2172
      %2174 = vmatmul.bf16.gmra.mxu0 %v2029
      %v2175 = vpop.f32.mrf.mxu0
      %v2176 = vadd.f32 0.0, %v2175
      %v2177 = vpop.f32.mrf.mxu0
      %v2178 = vadd.f32 0.0, %v2177
      %2179 = vmatmul.bf16.gmra.mxu0 %v2030
      %v2180 = vpop.f32.mrf.mxu0
      %v2181 = vadd.f32 0.0, %v2180
      %v2182 = vpop.f32.mrf.mxu0
      %v2183 = vadd.f32 0.0, %v2182
      %2184 = vdwg.mxu0
      %v2185 = vadd.f32 %v1823, %v2106
      %v2186 = vadd.f32 %v1824, %v2108
      %v2187 = vadd.f32 %v1825, %v2111
      %v2188 = vadd.f32 %v1826, %v2113
      %v2189 = vadd.f32 %v1827, %v2116
      %v2190 = vadd.f32 %v1828, %v2118
      %v2191 = vadd.f32 %v1829, %v2121
      %v2192 = vadd.f32 %v1830, %v2123
      %v2193 = vadd.f32 %v1831, %v2126
      %v2194 = vadd.f32 %v1832, %v2128
      %v2195 = vadd.f32 %v1833, %v2131
      %v2196 = vadd.f32 %v1834, %v2133
      %v2197 = vadd.f32 %v1835, %v2136
      %v2198 = vadd.f32 %v1836, %v2138
      %v2199 = vadd.f32 %v1837, %v2141
      %v2200 = vadd.f32 %v1838, %v2143
      %v2201 = vadd.f32 %v1839, %v2146
      %v2202 = vadd.f32 %v1840, %v2148
      %v2203 = vadd.f32 %v1841, %v2151
      %v2204 = vadd.f32 %v1842, %v2153
      %v2205 = vadd.f32 %v1843, %v2156
      %v2206 = vadd.f32 %v1844, %v2158
      %v2207 = vadd.f32 %v1845, %v2161
      %v2208 = vadd.f32 %v1846, %v2163
      %v2209 = vadd.f32 %v1847, %v2166
      %v2210 = vadd.f32 %v1848, %v2168
      %v2211 = vadd.f32 %v1849, %v2171
      %v2212 = vadd.f32 %v1850, %v2173
      %v2213 = vadd.f32 %v1851, %v2176
      %v2214 = vadd.f32 %v1852, %v2178
      %v2215 = vadd.f32 %v1853, %v2181
      %v2216 = vadd.f32 %v1854, %v2183
      %s2217 = scalar_lea.vmem %s165, 24
      %v2218 = vld [vmem:[%s2217] sm:$0xf]
      %v2219 = vld [vmem:[%s2217 + $0x4] sm:$0xf]
      %v2220 = vld [vmem:[%s2217 + $0xc] sm:$0xf]
      %v2221 = vld [vmem:[%s2217 + $0x10] sm:$0xf]
      %v2222 = vld [vmem:[%s2217 + $0x18] sm:$0xf]
      %v2223 = vld [vmem:[%s2217 + $0x1c] sm:$0xf]
      %v2224 = vld [vmem:[%s2217 + $0x24] sm:$0xf]
      %v2225 = vld [vmem:[%s2217 + $0x28] sm:$0xf]
      %v2226 = vld [vmem:[%s2217 + $0x30] sm:$0xf]
      %v2227 = vld [vmem:[%s2217 + $0x34] sm:$0xf]
      %v2228 = vld [vmem:[%s2217 + $0x3c] sm:$0xf]
      %v2229 = vld [vmem:[%s2217 + $0x40] sm:$0xf]
      %v2230 = vld [vmem:[%s2217 + $0x48] sm:$0xf]
      %v2231 = vld [vmem:[%s2217 + $0x4c] sm:$0xf]
      %v2232 = vld [vmem:[%s2217 + $0x54] sm:$0xf]
      %v2233 = vld [vmem:[%s2217 + $0x58] sm:$0xf]
      %v2234 = vld [vmem:[%s2217 + $0x60] sm:$0xf]
      %v2235 = vld [vmem:[%s2217 + $0x64] sm:$0xf]
      %v2236 = vld [vmem:[%s2217 + $0x6c] sm:$0xf]
      %v2237 = vld [vmem:[%s2217 + $0x70] sm:$0xf]
      %v2238 = vld [vmem:[%s2217 + $0x78] sm:$0xf]
      %v2239 = vld [vmem:[%s2217 + $0x7c] sm:$0xf]
      %v2240 = vld [vmem:[%s2217 + $0x84] sm:$0xf]
      %v2241 = vld [vmem:[%s2217 + $0x88] sm:$0xf]
      %v2242 = vld [vmem:[%s2217 + $0x90] sm:$0xf]
      %v2243 = vld [vmem:[%s2217 + $0x94] sm:$0xf]
      %v2244 = vld [vmem:[%s2217 + $0x9c] sm:$0xf]
      %v2245 = vld [vmem:[%s2217 + $0xa0] sm:$0xf]
      %v2246 = vld [vmem:[%s2217 + $0xa8] sm:$0xf]
      %v2247 = vld [vmem:[%s2217 + $0xac] sm:$0xf]
      %v2248 = vld [vmem:[%s2217 + $0xb4] sm:$0xf]
      %v2249 = vld [vmem:[%s2217 + $0xb8] sm:$0xf]
      %v2250 = vunpack.c.l.bf16 %v2218
      %v2251 = vunpack.c.l.bf16 %v2219
      %v2252 = vunpack.c.l.bf16 %v2220
      %v2253 = vunpack.c.l.bf16 %v2221
      %v2254 = vunpack.c.l.bf16 %v2222
      %v2255 = vunpack.c.l.bf16 %v2223
      %v2256 = vunpack.c.l.bf16 %v2224
      %v2257 = vunpack.c.l.bf16 %v2225
      %v2258 = vunpack.c.l.bf16 %v2226
      %v2259 = vunpack.c.l.bf16 %v2227
      %v2260 = vunpack.c.l.bf16 %v2228
      %v2261 = vunpack.c.l.bf16 %v2229
      %v2262 = vunpack.c.l.bf16 %v2230
      %v2263 = vunpack.c.l.bf16 %v2231
      %v2264 = vunpack.c.l.bf16 %v2232
      %v2265 = vunpack.c.l.bf16 %v2233
      %v2266 = vunpack.c.l.bf16 %v2234
      %v2267 = vunpack.c.l.bf16 %v2235
      %v2268 = vunpack.c.l.bf16 %v2236
      %v2269 = vunpack.c.l.bf16 %v2237
      %v2270 = vunpack.c.l.bf16 %v2238
      %v2271 = vunpack.c.l.bf16 %v2239
      %v2272 = vunpack.c.l.bf16 %v2240
      %v2273 = vunpack.c.l.bf16 %v2241
      %v2274 = vunpack.c.l.bf16 %v2242
      %v2275 = vunpack.c.l.bf16 %v2243
      %v2276 = vunpack.c.l.bf16 %v2244
      %v2277 = vunpack.c.l.bf16 %v2245
      %v2278 = vunpack.c.l.bf16 %v2246
      %v2279 = vunpack.c.l.bf16 %v2247
      %v2280 = vunpack.c.l.bf16 %v2248
      %v2281 = vunpack.c.l.bf16 %v2249
      %v2282 = vpack.c.bf16 %v2251, %v2250
      %v2283 = vpack.c.bf16 %v2253, %v2252
      %v2284 = vpack.c.bf16 %v2255, %v2254
      %v2285 = vpack.c.bf16 %v2257, %v2256
      %v2286 = vpack.c.bf16 %v2259, %v2258
      %v2287 = vpack.c.bf16 %v2261, %v2260
      %v2288 = vpack.c.bf16 %v2263, %v2262
      %v2289 = vpack.c.bf16 %v2265, %v2264
      %v2290 = vpack.c.bf16 %v2267, %v2266
      %v2291 = vpack.c.bf16 %v2269, %v2268
      %v2292 = vpack.c.bf16 %v2271, %v2270
      %v2293 = vpack.c.bf16 %v2273, %v2272
      %v2294 = vpack.c.bf16 %v2275, %v2274
      %v2295 = vpack.c.bf16 %v2277, %v2276
      %v2296 = vpack.c.bf16 %v2279, %v2278
      %v2297 = vpack.c.bf16 %v2281, %v2280
      %s2298 = scalar_lea.vmem %s1, 384
      %v2299 = vld [vmem:[%s2298] sm:$0xf]
      %v2300 = vld [vmem:[%s2298 + $0x4] sm:$0xf]
      %v2301 = vld [vmem:[%s2298 + $0x8] sm:$0xf]
      %v2302 = vld [vmem:[%s2298 + $0xc] sm:$0xf]
      %v2303 = vld [vmem:[%s2298 + $0x10] sm:$0xf]
      %v2304 = vld [vmem:[%s2298 + $0x14] sm:$0xf]
      %v2305 = vld [vmem:[%s2298 + $0x18] sm:$0xf]
      %v2306 = vld [vmem:[%s2298 + $0x1c] sm:$0xf]
      %v2307 = vld [vmem:[%s2298 + $0x20] sm:$0xf]
      %v2308 = vld [vmem:[%s2298 + $0x24] sm:$0xf]
      %v2309 = vld [vmem:[%s2298 + $0x28] sm:$0xf]
      %v2310 = vld [vmem:[%s2298 + $0x2c] sm:$0xf]
      %v2311 = vld [vmem:[%s2298 + $0x30] sm:$0xf]
      %v2312 = vld [vmem:[%s2298 + $0x34] sm:$0xf]
      %v2313 = vld [vmem:[%s2298 + $0x38] sm:$0xf]
      %v2314 = vld [vmem:[%s2298 + $0x3c] sm:$0xf]
      %v2331 = vunpack.c.l.b16 %v2299
      %v2332 = vunpack.c.l.b16 %v2300
      %v2333 = vunpack.c.l.b16 %v2301
      %v2334 = vunpack.c.l.b16 %v2302
      %v2335 = vunpack.c.l.b16 %v2303
      %v2336 = vunpack.c.l.b16 %v2304
      %v2337 = vunpack.c.l.b16 %v2305
      %v2338 = vunpack.c.l.b16 %v2306
      %v2339 = vunpack.c.l.b16 %v2307
      %v2340 = vunpack.c.l.b16 %v2308
      %v2341 = vunpack.c.l.b16 %v2309
      %v2342 = vunpack.c.l.b16 %v2310
      %v2343 = vunpack.c.l.b16 %v2311
      %v2344 = vunpack.c.l.b16 %v2312
      %v2345 = vunpack.c.l.b16 %v2313
      %v2346 = vunpack.c.l.b16 %v2314
      %v2347 = vpack.c.b16 %v2332, %v2331
      %v2348 = vpack.c.b16 %v2334, %v2333
      %v2349 = vpack.c.b16 %v2336, %v2335
      %v2350 = vpack.c.b16 %v2338, %v2337
      %v2351 = vpack.c.b16 %v2340, %v2339
      %v2352 = vpack.c.b16 %v2342, %v2341
      %v2353 = vpack.c.b16 %v2344, %v2343
      %v2354 = vpack.c.b16 %v2346, %v2345
      %2363 = vmatpush.bf16.msra.mxu0 %v2354
      %2364 = vmatpush.bf16.msra.mxu0 %v2353
      %2365 = vmatpush.bf16.msra.mxu0 %v2352
      %2366 = vmatpush.bf16.msra.mxu0 %v2351
      %2367 = vmatpush.bf16.msra.mxu0 %v2350
      %2368 = vmatpush.bf16.msra.mxu0 %v2349
      %2369 = vmatpush.bf16.msra.mxu0 %v2348
      %2370 = vmatpush.bf16.msra.mxu0 %v2347
      %2371 = vmatmul.bf16.gmra.mxu0 %v2282
      %v2372 = vpop.f32.mrf.mxu0
      %v2373 = vadd.f32 0.0, %v2372
      %v2374 = vpop.f32.mrf.mxu0
      %v2375 = vadd.f32 0.0, %v2374
      %2376 = vmatmul.bf16.gmra.mxu0 %v2283
      %v2377 = vpop.f32.mrf.mxu0
      %v2378 = vadd.f32 0.0, %v2377
      %v2379 = vpop.f32.mrf.mxu0
      %v2380 = vadd.f32 0.0, %v2379
      %2381 = vmatmul.bf16.gmra.mxu0 %v2284
      %v2382 = vpop.f32.mrf.mxu0
      %v2383 = vadd.f32 0.0, %v2382
      %v2384 = vpop.f32.mrf.mxu0
      %v2385 = vadd.f32 0.0, %v2384
      %2386 = vmatmul.bf16.gmra.mxu0 %v2285
      %v2387 = vpop.f32.mrf.mxu0
      %v2388 = vadd.f32 0.0, %v2387
      %v2389 = vpop.f32.mrf.mxu0
      %v2390 = vadd.f32 0.0, %v2389
      %2391 = vmatmul.bf16.gmra.mxu0 %v2286
      %v2392 = vpop.f32.mrf.mxu0
      %v2393 = vadd.f32 0.0, %v2392
      %v2394 = vpop.f32.mrf.mxu0
      %v2395 = vadd.f32 0.0, %v2394
      %2396 = vmatmul.bf16.gmra.mxu0 %v2287
      %v2397 = vpop.f32.mrf.mxu0
      %v2398 = vadd.f32 0.0, %v2397
      %v2399 = vpop.f32.mrf.mxu0
      %v2400 = vadd.f32 0.0, %v2399
      %2401 = vmatmul.bf16.gmra.mxu0 %v2288
      %v2402 = vpop.f32.mrf.mxu0
      %v2403 = vadd.f32 0.0, %v2402
      %v2404 = vpop.f32.mrf.mxu0
      %v2405 = vadd.f32 0.0, %v2404
      %2406 = vmatmul.bf16.gmra.mxu0 %v2289
      %v2407 = vpop.f32.mrf.mxu0
      %v2408 = vadd.f32 0.0, %v2407
      %v2409 = vpop.f32.mrf.mxu0
      %v2410 = vadd.f32 0.0, %v2409
      %2411 = vmatmul.bf16.gmra.mxu0 %v2290
      %v2412 = vpop.f32.mrf.mxu0
      %v2413 = vadd.f32 0.0, %v2412
      %v2414 = vpop.f32.mrf.mxu0
      %v2415 = vadd.f32 0.0, %v2414
      %2416 = vmatmul.bf16.gmra.mxu0 %v2291
      %v2417 = vpop.f32.mrf.mxu0
      %v2418 = vadd.f32 0.0, %v2417
      %v2419 = vpop.f32.mrf.mxu0
      %v2420 = vadd.f32 0.0, %v2419
      %2421 = vmatmul.bf16.gmra.mxu0 %v2292
      %v2422 = vpop.f32.mrf.mxu0
      %v2423 = vadd.f32 0.0, %v2422
      %v2424 = vpop.f32.mrf.mxu0
      %v2425 = vadd.f32 0.0, %v2424
      %2426 = vmatmul.bf16.gmra.mxu0 %v2293
      %v2427 = vpop.f32.mrf.mxu0
      %v2428 = vadd.f32 0.0, %v2427
      %v2429 = vpop.f32.mrf.mxu0
      %v2430 = vadd.f32 0.0, %v2429
      %2431 = vmatmul.bf16.gmra.mxu0 %v2294
      %v2432 = vpop.f32.mrf.mxu0
      %v2433 = vadd.f32 0.0, %v2432
      %v2434 = vpop.f32.mrf.mxu0
      %v2435 = vadd.f32 0.0, %v2434
      %2436 = vmatmul.bf16.gmra.mxu0 %v2295
      %v2437 = vpop.f32.mrf.mxu0
      %v2438 = vadd.f32 0.0, %v2437
      %v2439 = vpop.f32.mrf.mxu0
      %v2440 = vadd.f32 0.0, %v2439
      %2441 = vmatmul.bf16.gmra.mxu0 %v2296
      %v2442 = vpop.f32.mrf.mxu0
      %v2443 = vadd.f32 0.0, %v2442
      %v2444 = vpop.f32.mrf.mxu0
      %v2445 = vadd.f32 0.0, %v2444
      %2446 = vmatmul.bf16.gmra.mxu0 %v2297
      %v2447 = vpop.f32.mrf.mxu0
      %v2448 = vadd.f32 0.0, %v2447
      %v2449 = vpop.f32.mrf.mxu0
      %v2450 = vadd.f32 0.0, %v2449
      %2451 = vdwg.mxu0
      %v2452 = vadd.f32 %v2185, %v2373
      %v2453 = vadd.f32 %v2186, %v2375
      %v2454 = vadd.f32 %v2187, %v2378
      %v2455 = vadd.f32 %v2188, %v2380
      %v2456 = vadd.f32 %v2189, %v2383
      %v2457 = vadd.f32 %v2190, %v2385
      %v2458 = vadd.f32 %v2191, %v2388
      %v2459 = vadd.f32 %v2192, %v2390
      %v2460 = vadd.f32 %v2193, %v2393
      %v2461 = vadd.f32 %v2194, %v2395
      %v2462 = vadd.f32 %v2195, %v2398
      %v2463 = vadd.f32 %v2196, %v2400
      %v2464 = vadd.f32 %v2197, %v2403
      %v2465 = vadd.f32 %v2198, %v2405
      %v2466 = vadd.f32 %v2199, %v2408
      %v2467 = vadd.f32 %v2200, %v2410
      %v2468 = vadd.f32 %v2201, %v2413
      %v2469 = vadd.f32 %v2202, %v2415
      %v2470 = vadd.f32 %v2203, %v2418
      %v2471 = vadd.f32 %v2204, %v2420
      %v2472 = vadd.f32 %v2205, %v2423
      %v2473 = vadd.f32 %v2206, %v2425
      %v2474 = vadd.f32 %v2207, %v2428
      %v2475 = vadd.f32 %v2208, %v2430
      %v2476 = vadd.f32 %v2209, %v2433
      %v2477 = vadd.f32 %v2210, %v2435
      %v2478 = vadd.f32 %v2211, %v2438
      %v2479 = vadd.f32 %v2212, %v2440
      %v2480 = vadd.f32 %v2213, %v2443
      %v2481 = vadd.f32 %v2214, %v2445
      %v2482 = vadd.f32 %v2215, %v2448
      %v2483 = vadd.f32 %v2216, %v2450
      %v2484 = vld [vmem:[%s2217] sm:$0xf]
      %v2485 = vld [vmem:[%s2217 + $0x4] sm:$0xf]
      %v2486 = vld [vmem:[%s2217 + $0x8] sm:$0x1]
      %v2487 = vld [vmem:[%s2217 + $0xc] sm:$0xf]
      %v2488 = vld [vmem:[%s2217 + $0x10] sm:$0xf]
      %v2489 = vld [vmem:[%s2217 + $0x14] sm:$0x1]
      %v2490 = vld [vmem:[%s2217 + $0x18] sm:$0xf]
      %v2491 = vld [vmem:[%s2217 + $0x1c] sm:$0xf]
      %v2492 = vld [vmem:[%s2217 + $0x20] sm:$0x1]
      %v2493 = vld [vmem:[%s2217 + $0x24] sm:$0xf]
      %v2494 = vld [vmem:[%s2217 + $0x28] sm:$0xf]
      %v2495 = vld [vmem:[%s2217 + $0x2c] sm:$0x1]
      %v2496 = vld [vmem:[%s2217 + $0x30] sm:$0xf]
      %v2497 = vld [vmem:[%s2217 + $0x34] sm:$0xf]
      %v2498 = vld [vmem:[%s2217 + $0x38] sm:$0x1]
      %v2499 = vld [vmem:[%s2217 + $0x3c] sm:$0xf]
      %v2500 = vld [vmem:[%s2217 + $0x40] sm:$0xf]
      %v2501 = vld [vmem:[%s2217 + $0x44] sm:$0x1]
      %v2502 = vld [vmem:[%s2217 + $0x48] sm:$0xf]
      %v2503 = vld [vmem:[%s2217 + $0x4c] sm:$0xf]
      %v2504 = vld [vmem:[%s2217 + $0x50] sm:$0x1]
      %v2505 = vld [vmem:[%s2217 + $0x54] sm:$0xf]
      %v2506 = vld [vmem:[%s2217 + $0x58] sm:$0xf]
      %v2507 = vld [vmem:[%s2217 + $0x5c] sm:$0x1]
      %v2508 = vld [vmem:[%s2217 + $0x60] sm:$0xf]
      %v2509 = vld [vmem:[%s2217 + $0x64] sm:$0xf]
      %v2510 = vld [vmem:[%s2217 + $0x68] sm:$0x1]
      %v2511 = vld [vmem:[%s2217 + $0x6c] sm:$0xf]
      %v2512 = vld [vmem:[%s2217 + $0x70] sm:$0xf]
      %v2513 = vld [vmem:[%s2217 + $0x74] sm:$0x1]
      %v2514 = vld [vmem:[%s2217 + $0x78] sm:$0xf]
      %v2515 = vld [vmem:[%s2217 + $0x7c] sm:$0xf]
      %v2516 = vld [vmem:[%s2217 + $0x80] sm:$0x1]
      %v2517 = vld [vmem:[%s2217 + $0x84] sm:$0xf]
      %v2518 = vld [vmem:[%s2217 + $0x88] sm:$0xf]
      %v2519 = vld [vmem:[%s2217 + $0x8c] sm:$0x1]
      %v2520 = vld [vmem:[%s2217 + $0x90] sm:$0xf]
      %v2521 = vld [vmem:[%s2217 + $0x94] sm:$0xf]
      %v2522 = vld [vmem:[%s2217 + $0x98] sm:$0x1]
      %v2523 = vld [vmem:[%s2217 + $0x9c] sm:$0xf]
      %v2524 = vld [vmem:[%s2217 + $0xa0] sm:$0xf]
      %v2525 = vld [vmem:[%s2217 + $0xa4] sm:$0x1]
      %v2526 = vld [vmem:[%s2217 + $0xa8] sm:$0xf]
      %v2527 = vld [vmem:[%s2217 + $0xac] sm:$0xf]
      %v2528 = vld [vmem:[%s2217 + $0xb0] sm:$0x1]
      %v2529 = vld [vmem:[%s2217 + $0xb4] sm:$0xf]
      %v2530 = vld [vmem:[%s2217 + $0xb8] sm:$0xf]
      %v2531 = vld [vmem:[%s2217 + $0xbc] sm:$0x1]
      %v2532 = vunpack.c.l.bf16 %v2484
      %v2533 = vunpack.c.l.bf16 %v2485
      %v2534 = vunpack.c.l.bf16 %v2486
      %v2535 = vunpack.c.l.bf16 %v2487
      %v2536 = vunpack.c.l.bf16 %v2488
      %v2537 = vunpack.c.l.bf16 %v2489
      %v2538 = vunpack.c.l.bf16 %v2490
      %v2539 = vunpack.c.l.bf16 %v2491
      %v2540 = vunpack.c.l.bf16 %v2492
      %v2541 = vunpack.c.l.bf16 %v2493
      %v2542 = vunpack.c.l.bf16 %v2494
      %v2543 = vunpack.c.l.bf16 %v2495
      %v2544 = vunpack.c.l.bf16 %v2496
      %v2545 = vunpack.c.l.bf16 %v2497
      %v2546 = vunpack.c.l.bf16 %v2498
      %v2547 = vunpack.c.l.bf16 %v2499
      %v2548 = vunpack.c.l.bf16 %v2500
      %v2549 = vunpack.c.l.bf16 %v2501
      %v2550 = vunpack.c.l.bf16 %v2502
      %v2551 = vunpack.c.l.bf16 %v2503
      %v2552 = vunpack.c.l.bf16 %v2504
      %v2553 = vunpack.c.l.bf16 %v2505
      %v2554 = vunpack.c.l.bf16 %v2506
      %v2555 = vunpack.c.l.bf16 %v2507
      %v2556 = vunpack.c.l.bf16 %v2508
      %v2557 = vunpack.c.l.bf16 %v2509
      %v2558 = vunpack.c.l.bf16 %v2510
      %v2559 = vunpack.c.l.bf16 %v2511
      %v2560 = vunpack.c.l.bf16 %v2512
      %v2561 = vunpack.c.l.bf16 %v2513
      %v2562 = vunpack.c.l.bf16 %v2514
      %v2563 = vunpack.c.l.bf16 %v2515
      %v2564 = vunpack.c.l.bf16 %v2516
      %v2565 = vunpack.c.l.bf16 %v2517
      %v2566 = vunpack.c.l.bf16 %v2518
      %v2567 = vunpack.c.l.bf16 %v2519
      %v2568 = vunpack.c.l.bf16 %v2520
      %v2569 = vunpack.c.l.bf16 %v2521
      %v2570 = vunpack.c.l.bf16 %v2522
      %v2571 = vunpack.c.l.bf16 %v2523
      %v2572 = vunpack.c.l.bf16 %v2524
      %v2573 = vunpack.c.l.bf16 %v2525
      %v2574 = vunpack.c.l.bf16 %v2526
      %v2575 = vunpack.c.l.bf16 %v2527
      %v2576 = vunpack.c.l.bf16 %v2528
      %v2577 = vunpack.c.l.bf16 %v2529
      %v2578 = vunpack.c.l.bf16 %v2530
      %v2579 = vunpack.c.l.bf16 %v2531
      %v2628 = vrot.slane %v2532, 1
      %v2629 = vrot.slane %v2533, 1
      %v2630 = vsel %vm347, %v2628, %v2629
      %v2631 = vrot.slane %v2534, 1
      %v2632 = vsel %vm347, %v2629, %v2631
      %v2633 = vrot.slane %v2535, 1
      %v2634 = vrot.slane %v2536, 1
      %v2635 = vsel %vm347, %v2633, %v2634
      %v2636 = vrot.slane %v2537, 1
      %v2637 = vsel %vm347, %v2634, %v2636
      %v2638 = vrot.slane %v2538, 1
      %v2639 = vrot.slane %v2539, 1
      %v2640 = vsel %vm347, %v2638, %v2639
      %v2641 = vrot.slane %v2540, 1
      %v2642 = vsel %vm347, %v2639, %v2641
      %v2643 = vrot.slane %v2541, 1
      %v2644 = vrot.slane %v2542, 1
      %v2645 = vsel %vm347, %v2643, %v2644
      %v2646 = vrot.slane %v2543, 1
      %v2647 = vsel %vm347, %v2644, %v2646
      %v2648 = vrot.slane %v2544, 1
      %v2649 = vrot.slane %v2545, 1
      %v2650 = vsel %vm347, %v2648, %v2649
      %v2651 = vrot.slane %v2546, 1
      %v2652 = vsel %vm347, %v2649, %v2651
      %v2653 = vrot.slane %v2547, 1
      %v2654 = vrot.slane %v2548, 1
      %v2655 = vsel %vm347, %v2653, %v2654
      %v2656 = vrot.slane %v2549, 1
      %v2657 = vsel %vm347, %v2654, %v2656
      %v2658 = vrot.slane %v2550, 1
      %v2659 = vrot.slane %v2551, 1
      %v2660 = vsel %vm347, %v2658, %v2659
      %v2661 = vrot.slane %v2552, 1
      %v2662 = vsel %vm347, %v2659, %v2661
      %v2663 = vrot.slane %v2553, 1
      %v2664 = vrot.slane %v2554, 1
      %v2665 = vsel %vm347, %v2663, %v2664
      %v2666 = vrot.slane %v2555, 1
      %v2667 = vsel %vm347, %v2664, %v2666
      %v2668 = vrot.slane %v2556, 1
      %v2669 = vrot.slane %v2557, 1
      %v2670 = vsel %vm347, %v2668, %v2669
      %v2671 = vrot.slane %v2558, 1
      %v2672 = vsel %vm347, %v2669, %v2671
      %v2673 = vrot.slane %v2559, 1
      %v2674 = vrot.slane %v2560, 1
      %v2675 = vsel %vm347, %v2673, %v2674
      %v2676 = vrot.slane %v2561, 1
      %v2677 = vsel %vm347, %v2674, %v2676
      %v2678 = vrot.slane %v2562, 1
      %v2679 = vrot.slane %v2563, 1
      %v2680 = vsel %vm347, %v2678, %v2679
      %v2681 = vrot.slane %v2564, 1
      %v2682 = vsel %vm347, %v2679, %v2681
      %v2683 = vrot.slane %v2565, 1
      %v2684 = vrot.slane %v2566, 1
      %v2685 = vsel %vm347, %v2683, %v2684
      %v2686 = vrot.slane %v2567, 1
      %v2687 = vsel %vm347, %v2684, %v2686
      %v2688 = vrot.slane %v2568, 1
      %v2689 = vrot.slane %v2569, 1
      %v2690 = vsel %vm347, %v2688, %v2689
      %v2691 = vrot.slane %v2570, 1
      %v2692 = vsel %vm347, %v2689, %v2691
      %v2693 = vrot.slane %v2571, 1
      %v2694 = vrot.slane %v2572, 1
      %v2695 = vsel %vm347, %v2693, %v2694
      %v2696 = vrot.slane %v2573, 1
      %v2697 = vsel %vm347, %v2694, %v2696
      %v2698 = vrot.slane %v2574, 1
      %v2699 = vrot.slane %v2575, 1
      %v2700 = vsel %vm347, %v2698, %v2699
      %v2701 = vrot.slane %v2576, 1
      %v2702 = vsel %vm347, %v2699, %v2701
      %v2703 = vrot.slane %v2577, 1
      %v2704 = vrot.slane %v2578, 1
      %v2705 = vsel %vm347, %v2703, %v2704
      %v2706 = vrot.slane %v2579, 1
      %v2707 = vsel %vm347, %v2704, %v2706
      %v2740 = vpack.c.bf16 %v2632, %v2630
      %v2741 = vpack.c.bf16 %v2637, %v2635
      %v2742 = vpack.c.bf16 %v2642, %v2640
      %v2743 = vpack.c.bf16 %v2647, %v2645
      %v2744 = vpack.c.bf16 %v2652, %v2650
      %v2745 = vpack.c.bf16 %v2657, %v2655
      %v2746 = vpack.c.bf16 %v2662, %v2660
      %v2747 = vpack.c.bf16 %v2667, %v2665
      %v2748 = vpack.c.bf16 %v2672, %v2670
      %v2749 = vpack.c.bf16 %v2677, %v2675
      %v2750 = vpack.c.bf16 %v2682, %v2680
      %v2751 = vpack.c.bf16 %v2687, %v2685
      %v2752 = vpack.c.bf16 %v2692, %v2690
      %v2753 = vpack.c.bf16 %v2697, %v2695
      %v2754 = vpack.c.bf16 %v2702, %v2700
      %v2755 = vpack.c.bf16 %v2707, %v2705
      %s2756 = scalar_lea.vmem %s1, 448
      %v2757 = vld [vmem:[%s2756] sm:$0xf]
      %v2758 = vld [vmem:[%s2756 + $0x4] sm:$0xf]
      %v2759 = vld [vmem:[%s2756 + $0x8] sm:$0xf]
      %v2760 = vld [vmem:[%s2756 + $0xc] sm:$0xf]
      %v2761 = vld [vmem:[%s2756 + $0x10] sm:$0xf]
      %v2762 = vld [vmem:[%s2756 + $0x14] sm:$0xf]
      %v2763 = vld [vmem:[%s2756 + $0x18] sm:$0xf]
      %v2764 = vld [vmem:[%s2756 + $0x1c] sm:$0xf]
      %v2765 = vld [vmem:[%s2756 + $0x20] sm:$0xf]
      %v2766 = vld [vmem:[%s2756 + $0x24] sm:$0xf]
      %v2767 = vld [vmem:[%s2756 + $0x28] sm:$0xf]
      %v2768 = vld [vmem:[%s2756 + $0x2c] sm:$0xf]
      %v2769 = vld [vmem:[%s2756 + $0x30] sm:$0xf]
      %v2770 = vld [vmem:[%s2756 + $0x34] sm:$0xf]
      %v2771 = vld [vmem:[%s2756 + $0x38] sm:$0xf]
      %v2772 = vld [vmem:[%s2756 + $0x3c] sm:$0xf]
      %v2789 = vunpack.c.l.b16 %v2757
      %v2790 = vunpack.c.l.b16 %v2758
      %v2791 = vunpack.c.l.b16 %v2759
      %v2792 = vunpack.c.l.b16 %v2760
      %v2793 = vunpack.c.l.b16 %v2761
      %v2794 = vunpack.c.l.b16 %v2762
      %v2795 = vunpack.c.l.b16 %v2763
      %v2796 = vunpack.c.l.b16 %v2764
      %v2797 = vunpack.c.l.b16 %v2765
      %v2798 = vunpack.c.l.b16 %v2766
      %v2799 = vunpack.c.l.b16 %v2767
      %v2800 = vunpack.c.l.b16 %v2768
      %v2801 = vunpack.c.l.b16 %v2769
      %v2802 = vunpack.c.l.b16 %v2770
      %v2803 = vunpack.c.l.b16 %v2771
      %v2804 = vunpack.c.l.b16 %v2772
      %v2805 = vpack.c.b16 %v2790, %v2789
      %v2806 = vpack.c.b16 %v2792, %v2791
      %v2807 = vpack.c.b16 %v2794, %v2793
      %v2808 = vpack.c.b16 %v2796, %v2795
      %v2809 = vpack.c.b16 %v2798, %v2797
      %v2810 = vpack.c.b16 %v2800, %v2799
      %v2811 = vpack.c.b16 %v2802, %v2801
      %v2812 = vpack.c.b16 %v2804, %v2803
      %2821 = vmatpush.bf16.msra.mxu0 %v2812
      %2822 = vmatpush.bf16.msra.mxu0 %v2811
      %2823 = vmatpush.bf16.msra.mxu0 %v2810
      %2824 = vmatpush.bf16.msra.mxu0 %v2809
      %2825 = vmatpush.bf16.msra.mxu0 %v2808
      %2826 = vmatpush.bf16.msra.mxu0 %v2807
      %2827 = vmatpush.bf16.msra.mxu0 %v2806
      %2828 = vmatpush.bf16.msra.mxu0 %v2805
      %2829 = vmatmul.bf16.gmra.mxu0 %v2740
      %v2830 = vpop.f32.mrf.mxu0
      %v2831 = vadd.f32 0.0, %v2830
      %v2832 = vpop.f32.mrf.mxu0
      %v2833 = vadd.f32 0.0, %v2832
      %2834 = vmatmul.bf16.gmra.mxu0 %v2741
      %v2835 = vpop.f32.mrf.mxu0
      %v2836 = vadd.f32 0.0, %v2835
      %v2837 = vpop.f32.mrf.mxu0
      %v2838 = vadd.f32 0.0, %v2837
      %2839 = vmatmul.bf16.gmra.mxu0 %v2742
      %v2840 = vpop.f32.mrf.mxu0
      %v2841 = vadd.f32 0.0, %v2840
      %v2842 = vpop.f32.mrf.mxu0
      %v2843 = vadd.f32 0.0, %v2842
      %2844 = vmatmul.bf16.gmra.mxu0 %v2743
      %v2845 = vpop.f32.mrf.mxu0
      %v2846 = vadd.f32 0.0, %v2845
      %v2847 = vpop.f32.mrf.mxu0
      %v2848 = vadd.f32 0.0, %v2847
      %2849 = vmatmul.bf16.gmra.mxu0 %v2744
      %v2850 = vpop.f32.mrf.mxu0
      %v2851 = vadd.f32 0.0, %v2850
      %v2852 = vpop.f32.mrf.mxu0
      %v2853 = vadd.f32 0.0, %v2852
      %2854 = vmatmul.bf16.gmra.mxu0 %v2745
      %v2855 = vpop.f32.mrf.mxu0
      %v2856 = vadd.f32 0.0, %v2855
      %v2857 = vpop.f32.mrf.mxu0
      %v2858 = vadd.f32 0.0, %v2857
      %2859 = vmatmul.bf16.gmra.mxu0 %v2746
      %v2860 = vpop.f32.mrf.mxu0
      %v2861 = vadd.f32 0.0, %v2860
      %v2862 = vpop.f32.mrf.mxu0
      %v2863 = vadd.f32 0.0, %v2862
      %2864 = vmatmul.bf16.gmra.mxu0 %v2747
      %v2865 = vpop.f32.mrf.mxu0
      %v2866 = vadd.f32 0.0, %v2865
      %v2867 = vpop.f32.mrf.mxu0
      %v2868 = vadd.f32 0.0, %v2867
      %2869 = vmatmul.bf16.gmra.mxu0 %v2748
      %v2870 = vpop.f32.mrf.mxu0
      %v2871 = vadd.f32 0.0, %v2870
      %v2872 = vpop.f32.mrf.mxu0
      %v2873 = vadd.f32 0.0, %v2872
      %2874 = vmatmul.bf16.gmra.mxu0 %v2749
      %v2875 = vpop.f32.mrf.mxu0
      %v2876 = vadd.f32 0.0, %v2875
      %v2877 = vpop.f32.mrf.mxu0
      %v2878 = vadd.f32 0.0, %v2877
      %2879 = vmatmul.bf16.gmra.mxu0 %v2750
      %v2880 = vpop.f32.mrf.mxu0
      %v2881 = vadd.f32 0.0, %v2880
      %v2882 = vpop.f32.mrf.mxu0
      %v2883 = vadd.f32 0.0, %v2882
      %2884 = vmatmul.bf16.gmra.mxu0 %v2751
      %v2885 = vpop.f32.mrf.mxu0
      %v2886 = vadd.f32 0.0, %v2885
      %v2887 = vpop.f32.mrf.mxu0
      %v2888 = vadd.f32 0.0, %v2887
      %2889 = vmatmul.bf16.gmra.mxu0 %v2752
      %v2890 = vpop.f32.mrf.mxu0
      %v2891 = vadd.f32 0.0, %v2890
      %v2892 = vpop.f32.mrf.mxu0
      %v2893 = vadd.f32 0.0, %v2892
      %2894 = vmatmul.bf16.gmra.mxu0 %v2753
      %v2895 = vpop.f32.mrf.mxu0
      %v2896 = vadd.f32 0.0, %v2895
      %v2897 = vpop.f32.mrf.mxu0
      %v2898 = vadd.f32 0.0, %v2897
      %2899 = vmatmul.bf16.gmra.mxu0 %v2754
      %v2900 = vpop.f32.mrf.mxu0
      %v2901 = vadd.f32 0.0, %v2900
      %v2902 = vpop.f32.mrf.mxu0
      %v2903 = vadd.f32 0.0, %v2902
      %2904 = vmatmul.bf16.gmra.mxu0 %v2755
      %v2905 = vpop.f32.mrf.mxu0
      %v2906 = vadd.f32 0.0, %v2905
      %v2907 = vpop.f32.mrf.mxu0
      %v2908 = vadd.f32 0.0, %v2907
      %2909 = vdwg.mxu0
      %v2910 = vadd.f32 %v2452, %v2831
      %v2911 = vadd.f32 %v2453, %v2833
      %v2912 = vadd.f32 %v2454, %v2836
      %v2913 = vadd.f32 %v2455, %v2838
      %v2914 = vadd.f32 %v2456, %v2841
      %v2915 = vadd.f32 %v2457, %v2843
      %v2916 = vadd.f32 %v2458, %v2846
      %v2917 = vadd.f32 %v2459, %v2848
      %v2918 = vadd.f32 %v2460, %v2851
      %v2919 = vadd.f32 %v2461, %v2853
      %v2920 = vadd.f32 %v2462, %v2856
      %v2921 = vadd.f32 %v2463, %v2858
      %v2922 = vadd.f32 %v2464, %v2861
      %v2923 = vadd.f32 %v2465, %v2863
      %v2924 = vadd.f32 %v2466, %v2866
      %v2925 = vadd.f32 %v2467, %v2868
      %v2926 = vadd.f32 %v2468, %v2871
      %v2927 = vadd.f32 %v2469, %v2873
      %v2928 = vadd.f32 %v2470, %v2876
      %v2929 = vadd.f32 %v2471, %v2878
      %v2930 = vadd.f32 %v2472, %v2881
      %v2931 = vadd.f32 %v2473, %v2883
      %v2932 = vadd.f32 %v2474, %v2886
      %v2933 = vadd.f32 %v2475, %v2888
      %v2934 = vadd.f32 %v2476, %v2891
      %v2935 = vadd.f32 %v2477, %v2893
      %v2936 = vadd.f32 %v2478, %v2896
      %v2937 = vadd.f32 %v2479, %v2898
      %v2938 = vadd.f32 %v2480, %v2901
      %v2939 = vadd.f32 %v2481, %v2903
      %v2940 = vadd.f32 %v2482, %v2906
      %v2941 = vadd.f32 %v2483, %v2908
      %v2942 = vld [vmem:[%s2217] sm:$0xe]
      %v2943 = vld [vmem:[%s2217 + $0xc] sm:$0xe]
      %v2944 = vld [vmem:[%s2217 + $0x18] sm:$0xe]
      %v2945 = vld [vmem:[%s2217 + $0x24] sm:$0xe]
      %v2946 = vld [vmem:[%s2217 + $0x30] sm:$0xe]
      %v2947 = vld [vmem:[%s2217 + $0x3c] sm:$0xe]
      %v2948 = vld [vmem:[%s2217 + $0x48] sm:$0xe]
      %v2949 = vld [vmem:[%s2217 + $0x54] sm:$0xe]
      %v2950 = vld [vmem:[%s2217 + $0x60] sm:$0xe]
      %v2951 = vld [vmem:[%s2217 + $0x6c] sm:$0xe]
      %v2952 = vld [vmem:[%s2217 + $0x78] sm:$0xe]
      %v2953 = vld [vmem:[%s2217 + $0x84] sm:$0xe]
      %v2954 = vld [vmem:[%s2217 + $0x90] sm:$0xe]
      %v2955 = vld [vmem:[%s2217 + $0x9c] sm:$0xe]
      %v2956 = vld [vmem:[%s2217 + $0xa8] sm:$0xe]
      %v2957 = vld [vmem:[%s2217 + $0xb4] sm:$0xe]
      %v2958 = vunpack.c.l.bf16 %v2942
      %v2959 = vunpack.c.l.bf16 %v2943
      %v2960 = vunpack.c.l.bf16 %v2944
      %v2961 = vunpack.c.l.bf16 %v2945
      %v2962 = vunpack.c.l.bf16 %v2946
      %v2963 = vunpack.c.l.bf16 %v2947
      %v2964 = vunpack.c.l.bf16 %v2948
      %v2965 = vunpack.c.l.bf16 %v2949
      %v2966 = vunpack.c.l.bf16 %v2950
      %v2967 = vunpack.c.l.bf16 %v2951
      %v2968 = vunpack.c.l.bf16 %v2952
      %v2969 = vunpack.c.l.bf16 %v2953
      %v2970 = vunpack.c.l.bf16 %v2954
      %v2971 = vunpack.c.l.bf16 %v2955
      %v2972 = vunpack.c.l.bf16 %v2956
      %v2973 = vunpack.c.l.bf16 %v2957
      %v2990 = vrot.slane %v2958, 2
      %v2991 = vrot.slane %v2533, 2
      %v2992 = vsel %vm815, %v2990, %v2991
      %v2993 = vrot.slane %v2534, 2
      %v2994 = vsel %vm815, %v2991, %v2993
      %v2995 = vrot.slane %v2959, 2
      %v2996 = vrot.slane %v2536, 2
      %v2997 = vsel %vm815, %v2995, %v2996
      %v2998 = vrot.slane %v2537, 2
      %v2999 = vsel %vm815, %v2996, %v2998
      %v3000 = vrot.slane %v2960, 2
      %v3001 = vrot.slane %v2539, 2
      %v3002 = vsel %vm815, %v3000, %v3001
      %v3003 = vrot.slane %v2540, 2
      %v3004 = vsel %vm815, %v3001, %v3003
      %v3005 = vrot.slane %v2961, 2
      %v3006 = vrot.slane %v2542, 2
      %v3007 = vsel %vm815, %v3005, %v3006
      %v3008 = vrot.slane %v2543, 2
      %v3009 = vsel %vm815, %v3006, %v3008
      %v3010 = vrot.slane %v2962, 2
      %v3011 = vrot.slane %v2545, 2
      %v3012 = vsel %vm815, %v3010, %v3011
      %v3013 = vrot.slane %v2546, 2
      %v3014 = vsel %vm815, %v3011, %v3013
      %v3015 = vrot.slane %v2963, 2
      %v3016 = vrot.slane %v2548, 2
      %v3017 = vsel %vm815, %v3015, %v3016
      %v3018 = vrot.slane %v2549, 2
      %v3019 = vsel %vm815, %v3016, %v3018
      %v3020 = vrot.slane %v2964, 2
      %v3021 = vrot.slane %v2551, 2
      %v3022 = vsel %vm815, %v3020, %v3021
      %v3023 = vrot.slane %v2552, 2
      %v3024 = vsel %vm815, %v3021, %v3023
      %v3025 = vrot.slane %v2965, 2
      %v3026 = vrot.slane %v2554, 2
      %v3027 = vsel %vm815, %v3025, %v3026
      %v3028 = vrot.slane %v2555, 2
      %v3029 = vsel %vm815, %v3026, %v3028
      %v3030 = vrot.slane %v2966, 2
      %v3031 = vrot.slane %v2557, 2
      %v3032 = vsel %vm815, %v3030, %v3031
      %v3033 = vrot.slane %v2558, 2
      %v3034 = vsel %vm815, %v3031, %v3033
      %v3035 = vrot.slane %v2967, 2
      %v3036 = vrot.slane %v2560, 2
      %v3037 = vsel %vm815, %v3035, %v3036
      %v3038 = vrot.slane %v2561, 2
      %v3039 = vsel %vm815, %v3036, %v3038
      %v3040 = vrot.slane %v2968, 2
      %v3041 = vrot.slane %v2563, 2
      %v3042 = vsel %vm815, %v3040, %v3041
      %v3043 = vrot.slane %v2564, 2
      %v3044 = vsel %vm815, %v3041, %v3043
      %v3045 = vrot.slane %v2969, 2
      %v3046 = vrot.slane %v2566, 2
      %v3047 = vsel %vm815, %v3045, %v3046
      %v3048 = vrot.slane %v2567, 2
      %v3049 = vsel %vm815, %v3046, %v3048
      %v3050 = vrot.slane %v2970, 2
      %v3051 = vrot.slane %v2569, 2
      %v3052 = vsel %vm815, %v3050, %v3051
      %v3053 = vrot.slane %v2570, 2
      %v3054 = vsel %vm815, %v3051, %v3053
      %v3055 = vrot.slane %v2971, 2
      %v3056 = vrot.slane %v2572, 2
      %v3057 = vsel %vm815, %v3055, %v3056
      %v3058 = vrot.slane %v2573, 2
      %v3059 = vsel %vm815, %v3056, %v3058
      %v3060 = vrot.slane %v2972, 2
      %v3061 = vrot.slane %v2575, 2
      %v3062 = vsel %vm815, %v3060, %v3061
      %v3063 = vrot.slane %v2576, 2
      %v3064 = vsel %vm815, %v3061, %v3063
      %v3065 = vrot.slane %v2973, 2
      %v3066 = vrot.slane %v2578, 2
      %v3067 = vsel %vm815, %v3065, %v3066
      %v3068 = vrot.slane %v2579, 2
      %v3069 = vsel %vm815, %v3066, %v3068
      %v3102 = vpack.c.bf16 %v2994, %v2992
      %v3103 = vpack.c.bf16 %v2999, %v2997
      %v3104 = vpack.c.bf16 %v3004, %v3002
      %v3105 = vpack.c.bf16 %v3009, %v3007
      %v3106 = vpack.c.bf16 %v3014, %v3012
      %v3107 = vpack.c.bf16 %v3019, %v3017
      %v3108 = vpack.c.bf16 %v3024, %v3022
      %v3109 = vpack.c.bf16 %v3029, %v3027
      %v3110 = vpack.c.bf16 %v3034, %v3032
      %v3111 = vpack.c.bf16 %v3039, %v3037
      %v3112 = vpack.c.bf16 %v3044, %v3042
      %v3113 = vpack.c.bf16 %v3049, %v3047
      %v3114 = vpack.c.bf16 %v3054, %v3052
      %v3115 = vpack.c.bf16 %v3059, %v3057
      %v3116 = vpack.c.bf16 %v3064, %v3062
      %v3117 = vpack.c.bf16 %v3069, %v3067
      %s3118 = scalar_lea.vmem %s1, 512
      %v3119 = vld [vmem:[%s3118] sm:$0xf]
      %v3120 = vld [vmem:[%s3118 + $0x4] sm:$0xf]
      %v3121 = vld [vmem:[%s3118 + $0x8] sm:$0xf]
      %v3122 = vld [vmem:[%s3118 + $0xc] sm:$0xf]
      %v3123 = vld [vmem:[%s3118 + $0x10] sm:$0xf]
      %v3124 = vld [vmem:[%s3118 + $0x14] sm:$0xf]
      %v3125 = vld [vmem:[%s3118 + $0x18] sm:$0xf]
      %v3126 = vld [vmem:[%s3118 + $0x1c] sm:$0xf]
      %v3127 = vld [vmem:[%s3118 + $0x20] sm:$0xf]
      %v3128 = vld [vmem:[%s3118 + $0x24] sm:$0xf]
      %v3129 = vld [vmem:[%s3118 + $0x28] sm:$0xf]
      %v3130 = vld [vmem:[%s3118 + $0x2c] sm:$0xf]
      %v3131 = vld [vmem:[%s3118 + $0x30] sm:$0xf]
      %v3132 = vld [vmem:[%s3118 + $0x34] sm:$0xf]
      %v3133 = vld [vmem:[%s3118 + $0x38] sm:$0xf]
      %v3134 = vld [vmem:[%s3118 + $0x3c] sm:$0xf]
      %v3151 = vunpack.c.l.b16 %v3119
      %v3152 = vunpack.c.l.b16 %v3120
      %v3153 = vunpack.c.l.b16 %v3121
      %v3154 = vunpack.c.l.b16 %v3122
      %v3155 = vunpack.c.l.b16 %v3123
      %v3156 = vunpack.c.l.b16 %v3124
      %v3157 = vunpack.c.l.b16 %v3125
      %v3158 = vunpack.c.l.b16 %v3126
      %v3159 = vunpack.c.l.b16 %v3127
      %v3160 = vunpack.c.l.b16 %v3128
      %v3161 = vunpack.c.l.b16 %v3129
      %v3162 = vunpack.c.l.b16 %v3130
      %v3163 = vunpack.c.l.b16 %v3131
      %v3164 = vunpack.c.l.b16 %v3132
      %v3165 = vunpack.c.l.b16 %v3133
      %v3166 = vunpack.c.l.b16 %v3134
      %v3167 = vpack.c.b16 %v3152, %v3151
      %v3168 = vpack.c.b16 %v3154, %v3153
      %v3169 = vpack.c.b16 %v3156, %v3155
      %v3170 = vpack.c.b16 %v3158, %v3157
      %v3171 = vpack.c.b16 %v3160, %v3159
      %v3172 = vpack.c.b16 %v3162, %v3161
      %v3173 = vpack.c.b16 %v3164, %v3163
      %v3174 = vpack.c.b16 %v3166, %v3165
      %3183 = vmatpush.bf16.msra.mxu0 %v3174
      %3184 = vmatpush.bf16.msra.mxu0 %v3173
      %3185 = vmatpush.bf16.msra.mxu0 %v3172
      %3186 = vmatpush.bf16.msra.mxu0 %v3171
      %3187 = vmatpush.bf16.msra.mxu0 %v3170
      %3188 = vmatpush.bf16.msra.mxu0 %v3169
      %3189 = vmatpush.bf16.msra.mxu0 %v3168
      %3190 = vmatpush.bf16.msra.mxu0 %v3167
      %3191 = vmatmul.bf16.gmra.mxu0 %v3102
      %v3192 = vpop.f32.mrf.mxu0
      %v3193 = vadd.f32 0.0, %v3192
      %v3194 = vpop.f32.mrf.mxu0
      %v3195 = vadd.f32 0.0, %v3194
      %3196 = vmatmul.bf16.gmra.mxu0 %v3103
      %v3197 = vpop.f32.mrf.mxu0
      %v3198 = vadd.f32 0.0, %v3197
      %v3199 = vpop.f32.mrf.mxu0
      %v3200 = vadd.f32 0.0, %v3199
      %3201 = vmatmul.bf16.gmra.mxu0 %v3104
      %v3202 = vpop.f32.mrf.mxu0
      %v3203 = vadd.f32 0.0, %v3202
      %v3204 = vpop.f32.mrf.mxu0
      %v3205 = vadd.f32 0.0, %v3204
      %3206 = vmatmul.bf16.gmra.mxu0 %v3105
      %v3207 = vpop.f32.mrf.mxu0
      %v3208 = vadd.f32 0.0, %v3207
      %v3209 = vpop.f32.mrf.mxu0
      %v3210 = vadd.f32 0.0, %v3209
      %3211 = vmatmul.bf16.gmra.mxu0 %v3106
      %v3212 = vpop.f32.mrf.mxu0
      %v3213 = vadd.f32 0.0, %v3212
      %v3214 = vpop.f32.mrf.mxu0
      %v3215 = vadd.f32 0.0, %v3214
      %3216 = vmatmul.bf16.gmra.mxu0 %v3107
      %v3217 = vpop.f32.mrf.mxu0
      %v3218 = vadd.f32 0.0, %v3217
      %v3219 = vpop.f32.mrf.mxu0
      %v3220 = vadd.f32 0.0, %v3219
      %3221 = vmatmul.bf16.gmra.mxu0 %v3108
      %v3222 = vpop.f32.mrf.mxu0
      %v3223 = vadd.f32 0.0, %v3222
      %v3224 = vpop.f32.mrf.mxu0
      %v3225 = vadd.f32 0.0, %v3224
      %3226 = vmatmul.bf16.gmra.mxu0 %v3109
      %v3227 = vpop.f32.mrf.mxu0
      %v3228 = vadd.f32 0.0, %v3227
      %v3229 = vpop.f32.mrf.mxu0
      %v3230 = vadd.f32 0.0, %v3229
      %3231 = vmatmul.bf16.gmra.mxu0 %v3110
      %v3232 = vpop.f32.mrf.mxu0
      %v3233 = vadd.f32 0.0, %v3232
      %v3234 = vpop.f32.mrf.mxu0
      %v3235 = vadd.f32 0.0, %v3234
      %3236 = vmatmul.bf16.gmra.mxu0 %v3111
      %v3237 = vpop.f32.mrf.mxu0
      %v3238 = vadd.f32 0.0, %v3237
      %v3239 = vpop.f32.mrf.mxu0
      %v3240 = vadd.f32 0.0, %v3239
      %3241 = vmatmul.bf16.gmra.mxu0 %v3112
      %v3242 = vpop.f32.mrf.mxu0
      %v3243 = vadd.f32 0.0, %v3242
      %v3244 = vpop.f32.mrf.mxu0
      %v3245 = vadd.f32 0.0, %v3244
      %3246 = vmatmul.bf16.gmra.mxu0 %v3113
      %v3247 = vpop.f32.mrf.mxu0
      %v3248 = vadd.f32 0.0, %v3247
      %v3249 = vpop.f32.mrf.mxu0
      %v3250 = vadd.f32 0.0, %v3249
      %3251 = vmatmul.bf16.gmra.mxu0 %v3114
      %v3252 = vpop.f32.mrf.mxu0
      %v3253 = vadd.f32 0.0, %v3252
      %v3254 = vpop.f32.mrf.mxu0
      %v3255 = vadd.f32 0.0, %v3254
      %3256 = vmatmul.bf16.gmra.mxu0 %v3115
      %v3257 = vpop.f32.mrf.mxu0
      %v3258 = vadd.f32 0.0, %v3257
      %v3259 = vpop.f32.mrf.mxu0
      %v3260 = vadd.f32 0.0, %v3259
      %3261 = vmatmul.bf16.gmra.mxu0 %v3116
      %v3262 = vpop.f32.mrf.mxu0
      %v3263 = vadd.f32 0.0, %v3262
      %v3264 = vpop.f32.mrf.mxu0
      %v3265 = vadd.f32 0.0, %v3264
      %3266 = vmatmul.bf16.gmra.mxu0 %v3117
      %v3267 = vpop.f32.mrf.mxu0
      %v3268 = vadd.f32 0.0, %v3267
      %v3269 = vpop.f32.mrf.mxu0
      %v3270 = vadd.f32 0.0, %v3269
      %3271 = vdwg.mxu0
      %v3272 = vadd.f32 %v2910, %v3193
      %v3273 = vadd.f32 %v2911, %v3195
      %v3274 = vadd.f32 %v2912, %v3198
      %v3275 = vadd.f32 %v2913, %v3200
      %v3276 = vadd.f32 %v2914, %v3203
      %v3277 = vadd.f32 %v2915, %v3205
      %v3278 = vadd.f32 %v2916, %v3208
      %v3279 = vadd.f32 %v2917, %v3210
      %v3280 = vadd.f32 %v2918, %v3213
      %v3281 = vadd.f32 %v2919, %v3215
      %v3282 = vadd.f32 %v2920, %v3218
      %v3283 = vadd.f32 %v2921, %v3220
      %v3284 = vadd.f32 %v2922, %v3223
      %v3285 = vadd.f32 %v2923, %v3225
      %v3286 = vadd.f32 %v2924, %v3228
      %v3287 = vadd.f32 %v2925, %v3230
      %v3288 = vadd.f32 %v2926, %v3233
      %v3289 = vadd.f32 %v2927, %v3235
      %v3290 = vadd.f32 %v2928, %v3238
      %v3291 = vadd.f32 %v2929, %v3240
      %v3292 = vadd.f32 %v2930, %v3243
      %v3293 = vadd.f32 %v2931, %v3245
      %v3294 = vadd.f32 %v2932, %v3248
      %v3295 = vadd.f32 %v2933, %v3250
      %v3296 = vadd.f32 %v2934, %v3253
      %v3297 = vadd.f32 %v2935, %v3255
      %v3298 = vadd.f32 %v2936, %v3258
      %v3299 = vadd.f32 %v2937, %v3260
      %v3300 = vadd.f32 %v2938, %v3263
      %v3301 = vadd.f32 %v2939, %v3265
      %v3302 = vadd.f32 %v2940, %v3268
      %v3303 = vadd.f32 %v2941, %v3270
      %v3304 = vld [vmem:[%s2] sm:$0x1]
      %v3306 = vperm.slane %v3304, 0
      %v3308 = vadd.f32 %v3272, %v3306
      %v3309 = vadd.f32 %v3273, %v3306
      %v3310 = vadd.f32 %v3274, %v3306
      %v3311 = vadd.f32 %v3275, %v3306
      %v3312 = vadd.f32 %v3276, %v3306
      %v3313 = vadd.f32 %v3277, %v3306
      %v3314 = vadd.f32 %v3278, %v3306
      %v3315 = vadd.f32 %v3279, %v3306
      %v3316 = vadd.f32 %v3280, %v3306
      %v3317 = vadd.f32 %v3281, %v3306
      %v3318 = vadd.f32 %v3282, %v3306
      %v3319 = vadd.f32 %v3283, %v3306
      %v3320 = vadd.f32 %v3284, %v3306
      %v3321 = vadd.f32 %v3285, %v3306
      %v3322 = vadd.f32 %v3286, %v3306
      %v3323 = vadd.f32 %v3287, %v3306
      %v3324 = vadd.f32 %v3288, %v3306
      %v3325 = vadd.f32 %v3289, %v3306
      %v3326 = vadd.f32 %v3290, %v3306
      %v3327 = vadd.f32 %v3291, %v3306
      %v3328 = vadd.f32 %v3292, %v3306
      %v3329 = vadd.f32 %v3293, %v3306
      %v3330 = vadd.f32 %v3294, %v3306
      %v3331 = vadd.f32 %v3295, %v3306
      %v3332 = vadd.f32 %v3296, %v3306
      %v3333 = vadd.f32 %v3297, %v3306
      %v3334 = vadd.f32 %v3298, %v3306
      %v3335 = vadd.f32 %v3299, %v3306
      %v3336 = vadd.f32 %v3300, %v3306
      %v3337 = vadd.f32 %v3301, %v3306
      %v3338 = vadd.f32 %v3302, %v3306
      %v3339 = vadd.f32 %v3303, %v3306
      %v3340 = vmax.f32 %v3308, 0.0
      %v3341 = vmax.f32 %v3309, 0.0
      %v3342 = vmax.f32 %v3310, 0.0
      %v3343 = vmax.f32 %v3311, 0.0
      %v3344 = vmax.f32 %v3312, 0.0
      %v3345 = vmax.f32 %v3313, 0.0
      %v3346 = vmax.f32 %v3314, 0.0
      %v3347 = vmax.f32 %v3315, 0.0
      %v3348 = vmax.f32 %v3316, 0.0
      %v3349 = vmax.f32 %v3317, 0.0
      %v3350 = vmax.f32 %v3318, 0.0
      %v3351 = vmax.f32 %v3319, 0.0
      %v3352 = vmax.f32 %v3320, 0.0
      %v3353 = vmax.f32 %v3321, 0.0
      %v3354 = vmax.f32 %v3322, 0.0
      %v3355 = vmax.f32 %v3323, 0.0
      %v3356 = vmax.f32 %v3324, 0.0
      %v3357 = vmax.f32 %v3325, 0.0
      %v3358 = vmax.f32 %v3326, 0.0
      %v3359 = vmax.f32 %v3327, 0.0
      %v3360 = vmax.f32 %v3328, 0.0
      %v3361 = vmax.f32 %v3329, 0.0
      %v3362 = vmax.f32 %v3330, 0.0
      %v3363 = vmax.f32 %v3331, 0.0
      %v3364 = vmax.f32 %v3332, 0.0
      %v3365 = vmax.f32 %v3333, 0.0
      %v3366 = vmax.f32 %v3334, 0.0
      %v3367 = vmax.f32 %v3335, 0.0
      %v3368 = vmax.f32 %v3336, 0.0
      %v3369 = vmax.f32 %v3337, 0.0
      %v3370 = vmax.f32 %v3338, 0.0
      %v3371 = vmax.f32 %v3339, 0.0
      %v3372 = vpack.c.bf16 %v3340, %v3340
      %v3373 = vpack.c.bf16 %v3341, %v3341
      %v3374 = vpack.c.bf16 %v3342, %v3342
      %v3375 = vpack.c.bf16 %v3343, %v3343
      %v3376 = vpack.c.bf16 %v3344, %v3344
      %v3377 = vpack.c.bf16 %v3345, %v3345
      %v3378 = vpack.c.bf16 %v3346, %v3346
      %v3379 = vpack.c.bf16 %v3347, %v3347
      %v3380 = vpack.c.bf16 %v3348, %v3348
      %v3381 = vpack.c.bf16 %v3349, %v3349
      %v3382 = vpack.c.bf16 %v3350, %v3350
      %v3383 = vpack.c.bf16 %v3351, %v3351
      %v3384 = vpack.c.bf16 %v3352, %v3352
      %v3385 = vpack.c.bf16 %v3353, %v3353
      %v3386 = vpack.c.bf16 %v3354, %v3354
      %v3387 = vpack.c.bf16 %v3355, %v3355
      %v3388 = vpack.c.bf16 %v3356, %v3356
      %v3389 = vpack.c.bf16 %v3357, %v3357
      %v3390 = vpack.c.bf16 %v3358, %v3358
      %v3391 = vpack.c.bf16 %v3359, %v3359
      %v3392 = vpack.c.bf16 %v3360, %v3360
      %v3393 = vpack.c.bf16 %v3361, %v3361
      %v3394 = vpack.c.bf16 %v3362, %v3362
      %v3395 = vpack.c.bf16 %v3363, %v3363
      %v3396 = vpack.c.bf16 %v3364, %v3364
      %v3397 = vpack.c.bf16 %v3365, %v3365
      %v3398 = vpack.c.bf16 %v3366, %v3366
      %v3399 = vpack.c.bf16 %v3367, %v3367
      %v3400 = vpack.c.bf16 %v3368, %v3368
      %v3401 = vpack.c.bf16 %v3369, %v3369
      %v3402 = vpack.c.bf16 %v3370, %v3370
      %v3403 = vpack.c.bf16 %v3371, %v3371
      %3404 = vst [vmem:[%s170] sm:$0xf] %v3372
      %3405 = vst [vmem:[%s170 + $0x4] sm:$0xf] %v3373
      %3406 = vst [vmem:[%s170 + $0x8] sm:$0xf] %v3374
      %3407 = vst [vmem:[%s170 + $0xc] sm:$0xf] %v3375
      %3408 = vst [vmem:[%s170 + $0x10] sm:$0xf] %v3376
      %3409 = vst [vmem:[%s170 + $0x14] sm:$0xf] %v3377
      %3410 = vst [vmem:[%s170 + $0x18] sm:$0xf] %v3378
      %3411 = vst [vmem:[%s170 + $0x1c] sm:$0xf] %v3379
      %3412 = vst [vmem:[%s170 + $0x20] sm:$0xf] %v3380
      %3413 = vst [vmem:[%s170 + $0x24] sm:$0xf] %v3381
      %3414 = vst [vmem:[%s170 + $0x28] sm:$0xf] %v3382
      %3415 = vst [vmem:[%s170 + $0x2c] sm:$0xf] %v3383
      %3416 = vst [vmem:[%s170 + $0x30] sm:$0xf] %v3384
      %3417 = vst [vmem:[%s170 + $0x34] sm:$0xf] %v3385
      %3418 = vst [vmem:[%s170 + $0x38] sm:$0xf] %v3386
      %3419 = vst [vmem:[%s170 + $0x3c] sm:$0xf] %v3387
      %3420 = vst [vmem:[%s170 + $0x40] sm:$0xf] %v3388
      %3421 = vst [vmem:[%s170 + $0x44] sm:$0xf] %v3389
      %3422 = vst [vmem:[%s170 + $0x48] sm:$0xf] %v3390
      %3423 = vst [vmem:[%s170 + $0x4c] sm:$0xf] %v3391
      %3424 = vst [vmem:[%s170 + $0x50] sm:$0xf] %v3392
      %3425 = vst [vmem:[%s170 + $0x54] sm:$0xf] %v3393
      %3426 = vst [vmem:[%s170 + $0x58] sm:$0xf] %v3394
      %3427 = vst [vmem:[%s170 + $0x5c] sm:$0xf] %v3395
      %3428 = vst [vmem:[%s170 + $0x60] sm:$0xf] %v3396
      %3429 = vst [vmem:[%s170 + $0x64] sm:$0xf] %v3397
      %3430 = vst [vmem:[%s170 + $0x68] sm:$0xf] %v3398
      %3431 = vst [vmem:[%s170 + $0x6c] sm:$0xf] %v3399
      %3432 = vst [vmem:[%s170 + $0x70] sm:$0xf] %v3400
      %3433 = vst [vmem:[%s170 + $0x74] sm:$0xf] %v3401
      %3434 = vst [vmem:[%s170 + $0x78] sm:$0xf] %v3402
      %3435 = vst [vmem:[%s170 + $0x7c] sm:$0xf] %v3403
      %p3436 = scmp.lt.s32.totalorder %s14, 1
      %s3437 = scalar_select %p3436, %s14, 1
      %s3438 = smul.addr %s3437, 32
      %s3439 = smul.addr %s3438, 4
      %s3440 = scalar_lea.vmem %s3, %s3439
      // Predicated region
      $region33: #{griddy_forward.5} parent=31 // pred_check
        %p3441 = pneg %p100
      $region34: #{griddy_forward.5} parent=31 // pred_check_branch
        %3443 = sbr.rel (%p3441) target = $region36
      $region35: #{griddy_forward.5} parent=31 // pred_region
        _
      $region36: #{griddy_forward.5} parent=31 // pred_fallthru
        _
    $region32: #{griddy_forward.5} parent=5 // pred_fallthru
      _
    %p3444 = scmp.le.s32.totalorder 2, %s9
    // Predicated region
    $region37: #{griddy_forward.5} parent=5 // pred_check
      %p3445 = pneg %p3444
    $region38: #{griddy_forward.5} parent=5 // pred_check_branch
      %3447 = sbr.rel (%p3445) target = $region40
    $region39: #{griddy_forward.5} parent=5 // pred_region
      %s3448 = ssub.s32 %s9, 2
      // Predicated region
      $region41: #{griddy_forward.5} parent=39 // pred_check
        %p3449 = pneg %p106
      $region42: #{griddy_forward.5} parent=39 // pred_check_branch
        %3451 = sbr.rel (%p3449) target = $region44
      $region43: #{griddy_forward.5} parent=39 // pred_region
        %p3452 = scmp.lt.s32.totalorder %s15, 1
        %s3453 = scalar_select %p3452, %s15, 1
        %s3454 = smul.addr %s3453, 32
        %s3455 = smul.addr %s3454, 4
        %s3456 = scalar_lea.vmem %s3, %s3455
      $region44: #{griddy_forward.5} parent=39 // pred_fallthru
        _
    $region40: #{griddy_forward.5} parent=5 // pred_fallthru
      _
  $region6: #{griddy_forward.5} parent=0 // loop_footer
    %s13 = sadd.s32 1, %s9
  $region7: #{griddy_forward.5} parent=0 // loop_footer_branch
    %8 = sbr.rel target = $region3
  $region8: #{griddy_forward.5} parent=0 // loop_exit
    _

// kernel: griddy_forward.9
$region0: #{griddy_forward.9}
  #allocation0 [shape = 'u32[]', space=smem, size = 0x4, offset = 0x4, fixed_abs, tag = 'smem constant byte address 0x4 - core index']
  #allocation1 [shape = 'u32[72,128]{1,0:T(1,128)}', space=vmem, size = 0x9000, scoped, tag = 'internal scratch']
  %s0 = inlined_call_operand.vmem [shape: bf16[2,16,128], index: 0, kind: input, shape index: {}]
  %s1 = inlined_call_operand.vmem [shape: f32[128,128], index: 1, kind: input, shape index: {}]
  %s2 = inlined_call_operand.vmem [shape: f32[1,128], index: 2, kind: input, shape index: {}]
  %s3 = inlined_call_operand.hbm [shape: f32[2,128], index: 3, kind: output, shape index: {}]
  %s4 = sld [smem:[#allocation0]]
  $region22: #{griddy_forward.9} parent=0
    _
  %s6 = ssub.s32 1, %s4
  %s7 = scalar_select 0, %s6, %s4
  $region1: #{griddy_forward.9} parent=0
    #allocation2 [shape = 'u8[1024]{0}', space=vmem, size = 0x400, scoped, tag = 'output window, operand 0, single buffered']
    #allocation3 [shape = 's32[1]{0}', space=sflag, size = 0x4, scoped, tag = 'scoped memory for griddy_forward.9']
    %8 = vsyncpa [#allocation3], 0
    // Predicated region
    $region2: #{griddy_forward.9} parent=1 // pred_check
      _
    $region3: #{griddy_forward.9} parent=1 // pred_check_branch
      %10 = sbr.rel (0) target = $region5
    $region4: #{griddy_forward.9} parent=1 // pred_region
      _
    $region5: #{griddy_forward.9} parent=1 // pred_fallthru
      _
    // Predicated region
    $region6: #{griddy_forward.9} parent=1 // pred_check
      _
    $region7: #{griddy_forward.9} parent=1 // pred_check_branch
      %12 = sbr.rel (0) target = $region9
    $region8: #{griddy_forward.9} parent=1 // pred_region
      _
    $region9: #{griddy_forward.9} parent=1 // pred_fallthru
      _
    // Predicated region
    $region10: #{griddy_forward.9} parent=1 // pred_check
      _
    $region11: #{griddy_forward.9} parent=1 // pred_check_branch
      %14 = sbr.rel (0) target = $region13
    $region12: #{griddy_forward.9} parent=1 // pred_region
      _
    $region13: #{griddy_forward.9} parent=1 // pred_fallthru
      _
    %v15 = vld [vmem:[%s0] sm:$0xf]
    %v16 = vld [vmem:[%s0 + $0x4] sm:$0xf]
    %v17 = vld [vmem:[%s0 + $0x8] sm:$0xf]
    %v18 = vld [vmem:[%s0 + $0xc] sm:$0xf]
    %v19 = vunpack.c.l.bf16 %v15
    %v20 = vunpack.c.l.bf16 %v16
    %v21 = vunpack.c.l.bf16 %v17
    %v22 = vunpack.c.l.bf16 %v18
    %v23 = vadd.f32 %v19, %v20
    %v24 = vrot.slane %v23, 4
    %v25 = vadd.f32 %v23, %v24
    %v26 = vrot.slane %v25, 2
    %v27 = vadd.f32 %v25, %v26
    %v28 = vrot.slane %v27, 1
    %v29 = vadd.f32 %v27, %v28
    %v30 = vadd.f32 %v21, %v22
    %v31 = vrot.slane %v30, 4
    %v32 = vadd.f32 %v30, %v31
    %v33 = vrot.slane %v32, 2
    %v34 = vadd.f32 %v32, %v33
    %v35 = vrot.slane %v34, 1
    %v36 = vadd.f32 %v34, %v35
    %v37 = vmul.f32 %v29, 0.0625
    %v38 = vmul.f32 %v36, 0.0625
    %v39 = vld [vmem:[%s1] sm:$0xff]
    %v40 = vld [vmem:[%s1 + $0x8] sm:$0xff]
    %v41 = vld [vmem:[%s1 + $0x10] sm:$0xff]
    %v42 = vld [vmem:[%s1 + $0x18] sm:$0xff]
    %v43 = vld [vmem:[%s1 + $0x20] sm:$0xff]
    %v44 = vld [vmem:[%s1 + $0x28] sm:$0xff]
    %v45 = vld [vmem:[%s1 + $0x30] sm:$0xff]
    %v46 = vld [vmem:[%s1 + $0x38] sm:$0xff]
    %v47 = vld [vmem:[%s1 + $0x40] sm:$0xff]
    %v48 = vld [vmem:[%s1 + $0x48] sm:$0xff]
    %v49 = vld [vmem:[%s1 + $0x50] sm:$0xff]
    %v50 = vld [vmem:[%s1 + $0x58] sm:$0xff]
    %v51 = vld [vmem:[%s1 + $0x60] sm:$0xff]
    %v52 = vld [vmem:[%s1 + $0x68] sm:$0xff]
    %v53 = vld [vmem:[%s1 + $0x70] sm:$0xff]
    %v54 = vld [vmem:[%s1 + $0x78] sm:$0xff]
    %v55 = vld [vmem:[%s2] sm:$0x1]
    %v57 = vperm.slane %v55, 0
    %vm61 = vcmask 1041409
    %v62 = vsel %vm61, %v38, %v37
    %64 = vmatpush.msra.mxu0 %v54
    %65 = vmatpush.msra.mxu0 %v53
    %66 = vmatpush.msra.mxu0 %v52
    %67 = vmatpush.msra.mxu0 %v51
    %68 = vmatpush.msra.mxu0 %v50
    %69 = vmatpush.msra.mxu0 %v49
    %70 = vmatpush.msra.mxu0 %v48
    %71 = vmatpush.msra.mxu0 %v47
    %72 = vmatpush.msra.mxu0 %v46
    %73 = vmatpush.msra.mxu0 %v45
    %74 = vmatpush.msra.mxu0 %v44
    %75 = vmatpush.msra.mxu0 %v43
    %76 = vmatpush.msra.mxu0 %v42
    %77 = vmatpush.msra.mxu0 %v41
    %78 = vmatpush.msra.mxu0 %v40
    %79 = vmatpush.msra.mxu0 %v39
    %80 = vmatmul.f32.gmra.mxu0 %v62
    %v81 = vpop.f32.mrf.mxu0
    %v82 = vadd.f32 %v57, %v81
    %83 = vdwg.mxu0
    %84 = vst [vmem:[#allocation2] sm:$0x3] %v82
    // Predicated region
    $region14: #{griddy_forward.9} parent=1 // pred_check
      _
    $region15: #{griddy_forward.9} parent=1 // pred_check_branch
      %86 = sbr.rel (0) target = $region17
    $region16: #{griddy_forward.9} parent=1 // pred_region
      %88 = vsyncadd [#allocation3], 0
      %s90 = sshll.u32 [#allocation2], 4
      %s91 = int_to_ptr.vmem [resolvable:$true] %s90
      %s92 = sshll.u32 %s3, 4
      %s93 = int_to_ptr.hbm [resolvable:$true] %s92
      %95 = dma.vmem_to_hbm [thread:$0]  %s91, 32, %s93, [#allocation3]
    $region17: #{griddy_forward.9} parent=1 // pred_fallthru
      _
    // Predicated region
    $region18: #{griddy_forward.9} parent=1 // pred_check
      _
    $region19: #{griddy_forward.9} parent=1 // pred_check_branch
      %97 = sbr.rel (0) target = $region21
    $region20: #{griddy_forward.9} parent=1 // pred_region
      %99 = dma.done [#allocation3], 32
    $region21: #{griddy_forward.9} parent=1 // pred_fallthru
      _
    %100 = vsyncpa [#allocation3], 1

</llo_original>
